<compile_context>
chip_gen: v5e
topology: v5e:2x2
jax: 0.10.0
libtpu: 0.0.40
codegen_flags: <defaults>
</compile_context>

<pallas_src>
import jax
import jax.numpy as jnp
import numpy as np
from jax.experimental import pallas as pl
from jax.experimental.pallas import tpu as pltpu

VOCAB_SIZE = 130
EMBED_SIZE = 64
NUM_HIDDENS = 128
NUM_LAYERS = 2
VOCAB_PAD = ((VOCAB_SIZE + 127) // 128) * 128   # 130 -> 256, lane-dense decoder


def _melody_rnn_kernel(x_emb_ref, wih0_ref, b0_ref, whh0_ref,
                       wih1_ref, whh1_ref, b1_ref, wd_ref, bd_ref,
                       probs_ref, h_out_ref, c_out_ref,
                       h1_scr):
    """Single-invocation kernel: all T steps of the 2-layer LSTM + batched decoder.

    x_emb_ref : (T*B, E)   gathered embeddings, seq-major, batch-minor flattened
    wih0_ref  : (E, 4H)    layer-0 input weights   (transposed)
    b0_ref    : (1, 4H)    layer-0 bias (b_ih + b_hh)
    whh0_ref  : (H, 4H)    layer-0 recurrent weights
    wih1_ref  : (H, 4H)    layer-1 input weights
    whh1_ref  : (H, 4H)    layer-1 recurrent weights
    b1_ref    : (1, 4H)
    wd_ref    : (H, Vp)    decoder weights, lane-padded with zero columns
    bd_ref    : (1, Vp)    decoder bias, pad lanes = -1e30 (softmax-neutral)
    probs_ref : (T*B, Vp)  softmax output (pad lanes = 0)
    h_out_ref / c_out_ref : (L, B, H) final LSTM state
    h1_scr    : (T*B, H)   VMEM scratch collecting h1_t for the batched decoder
    """
    TB, _ = x_emb_ref.shape
    H = whh0_ref.shape[0]
    B = h_out_ref.shape[1]
    T = TB // B

    # Non-recurrent layer-0 input projection folded into the kernel: one
    # (T*B, E) x (E, 4H) MXU pass before the recurrence starts.
    xproj = (jnp.dot(x_emb_ref[...], wih0_ref[...],
                     preferred_element_type=jnp.float32)
             + jnp.broadcast_to(b0_ref[...], (TB, 4 * H)))

    # Hoist the bias broadcast out of the unrolled loop (no CSE for it).
    b1b = jnp.broadcast_to(b1_ref[...], (B, 4 * H))

    def lstm_update(gates, c):
        # PyTorch gate order [i, f, g, o]; slices are 128-lane aligned.
        i = jax.nn.sigmoid(gates[:, 0 * H:1 * H])
        f = jax.nn.sigmoid(gates[:, 1 * H:2 * H])
        g = jnp.tanh(gates[:, 2 * H:3 * H])
        o = jax.nn.sigmoid(gates[:, 3 * H:4 * H])
        c_new = f * c + i * g
        h_new = o * jnp.tanh(c_new)
        return h_new, c_new

    zeros = jnp.zeros((B, H), jnp.float32)
    h0, c0, h1, c1 = zeros, zeros, zeros, zeros

    # T is small and static -> fully unrolled loop (static indices, full
    # scheduler visibility, no grid / per-step DMA machinery).
    # TODO(synk): switch to lax.fori_loop for long sequences to bound code size.
    for t in range(T):
        # layer 0: only the recurrent matmul sits on the per-step critical path.
        g0 = xproj[t * B:(t + 1) * B, :] + jnp.dot(
            h0, whh0_ref[...], preferred_element_type=jnp.float32)
        h0, c0 = lstm_update(g0, c0)

        # layer 1: two K=128 dots, no per-step lane concat on the critical path.
        g1 = (jnp.dot(h0, wih1_ref[...], preferred_element_type=jnp.float32)
              + jnp.dot(h1, whh1_ref[...], preferred_element_type=jnp.float32)
              + b1b)
        h1, c1 = lstm_update(g1, c1)

        # Stash h1_t; decoder/softmax run once, batched over all T*B rows.
        h1_scr[t * B:(t + 1) * B, :] = h1

    # Batched decoder + lane-dense softmax: one (T*B,H)x(H,Vp) matmul, one
    # bias add, one softmax, one unmasked (T*B,Vp) store.  Pad lanes carry a
    # -1e30 bias so exp()==0 there and the denominator is untouched.
    logits = (jnp.dot(h1_scr[...], wd_ref[...],
                      preferred_element_type=jnp.float32) + bd_ref[...])
    m = jnp.max(logits, axis=-1, keepdims=True)
    e = jnp.exp(logits - m)
    s = jnp.sum(e, axis=-1, keepdims=True)
    probs_ref[...] = e * pl.reciprocal(s, approx=True)

    # TODO(synk): nn.LSTM inter-layer dropout (p=0.5) is training-only; this
    # implements eval() semantics (no-op), matching inference behaviour.
    h_out_ref[0] = h0
    h_out_ref[1] = h1
    c_out_ref[0] = c0
    c_out_ref[1] = c1


def prepare_params(params):
    """One-time parameter prep (decoder lane-padding). Call once, not per step."""
    emb, wih0T, whh0T, b0, wih1T, whh1T, b1, wdT, bd = params
    H = whh0T.shape[0]
    V = wdT.shape[1]
    wd_pad = jnp.zeros((H, VOCAB_PAD), jnp.float32).at[:, :V].set(wdT)
    bd_pad = jnp.full((1, VOCAB_PAD), -1e30, jnp.float32).at[:, :V].set(bd)
    return (emb, wih0T, b0, whh0T, wih1T, whh1T, b1, wd_pad, bd_pad)


@jax.jit
def melody_rnn_forward(tokens, prepped):
    """tokens: (batch, seq) int32.  Returns (probs (seq*batch, V), (h_n, c_n))."""
    emb, wih0T, b0, whh0T, wih1T, whh1T, b1, wd_pad, bd_pad = prepped
    B, T = tokens.shape
    H = whh0T.shape[0]
    L = NUM_LAYERS
    Vp = wd_pad.shape[1]

    # Embedding lookup, seq-major like PyTorch nn.LSTM, flattened to (T*B, E).
    # TODO(synk): the 33 KiB table gather could move into the kernel via
    # scalar-prefetched token ids; kept in XLA (it fuses under this jit).
    x_emb = jnp.take(emb, tokens.T.reshape(-1), axis=0).astype(jnp.float32)

    vmem = pl.BlockSpec(memory_space=pltpu.MemorySpace.VMEM)
    probs_pad, h_out, c_out = pl.pallas_call(
        _melody_rnn_kernel,
        out_shape=(
            jax.ShapeDtypeStruct((T * B, Vp), jnp.float32),
            jax.ShapeDtypeStruct((L, B, H), jnp.float32),
            jax.ShapeDtypeStruct((L, B, H), jnp.float32),
        ),
        in_specs=[vmem] * 9,
        out_specs=(vmem, vmem, vmem),
        scratch_shapes=[pltpu.VMEM((T * B, H), jnp.float32)],
    )(x_emb, wih0T, b0, whh0T, wih1T, whh1T, b1, wd_pad, bd_pad)

    probs = probs_pad[:, :VOCAB_SIZE]
    return probs, (h_out, c_out)


def _ref_forward(tokens, params):
    """Pure-JAX reference with identical semantics (no Pallas)."""
    emb, wih0T, whh0T, b0, wih1T, whh1T, b1, wdT, bd = params
    x_emb = jnp.take(emb, tokens.T, axis=0).astype(jnp.float32)
    T, B, E = x_emb.shape
    H = whh0T.shape[0]

    def cell(x, h, c, wihT, whhT, b):
        g = x @ wihT + h @ whhT + b
        i = jax.nn.sigmoid(g[:, 0 * H:1 * H])
        f = jax.nn.sigmoid(g[:, 1 * H:2 * H])
        gg = jnp.tanh(g[:, 2 * H:3 * H])
        o = jax.nn.sigmoid(g[:, 3 * H:4 * H])
        c_new = f * c + i * gg
        h_new = o * jnp.tanh(c_new)
        return h_new, c_new

    h0 = c0 = h1 = c1 = jnp.zeros((B, H), jnp.float32)
    probs_all = []
    for t in range(T):
        h0, c0 = cell(x_emb[t], h0, c0, wih0T, whh0T, b0)
        h1, c1 = cell(h0, h1, c1, wih1T, whh1T, b1)
        logits = h1 @ wdT + bd
        probs_all.append(jax.nn.softmax(logits, axis=-1))
    probs = jnp.stack(probs_all, axis=0)
    h_n = jnp.stack([h0, h1], axis=0)
    c_n = jnp.stack([c0, c1], axis=0)
    return probs.reshape(-1, probs.shape[-1]), (h_n, c_n)


def init_params(key):
    """Deterministic synthetic parameters matching the nn.Module shapes."""
    ks = jax.random.split(key, 12)
    H, E, V = NUM_HIDDENS, EMBED_SIZE, VOCAB_SIZE
    k = 1.0 / np.sqrt(H)
    u = lambda kk, shape, s: jax.random.uniform(kk, shape, jnp.float32, -s, s)

    emb = jax.random.normal(ks[0], (V, E), jnp.float32)          # nn.Embedding
    # layer 0 (input E -> H), stored transposed: (in, 4H)
    wih0T = u(ks[1], (E, 4 * H), k)
    whh0T = u(ks[2], (H, 4 * H), k)
    b0 = u(ks[3], (1, 4 * H), k) + u(ks[4], (1, 4 * H), k)        # b_ih + b_hh
    # layer 1 (input H -> H)
    wih1T = u(ks[5], (H, 4 * H), k)
    whh1T = u(ks[6], (H, 4 * H), k)
    b1 = u(ks[7], (1, 4 * H), k) + u(ks[8], (1, 4 * H), k)
    # decoder Linear(H -> V), stored transposed
    kd = 1.0 / np.sqrt(H)
    wdT = u(ks[9], (H, V), kd)
    bd = u(ks[10], (1, V), kd)
    return (emb, wih0T, whh0T, b0, wih1T, whh1T, b1, wdT, bd)


if __name__ == "__main__":
    key = jax.random.PRNGKey(0)
    pkey, tkey = jax.random.split(key)
    params = init_params(pkey)
    prepped = jax.block_until_ready(prepare_params(params))   # one-time prep

    batch, seq = 2, 8
    tokens = jax.random.randint(tkey, (batch, seq), 0, VOCAB_SIZE, jnp.int32)

    probs, (h_n, c_n) = melody_rnn_forward(tokens, prepped)
    jax.block_until_ready((probs, h_n, c_n))

    # sanity check against pure-JAX reference
    probs_ref, (h_ref, c_ref) = _ref_forward(tokens, params)
    assert probs.shape == (seq * batch, VOCAB_SIZE)
    assert h_n.shape == (NUM_LAYERS, batch, NUM_HIDDENS)
    assert c_n.shape == (NUM_LAYERS, batch, NUM_HIDDENS)
    np.testing.assert_allclose(np.asarray(probs), np.asarray(probs_ref),
                               rtol=2e-3, atol=2e-3)
    np.testing.assert_allclose(np.asarray(h_n), np.asarray(h_ref),
                               rtol=2e-3, atol=2e-3)
    np.testing.assert_allclose(np.asarray(c_n), np.asarray(c_ref),
                               rtol=2e-3, atol=2e-3)

    print("KERNEL_OK")
</pallas_src>

<mosaic_0001>
module attributes {stable_mosaic.version = 11 : i64} {
  func.func @_melody_rnn_kernel(%arg0: memref<16x64xf32, #tpu.memory_space<vmem>>, %arg1: memref<64x512xf32, #tpu.memory_space<vmem>>, %arg2: memref<1x512xf32, #tpu.memory_space<vmem>>, %arg3: memref<128x512xf32, #tpu.memory_space<vmem>>, %arg4: memref<128x512xf32, #tpu.memory_space<vmem>>, %arg5: memref<128x512xf32, #tpu.memory_space<vmem>>, %arg6: memref<1x512xf32, #tpu.memory_space<vmem>>, %arg7: memref<128x256xf32, #tpu.memory_space<vmem>>, %arg8: memref<1x256xf32, #tpu.memory_space<vmem>>, %arg9: memref<16x256xf32, #tpu.memory_space<vmem>>, %arg10: memref<2x2x128xf32, #tpu.memory_space<vmem>>, %arg11: memref<2x2x128xf32, #tpu.memory_space<vmem>>, %arg12: memref<16x128xf32, #tpu.memory_space<vmem>>) attributes {dimension_semantics = [], scalar_prefetch = 0 : i64, scratch_operands = 1 : i64, tpu.core_type = #tpu.core_type<tc>} {
    %c0 = arith.constant 0 : index
    %c0_0 = arith.constant 0 : index
    %0 = vector.load %arg0[%c0, %c0_0] : memref<16x64xf32, #tpu.memory_space<vmem>>, vector<16x64xf32>
    %c0_1 = arith.constant 0 : index
    %c0_2 = arith.constant 0 : index
    %1 = vector.load %arg1[%c0_1, %c0_2] : memref<64x512xf32, #tpu.memory_space<vmem>>, vector<64x512xf32>
    %cst = arith.constant dense<0.000000e+00> : vector<16x512xf32>
    %2 = tpu.matmul %0, %1, %cst {dimension_numbers = #tpu.dot_dimension_numbers<[1], [0], [0], [1], [0, 0, 1, 1], [], []>} : vector<16x64xf32>, vector<64x512xf32>, vector<16x512xf32> -> vector<16x512xf32>
    %c0_3 = arith.constant 0 : index
    %c0_4 = arith.constant 0 : index
    %3 = vector.load %arg2[%c0_3, %c0_4] : memref<1x512xf32, #tpu.memory_space<vmem>>, vector<1x512xf32>
    %4 = vector.shape_cast %3 : vector<1x512xf32> to vector<1x512xf32>
    %5 = vector.broadcast %4 : vector<1x512xf32> to vector<16x512xf32>
    %6 = arith.addf %2, %5 : vector<16x512xf32>
    %c0_5 = arith.constant 0 : index
    %c0_6 = arith.constant 0 : index
    %7 = vector.load %arg6[%c0_5, %c0_6] : memref<1x512xf32, #tpu.memory_space<vmem>>, vector<1x512xf32>
    %8 = vector.shape_cast %7 : vector<1x512xf32> to vector<1x512xf32>
    %9 = vector.broadcast %8 : vector<1x512xf32> to vector<2x512xf32>
    %cst_7 = arith.constant 0.000000e+00 : f32
    %10 = vector.broadcast %cst_7 : f32 to vector<2x128xf32>
    %11 = vector.extract_strided_slice %6 {offsets = [0, 0], sizes = [2, 512], strides = [1, 1]} : vector<16x512xf32> to vector<2x512xf32>
    %c0_8 = arith.constant 0 : index
    %c0_9 = arith.constant 0 : index
    %12 = vector.load %arg3[%c0_8, %c0_9] : memref<128x512xf32, #tpu.memory_space<vmem>>, vector<128x512xf32>
    %cst_10 = arith.constant dense<0.000000e+00> : vector<2x512xf32>
    %13 = tpu.matmul %10, %12, %cst_10 {dimension_numbers = #tpu.dot_dimension_numbers<[1], [0], [0], [1], [0, 0, 1, 1], [], []>} : vector<2x128xf32>, vector<128x512xf32>, vector<2x512xf32> -> vector<2x512xf32>
    %14 = arith.addf %11, %13 : vector<2x512xf32>
    %15 = vector.extract_strided_slice %14 {offsets = [0, 0], sizes = [2, 128], strides = [1, 1]} : vector<2x512xf32> to vector<2x128xf32>
    %16 = arith.negf %15 : vector<2x128xf32>
    %17 = math.exp %16 : vector<2x128xf32>
    %cst_11 = arith.constant 1.000000e+00 : f32
    %18 = vector.broadcast %cst_11 : f32 to vector<2x128xf32>
    %19 = arith.addf %18, %17 : vector<2x128xf32>
    %20 = arith.divf %18, %19 : vector<2x128xf32>
    %21 = vector.extract_strided_slice %14 {offsets = [0, 128], sizes = [2, 128], strides = [1, 1]} : vector<2x512xf32> to vector<2x128xf32>
    %22 = arith.negf %21 : vector<2x128xf32>
    %23 = math.exp %22 : vector<2x128xf32>
    %cst_12 = arith.constant 1.000000e+00 : f32
    %24 = vector.broadcast %cst_12 : f32 to vector<2x128xf32>
    %25 = arith.addf %24, %23 : vector<2x128xf32>
    %26 = arith.divf %24, %25 : vector<2x128xf32>
    %27 = vector.extract_strided_slice %14 {offsets = [0, 256], sizes = [2, 128], strides = [1, 1]} : vector<2x512xf32> to vector<2x128xf32>
    %28 = math.tanh %27 : vector<2x128xf32>
    %29 = vector.extract_strided_slice %14 {offsets = [0, 384], sizes = [2, 128], strides = [1, 1]} : vector<2x512xf32> to vector<2x128xf32>
    %30 = arith.negf %29 : vector<2x128xf32>
    %31 = math.exp %30 : vector<2x128xf32>
    %cst_13 = arith.constant 1.000000e+00 : f32
    %32 = vector.broadcast %cst_13 : f32 to vector<2x128xf32>
    %33 = arith.addf %32, %31 : vector<2x128xf32>
    %34 = arith.divf %32, %33 : vector<2x128xf32>
    %35 = arith.mulf %26, %10 : vector<2x128xf32>
    %36 = arith.mulf %20, %28 : vector<2x128xf32>
    %37 = arith.addf %35, %36 : vector<2x128xf32>
    %38 = math.tanh %37 : vector<2x128xf32>
    %39 = arith.mulf %34, %38 : vector<2x128xf32>
    %c0_14 = arith.constant 0 : index
    %c0_15 = arith.constant 0 : index
    %40 = vector.load %arg4[%c0_14, %c0_15] : memref<128x512xf32, #tpu.memory_space<vmem>>, vector<128x512xf32>
    %cst_16 = arith.constant dense<0.000000e+00> : vector<2x512xf32>
    %41 = tpu.matmul %39, %40, %cst_16 {dimension_numbers = #tpu.dot_dimension_numbers<[1], [0], [0], [1], [0, 0, 1, 1], [], []>} : vector<2x128xf32>, vector<128x512xf32>, vector<2x512xf32> -> vector<2x512xf32>
    %c0_17 = arith.constant 0 : index
    %c0_18 = arith.constant 0 : index
    %42 = vector.load %arg5[%c0_17, %c0_18] : memref<128x512xf32, #tpu.memory_space<vmem>>, vector<128x512xf32>
    %cst_19 = arith.constant dense<0.000000e+00> : vector<2x512xf32>
    %43 = tpu.matmul %10, %42, %cst_19 {dimension_numbers = #tpu.dot_dimension_numbers<[1], [0], [0], [1], [0, 0, 1, 1], [], []>} : vector<2x128xf32>, vector<128x512xf32>, vector<2x512xf32> -> vector<2x512xf32>
    %44 = arith.addf %41, %43 : vector<2x512xf32>
    %45 = arith.addf %44, %9 : vector<2x512xf32>
    %46 = vector.extract_strided_slice %45 {offsets = [0, 0], sizes = [2, 128], strides = [1, 1]} : vector<2x512xf32> to vector<2x128xf32>
    %47 = arith.negf %46 : vector<2x128xf32>
    %48 = math.exp %47 : vector<2x128xf32>
    %cst_20 = arith.constant 1.000000e+00 : f32
    %49 = vector.broadcast %cst_20 : f32 to vector<2x128xf32>
    %50 = arith.addf %49, %48 : vector<2x128xf32>
    %51 = arith.divf %49, %50 : vector<2x128xf32>
    %52 = vector.extract_strided_slice %45 {offsets = [0, 128], sizes = [2, 128], strides = [1, 1]} : vector<2x512xf32> to vector<2x128xf32>
    %53 = arith.negf %52 : vector<2x128xf32>
    %54 = math.exp %53 : vector<2x128xf32>
    %cst_21 = arith.constant 1.000000e+00 : f32
    %55 = vector.broadcast %cst_21 : f32 to vector<2x128xf32>
    %56 = arith.addf %55, %54 : vector<2x128xf32>
    %57 = arith.divf %55, %56 : vector<2x128xf32>
    %58 = vector.extract_strided_slice %45 {offsets = [0, 256], sizes = [2, 128], strides = [1, 1]} : vector<2x512xf32> to vector<2x128xf32>
    %59 = math.tanh %58 : vector<2x128xf32>
    %60 = vector.extract_strided_slice %45 {offsets = [0, 384], sizes = [2, 128], strides = [1, 1]} : vector<2x512xf32> to vector<2x128xf32>
    %61 = arith.negf %60 : vector<2x128xf32>
    %62 = math.exp %61 : vector<2x128xf32>
    %cst_22 = arith.constant 1.000000e+00 : f32
    %63 = vector.broadcast %cst_22 : f32 to vector<2x128xf32>
    %64 = arith.addf %63, %62 : vector<2x128xf32>
    %65 = arith.divf %63, %64 : vector<2x128xf32>
    %66 = arith.mulf %57, %10 : vector<2x128xf32>
    %67 = arith.mulf %51, %59 : vector<2x128xf32>
    %68 = arith.addf %66, %67 : vector<2x128xf32>
    %69 = math.tanh %68 : vector<2x128xf32>
    %70 = arith.mulf %65, %69 : vector<2x128xf32>
    %c0_23 = arith.constant 0 : index
    %c0_24 = arith.constant 0 : index
    %71 = vector.load %arg12[%c0_23, %c0_24] : memref<16x128xf32, #tpu.memory_space<vmem>>, vector<2x128xf32>
    tpu.vector_store %arg12[%c0_23, %c0_24], %70 {strides = array<i32>} : memref<16x128xf32, #tpu.memory_space<vmem>>, vector<2x128xf32>,
    %72 = vector.extract_strided_slice %6 {offsets = [2, 0], sizes = [2, 512], strides = [1, 1]} : vector<16x512xf32> to vector<2x512xf32>
    %c0_25 = arith.constant 0 : index
    %c0_26 = arith.constant 0 : index
    %73 = vector.load %arg3[%c0_25, %c0_26] : memref<128x512xf32, #tpu.memory_space<vmem>>, vector<128x512xf32>
    %cst_27 = arith.constant dense<0.000000e+00> : vector<2x512xf32>
    %74 = tpu.matmul %39, %73, %cst_27 {dimension_numbers = #tpu.dot_dimension_numbers<[1], [0], [0], [1], [0, 0, 1, 1], [], []>} : vector<2x128xf32>, vector<128x512xf32>, vector<2x512xf32> -> vector<2x512xf32>
    %75 = arith.addf %72, %74 : vector<2x512xf32>
    %76 = vector.extract_strided_slice %75 {offsets = [0, 0], sizes = [2, 128], strides = [1, 1]} : vector<2x512xf32> to vector<2x128xf32>
    %77 = arith.negf %76 : vector<2x128xf32>
    %78 = math.exp %77 : vector<2x128xf32>
    %cst_28 = arith.constant 1.000000e+00 : f32
    %79 = vector.broadcast %cst_28 : f32 to vector<2x128xf32>
    %80 = arith.addf %79, %78 : vector<2x128xf32>
    %81 = arith.divf %79, %80 : vector<2x128xf32>
    %82 = vector.extract_strided_slice %75 {offsets = [0, 128], sizes = [2, 128], strides = [1, 1]} : vector<2x512xf32> to vector<2x128xf32>
    %83 = arith.negf %82 : vector<2x128xf32>
    %84 = math.exp %83 : vector<2x128xf32>
    %cst_29 = arith.constant 1.000000e+00 : f32
    %85 = vector.broadcast %cst_29 : f32 to vector<2x128xf32>
    %86 = arith.addf %85, %84 : vector<2x128xf32>
    %87 = arith.divf %85, %86 : vector<2x128xf32>
    %88 = vector.extract_strided_slice %75 {offsets = [0, 256], sizes = [2, 128], strides = [1, 1]} : vector<2x512xf32> to vector<2x128xf32>
    %89 = math.tanh %88 : vector<2x128xf32>
    %90 = vector.extract_strided_slice %75 {offsets = [0, 384], sizes = [2, 128], strides = [1, 1]} : vector<2x512xf32> to vector<2x128xf32>
    %91 = arith.negf %90 : vector<2x128xf32>
    %92 = math.exp %91 : vector<2x128xf32>
    %cst_30 = arith.constant 1.000000e+00 : f32
    %93 = vector.broadcast %cst_30 : f32 to vector<2x128xf32>
    %94 = arith.addf %93, %92 : vector<2x128xf32>
    %95 = arith.divf %93, %94 : vector<2x128xf32>
    %96 = arith.mulf %87, %37 : vector<2x128xf32>
    %97 = arith.mulf %81, %89 : vector<2x128xf32>
    %98 = arith.addf %96, %97 : vector<2x128xf32>
    %99 = math.tanh %98 : vector<2x128xf32>
    %100 = arith.mulf %95, %99 : vector<2x128xf32>
    %c0_31 = arith.constant 0 : index
    %c0_32 = arith.constant 0 : index
    %101 = vector.load %arg4[%c0_31, %c0_32] : memref<128x512xf32, #tpu.memory_space<vmem>>, vector<128x512xf32>
    %cst_33 = arith.constant dense<0.000000e+00> : vector<2x512xf32>
    %102 = tpu.matmul %100, %101, %cst_33 {dimension_numbers = #tpu.dot_dimension_numbers<[1], [0], [0], [1], [0, 0, 1, 1], [], []>} : vector<2x128xf32>, vector<128x512xf32>, vector<2x512xf32> -> vector<2x512xf32>
    %c0_34 = arith.constant 0 : index
    %c0_35 = arith.constant 0 : index
    %103 = vector.load %arg5[%c0_34, %c0_35] : memref<128x512xf32, #tpu.memory_space<vmem>>, vector<128x512xf32>
    %cst_36 = arith.constant dense<0.000000e+00> : vector<2x512xf32>
    %104 = tpu.matmul %70, %103, %cst_36 {dimension_numbers = #tpu.dot_dimension_numbers<[1], [0], [0], [1], [0, 0, 1, 1], [], []>} : vector<2x128xf32>, vector<128x512xf32>, vector<2x512xf32> -> vector<2x512xf32>
    %105 = arith.addf %102, %104 : vector<2x512xf32>
    %106 = arith.addf %105, %9 : vector<2x512xf32>
    %107 = vector.extract_strided_slice %106 {offsets = [0, 0], sizes = [2, 128], strides = [1, 1]} : vector<2x512xf32> to vector<2x128xf32>
    %108 = arith.negf %107 : vector<2x128xf32>
    %109 = math.exp %108 : vector<2x128xf32>
    %cst_37 = arith.constant 1.000000e+00 : f32
    %110 = vector.broadcast %cst_37 : f32 to vector<2x128xf32>
    %111 = arith.addf %110, %109 : vector<2x128xf32>
    %112 = arith.divf %110, %111 : vector<2x128xf32>
    %113 = vector.extract_strided_slice %106 {offsets = [0, 128], sizes = [2, 128], strides = [1, 1]} : vector<2x512xf32> to vector<2x128xf32>
    %114 = arith.negf %113 : vector<2x128xf32>
    %115 = math.exp %114 : vector<2x128xf32>
    %cst_38 = arith.constant 1.000000e+00 : f32
    %116 = vector.broadcast %cst_38 : f32 to vector<2x128xf32>
    %117 = arith.addf %116, %115 : vector<2x128xf32>
    %118 = arith.divf %116, %117 : vector<2x128xf32>
    %119 = vector.extract_strided_slice %106 {offsets = [0, 256], sizes = [2, 128], strides = [1, 1]} : vector<2x512xf32> to vector<2x128xf32>
    %120 = math.tanh %119 : vector<2x128xf32>
    %121 = vector.extract_strided_slice %106 {offsets = [0, 384], sizes = [2, 128], strides = [1, 1]} : vector<2x512xf32> to vector<2x128xf32>
    %122 = arith.negf %121 : vector<2x128xf32>
    %123 = math.exp %122 : vector<2x128xf32>
    %cst_39 = arith.constant 1.000000e+00 : f32
    %124 = vector.broadcast %cst_39 : f32 to vector<2x128xf32>
    %125 = arith.addf %124, %123 : vector<2x128xf32>
    %126 = arith.divf %124, %125 : vector<2x128xf32>
    %127 = arith.mulf %118, %68 : vector<2x128xf32>
    %128 = arith.mulf %112, %120 : vector<2x128xf32>
    %129 = arith.addf %127, %128 : vector<2x128xf32>
    %130 = math.tanh %129 : vector<2x128xf32>
    %131 = arith.mulf %126, %130 : vector<2x128xf32>
    %c2 = arith.constant 2 : index
    %c0_40 = arith.constant 0 : index
    %132 = vector.load %arg12[%c2, %c0_40] : memref<16x128xf32, #tpu.memory_space<vmem>>, vector<2x128xf32>
    tpu.vector_store %arg12[%c2, %c0_40], %131 {strides = array<i32>} : memref<16x128xf32, #tpu.memory_space<vmem>>, vector<2x128xf32>,
    %133 = vector.extract_strided_slice %6 {offsets = [4, 0], sizes = [2, 512], strides = [1, 1]} : vector<16x512xf32> to vector<2x512xf32>
    %c0_41 = arith.constant 0 : index
    %c0_42 = arith.constant 0 : index
    %134 = vector.load %arg3[%c0_41, %c0_42] : memref<128x512xf32, #tpu.memory_space<vmem>>, vector<128x512xf32>
    %cst_43 = arith.constant dense<0.000000e+00> : vector<2x512xf32>
    %135 = tpu.matmul %100, %134, %cst_43 {dimension_numbers = #tpu.dot_dimension_numbers<[1], [0], [0], [1], [0, 0, 1, 1], [], []>} : vector<2x128xf32>, vector<128x512xf32>, vector<2x512xf32> -> vector<2x512xf32>
    %136 = arith.addf %133, %135 : vector<2x512xf32>
    %137 = vector.extract_strided_slice %136 {offsets = [0, 0], sizes = [2, 128], strides = [1, 1]} : vector<2x512xf32> to vector<2x128xf32>
    %138 = arith.negf %137 : vector<2x128xf32>
    %139 = math.exp %138 : vector<2x128xf32>
    %cst_44 = arith.constant 1.000000e+00 : f32
    %140 = vector.broadcast %cst_44 : f32 to vector<2x128xf32>
    %141 = arith.addf %140, %139 : vector<2x128xf32>
    %142 = arith.divf %140, %141 : vector<2x128xf32>
    %143 = vector.extract_strided_slice %136 {offsets = [0, 128], sizes = [2, 128], strides = [1, 1]} : vector<2x512xf32> to vector<2x128xf32>
    %144 = arith.negf %143 : vector<2x128xf32>
    %145 = math.exp %144 : vector<2x128xf32>
    %cst_45 = arith.constant 1.000000e+00 : f32
    %146 = vector.broadcast %cst_45 : f32 to vector<2x128xf32>
    %147 = arith.addf %146, %145 : vector<2x128xf32>
    %148 = arith.divf %146, %147 : vector<2x128xf32>
    %149 = vector.extract_strided_slice %136 {offsets = [0, 256], sizes = [2, 128], strides = [1, 1]} : vector<2x512xf32> to vector<2x128xf32>
    %150 = math.tanh %149 : vector<2x128xf32>
    %151 = vector.extract_strided_slice %136 {offsets = [0, 384], sizes = [2, 128], strides = [1, 1]} : vector<2x512xf32> to vector<2x128xf32>
    %152 = arith.negf %151 : vector<2x128xf32>
    %153 = math.exp %152 : vector<2x128xf32>
    %cst_46 = arith.constant 1.000000e+00 : f32
    %154 = vector.broadcast %cst_46 : f32 to vector<2x128xf32>
    %155 = arith.addf %154, %153 : vector<2x128xf32>
    %156 = arith.divf %154, %155 : vector<2x128xf32>
    %157 = arith.mulf %148, %98 : vector<2x128xf32>
    %158 = arith.mulf %142, %150 : vector<2x128xf32>
    %159 = arith.addf %157, %158 : vector<2x128xf32>
    %160 = math.tanh %159 : vector<2x128xf32>
    %161 = arith.mulf %156, %160 : vector<2x128xf32>
    %c0_47 = arith.constant 0 : index
    %c0_48 = arith.constant 0 : index
    %162 = vector.load %arg4[%c0_47, %c0_48] : memref<128x512xf32, #tpu.memory_space<vmem>>, vector<128x512xf32>
    %cst_49 = arith.constant dense<0.000000e+00> : vector<2x512xf32>
    %163 = tpu.matmul %161, %162, %cst_49 {dimension_numbers = #tpu.dot_dimension_numbers<[1], [0], [0], [1], [0, 0, 1, 1], [], []>} : vector<2x128xf32>, vector<128x512xf32>, vector<2x512xf32> -> vector<2x512xf32>
    %c0_50 = arith.constant 0 : index
    %c0_51 = arith.constant 0 : index
    %164 = vector.load %arg5[%c0_50, %c0_51] : memref<128x512xf32, #tpu.memory_space<vmem>>, vector<128x512xf32>
    %cst_52 = arith.constant dense<0.000000e+00> : vector<2x512xf32>
    %165 = tpu.matmul %131, %164, %cst_52 {dimension_numbers = #tpu.dot_dimension_numbers<[1], [0], [0], [1], [0, 0, 1, 1], [], []>} : vector<2x128xf32>, vector<128x512xf32>, vector<2x512xf32> -> vector<2x512xf32>
    %166 = arith.addf %163, %165 : vector<2x512xf32>
    %167 = arith.addf %166, %9 : vector<2x512xf32>
    %168 = vector.extract_strided_slice %167 {offsets = [0, 0], sizes = [2, 128], strides = [1, 1]} : vector<2x512xf32> to vector<2x128xf32>
    %169 = arith.negf %168 : vector<2x128xf32>
    %170 = math.exp %169 : vector<2x128xf32>
    %cst_53 = arith.constant 1.000000e+00 : f32
    %171 = vector.broadcast %cst_53 : f32 to vector<2x128xf32>
    %172 = arith.addf %171, %170 : vector<2x128xf32>
    %173 = arith.divf %171, %172 : vector<2x128xf32>
    %174 = vector.extract_strided_slice %167 {offsets = [0, 128], sizes = [2, 128], strides = [1, 1]} : vector<2x512xf32> to vector<2x128xf32>
    %175 = arith.negf %174 : vector<2x128xf32>
    %176 = math.exp %175 : vector<2x128xf32>
    %cst_54 = arith.constant 1.000000e+00 : f32
    %177 = vector.broadcast %cst_54 : f32 to vector<2x128xf32>
    %178 = arith.addf %177, %176 : vector<2x128xf32>
    %179 = arith.divf %177, %178 : vector<2x128xf32>
    %180 = vector.extract_strided_slice %167 {offsets = [0, 256], sizes = [2, 128], strides = [1, 1]} : vector<2x512xf32> to vector<2x128xf32>
    %181 = math.tanh %180 : vector<2x128xf32>
    %182 = vector.extract_strided_slice %167 {offsets = [0, 384], sizes = [2, 128], strides = [1, 1]} : vector<2x512xf32> to vector<2x128xf32>
    %183 = arith.negf %182 : vector<2x128xf32>
    %184 = math.exp %183 : vector<2x128xf32>
    %cst_55 = arith.constant 1.000000e+00 : f32
    %185 = vector.broadcast %cst_55 : f32 to vector<2x128xf32>
    %186 = arith.addf %185, %184 : vector<2x128xf32>
    %187 = arith.divf %185, %186 : vector<2x128xf32>
    %188 = arith.mulf %179, %129 : vector<2x128xf32>
    %189 = arith.mulf %173, %181 : vector<2x128xf32>
    %190 = arith.addf %188, %189 : vector<2x128xf32>
    %191 = math.tanh %190 : vector<2x128xf32>
    %192 = arith.mulf %187, %191 : vector<2x128xf32>
    %c4 = arith.constant 4 : index
    %c0_56 = arith.constant 0 : index
    %193 = vector.load %arg12[%c4, %c0_56] : memref<16x128xf32, #tpu.memory_space<vmem>>, vector<2x128xf32>
    tpu.vector_store %arg12[%c4, %c0_56], %192 {strides = array<i32>} : memref<16x128xf32, #tpu.memory_space<vmem>>, vector<2x128xf32>,
    %194 = vector.extract_strided_slice %6 {offsets = [6, 0], sizes = [2, 512], strides = [1, 1]} : vector<16x512xf32> to vector<2x512xf32>
    %c0_57 = arith.constant 0 : index
    %c0_58 = arith.constant 0 : index
    %195 = vector.load %arg3[%c0_57, %c0_58] : memref<128x512xf32, #tpu.memory_space<vmem>>, vector<128x512xf32>
    %cst_59 = arith.constant dense<0.000000e+00> : vector<2x512xf32>
    %196 = tpu.matmul %161, %195, %cst_59 {dimension_numbers = #tpu.dot_dimension_numbers<[1], [0], [0], [1], [0, 0, 1, 1], [], []>} : vector<2x128xf32>, vector<128x512xf32>, vector<2x512xf32> -> vector<2x512xf32>
    %197 = arith.addf %194, %196 : vector<2x512xf32>
    %198 = vector.extract_strided_slice %197 {offsets = [0, 0], sizes = [2, 128], strides = [1, 1]} : vector<2x512xf32> to vector<2x128xf32>
    %199 = arith.negf %198 : vector<2x128xf32>
    %200 = math.exp %199 : vector<2x128xf32>
    %cst_60 = arith.constant 1.000000e+00 : f32
    %201 = vector.broadcast %cst_60 : f32 to vector<2x128xf32>
    %202 = arith.addf %201, %200 : vector<2x128xf32>
    %203 = arith.divf %201, %202 : vector<2x128xf32>
    %204 = vector.extract_strided_slice %197 {offsets = [0, 128], sizes = [2, 128], strides = [1, 1]} : vector<2x512xf32> to vector<2x128xf32>
    %205 = arith.negf %204 : vector<2x128xf32>
    %206 = math.exp %205 : vector<2x128xf32>
    %cst_61 = arith.constant 1.000000e+00 : f32
    %207 = vector.broadcast %cst_61 : f32 to vector<2x128xf32>
    %208 = arith.addf %207, %206 : vector<2x128xf32>
    %209 = arith.divf %207, %208 : vector<2x128xf32>
    %210 = vector.extract_strided_slice %197 {offsets = [0, 256], sizes = [2, 128], strides = [1, 1]} : vector<2x512xf32> to vector<2x128xf32>
    %211 = math.tanh %210 : vector<2x128xf32>
    %212 = vector.extract_strided_slice %197 {offsets = [0, 384], sizes = [2, 128], strides = [1, 1]} : vector<2x512xf32> to vector<2x128xf32>
    %213 = arith.negf %212 : vector<2x128xf32>
    %214 = math.exp %213 : vector<2x128xf32>
    %cst_62 = arith.constant 1.000000e+00 : f32
    %215 = vector.broadcast %cst_62 : f32 to vector<2x128xf32>
    %216 = arith.addf %215, %214 : vector<2x128xf32>
    %217 = arith.divf %215, %216 : vector<2x128xf32>
    %218 = arith.mulf %209, %159 : vector<2x128xf32>
    %219 = arith.mulf %203, %211 : vector<2x128xf32>
    %220 = arith.addf %218, %219 : vector<2x128xf32>
    %221 = math.tanh %220 : vector<2x128xf32>
    %222 = arith.mulf %217, %221 : vector<2x128xf32>
    %c0_63 = arith.constant 0 : index
    %c0_64 = arith.constant 0 : index
    %223 = vector.load %arg4[%c0_63, %c0_64] : memref<128x512xf32, #tpu.memory_space<vmem>>, vector<128x512xf32>
    %cst_65 = arith.constant dense<0.000000e+00> : vector<2x512xf32>
    %224 = tpu.matmul %222, %223, %cst_65 {dimension_numbers = #tpu.dot_dimension_numbers<[1], [0], [0], [1], [0, 0, 1, 1], [], []>} : vector<2x128xf32>, vector<128x512xf32>, vector<2x512xf32> -> vector<2x512xf32>
    %c0_66 = arith.constant 0 : index
    %c0_67 = arith.constant 0 : index
    %225 = vector.load %arg5[%c0_66, %c0_67] : memref<128x512xf32, #tpu.memory_space<vmem>>, vector<128x512xf32>
    %cst_68 = arith.constant dense<0.000000e+00> : vector<2x512xf32>
    %226 = tpu.matmul %192, %225, %cst_68 {dimension_numbers = #tpu.dot_dimension_numbers<[1], [0], [0], [1], [0, 0, 1, 1], [], []>} : vector<2x128xf32>, vector<128x512xf32>, vector<2x512xf32> -> vector<2x512xf32>
    %227 = arith.addf %224, %226 : vector<2x512xf32>
    %228 = arith.addf %227, %9 : vector<2x512xf32>
    %229 = vector.extract_strided_slice %228 {offsets = [0, 0], sizes = [2, 128], strides = [1, 1]} : vector<2x512xf32> to vector<2x128xf32>
    %230 = arith.negf %229 : vector<2x128xf32>
    %231 = math.exp %230 : vector<2x128xf32>
    %cst_69 = arith.constant 1.000000e+00 : f32
    %232 = vector.broadcast %cst_69 : f32 to vector<2x128xf32>
    %233 = arith.addf %232, %231 : vector<2x128xf32>
    %234 = arith.divf %232, %233 : vector<2x128xf32>
    %235 = vector.extract_strided_slice %228 {offsets = [0, 128], sizes = [2, 128], strides = [1, 1]} : vector<2x512xf32> to vector<2x128xf32>
    %236 = arith.negf %235 : vector<2x128xf32>
    %237 = math.exp %236 : vector<2x128xf32>
    %cst_70 = arith.constant 1.000000e+00 : f32
    %238 = vector.broadcast %cst_70 : f32 to vector<2x128xf32>
    %239 = arith.addf %238, %237 : vector<2x128xf32>
    %240 = arith.divf %238, %239 : vector<2x128xf32>
    %241 = vector.extract_strided_slice %228 {offsets = [0, 256], sizes = [2, 128], strides = [1, 1]} : vector<2x512xf32> to vector<2x128xf32>
    %242 = math.tanh %241 : vector<2x128xf32>
    %243 = vector.extract_strided_slice %228 {offsets = [0, 384], sizes = [2, 128], strides = [1, 1]} : vector<2x512xf32> to vector<2x128xf32>
    %244 = arith.negf %243 : vector<2x128xf32>
    %245 = math.exp %244 : vector<2x128xf32>
    %cst_71 = arith.constant 1.000000e+00 : f32
    %246 = vector.broadcast %cst_71 : f32 to vector<2x128xf32>
    %247 = arith.addf %246, %245 : vector<2x128xf32>
    %248 = arith.divf %246, %247 : vector<2x128xf32>
    %249 = arith.mulf %240, %190 : vector<2x128xf32>
    %250 = arith.mulf %234, %242 : vector<2x128xf32>
    %251 = arith.addf %249, %250 : vector<2x128xf32>
    %252 = math.tanh %251 : vector<2x128xf32>
    %253 = arith.mulf %248, %252 : vector<2x128xf32>
    %c6 = arith.constant 6 : index
    %c0_72 = arith.constant 0 : index
    %254 = vector.load %arg12[%c6, %c0_72] : memref<16x128xf32, #tpu.memory_space<vmem>>, vector<2x128xf32>
    tpu.vector_store %arg12[%c6, %c0_72], %253 {strides = array<i32>} : memref<16x128xf32, #tpu.memory_space<vmem>>, vector<2x128xf32>,
    %255 = vector.extract_strided_slice %6 {offsets = [8, 0], sizes = [2, 512], strides = [1, 1]} : vector<16x512xf32> to vector<2x512xf32>
    %c0_73 = arith.constant 0 : index
    %c0_74 = arith.constant 0 : index
    %256 = vector.load %arg3[%c0_73, %c0_74] : memref<128x512xf32, #tpu.memory_space<vmem>>, vector<128x512xf32>
    %cst_75 = arith.constant dense<0.000000e+00> : vector<2x512xf32>
    %257 = tpu.matmul %222, %256, %cst_75 {dimension_numbers = #tpu.dot_dimension_numbers<[1], [0], [0], [1], [0, 0, 1, 1], [], []>} : vector<2x128xf32>, vector<128x512xf32>, vector<2x512xf32> -> vector<2x512xf32>
    %258 = arith.addf %255, %257 : vector<2x512xf32>
    %259 = vector.extract_strided_slice %258 {offsets = [0, 0], sizes = [2, 128], strides = [1, 1]} : vector<2x512xf32> to vector<2x128xf32>
    %260 = arith.negf %259 : vector<2x128xf32>
    %261 = math.exp %260 : vector<2x128xf32>
    %cst_76 = arith.constant 1.000000e+00 : f32
    %262 = vector.broadcast %cst_76 : f32 to vector<2x128xf32>
    %263 = arith.addf %262, %261 : vector<2x128xf32>
    %264 = arith.divf %262, %263 : vector<2x128xf32>
    %265 = vector.extract_strided_slice %258 {offsets = [0, 128], sizes = [2, 128], strides = [1, 1]} : vector<2x512xf32> to vector<2x128xf32>
    %266 = arith.negf %265 : vector<2x128xf32>
    %267 = math.exp %266 : vector<2x128xf32>
    %cst_77 = arith.constant 1.000000e+00 : f32
    %268 = vector.broadcast %cst_77 : f32 to vector<2x128xf32>
    %269 = arith.addf %268, %267 : vector<2x128xf32>
    %270 = arith.divf %268, %269 : vector<2x128xf32>
    %271 = vector.extract_strided_slice %258 {offsets = [0, 256], sizes = [2, 128], strides = [1, 1]} : vector<2x512xf32> to vector<2x128xf32>
    %272 = math.tanh %271 : vector<2x128xf32>
    %273 = vector.extract_strided_slice %258 {offsets = [0, 384], sizes = [2, 128], strides = [1, 1]} : vector<2x512xf32> to vector<2x128xf32>
    %274 = arith.negf %273 : vector<2x128xf32>
    %275 = math.exp %274 : vector<2x128xf32>
    %cst_78 = arith.constant 1.000000e+00 : f32
    %276 = vector.broadcast %cst_78 : f32 to vector<2x128xf32>
    %277 = arith.addf %276, %275 : vector<2x128xf32>
    %278 = arith.divf %276, %277 : vector<2x128xf32>
    %279 = arith.mulf %270, %220 : vector<2x128xf32>
    %280 = arith.mulf %264, %272 : vector<2x128xf32>
    %281 = arith.addf %279, %280 : vector<2x128xf32>
    %282 = math.tanh %281 : vector<2x128xf32>
    %283 = arith.mulf %278, %282 : vector<2x128xf32>
    %c0_79 = arith.constant 0 : index
    %c0_80 = arith.constant 0 : index
    %284 = vector.load %arg4[%c0_79, %c0_80] : memref<128x512xf32, #tpu.memory_space<vmem>>, vector<128x512xf32>
    %cst_81 = arith.constant dense<0.000000e+00> : vector<2x512xf32>
    %285 = tpu.matmul %283, %284, %cst_81 {dimension_numbers = #tpu.dot_dimension_numbers<[1], [0], [0], [1], [0, 0, 1, 1], [], []>} : vector<2x128xf32>, vector<128x512xf32>, vector<2x512xf32> -> vector<2x512xf32>
    %c0_82 = arith.constant 0 : index
    %c0_83 = arith.constant 0 : index
    %286 = vector.load %arg5[%c0_82, %c0_83] : memref<128x512xf32, #tpu.memory_space<vmem>>, vector<128x512xf32>
    %cst_84 = arith.constant dense<0.000000e+00> : vector<2x512xf32>
    %287 = tpu.matmul %253, %286, %cst_84 {dimension_numbers = #tpu.dot_dimension_numbers<[1], [0], [0], [1], [0, 0, 1, 1], [], []>} : vector<2x128xf32>, vector<128x512xf32>, vector<2x512xf32> -> vector<2x512xf32>
    %288 = arith.addf %285, %287 : vector<2x512xf32>
    %289 = arith.addf %288, %9 : vector<2x512xf32>
    %290 = vector.extract_strided_slice %289 {offsets = [0, 0], sizes = [2, 128], strides = [1, 1]} : vector<2x512xf32> to vector<2x128xf32>
    %291 = arith.negf %290 : vector<2x128xf32>
    %292 = math.exp %291 : vector<2x128xf32>
    %cst_85 = arith.constant 1.000000e+00 : f32
    %293 = vector.broadcast %cst_85 : f32 to vector<2x128xf32>
    %294 = arith.addf %293, %292 : vector<2x128xf32>
    %295 = arith.divf %293, %294 : vector<2x128xf32>
    %296 = vector.extract_strided_slice %289 {offsets = [0, 128], sizes = [2, 128], strides = [1, 1]} : vector<2x512xf32> to vector<2x128xf32>
    %297 = arith.negf %296 : vector<2x128xf32>
    %298 = math.exp %297 : vector<2x128xf32>
    %cst_86 = arith.constant 1.000000e+00 : f32
    %299 = vector.broadcast %cst_86 : f32 to vector<2x128xf32>
    %300 = arith.addf %299, %298 : vector<2x128xf32>
    %301 = arith.divf %299, %300 : vector<2x128xf32>
    %302 = vector.extract_strided_slice %289 {offsets = [0, 256], sizes = [2, 128], strides = [1, 1]} : vector<2x512xf32> to vector<2x128xf32>
    %303 = math.tanh %302 : vector<2x128xf32>
    %304 = vector.extract_strided_slice %289 {offsets = [0, 384], sizes = [2, 128], strides = [1, 1]} : vector<2x512xf32> to vector<2x128xf32>
    %305 = arith.negf %304 : vector<2x128xf32>
    %306 = math.exp %305 : vector<2x128xf32>
    %cst_87 = arith.constant 1.000000e+00 : f32
    %307 = vector.broadcast %cst_87 : f32 to vector<2x128xf32>
    %308 = arith.addf %307, %306 : vector<2x128xf32>
    %309 = arith.divf %307, %308 : vector<2x128xf32>
    %310 = arith.mulf %301, %251 : vector<2x128xf32>
    %311 = arith.mulf %295, %303 : vector<2x128xf32>
    %312 = arith.addf %310, %311 : vector<2x128xf32>
    %313 = math.tanh %312 : vector<2x128xf32>
    %314 = arith.mulf %309, %313 : vector<2x128xf32>
    %c8 = arith.constant 8 : index
    %c0_88 = arith.constant 0 : index
    %315 = vector.load %arg12[%c8, %c0_88] : memref<16x128xf32, #tpu.memory_space<vmem>>, vector<2x128xf32>
    tpu.vector_store %arg12[%c8, %c0_88], %314 {strides = array<i32>} : memref<16x128xf32, #tpu.memory_space<vmem>>, vector<2x128xf32>,
    %316 = vector.extract_strided_slice %6 {offsets = [10, 0], sizes = [2, 512], strides = [1, 1]} : vector<16x512xf32> to vector<2x512xf32>
    %c0_89 = arith.constant 0 : index
    %c0_90 = arith.constant 0 : index
    %317 = vector.load %arg3[%c0_89, %c0_90] : memref<128x512xf32, #tpu.memory_space<vmem>>, vector<128x512xf32>
    %cst_91 = arith.constant dense<0.000000e+00> : vector<2x512xf32>
    %318 = tpu.matmul %283, %317, %cst_91 {dimension_numbers = #tpu.dot_dimension_numbers<[1], [0], [0], [1], [0, 0, 1, 1], [], []>} : vector<2x128xf32>, vector<128x512xf32>, vector<2x512xf32> -> vector<2x512xf32>
    %319 = arith.addf %316, %318 : vector<2x512xf32>
    %320 = vector.extract_strided_slice %319 {offsets = [0, 0], sizes = [2, 128], strides = [1, 1]} : vector<2x512xf32> to vector<2x128xf32>
    %321 = arith.negf %320 : vector<2x128xf32>
    %322 = math.exp %321 : vector<2x128xf32>
    %cst_92 = arith.constant 1.000000e+00 : f32
    %323 = vector.broadcast %cst_92 : f32 to vector<2x128xf32>
    %324 = arith.addf %323, %322 : vector<2x128xf32>
    %325 = arith.divf %323, %324 : vector<2x128xf32>
    %326 = vector.extract_strided_slice %319 {offsets = [0, 128], sizes = [2, 128], strides = [1, 1]} : vector<2x512xf32> to vector<2x128xf32>
    %327 = arith.negf %326 : vector<2x128xf32>
    %328 = math.exp %327 : vector<2x128xf32>
    %cst_93 = arith.constant 1.000000e+00 : f32
    %329 = vector.broadcast %cst_93 : f32 to vector<2x128xf32>
    %330 = arith.addf %329, %328 : vector<2x128xf32>
    %331 = arith.divf %329, %330 : vector<2x128xf32>
    %332 = vector.extract_strided_slice %319 {offsets = [0, 256], sizes = [2, 128], strides = [1, 1]} : vector<2x512xf32> to vector<2x128xf32>
    %333 = math.tanh %332 : vector<2x128xf32>
    %334 = vector.extract_strided_slice %319 {offsets = [0, 384], sizes = [2, 128], strides = [1, 1]} : vector<2x512xf32> to vector<2x128xf32>
    %335 = arith.negf %334 : vector<2x128xf32>
    %336 = math.exp %335 : vector<2x128xf32>
    %cst_94 = arith.constant 1.000000e+00 : f32
    %337 = vector.broadcast %cst_94 : f32 to vector<2x128xf32>
    %338 = arith.addf %337, %336 : vector<2x128xf32>
    %339 = arith.divf %337, %338 : vector<2x128xf32>
    %340 = arith.mulf %331, %281 : vector<2x128xf32>
    %341 = arith.mulf %325, %333 : vector<2x128xf32>
    %342 = arith.addf %340, %341 : vector<2x128xf32>
    %343 = math.tanh %342 : vector<2x128xf32>
    %344 = arith.mulf %339, %343 : vector<2x128xf32>
    %c0_95 = arith.constant 0 : index
    %c0_96 = arith.constant 0 : index
    %345 = vector.load %arg4[%c0_95, %c0_96] : memref<128x512xf32, #tpu.memory_space<vmem>>, vector<128x512xf32>
    %cst_97 = arith.constant dense<0.000000e+00> : vector<2x512xf32>
    %346 = tpu.matmul %344, %345, %cst_97 {dimension_numbers = #tpu.dot_dimension_numbers<[1], [0], [0], [1], [0, 0, 1, 1], [], []>} : vector<2x128xf32>, vector<128x512xf32>, vector<2x512xf32> -> vector<2x512xf32>
    %c0_98 = arith.constant 0 : index
    %c0_99 = arith.constant 0 : index
    %347 = vector.load %arg5[%c0_98, %c0_99] : memref<128x512xf32, #tpu.memory_space<vmem>>, vector<128x512xf32>
    %cst_100 = arith.constant dense<0.000000e+00> : vector<2x512xf32>
    %348 = tpu.matmul %314, %347, %cst_100 {dimension_numbers = #tpu.dot_dimension_numbers<[1], [0], [0], [1], [0, 0, 1, 1], [], []>} : vector<2x128xf32>, vector<128x512xf32>, vector<2x512xf32> -> vector<2x512xf32>
    %349 = arith.addf %346, %348 : vector<2x512xf32>
    %350 = arith.addf %349, %9 : vector<2x512xf32>
    %351 = vector.extract_strided_slice %350 {offsets = [0, 0], sizes = [2, 128], strides = [1, 1]} : vector<2x512xf32> to vector<2x128xf32>
    %352 = arith.negf %351 : vector<2x128xf32>
    %353 = math.exp %352 : vector<2x128xf32>
    %cst_101 = arith.constant 1.000000e+00 : f32
    %354 = vector.broadcast %cst_101 : f32 to vector<2x128xf32>
    %355 = arith.addf %354, %353 : vector<2x128xf32>
    %356 = arith.divf %354, %355 : vector<2x128xf32>
    %357 = vector.extract_strided_slice %350 {offsets = [0, 128], sizes = [2, 128], strides = [1, 1]} : vector<2x512xf32> to vector<2x128xf32>
    %358 = arith.negf %357 : vector<2x128xf32>
    %359 = math.exp %358 : vector<2x128xf32>
    %cst_102 = arith.constant 1.000000e+00 : f32
    %360 = vector.broadcast %cst_102 : f32 to vector<2x128xf32>
    %361 = arith.addf %360, %359 : vector<2x128xf32>
    %362 = arith.divf %360, %361 : vector<2x128xf32>
    %363 = vector.extract_strided_slice %350 {offsets = [0, 256], sizes = [2, 128], strides = [1, 1]} : vector<2x512xf32> to vector<2x128xf32>
    %364 = math.tanh %363 : vector<2x128xf32>
    %365 = vector.extract_strided_slice %350 {offsets = [0, 384], sizes = [2, 128], strides = [1, 1]} : vector<2x512xf32> to vector<2x128xf32>
    %366 = arith.negf %365 : vector<2x128xf32>
    %367 = math.exp %366 : vector<2x128xf32>
    %cst_103 = arith.constant 1.000000e+00 : f32
    %368 = vector.broadcast %cst_103 : f32 to vector<2x128xf32>
    %369 = arith.addf %368, %367 : vector<2x128xf32>
    %370 = arith.divf %368, %369 : vector<2x128xf32>
    %371 = arith.mulf %362, %312 : vector<2x128xf32>
    %372 = arith.mulf %356, %364 : vector<2x128xf32>
    %373 = arith.addf %371, %372 : vector<2x128xf32>
    %374 = math.tanh %373 : vector<2x128xf32>
    %375 = arith.mulf %370, %374 : vector<2x128xf32>
    %c10 = arith.constant 10 : index
    %c0_104 = arith.constant 0 : index
    %376 = vector.load %arg12[%c10, %c0_104] : memref<16x128xf32, #tpu.memory_space<vmem>>, vector<2x128xf32>
    tpu.vector_store %arg12[%c10, %c0_104], %375 {strides = array<i32>} : memref<16x128xf32, #tpu.memory_space<vmem>>, vector<2x128xf32>,
    %377 = vector.extract_strided_slice %6 {offsets = [12, 0], sizes = [2, 512], strides = [1, 1]} : vector<16x512xf32> to vector<2x512xf32>
    %c0_105 = arith.constant 0 : index
    %c0_106 = arith.constant 0 : index
    %378 = vector.load %arg3[%c0_105, %c0_106] : memref<128x512xf32, #tpu.memory_space<vmem>>, vector<128x512xf32>
    %cst_107 = arith.constant dense<0.000000e+00> : vector<2x512xf32>
    %379 = tpu.matmul %344, %378, %cst_107 {dimension_numbers = #tpu.dot_dimension_numbers<[1], [0], [0], [1], [0, 0, 1, 1], [], []>} : vector<2x128xf32>, vector<128x512xf32>, vector<2x512xf32> -> vector<2x512xf32>
    %380 = arith.addf %377, %379 : vector<2x512xf32>
    %381 = vector.extract_strided_slice %380 {offsets = [0, 0], sizes = [2, 128], strides = [1, 1]} : vector<2x512xf32> to vector<2x128xf32>
    %382 = arith.negf %381 : vector<2x128xf32>
    %383 = math.exp %382 : vector<2x128xf32>
    %cst_108 = arith.constant 1.000000e+00 : f32
    %384 = vector.broadcast %cst_108 : f32 to vector<2x128xf32>
    %385 = arith.addf %384, %383 : vector<2x128xf32>
    %386 = arith.divf %384, %385 : vector<2x128xf32>
    %387 = vector.extract_strided_slice %380 {offsets = [0, 128], sizes = [2, 128], strides = [1, 1]} : vector<2x512xf32> to vector<2x128xf32>
    %388 = arith.negf %387 : vector<2x128xf32>
    %389 = math.exp %388 : vector<2x128xf32>
    %cst_109 = arith.constant 1.000000e+00 : f32
    %390 = vector.broadcast %cst_109 : f32 to vector<2x128xf32>
    %391 = arith.addf %390, %389 : vector<2x128xf32>
    %392 = arith.divf %390, %391 : vector<2x128xf32>
    %393 = vector.extract_strided_slice %380 {offsets = [0, 256], sizes = [2, 128], strides = [1, 1]} : vector<2x512xf32> to vector<2x128xf32>
    %394 = math.tanh %393 : vector<2x128xf32>
    %395 = vector.extract_strided_slice %380 {offsets = [0, 384], sizes = [2, 128], strides = [1, 1]} : vector<2x512xf32> to vector<2x128xf32>
    %396 = arith.negf %395 : vector<2x128xf32>
    %397 = math.exp %396 : vector<2x128xf32>
    %cst_110 = arith.constant 1.000000e+00 : f32
    %398 = vector.broadcast %cst_110 : f32 to vector<2x128xf32>
    %399 = arith.addf %398, %397 : vector<2x128xf32>
    %400 = arith.divf %398, %399 : vector<2x128xf32>
    %401 = arith.mulf %392, %342 : vector<2x128xf32>
    %402 = arith.mulf %386, %394 : vector<2x128xf32>
    %403 = arith.addf %401, %402 : vector<2x128xf32>
    %404 = math.tanh %403 : vector<2x128xf32>
    %405 = arith.mulf %400, %404 : vector<2x128xf32>
    %c0_111 = arith.constant 0 : index
    %c0_112 = arith.constant 0 : index
    %406 = vector.load %arg4[%c0_111, %c0_112] : memref<128x512xf32, #tpu.memory_space<vmem>>, vector<128x512xf32>
    %cst_113 = arith.constant dense<0.000000e+00> : vector<2x512xf32>
    %407 = tpu.matmul %405, %406, %cst_113 {dimension_numbers = #tpu.dot_dimension_numbers<[1], [0], [0], [1], [0, 0, 1, 1], [], []>} : vector<2x128xf32>, vector<128x512xf32>, vector<2x512xf32> -> vector<2x512xf32>
    %c0_114 = arith.constant 0 : index
    %c0_115 = arith.constant 0 : index
    %408 = vector.load %arg5[%c0_114, %c0_115] : memref<128x512xf32, #tpu.memory_space<vmem>>, vector<128x512xf32>
    %cst_116 = arith.constant dense<0.000000e+00> : vector<2x512xf32>
    %409 = tpu.matmul %375, %408, %cst_116 {dimension_numbers = #tpu.dot_dimension_numbers<[1], [0], [0], [1], [0, 0, 1, 1], [], []>} : vector<2x128xf32>, vector<128x512xf32>, vector<2x512xf32> -> vector<2x512xf32>
    %410 = arith.addf %407, %409 : vector<2x512xf32>
    %411 = arith.addf %410, %9 : vector<2x512xf32>
    %412 = vector.extract_strided_slice %411 {offsets = [0, 0], sizes = [2, 128], strides = [1, 1]} : vector<2x512xf32> to vector<2x128xf32>
    %413 = arith.negf %412 : vector<2x128xf32>
    %414 = math.exp %413 : vector<2x128xf32>
    %cst_117 = arith.constant 1.000000e+00 : f32
    %415 = vector.broadcast %cst_117 : f32 to vector<2x128xf32>
    %416 = arith.addf %415, %414 : vector<2x128xf32>
    %417 = arith.divf %415, %416 : vector<2x128xf32>
    %418 = vector.extract_strided_slice %411 {offsets = [0, 128], sizes = [2, 128], strides = [1, 1]} : vector<2x512xf32> to vector<2x128xf32>
    %419 = arith.negf %418 : vector<2x128xf32>
    %420 = math.exp %419 : vector<2x128xf32>
    %cst_118 = arith.constant 1.000000e+00 : f32
    %421 = vector.broadcast %cst_118 : f32 to vector<2x128xf32>
    %422 = arith.addf %421, %420 : vector<2x128xf32>
    %423 = arith.divf %421, %422 : vector<2x128xf32>
    %424 = vector.extract_strided_slice %411 {offsets = [0, 256], sizes = [2, 128], strides = [1, 1]} : vector<2x512xf32> to vector<2x128xf32>
    %425 = math.tanh %424 : vector<2x128xf32>
    %426 = vector.extract_strided_slice %411 {offsets = [0, 384], sizes = [2, 128], strides = [1, 1]} : vector<2x512xf32> to vector<2x128xf32>
    %427 = arith.negf %426 : vector<2x128xf32>
    %428 = math.exp %427 : vector<2x128xf32>
    %cst_119 = arith.constant 1.000000e+00 : f32
    %429 = vector.broadcast %cst_119 : f32 to vector<2x128xf32>
    %430 = arith.addf %429, %428 : vector<2x128xf32>
    %431 = arith.divf %429, %430 : vector<2x128xf32>
    %432 = arith.mulf %423, %373 : vector<2x128xf32>
    %433 = arith.mulf %417, %425 : vector<2x128xf32>
    %434 = arith.addf %432, %433 : vector<2x128xf32>
    %435 = math.tanh %434 : vector<2x128xf32>
    %436 = arith.mulf %431, %435 : vector<2x128xf32>
    %c12 = arith.constant 12 : index
    %c0_120 = arith.constant 0 : index
    %437 = vector.load %arg12[%c12, %c0_120] : memref<16x128xf32, #tpu.memory_space<vmem>>, vector<2x128xf32>
    tpu.vector_store %arg12[%c12, %c0_120], %436 {strides = array<i32>} : memref<16x128xf32, #tpu.memory_space<vmem>>, vector<2x128xf32>,
    %438 = vector.extract_strided_slice %6 {offsets = [14, 0], sizes = [2, 512], strides = [1, 1]} : vector<16x512xf32> to vector<2x512xf32>
    %c0_121 = arith.constant 0 : index
    %c0_122 = arith.constant 0 : index
    %439 = vector.load %arg3[%c0_121, %c0_122] : memref<128x512xf32, #tpu.memory_space<vmem>>, vector<128x512xf32>
    %cst_123 = arith.constant dense<0.000000e+00> : vector<2x512xf32>
    %440 = tpu.matmul %405, %439, %cst_123 {dimension_numbers = #tpu.dot_dimension_numbers<[1], [0], [0], [1], [0, 0, 1, 1], [], []>} : vector<2x128xf32>, vector<128x512xf32>, vector<2x512xf32> -> vector<2x512xf32>
    %441 = arith.addf %438, %440 : vector<2x512xf32>
    %442 = vector.extract_strided_slice %441 {offsets = [0, 0], sizes = [2, 128], strides = [1, 1]} : vector<2x512xf32> to vector<2x128xf32>
    %443 = arith.negf %442 : vector<2x128xf32>
    %444 = math.exp %443 : vector<2x128xf32>
    %cst_124 = arith.constant 1.000000e+00 : f32
    %445 = vector.broadcast %cst_124 : f32 to vector<2x128xf32>
    %446 = arith.addf %445, %444 : vector<2x128xf32>
    %447 = arith.divf %445, %446 : vector<2x128xf32>
    %448 = vector.extract_strided_slice %441 {offsets = [0, 128], sizes = [2, 128], strides = [1, 1]} : vector<2x512xf32> to vector<2x128xf32>
    %449 = arith.negf %448 : vector<2x128xf32>
    %450 = math.exp %449 : vector<2x128xf32>
    %cst_125 = arith.constant 1.000000e+00 : f32
    %451 = vector.broadcast %cst_125 : f32 to vector<2x128xf32>
    %452 = arith.addf %451, %450 : vector<2x128xf32>
    %453 = arith.divf %451, %452 : vector<2x128xf32>
    %454 = vector.extract_strided_slice %441 {offsets = [0, 256], sizes = [2, 128], strides = [1, 1]} : vector<2x512xf32> to vector<2x128xf32>
    %455 = math.tanh %454 : vector<2x128xf32>
    %456 = vector.extract_strided_slice %441 {offsets = [0, 384], sizes = [2, 128], strides = [1, 1]} : vector<2x512xf32> to vector<2x128xf32>
    %457 = arith.negf %456 : vector<2x128xf32>
    %458 = math.exp %457 : vector<2x128xf32>
    %cst_126 = arith.constant 1.000000e+00 : f32
    %459 = vector.broadcast %cst_126 : f32 to vector<2x128xf32>
    %460 = arith.addf %459, %458 : vector<2x128xf32>
    %461 = arith.divf %459, %460 : vector<2x128xf32>
    %462 = arith.mulf %453, %403 : vector<2x128xf32>
    %463 = arith.mulf %447, %455 : vector<2x128xf32>
    %464 = arith.addf %462, %463 : vector<2x128xf32>
    %465 = math.tanh %464 : vector<2x128xf32>
    %466 = arith.mulf %461, %465 : vector<2x128xf32>
    %c0_127 = arith.constant 0 : index
    %c0_128 = arith.constant 0 : index
    %467 = vector.load %arg4[%c0_127, %c0_128] : memref<128x512xf32, #tpu.memory_space<vmem>>, vector<128x512xf32>
    %cst_129 = arith.constant dense<0.000000e+00> : vector<2x512xf32>
    %468 = tpu.matmul %466, %467, %cst_129 {dimension_numbers = #tpu.dot_dimension_numbers<[1], [0], [0], [1], [0, 0, 1, 1], [], []>} : vector<2x128xf32>, vector<128x512xf32>, vector<2x512xf32> -> vector<2x512xf32>
    %c0_130 = arith.constant 0 : index
    %c0_131 = arith.constant 0 : index
    %469 = vector.load %arg5[%c0_130, %c0_131] : memref<128x512xf32, #tpu.memory_space<vmem>>, vector<128x512xf32>
    %cst_132 = arith.constant dense<0.000000e+00> : vector<2x512xf32>
    %470 = tpu.matmul %436, %469, %cst_132 {dimension_numbers = #tpu.dot_dimension_numbers<[1], [0], [0], [1], [0, 0, 1, 1], [], []>} : vector<2x128xf32>, vector<128x512xf32>, vector<2x512xf32> -> vector<2x512xf32>
    %471 = arith.addf %468, %470 : vector<2x512xf32>
    %472 = arith.addf %471, %9 : vector<2x512xf32>
    %473 = vector.extract_strided_slice %472 {offsets = [0, 0], sizes = [2, 128], strides = [1, 1]} : vector<2x512xf32> to vector<2x128xf32>
    %474 = arith.negf %473 : vector<2x128xf32>
    %475 = math.exp %474 : vector<2x128xf32>
    %cst_133 = arith.constant 1.000000e+00 : f32
    %476 = vector.broadcast %cst_133 : f32 to vector<2x128xf32>
    %477 = arith.addf %476, %475 : vector<2x128xf32>
    %478 = arith.divf %476, %477 : vector<2x128xf32>
    %479 = vector.extract_strided_slice %472 {offsets = [0, 128], sizes = [2, 128], strides = [1, 1]} : vector<2x512xf32> to vector<2x128xf32>
    %480 = arith.negf %479 : vector<2x128xf32>
    %481 = math.exp %480 : vector<2x128xf32>
    %cst_134 = arith.constant 1.000000e+00 : f32
    %482 = vector.broadcast %cst_134 : f32 to vector<2x128xf32>
    %483 = arith.addf %482, %481 : vector<2x128xf32>
    %484 = arith.divf %482, %483 : vector<2x128xf32>
    %485 = vector.extract_strided_slice %472 {offsets = [0, 256], sizes = [2, 128], strides = [1, 1]} : vector<2x512xf32> to vector<2x128xf32>
    %486 = math.tanh %485 : vector<2x128xf32>
    %487 = vector.extract_strided_slice %472 {offsets = [0, 384], sizes = [2, 128], strides = [1, 1]} : vector<2x512xf32> to vector<2x128xf32>
    %488 = arith.negf %487 : vector<2x128xf32>
    %489 = math.exp %488 : vector<2x128xf32>
    %cst_135 = arith.constant 1.000000e+00 : f32
    %490 = vector.broadcast %cst_135 : f32 to vector<2x128xf32>
    %491 = arith.addf %490, %489 : vector<2x128xf32>
    %492 = arith.divf %490, %491 : vector<2x128xf32>
    %493 = arith.mulf %484, %434 : vector<2x128xf32>
    %494 = arith.mulf %478, %486 : vector<2x128xf32>
    %495 = arith.addf %493, %494 : vector<2x128xf32>
    %496 = math.tanh %495 : vector<2x128xf32>
    %497 = arith.mulf %492, %496 : vector<2x128xf32>
    %c14 = arith.constant 14 : index
    %c0_136 = arith.constant 0 : index
    %498 = vector.load %arg12[%c14, %c0_136] : memref<16x128xf32, #tpu.memory_space<vmem>>, vector<2x128xf32>
    tpu.vector_store %arg12[%c14, %c0_136], %497 {strides = array<i32>} : memref<16x128xf32, #tpu.memory_space<vmem>>, vector<2x128xf32>,
    %c0_137 = arith.constant 0 : index
    %c0_138 = arith.constant 0 : index
    %499 = vector.load %arg12[%c0_137, %c0_138] : memref<16x128xf32, #tpu.memory_space<vmem>>, vector<16x128xf32>
    %c0_139 = arith.constant 0 : index
    %c0_140 = arith.constant 0 : index
    %500 = vector.load %arg7[%c0_139, %c0_140] : memref<128x256xf32, #tpu.memory_space<vmem>>, vector<128x256xf32>
    %cst_141 = arith.constant dense<0.000000e+00> : vector<16x256xf32>
    %501 = tpu.matmul %499, %500, %cst_141 {dimension_numbers = #tpu.dot_dimension_numbers<[1], [0], [0], [1], [0, 0, 1, 1], [], []>} : vector<16x128xf32>, vector<128x256xf32>, vector<16x256xf32> -> vector<16x256xf32>
    %c0_142 = arith.constant 0 : index
    %c0_143 = arith.constant 0 : index
    %502 = vector.load %arg8[%c0_142, %c0_143] : memref<1x256xf32, #tpu.memory_space<vmem>>, vector<1x256xf32>
    %503 = vector.broadcast %502 : vector<1x256xf32> to vector<16x256xf32>
    %504 = arith.addf %501, %503 : vector<16x256xf32>
    %cst_144 = arith.constant dense<0xFF800000> : vector<16xf32>
    %505 = vector.multi_reduction <maximumf>, %504, %cst_144 [1] : vector<16x256xf32> to vector<16xf32>
    %506 = vector.shape_cast %505 : vector<16xf32> to vector<16x1xf32>
    %507 = vector.broadcast %506 : vector<16x1xf32> to vector<16x256xf32>
    %508 = arith.subf %504, %507 : vector<16x256xf32>
    %509 = math.exp %508 : vector<16x256xf32>
    %cst_145 = arith.constant dense<0.000000e+00> : vector<16xf32>
    %510 = vector.multi_reduction <add>, %509, %cst_145 [1] : vector<16x256xf32> to vector<16xf32>
    %511 = vector.shape_cast %510 : vector<16xf32> to vector<16x1xf32>
    %512 = tpu.reciprocal %511 {approx = true} : vector<16x1xf32> -> vector<16x1xf32>
    %513 = vector.broadcast %512 : vector<16x1xf32> to vector<16x256xf32>
    %514 = arith.mulf %509, %513 : vector<16x256xf32>
    %c0_146 = arith.constant 0 : index
    %c0_147 = arith.constant 0 : index
    %515 = vector.load %arg9[%c0_146, %c0_147] : memref<16x256xf32, #tpu.memory_space<vmem>>, vector<16x256xf32>
    tpu.vector_store %arg9[%c0_146, %c0_147], %514 {strides = array<i32>} : memref<16x256xf32, #tpu.memory_space<vmem>>, vector<16x256xf32>,
    %c0_148 = arith.constant 0 : index
    %c0_149 = arith.constant 0 : index
    %c0_150 = arith.constant 0 : index
    %516 = vector.load %arg10[%c0_148, %c0_149, %c0_150] : memref<2x2x128xf32, #tpu.memory_space<vmem>>, vector<1x2x128xf32>
    %517 = vector.shape_cast %516 : vector<1x2x128xf32> to vector<2x128xf32>
    %518 = vector.shape_cast %466 : vector<2x128xf32> to vector<1x2x128xf32>
    tpu.vector_store %arg10[%c0_148, %c0_149, %c0_150], %518 {strides = array<i32>} : memref<2x2x128xf32, #tpu.memory_space<vmem>>, vector<1x2x128xf32>,
    %c1 = arith.constant 1 : index
    %c0_151 = arith.constant 0 : index
    %c0_152 = arith.constant 0 : index
    %519 = vector.load %arg10[%c1, %c0_151, %c0_152] : memref<2x2x128xf32, #tpu.memory_space<vmem>>, vector<1x2x128xf32>
    %520 = vector.shape_cast %519 : vector<1x2x128xf32> to vector<2x128xf32>
    %521 = vector.shape_cast %497 : vector<2x128xf32> to vector<1x2x128xf32>
    tpu.vector_store %arg10[%c1, %c0_151, %c0_152], %521 {strides = array<i32>} : memref<2x2x128xf32, #tpu.memory_space<vmem>>, vector<1x2x128xf32>,
    %c0_153 = arith.constant 0 : index
    %c0_154 = arith.constant 0 : index
    %c0_155 = arith.constant 0 : index
    %522 = vector.load %arg11[%c0_153, %c0_154, %c0_155] : memref<2x2x128xf32, #tpu.memory_space<vmem>>, vector<1x2x128xf32>
    %523 = vector.shape_cast %522 : vector<1x2x128xf32> to vector<2x128xf32>
    %524 = vector.shape_cast %464 : vector<2x128xf32> to vector<1x2x128xf32>
    tpu.vector_store %arg11[%c0_153, %c0_154, %c0_155], %524 {strides = array<i32>} : memref<2x2x128xf32, #tpu.memory_space<vmem>>, vector<1x2x128xf32>,
    %c1_156 = arith.constant 1 : index
    %c0_157 = arith.constant 0 : index
    %c0_158 = arith.constant 0 : index
    %525 = vector.load %arg11[%c1_156, %c0_157, %c0_158] : memref<2x2x128xf32, #tpu.memory_space<vmem>>, vector<1x2x128xf32>
    %526 = vector.shape_cast %525 : vector<1x2x128xf32> to vector<2x128xf32>
    %527 = vector.shape_cast %495 : vector<2x128xf32> to vector<1x2x128xf32>
    tpu.vector_store %arg11[%c1_156, %c0_157, %c0_158], %527 {strides = array<i32>} : memref<2x2x128xf32, #tpu.memory_space<vmem>>, vector<1x2x128xf32>,
    return
  }
}

</mosaic_0001>

<llo_original>
// kernel: melody_rnn_forward.1
$region0: #{melody_rnn_forward.1}
  #allocation0 [shape = 'u32[]', space=smem, size = 0x4, offset = 0x4, fixed_abs, tag = 'smem constant byte address 0x4 - core index']
  #allocation1 [shape = 'u32[72,128]{1,0:T(1,128)}', space=vmem, size = 0x9000, scoped, tag = 'internal scratch']
  #allocation2 [shape = 'f32[16,128]{1,0:T(8,128)}', space=vmem, size = 0x2000, scoped, tag = 'scratch operand']
  %s0 = inlined_call_operand.vmem [shape: f32[16,64], index: 0, kind: input, shape index: {}]
  %s1 = inlined_call_operand.vmem [shape: f32[64,512], index: 1, kind: input, shape index: {}]
  %s2 = inlined_call_operand.vmem [shape: f32[1,512], index: 2, kind: input, shape index: {}]
  %s3 = inlined_call_operand.hbm [shape: f32[128,512], index: 3, kind: input, shape index: {}]
  %s4 = inlined_call_operand.hbm [shape: f32[128,512], index: 4, kind: input, shape index: {}]
  %s5 = inlined_call_operand.hbm [shape: f32[128,512], index: 5, kind: input, shape index: {}]
  %s6 = inlined_call_operand.vmem [shape: f32[1,512], index: 6, kind: input, shape index: {}]
  %s7 = inlined_call_operand.hbm [shape: f32[128,256], index: 7, kind: input, shape index: {}]
  %s8 = inlined_call_operand.vmem [shape: f32[1,256], index: 8, kind: input, shape index: {}]
  %s9 = inlined_call_operand.hbm [shape: f32[16,256], index: 9, kind: output, shape index: {0}]
  %s10 = inlined_call_operand.hbm [shape: f32[2,2,128], index: 10, kind: output, shape index: {1}]
  %s11 = inlined_call_operand.hbm [shape: f32[2,2,128], index: 11, kind: output, shape index: {2}]
  %12 = xla_tuple %s9, %s10, %s11
  %s13 = sld [smem:[#allocation0]]
  $region78: #{melody_rnn_forward.1} parent=0
    _
  %s15 = ssub.s32 1, %s13
  %s16 = scalar_select 0, %s15, %s13
  $region1: #{melody_rnn_forward.1} parent=0
    #allocation3 [shape = 'u8[262144]{0}', space=vmem, size = 0x40000, scoped, tag = 'input window, operand 3, single buffered']
    #allocation4 [shape = 's32[1]{0}', space=sflag, size = 0x4, scoped, tag = 'scoped memory for melody_rnn_forward.1']
    #allocation5 [shape = 's32[1]{0}', space=sflag, size = 0x4, scoped, tag = 'scoped memory for melody_rnn_forward.1']
    #allocation6 [shape = 'u8[262144]{0}', space=vmem, size = 0x40000, scoped, tag = 'input window, operand 4, single buffered']
    #allocation7 [shape = 's32[1]{0}', space=sflag, size = 0x4, scoped, tag = 'scoped memory for melody_rnn_forward.1']
    #allocation8 [shape = 'u8[262144]{0}', space=vmem, size = 0x40000, scoped, tag = 'input window, operand 5, single buffered']
    #allocation9 [shape = 'u8[131072]{0}', space=vmem, size = 0x20000, scoped, tag = 'input window, operand 7, single buffered']
    #allocation10 [shape = 's32[1]{0}', space=sflag, size = 0x4, scoped, tag = 'scoped memory for melody_rnn_forward.1']
    #allocation11 [shape = 'u8[16384]{0}', space=vmem, size = 0x4000, scoped, tag = 'output window, operand 0, single buffered']
    #allocation12 [shape = 'u8[2048]{0}', space=vmem, size = 0x800, scoped, tag = 'output window, operand 1, single buffered']
    #allocation13 [shape = 's32[1]{0}', space=sflag, size = 0x4, scoped, tag = 'scoped memory for melody_rnn_forward.1']
    #allocation14 [shape = 'u8[2048]{0}', space=vmem, size = 0x800, scoped, tag = 'output window, operand 2, single buffered']
    %17 = vsyncpa [#allocation4], 0
    %18 = vsyncpa [#allocation7], 0
    %19 = vsyncpa [#allocation10], 0
    %20 = vsyncpa [#allocation5], 0
    %21 = vsyncpa [#allocation13], 0
    // Predicated region
    $region2: #{melody_rnn_forward.1} parent=1 // pred_check
      _
    $region3: #{melody_rnn_forward.1} parent=1 // pred_check_branch
      %23 = sbr.rel (0) target = $region5
    $region4: #{melody_rnn_forward.1} parent=1 // pred_region
      _
    $region5: #{melody_rnn_forward.1} parent=1 // pred_fallthru
      _
    // Predicated region
    $region6: #{melody_rnn_forward.1} parent=1 // pred_check
      _
    $region7: #{melody_rnn_forward.1} parent=1 // pred_check_branch
      %25 = sbr.rel (0) target = $region9
    $region8: #{melody_rnn_forward.1} parent=1 // pred_region
      _
    $region9: #{melody_rnn_forward.1} parent=1 // pred_fallthru
      _
    // Predicated region
    $region10: #{melody_rnn_forward.1} parent=1 // pred_check
      _
    $region11: #{melody_rnn_forward.1} parent=1 // pred_check_branch
      %27 = sbr.rel (0) target = $region13
    $region12: #{melody_rnn_forward.1} parent=1 // pred_region
      _
    $region13: #{melody_rnn_forward.1} parent=1 // pred_fallthru
      _
    // Predicated region
    $region14: #{melody_rnn_forward.1} parent=1 // pred_check
      _
    $region15: #{melody_rnn_forward.1} parent=1 // pred_check_branch
      %29 = sbr.rel (0) target = $region17
    $region16: #{melody_rnn_forward.1} parent=1 // pred_region
      %31 = vsyncadd [#allocation4], 0
      %s32 = sshll.u32 %s3, 4
      %s33 = int_to_ptr.hbm [resolvable:$true] %s32
      %s34 = sshll.u32 [#allocation3], 4
      %s35 = int_to_ptr.vmem [resolvable:$true] %s34
      %40 = dma.hbm_to_vmem [thread:$0]  %s33, 8192, %s35, [#allocation4], 512, 512, 32
    $region17: #{melody_rnn_forward.1} parent=1 // pred_fallthru
      _
    // Predicated region
    $region18: #{melody_rnn_forward.1} parent=1 // pred_check
      _
    $region19: #{melody_rnn_forward.1} parent=1 // pred_check_branch
      %42 = sbr.rel (0) target = $region21
    $region20: #{melody_rnn_forward.1} parent=1 // pred_region
      %44 = vsyncadd [#allocation7], 0
      %s45 = sshll.u32 %s4, 4
      %s46 = int_to_ptr.hbm [resolvable:$true] %s45
      %s47 = sshll.u32 [#allocation6], 4
      %s48 = int_to_ptr.vmem [resolvable:$true] %s47
      %53 = dma.hbm_to_vmem [thread:$0]  %s46, 8192, %s48, [#allocation7], 512, 512, 32
    $region21: #{melody_rnn_forward.1} parent=1 // pred_fallthru
      _
    // Predicated region
    $region22: #{melody_rnn_forward.1} parent=1 // pred_check
      _
    $region23: #{melody_rnn_forward.1} parent=1 // pred_check_branch
      %55 = sbr.rel (0) target = $region25
    $region24: #{melody_rnn_forward.1} parent=1 // pred_region
      %57 = vsyncadd [#allocation7], 0
      %s58 = sshll.u32 %s5, 4
      %s59 = int_to_ptr.hbm [resolvable:$true] %s58
      %s60 = sshll.u32 [#allocation8], 4
      %s61 = int_to_ptr.vmem [resolvable:$true] %s60
      %66 = dma.hbm_to_vmem [thread:$0]  %s59, 8192, %s61, [#allocation7], 512, 512, 32
    $region25: #{melody_rnn_forward.1} parent=1 // pred_fallthru
      _
    // Predicated region
    $region26: #{melody_rnn_forward.1} parent=1 // pred_check
      _
    $region27: #{melody_rnn_forward.1} parent=1 // pred_check_branch
      %68 = sbr.rel (0) target = $region29
    $region28: #{melody_rnn_forward.1} parent=1 // pred_region
      _
    $region29: #{melody_rnn_forward.1} parent=1 // pred_fallthru
      _
    // Predicated region
    $region30: #{melody_rnn_forward.1} parent=1 // pred_check
      _
    $region31: #{melody_rnn_forward.1} parent=1 // pred_check_branch
      %70 = sbr.rel (0) target = $region33
    $region32: #{melody_rnn_forward.1} parent=1 // pred_region
      %72 = vsyncadd [#allocation10], 0
      %s73 = sshll.u32 %s7, 4
      %s74 = int_to_ptr.hbm [resolvable:$true] %s73
      %s75 = sshll.u32 [#allocation9], 4
      %s76 = int_to_ptr.vmem [resolvable:$true] %s75
      %81 = dma.hbm_to_vmem [thread:$0]  %s74, 4096, %s76, [#allocation10], 256, 256, 16
    $region33: #{melody_rnn_forward.1} parent=1 // pred_fallthru
      _
    // Predicated region
    $region34: #{melody_rnn_forward.1} parent=1 // pred_check
      _
    $region35: #{melody_rnn_forward.1} parent=1 // pred_check_branch
      %83 = sbr.rel (0) target = $region37
    $region36: #{melody_rnn_forward.1} parent=1 // pred_region
      _
    $region37: #{melody_rnn_forward.1} parent=1 // pred_fallthru
      _
    // Predicated region
    $region38: #{melody_rnn_forward.1} parent=1 // pred_check
      _
    $region39: #{melody_rnn_forward.1} parent=1 // pred_check_branch
      %85 = sbr.rel (0) target = $region41
    $region40: #{melody_rnn_forward.1} parent=1 // pred_region
      %87 = dma.done [#allocation4], 8192
    $region41: #{melody_rnn_forward.1} parent=1 // pred_fallthru
      _
    // Predicated region
    $region42: #{melody_rnn_forward.1} parent=1 // pred_check
      _
    $region43: #{melody_rnn_forward.1} parent=1 // pred_check_branch
      %89 = sbr.rel (0) target = $region45
    $region44: #{melody_rnn_forward.1} parent=1 // pred_region
      %91 = dma.done [#allocation7], 8192
    $region45: #{melody_rnn_forward.1} parent=1 // pred_fallthru
      _
    // Predicated region
    $region46: #{melody_rnn_forward.1} parent=1 // pred_check
      _
    $region47: #{melody_rnn_forward.1} parent=1 // pred_check_branch
      %93 = sbr.rel (0) target = $region49
    $region48: #{melody_rnn_forward.1} parent=1 // pred_region
      %95 = dma.done [#allocation7], 8192
    $region49: #{melody_rnn_forward.1} parent=1 // pred_fallthru
      _
    // Predicated region
    $region50: #{melody_rnn_forward.1} parent=1 // pred_check
      _
    $region51: #{melody_rnn_forward.1} parent=1 // pred_check_branch
      %97 = sbr.rel (0) target = $region53
    $region52: #{melody_rnn_forward.1} parent=1 // pred_region
      %99 = dma.done [#allocation10], 4096
    $region53: #{melody_rnn_forward.1} parent=1 // pred_fallthru
      _
    %v100 = vld [vmem:[%s0] sm:$0xff]
    %v101 = vld [vmem:[%s0 + $0x8] sm:$0xff]
    %v102 = vld [vmem:[%s1] sm:$0xff]
    %v103 = vld [vmem:[%s1 + $0x8] sm:$0xff]
    %v104 = vld [vmem:[%s1 + $0x10] sm:$0xff]
    %v105 = vld [vmem:[%s1 + $0x18] sm:$0xff]
    %v106 = vld [vmem:[%s1 + $0x20] sm:$0xff]
    %v107 = vld [vmem:[%s1 + $0x28] sm:$0xff]
    %v108 = vld [vmem:[%s1 + $0x30] sm:$0xff]
    %v109 = vld [vmem:[%s1 + $0x38] sm:$0xff]
    %v110 = vld [vmem:[%s1 + $0x40] sm:$0xff]
    %v111 = vld [vmem:[%s1 + $0x48] sm:$0xff]
    %v112 = vld [vmem:[%s1 + $0x50] sm:$0xff]
    %v113 = vld [vmem:[%s1 + $0x58] sm:$0xff]
    %v114 = vld [vmem:[%s1 + $0x60] sm:$0xff]
    %v115 = vld [vmem:[%s1 + $0x68] sm:$0xff]
    %v116 = vld [vmem:[%s1 + $0x70] sm:$0xff]
    %v117 = vld [vmem:[%s1 + $0x78] sm:$0xff]
    %v118 = vld [vmem:[%s1 + $0x80] sm:$0xff]
    %v119 = vld [vmem:[%s1 + $0x88] sm:$0xff]
    %v120 = vld [vmem:[%s1 + $0x90] sm:$0xff]
    %v121 = vld [vmem:[%s1 + $0x98] sm:$0xff]
    %v122 = vld [vmem:[%s1 + $0xa0] sm:$0xff]
    %v123 = vld [vmem:[%s1 + $0xa8] sm:$0xff]
    %v124 = vld [vmem:[%s1 + $0xb0] sm:$0xff]
    %v125 = vld [vmem:[%s1 + $0xb8] sm:$0xff]
    %v126 = vld [vmem:[%s1 + $0xc0] sm:$0xff]
    %v127 = vld [vmem:[%s1 + $0xc8] sm:$0xff]
    %v128 = vld [vmem:[%s1 + $0xd0] sm:$0xff]
    %v129 = vld [vmem:[%s1 + $0xd8] sm:$0xff]
    %v130 = vld [vmem:[%s1 + $0xe0] sm:$0xff]
    %v131 = vld [vmem:[%s1 + $0xe8] sm:$0xff]
    %v132 = vld [vmem:[%s1 + $0xf0] sm:$0xff]
    %v133 = vld [vmem:[%s1 + $0xf8] sm:$0xff]
    %v134 = vld [vmem:[%s2] sm:$0xf]
    %v136 = vperm.slane %v134, 0
    %v137 = vperm.slane %v134, 1
    %v138 = vperm.slane %v134, 2
    %v139 = vperm.slane %v134, 3
    %vm144 = vcmask 523264
    %v146 = vsel %vm144, %v100, 0
    %v149 = vsel %vm144, %v101, 0
    %151 = vmatpush.msra.mxu0 0.0
    %152 = vmatpush.msra.mxu0 0.0
    %153 = vmatpush.msra.mxu0 0.0
    %154 = vmatpush.msra.mxu0 0.0
    %155 = vmatpush.msra.mxu0 0.0
    %156 = vmatpush.msra.mxu0 0.0
    %157 = vmatpush.msra.mxu0 0.0
    %158 = vmatpush.msra.mxu0 0.0
    %159 = vmatpush.msra.mxu0 %v130
    %160 = vmatpush.msra.mxu0 %v126
    %161 = vmatpush.msra.mxu0 %v122
    %162 = vmatpush.msra.mxu0 %v118
    %163 = vmatpush.msra.mxu0 %v114
    %164 = vmatpush.msra.mxu0 %v110
    %165 = vmatpush.msra.mxu0 %v106
    %166 = vmatpush.msra.mxu0 %v102
    %167 = vmatmul.f32.gmra.mxu0 %v146
    %v168 = vpop.f32.mrf.mxu0
    %v169 = vadd.f32 %v136, %v168
    %170 = vmatmul.f32.gmra.mxu0 %v149
    %v171 = vpop.f32.mrf.mxu0
    %v172 = vadd.f32 %v136, %v171
    %173 = vdwg.mxu0
    %174 = vmatpush.msra.mxu0 0.0
    %175 = vmatpush.msra.mxu0 0.0
    %176 = vmatpush.msra.mxu0 0.0
    %177 = vmatpush.msra.mxu0 0.0
    %178 = vmatpush.msra.mxu0 0.0
    %179 = vmatpush.msra.mxu0 0.0
    %180 = vmatpush.msra.mxu0 0.0
    %181 = vmatpush.msra.mxu0 0.0
    %182 = vmatpush.msra.mxu0 %v131
    %183 = vmatpush.msra.mxu0 %v127
    %184 = vmatpush.msra.mxu0 %v123
    %185 = vmatpush.msra.mxu0 %v119
    %186 = vmatpush.msra.mxu0 %v115
    %187 = vmatpush.msra.mxu0 %v111
    %188 = vmatpush.msra.mxu0 %v107
    %189 = vmatpush.msra.mxu0 %v103
    %190 = vmatmul.f32.gmra.mxu0 %v146
    %v191 = vpop.f32.mrf.mxu0
    %v192 = vadd.f32 %v137, %v191
    %193 = vmatmul.f32.gmra.mxu0 %v149
    %v194 = vpop.f32.mrf.mxu0
    %v195 = vadd.f32 %v137, %v194
    %196 = vdwg.mxu0
    %197 = vmatpush.msra.mxu0 0.0
    %198 = vmatpush.msra.mxu0 0.0
    %199 = vmatpush.msra.mxu0 0.0
    %200 = vmatpush.msra.mxu0 0.0
    %201 = vmatpush.msra.mxu0 0.0
    %202 = vmatpush.msra.mxu0 0.0
    %203 = vmatpush.msra.mxu0 0.0
    %204 = vmatpush.msra.mxu0 0.0
    %205 = vmatpush.msra.mxu0 %v132
    %206 = vmatpush.msra.mxu0 %v128
    %207 = vmatpush.msra.mxu0 %v124
    %208 = vmatpush.msra.mxu0 %v120
    %209 = vmatpush.msra.mxu0 %v116
    %210 = vmatpush.msra.mxu0 %v112
    %211 = vmatpush.msra.mxu0 %v108
    %212 = vmatpush.msra.mxu0 %v104
    %213 = vmatmul.f32.gmra.mxu0 %v146
    %v214 = vpop.f32.mrf.mxu0
    %v215 = vadd.f32 %v138, %v214
    %216 = vmatmul.f32.gmra.mxu0 %v149
    %v217 = vpop.f32.mrf.mxu0
    %v218 = vadd.f32 %v138, %v217
    %219 = vdwg.mxu0
    %220 = vmatpush.msra.mxu0 0.0
    %221 = vmatpush.msra.mxu0 0.0
    %222 = vmatpush.msra.mxu0 0.0
    %223 = vmatpush.msra.mxu0 0.0
    %224 = vmatpush.msra.mxu0 0.0
    %225 = vmatpush.msra.mxu0 0.0
    %226 = vmatpush.msra.mxu0 0.0
    %227 = vmatpush.msra.mxu0 0.0
    %228 = vmatpush.msra.mxu0 %v133
    %229 = vmatpush.msra.mxu0 %v129
    %230 = vmatpush.msra.mxu0 %v125
    %231 = vmatpush.msra.mxu0 %v121
    %232 = vmatpush.msra.mxu0 %v117
    %233 = vmatpush.msra.mxu0 %v113
    %234 = vmatpush.msra.mxu0 %v109
    %235 = vmatpush.msra.mxu0 %v105
    %236 = vmatmul.f32.gmra.mxu0 %v146
    %v237 = vpop.f32.mrf.mxu0
    %v238 = vadd.f32 %v139, %v237
    %239 = vmatmul.f32.gmra.mxu0 %v149
    %v240 = vpop.f32.mrf.mxu0
    %v241 = vadd.f32 %v139, %v240
    %242 = vdwg.mxu0
    %v243 = vld [vmem:[%s6] sm:$0xf]
    %v245 = vperm.slane %v243, 0
    %v246 = vperm.slane %v243, 1
    %v247 = vperm.slane %v243, 2
    %v248 = vperm.slane %v243, 3
    %v253 = vld [vmem:[#allocation3] sm:$0xff]
    %v254 = vld [vmem:[#allocation3 + $0x8] sm:$0xff]
    %v255 = vld [vmem:[#allocation3 + $0x10] sm:$0xff]
    %v256 = vld [vmem:[#allocation3 + $0x18] sm:$0xff]
    %v257 = vld [vmem:[#allocation3 + $0x20] sm:$0xff]
    %v258 = vld [vmem:[#allocation3 + $0x28] sm:$0xff]
    %v259 = vld [vmem:[#allocation3 + $0x30] sm:$0xff]
    %v260 = vld [vmem:[#allocation3 + $0x38] sm:$0xff]
    %v261 = vld [vmem:[#allocation3 + $0x40] sm:$0xff]
    %v262 = vld [vmem:[#allocation3 + $0x48] sm:$0xff]
    %v263 = vld [vmem:[#allocation3 + $0x50] sm:$0xff]
    %v264 = vld [vmem:[#allocation3 + $0x58] sm:$0xff]
    %v265 = vld [vmem:[#allocation3 + $0x60] sm:$0xff]
    %v266 = vld [vmem:[#allocation3 + $0x68] sm:$0xff]
    %v267 = vld [vmem:[#allocation3 + $0x70] sm:$0xff]
    %v268 = vld [vmem:[#allocation3 + $0x78] sm:$0xff]
    %v269 = vld [vmem:[#allocation3 + $0x80] sm:$0xff]
    %v270 = vld [vmem:[#allocation3 + $0x88] sm:$0xff]
    %v271 = vld [vmem:[#allocation3 + $0x90] sm:$0xff]
    %v272 = vld [vmem:[#allocation3 + $0x98] sm:$0xff]
    %v273 = vld [vmem:[#allocation3 + $0xa0] sm:$0xff]
    %v274 = vld [vmem:[#allocation3 + $0xa8] sm:$0xff]
    %v275 = vld [vmem:[#allocation3 + $0xb0] sm:$0xff]
    %v276 = vld [vmem:[#allocation3 + $0xb8] sm:$0xff]
    %v277 = vld [vmem:[#allocation3 + $0xc0] sm:$0xff]
    %v278 = vld [vmem:[#allocation3 + $0xc8] sm:$0xff]
    %v279 = vld [vmem:[#allocation3 + $0xd0] sm:$0xff]
    %v280 = vld [vmem:[#allocation3 + $0xd8] sm:$0xff]
    %v281 = vld [vmem:[#allocation3 + $0xe0] sm:$0xff]
    %v282 = vld [vmem:[#allocation3 + $0xe8] sm:$0xff]
    %v283 = vld [vmem:[#allocation3 + $0xf0] sm:$0xff]
    %v284 = vld [vmem:[#allocation3 + $0xf8] sm:$0xff]
    %v285 = vld [vmem:[#allocation3 + $0x100] sm:$0xff]
    %v286 = vld [vmem:[#allocation3 + $0x108] sm:$0xff]
    %v287 = vld [vmem:[#allocation3 + $0x110] sm:$0xff]
    %v288 = vld [vmem:[#allocation3 + $0x118] sm:$0xff]
    %v289 = vld [vmem:[#allocation3 + $0x120] sm:$0xff]
    %v290 = vld [vmem:[#allocation3 + $0x128] sm:$0xff]
    %v291 = vld [vmem:[#allocation3 + $0x130] sm:$0xff]
    %v292 = vld [vmem:[#allocation3 + $0x138] sm:$0xff]
    %v293 = vld [vmem:[#allocation3 + $0x140] sm:$0xff]
    %v294 = vld [vmem:[#allocation3 + $0x148] sm:$0xff]
    %v295 = vld [vmem:[#allocation3 + $0x150] sm:$0xff]
    %v296 = vld [vmem:[#allocation3 + $0x158] sm:$0xff]
    %v297 = vld [vmem:[#allocation3 + $0x160] sm:$0xff]
    %v298 = vld [vmem:[#allocation3 + $0x168] sm:$0xff]
    %v299 = vld [vmem:[#allocation3 + $0x170] sm:$0xff]
    %v300 = vld [vmem:[#allocation3 + $0x178] sm:$0xff]
    %v301 = vld [vmem:[#allocation3 + $0x180] sm:$0xff]
    %v302 = vld [vmem:[#allocation3 + $0x188] sm:$0xff]
    %v303 = vld [vmem:[#allocation3 + $0x190] sm:$0xff]
    %v304 = vld [vmem:[#allocation3 + $0x198] sm:$0xff]
    %v305 = vld [vmem:[#allocation3 + $0x1a0] sm:$0xff]
    %v306 = vld [vmem:[#allocation3 + $0x1a8] sm:$0xff]
    %v307 = vld [vmem:[#allocation3 + $0x1b0] sm:$0xff]
    %v308 = vld [vmem:[#allocation3 + $0x1b8] sm:$0xff]
    %v309 = vld [vmem:[#allocation3 + $0x1c0] sm:$0xff]
    %v310 = vld [vmem:[#allocation3 + $0x1c8] sm:$0xff]
    %v311 = vld [vmem:[#allocation3 + $0x1d0] sm:$0xff]
    %v312 = vld [vmem:[#allocation3 + $0x1d8] sm:$0xff]
    %v313 = vld [vmem:[#allocation3 + $0x1e0] sm:$0xff]
    %v314 = vld [vmem:[#allocation3 + $0x1e8] sm:$0xff]
    %v315 = vld [vmem:[#allocation3 + $0x1f0] sm:$0xff]
    %v316 = vld [vmem:[#allocation3 + $0x1f8] sm:$0xff]
    %317 = vmatpush.msra.mxu0 %v313
    %318 = vmatpush.msra.mxu0 %v309
    %319 = vmatpush.msra.mxu0 %v305
    %320 = vmatpush.msra.mxu0 %v301
    %321 = vmatpush.msra.mxu0 %v297
    %322 = vmatpush.msra.mxu0 %v293
    %323 = vmatpush.msra.mxu0 %v289
    %324 = vmatpush.msra.mxu0 %v285
    %325 = vmatpush.msra.mxu0 %v281
    %326 = vmatpush.msra.mxu0 %v277
    %327 = vmatpush.msra.mxu0 %v273
    %328 = vmatpush.msra.mxu0 %v269
    %329 = vmatpush.msra.mxu0 %v265
    %330 = vmatpush.msra.mxu0 %v261
    %331 = vmatpush.msra.mxu0 %v257
    %332 = vmatpush.msra.mxu0 %v253
    %333 = vmatmul.f32.gmra.mxu0 0.0
    %v334 = vpop.f32.mrf.mxu0
    %v335 = vadd.f32 0.0, %v334
    %336 = vdwg.mxu0
    %337 = vmatpush.msra.mxu0 %v314
    %338 = vmatpush.msra.mxu0 %v310
    %339 = vmatpush.msra.mxu0 %v306
    %340 = vmatpush.msra.mxu0 %v302
    %341 = vmatpush.msra.mxu0 %v298
    %342 = vmatpush.msra.mxu0 %v294
    %343 = vmatpush.msra.mxu0 %v290
    %344 = vmatpush.msra.mxu0 %v286
    %345 = vmatpush.msra.mxu0 %v282
    %346 = vmatpush.msra.mxu0 %v278
    %347 = vmatpush.msra.mxu0 %v274
    %348 = vmatpush.msra.mxu0 %v270
    %349 = vmatpush.msra.mxu0 %v266
    %350 = vmatpush.msra.mxu0 %v262
    %351 = vmatpush.msra.mxu0 %v258
    %352 = vmatpush.msra.mxu0 %v254
    %353 = vmatmul.f32.gmra.mxu0 0.0
    %v354 = vpop.f32.mrf.mxu0
    %v355 = vadd.f32 0.0, %v354
    %356 = vdwg.mxu0
    %357 = vmatpush.msra.mxu0 %v315
    %358 = vmatpush.msra.mxu0 %v311
    %359 = vmatpush.msra.mxu0 %v307
    %360 = vmatpush.msra.mxu0 %v303
    %361 = vmatpush.msra.mxu0 %v299
    %362 = vmatpush.msra.mxu0 %v295
    %363 = vmatpush.msra.mxu0 %v291
    %364 = vmatpush.msra.mxu0 %v287
    %365 = vmatpush.msra.mxu0 %v283
    %366 = vmatpush.msra.mxu0 %v279
    %367 = vmatpush.msra.mxu0 %v275
    %368 = vmatpush.msra.mxu0 %v271
    %369 = vmatpush.msra.mxu0 %v267
    %370 = vmatpush.msra.mxu0 %v263
    %371 = vmatpush.msra.mxu0 %v259
    %372 = vmatpush.msra.mxu0 %v255
    %373 = vmatmul.f32.gmra.mxu0 0.0
    %v374 = vpop.f32.mrf.mxu0
    %v375 = vadd.f32 0.0, %v374
    %376 = vdwg.mxu0
    %377 = vmatpush.msra.mxu0 %v316
    %378 = vmatpush.msra.mxu0 %v312
    %379 = vmatpush.msra.mxu0 %v308
    %380 = vmatpush.msra.mxu0 %v304
    %381 = vmatpush.msra.mxu0 %v300
    %382 = vmatpush.msra.mxu0 %v296
    %383 = vmatpush.msra.mxu0 %v292
    %384 = vmatpush.msra.mxu0 %v288
    %385 = vmatpush.msra.mxu0 %v284
    %386 = vmatpush.msra.mxu0 %v280
    %387 = vmatpush.msra.mxu0 %v276
    %388 = vmatpush.msra.mxu0 %v272
    %389 = vmatpush.msra.mxu0 %v268
    %390 = vmatpush.msra.mxu0 %v264
    %391 = vmatpush.msra.mxu0 %v260
    %392 = vmatpush.msra.mxu0 %v256
    %393 = vmatmul.f32.gmra.mxu0 0.0
    %v394 = vpop.f32.mrf.mxu0
    %v395 = vadd.f32 0.0, %v394
    %396 = vdwg.mxu0
    %v397 = vadd.f32 %v169, %v335
    %v398 = vadd.f32 %v192, %v355
    %v399 = vadd.f32 %v215, %v375
    %v400 = vadd.f32 %v238, %v395
    %v401 = vxor.u32 %v397, 2147483648
    %v402 = vmul.f32 %v401, 1.442695
    %v403 = vpow.pop %v402
    %v404 = vadd.f32 %v403, 1.0
    %v405 = vrcp.pop %v404
    %v406 = vmul.f32 %v404, %v405
    %v407 = vsub.f32 1.0, %v406
    %v408 = vmul.f32 %v405, %v407
    %v409 = vadd.f32 %v405, %v408
    %vm410 = vweird.f32 %v404
    %vm411 = vweird.f32 %v405
    %vm412 = vmor %vm410, %vm411
    %v413 = vsel %vm412, %v405, %v409
    %v414 = vand.u32 2147483647, %v404
    %vm415 = vcmp.eq.f32.partialorder %v414, 8.507059e+37
    %v416 = vand.u32 %v404, 2147483648
    %v417 = vor.u32 1.1754944e-38, %v416
    %v418 = vsel %vm415, %v417, %v413
    %v419 = vmul.f32 1.0, %v418
    %v420 = vxor.u32 %v398, 2147483648
    %v421 = vmul.f32 %v420, 1.442695
    %v422 = vpow.pop %v421
    %v423 = vadd.f32 %v422, 1.0
    %v424 = vrcp.pop %v423
    %v425 = vmul.f32 %v423, %v424
    %v426 = vsub.f32 1.0, %v425
    %v427 = vmul.f32 %v424, %v426
    %v428 = vadd.f32 %v424, %v427
    %vm429 = vweird.f32 %v423
    %vm430 = vweird.f32 %v424
    %vm431 = vmor %vm429, %vm430
    %v432 = vsel %vm431, %v424, %v428
    %v433 = vand.u32 2147483647, %v423
    %vm434 = vcmp.eq.f32.partialorder %v433, 8.507059e+37
    %v435 = vand.u32 %v423, 2147483648
    %v436 = vor.u32 1.1754944e-38, %v435
    %v437 = vsel %vm434, %v436, %v432
    %v438 = vmul.f32 1.0, %v437
    %v439 = vtanh.pop %v399
    %v440 = vxor.u32 %v400, 2147483648
    %v441 = vmul.f32 %v440, 1.442695
    %v442 = vpow.pop %v441
    %v443 = vadd.f32 %v442, 1.0
    %v444 = vrcp.pop %v443
    %v445 = vmul.f32 %v443, %v444
    %v446 = vsub.f32 1.0, %v445
    %v447 = vmul.f32 %v444, %v446
    %v448 = vadd.f32 %v444, %v447
    %vm449 = vweird.f32 %v443
    %vm450 = vweird.f32 %v444
    %vm451 = vmor %vm449, %vm450
    %v452 = vsel %vm451, %v444, %v448
    %v453 = vand.u32 2147483647, %v443
    %vm454 = vcmp.eq.f32.partialorder %v453, 8.507059e+37
    %v455 = vand.u32 %v443, 2147483648
    %v456 = vor.u32 1.1754944e-38, %v455
    %v457 = vsel %vm454, %v456, %v452
    %v458 = vmul.f32 1.0, %v457
    %v459 = vmul.f32 %v438, 0.0
    %v460 = vmul.f32 %v419, %v439
    %v461 = vadd.f32 %v459, %v460
    %v462 = vtanh.pop %v461
    %v463 = vmul.f32 %v458, %v462
    %v464 = vld [vmem:[#allocation6] sm:$0xff]
    %v465 = vld [vmem:[#allocation6 + $0x8] sm:$0xff]
    %v466 = vld [vmem:[#allocation6 + $0x10] sm:$0xff]
    %v467 = vld [vmem:[#allocation6 + $0x18] sm:$0xff]
    %v468 = vld [vmem:[#allocation6 + $0x20] sm:$0xff]
    %v469 = vld [vmem:[#allocation6 + $0x28] sm:$0xff]
    %v470 = vld [vmem:[#allocation6 + $0x30] sm:$0xff]
    %v471 = vld [vmem:[#allocation6 + $0x38] sm:$0xff]
    %v472 = vld [vmem:[#allocation6 + $0x40] sm:$0xff]
    %v473 = vld [vmem:[#allocation6 + $0x48] sm:$0xff]
    %v474 = vld [vmem:[#allocation6 + $0x50] sm:$0xff]
    %v475 = vld [vmem:[#allocation6 + $0x58] sm:$0xff]
    %v476 = vld [vmem:[#allocation6 + $0x60] sm:$0xff]
    %v477 = vld [vmem:[#allocation6 + $0x68] sm:$0xff]
    %v478 = vld [vmem:[#allocation6 + $0x70] sm:$0xff]
    %v479 = vld [vmem:[#allocation6 + $0x78] sm:$0xff]
    %v480 = vld [vmem:[#allocation6 + $0x80] sm:$0xff]
    %v481 = vld [vmem:[#allocation6 + $0x88] sm:$0xff]
    %v482 = vld [vmem:[#allocation6 + $0x90] sm:$0xff]
    %v483 = vld [vmem:[#allocation6 + $0x98] sm:$0xff]
    %v484 = vld [vmem:[#allocation6 + $0xa0] sm:$0xff]
    %v485 = vld [vmem:[#allocation6 + $0xa8] sm:$0xff]
    %v486 = vld [vmem:[#allocation6 + $0xb0] sm:$0xff]
    %v487 = vld [vmem:[#allocation6 + $0xb8] sm:$0xff]
    %v488 = vld [vmem:[#allocation6 + $0xc0] sm:$0xff]
    %v489 = vld [vmem:[#allocation6 + $0xc8] sm:$0xff]
    %v490 = vld [vmem:[#allocation6 + $0xd0] sm:$0xff]
    %v491 = vld [vmem:[#allocation6 + $0xd8] sm:$0xff]
    %v492 = vld [vmem:[#allocation6 + $0xe0] sm:$0xff]
    %v493 = vld [vmem:[#allocation6 + $0xe8] sm:$0xff]
    %v494 = vld [vmem:[#allocation6 + $0xf0] sm:$0xff]
    %v495 = vld [vmem:[#allocation6 + $0xf8] sm:$0xff]
    %v496 = vld [vmem:[#allocation6 + $0x100] sm:$0xff]
    %v497 = vld [vmem:[#allocation6 + $0x108] sm:$0xff]
    %v498 = vld [vmem:[#allocation6 + $0x110] sm:$0xff]
    %v499 = vld [vmem:[#allocation6 + $0x118] sm:$0xff]
    %v500 = vld [vmem:[#allocation6 + $0x120] sm:$0xff]
    %v501 = vld [vmem:[#allocation6 + $0x128] sm:$0xff]
    %v502 = vld [vmem:[#allocation6 + $0x130] sm:$0xff]
    %v503 = vld [vmem:[#allocation6 + $0x138] sm:$0xff]
    %v504 = vld [vmem:[#allocation6 + $0x140] sm:$0xff]
    %v505 = vld [vmem:[#allocation6 + $0x148] sm:$0xff]
    %v506 = vld [vmem:[#allocation6 + $0x150] sm:$0xff]
    %v507 = vld [vmem:[#allocation6 + $0x158] sm:$0xff]
    %v508 = vld [vmem:[#allocation6 + $0x160] sm:$0xff]
    %v509 = vld [vmem:[#allocation6 + $0x168] sm:$0xff]
    %v510 = vld [vmem:[#allocation6 + $0x170] sm:$0xff]
    %v511 = vld [vmem:[#allocation6 + $0x178] sm:$0xff]
    %v512 = vld [vmem:[#allocation6 + $0x180] sm:$0xff]
    %v513 = vld [vmem:[#allocation6 + $0x188] sm:$0xff]
    %v514 = vld [vmem:[#allocation6 + $0x190] sm:$0xff]
    %v515 = vld [vmem:[#allocation6 + $0x198] sm:$0xff]
    %v516 = vld [vmem:[#allocation6 + $0x1a0] sm:$0xff]
    %v517 = vld [vmem:[#allocation6 + $0x1a8] sm:$0xff]
    %v518 = vld [vmem:[#allocation6 + $0x1b0] sm:$0xff]
    %v519 = vld [vmem:[#allocation6 + $0x1b8] sm:$0xff]
    %v520 = vld [vmem:[#allocation6 + $0x1c0] sm:$0xff]
    %v521 = vld [vmem:[#allocation6 + $0x1c8] sm:$0xff]
    %v522 = vld [vmem:[#allocation6 + $0x1d0] sm:$0xff]
    %v523 = vld [vmem:[#allocation6 + $0x1d8] sm:$0xff]
    %v524 = vld [vmem:[#allocation6 + $0x1e0] sm:$0xff]
    %v525 = vld [vmem:[#allocation6 + $0x1e8] sm:$0xff]
    %v526 = vld [vmem:[#allocation6 + $0x1f0] sm:$0xff]
    %v527 = vld [vmem:[#allocation6 + $0x1f8] sm:$0xff]
    %v528 = vld [vmem:[#allocation8] sm:$0xff]
    %v529 = vld [vmem:[#allocation8 + $0x8] sm:$0xff]
    %v530 = vld [vmem:[#allocation8 + $0x10] sm:$0xff]
    %v531 = vld [vmem:[#allocation8 + $0x18] sm:$0xff]
    %v532 = vld [vmem:[#allocation8 + $0x20] sm:$0xff]
    %v533 = vld [vmem:[#allocation8 + $0x28] sm:$0xff]
    %v534 = vld [vmem:[#allocation8 + $0x30] sm:$0xff]
    %v535 = vld [vmem:[#allocation8 + $0x38] sm:$0xff]
    %v536 = vld [vmem:[#allocation8 + $0x40] sm:$0xff]
    %v537 = vld [vmem:[#allocation8 + $0x48] sm:$0xff]
    %v538 = vld [vmem:[#allocation8 + $0x50] sm:$0xff]
    %v539 = vld [vmem:[#allocation8 + $0x58] sm:$0xff]
    %v540 = vld [vmem:[#allocation8 + $0x60] sm:$0xff]
    %v541 = vld [vmem:[#allocation8 + $0x68] sm:$0xff]
    %v542 = vld [vmem:[#allocation8 + $0x70] sm:$0xff]
    %v543 = vld [vmem:[#allocation8 + $0x78] sm:$0xff]
    %v544 = vld [vmem:[#allocation8 + $0x80] sm:$0xff]
    %v545 = vld [vmem:[#allocation8 + $0x88] sm:$0xff]
    %v546 = vld [vmem:[#allocation8 + $0x90] sm:$0xff]
    %v547 = vld [vmem:[#allocation8 + $0x98] sm:$0xff]
    %v548 = vld [vmem:[#allocation8 + $0xa0] sm:$0xff]
    %v549 = vld [vmem:[#allocation8 + $0xa8] sm:$0xff]
    %v550 = vld [vmem:[#allocation8 + $0xb0] sm:$0xff]
    %v551 = vld [vmem:[#allocation8 + $0xb8] sm:$0xff]
    %v552 = vld [vmem:[#allocation8 + $0xc0] sm:$0xff]
    %v553 = vld [vmem:[#allocation8 + $0xc8] sm:$0xff]
    %v554 = vld [vmem:[#allocation8 + $0xd0] sm:$0xff]
    %v555 = vld [vmem:[#allocation8 + $0xd8] sm:$0xff]
    %v556 = vld [vmem:[#allocation8 + $0xe0] sm:$0xff]
    %v557 = vld [vmem:[#allocation8 + $0xe8] sm:$0xff]
    %v558 = vld [vmem:[#allocation8 + $0xf0] sm:$0xff]
    %v559 = vld [vmem:[#allocation8 + $0xf8] sm:$0xff]
    %v560 = vld [vmem:[#allocation8 + $0x100] sm:$0xff]
    %v561 = vld [vmem:[#allocation8 + $0x108] sm:$0xff]
    %v562 = vld [vmem:[#allocation8 + $0x110] sm:$0xff]
    %v563 = vld [vmem:[#allocation8 + $0x118] sm:$0xff]
    %v564 = vld [vmem:[#allocation8 + $0x120] sm:$0xff]
    %v565 = vld [vmem:[#allocation8 + $0x128] sm:$0xff]
    %v566 = vld [vmem:[#allocation8 + $0x130] sm:$0xff]
    %v567 = vld [vmem:[#allocation8 + $0x138] sm:$0xff]
    %v568 = vld [vmem:[#allocation8 + $0x140] sm:$0xff]
    %v569 = vld [vmem:[#allocation8 + $0x148] sm:$0xff]
    %v570 = vld [vmem:[#allocation8 + $0x150] sm:$0xff]
    %v571 = vld [vmem:[#allocation8 + $0x158] sm:$0xff]
    %v572 = vld [vmem:[#allocation8 + $0x160] sm:$0xff]
    %v573 = vld [vmem:[#allocation8 + $0x168] sm:$0xff]
    %v574 = vld [vmem:[#allocation8 + $0x170] sm:$0xff]
    %v575 = vld [vmem:[#allocation8 + $0x178] sm:$0xff]
    %v576 = vld [vmem:[#allocation8 + $0x180] sm:$0xff]
    %v577 = vld [vmem:[#allocation8 + $0x188] sm:$0xff]
    %v578 = vld [vmem:[#allocation8 + $0x190] sm:$0xff]
    %v579 = vld [vmem:[#allocation8 + $0x198] sm:$0xff]
    %v580 = vld [vmem:[#allocation8 + $0x1a0] sm:$0xff]
    %v581 = vld [vmem:[#allocation8 + $0x1a8] sm:$0xff]
    %v582 = vld [vmem:[#allocation8 + $0x1b0] sm:$0xff]
    %v583 = vld [vmem:[#allocation8 + $0x1b8] sm:$0xff]
    %v584 = vld [vmem:[#allocation8 + $0x1c0] sm:$0xff]
    %v585 = vld [vmem:[#allocation8 + $0x1c8] sm:$0xff]
    %v586 = vld [vmem:[#allocation8 + $0x1d0] sm:$0xff]
    %v587 = vld [vmem:[#allocation8 + $0x1d8] sm:$0xff]
    %v588 = vld [vmem:[#allocation8 + $0x1e0] sm:$0xff]
    %v589 = vld [vmem:[#allocation8 + $0x1e8] sm:$0xff]
    %v590 = vld [vmem:[#allocation8 + $0x1f0] sm:$0xff]
    %v591 = vld [vmem:[#allocation8 + $0x1f8] sm:$0xff]
    %592 = vmatpush.msra.mxu0 %v588
    %593 = vmatpush.msra.mxu0 %v584
    %594 = vmatpush.msra.mxu0 %v580
    %595 = vmatpush.msra.mxu0 %v576
    %596 = vmatpush.msra.mxu0 %v572
    %597 = vmatpush.msra.mxu0 %v568
    %598 = vmatpush.msra.mxu0 %v564
    %599 = vmatpush.msra.mxu0 %v560
    %600 = vmatpush.msra.mxu0 %v556
    %601 = vmatpush.msra.mxu0 %v552
    %602 = vmatpush.msra.mxu0 %v548
    %603 = vmatpush.msra.mxu0 %v544
    %604 = vmatpush.msra.mxu0 %v540
    %605 = vmatpush.msra.mxu0 %v536
    %606 = vmatpush.msra.mxu0 %v532
    %607 = vmatpush.msra.mxu0 %v528
    %608 = vmatmul.f32.gmra.mxu0 0.0
    %v609 = vpop.f32.mrf.mxu0
    %v610 = vadd.f32 0.0, %v609
    %611 = vdwg.mxu0
    %612 = vmatpush.msra.mxu0 %v589
    %613 = vmatpush.msra.mxu0 %v585
    %614 = vmatpush.msra.mxu0 %v581
    %615 = vmatpush.msra.mxu0 %v577
    %616 = vmatpush.msra.mxu0 %v573
    %617 = vmatpush.msra.mxu0 %v569
    %618 = vmatpush.msra.mxu0 %v565
    %619 = vmatpush.msra.mxu0 %v561
    %620 = vmatpush.msra.mxu0 %v557
    %621 = vmatpush.msra.mxu0 %v553
    %622 = vmatpush.msra.mxu0 %v549
    %623 = vmatpush.msra.mxu0 %v545
    %624 = vmatpush.msra.mxu0 %v541
    %625 = vmatpush.msra.mxu0 %v537
    %626 = vmatpush.msra.mxu0 %v533
    %627 = vmatpush.msra.mxu0 %v529
    %628 = vmatmul.f32.gmra.mxu0 0.0
    %v629 = vpop.f32.mrf.mxu0
    %v630 = vadd.f32 0.0, %v629
    %631 = vdwg.mxu0
    %632 = vmatpush.msra.mxu0 %v590
    %633 = vmatpush.msra.mxu0 %v586
    %634 = vmatpush.msra.mxu0 %v582
    %635 = vmatpush.msra.mxu0 %v578
    %636 = vmatpush.msra.mxu0 %v574
    %637 = vmatpush.msra.mxu0 %v570
    %638 = vmatpush.msra.mxu0 %v566
    %639 = vmatpush.msra.mxu0 %v562
    %640 = vmatpush.msra.mxu0 %v558
    %641 = vmatpush.msra.mxu0 %v554
    %642 = vmatpush.msra.mxu0 %v550
    %643 = vmatpush.msra.mxu0 %v546
    %644 = vmatpush.msra.mxu0 %v542
    %645 = vmatpush.msra.mxu0 %v538
    %646 = vmatpush.msra.mxu0 %v534
    %647 = vmatpush.msra.mxu0 %v530
    %648 = vmatmul.f32.gmra.mxu0 0.0
    %v649 = vpop.f32.mrf.mxu0
    %v650 = vadd.f32 0.0, %v649
    %651 = vdwg.mxu0
    %652 = vmatpush.msra.mxu0 %v591
    %653 = vmatpush.msra.mxu0 %v587
    %654 = vmatpush.msra.mxu0 %v583
    %655 = vmatpush.msra.mxu0 %v579
    %656 = vmatpush.msra.mxu0 %v575
    %657 = vmatpush.msra.mxu0 %v571
    %658 = vmatpush.msra.mxu0 %v567
    %659 = vmatpush.msra.mxu0 %v563
    %660 = vmatpush.msra.mxu0 %v559
    %661 = vmatpush.msra.mxu0 %v555
    %662 = vmatpush.msra.mxu0 %v551
    %663 = vmatpush.msra.mxu0 %v547
    %664 = vmatpush.msra.mxu0 %v543
    %665 = vmatpush.msra.mxu0 %v539
    %666 = vmatpush.msra.mxu0 %v535
    %667 = vmatpush.msra.mxu0 %v531
    %668 = vmatmul.f32.gmra.mxu0 0.0
    %v669 = vpop.f32.mrf.mxu0
    %v670 = vadd.f32 0.0, %v669
    %671 = vdwg.mxu0
    %672 = vmatpush.msra.mxu0 %v524
    %673 = vmatpush.msra.mxu0 %v520
    %674 = vmatpush.msra.mxu0 %v516
    %675 = vmatpush.msra.mxu0 %v512
    %676 = vmatpush.msra.mxu0 %v508
    %677 = vmatpush.msra.mxu0 %v504
    %678 = vmatpush.msra.mxu0 %v500
    %679 = vmatpush.msra.mxu0 %v496
    %680 = vmatpush.msra.mxu0 %v492
    %681 = vmatpush.msra.mxu0 %v488
    %682 = vmatpush.msra.mxu0 %v484
    %683 = vmatpush.msra.mxu0 %v480
    %684 = vmatpush.msra.mxu0 %v476
    %685 = vmatpush.msra.mxu0 %v472
    %686 = vmatpush.msra.mxu0 %v468
    %687 = vmatpush.msra.mxu0 %v464
    %688 = vmatmul.f32.gmra.mxu0 %v463
    %v689 = vpop.f32.mrf.mxu0
    %v690 = vadd.f32 %v610, %v689
    %691 = vdwg.mxu0
    %692 = vmatpush.msra.mxu0 %v525
    %693 = vmatpush.msra.mxu0 %v521
    %694 = vmatpush.msra.mxu0 %v517
    %695 = vmatpush.msra.mxu0 %v513
    %696 = vmatpush.msra.mxu0 %v509
    %697 = vmatpush.msra.mxu0 %v505
    %698 = vmatpush.msra.mxu0 %v501
    %699 = vmatpush.msra.mxu0 %v497
    %700 = vmatpush.msra.mxu0 %v493
    %701 = vmatpush.msra.mxu0 %v489
    %702 = vmatpush.msra.mxu0 %v485
    %703 = vmatpush.msra.mxu0 %v481
    %704 = vmatpush.msra.mxu0 %v477
    %705 = vmatpush.msra.mxu0 %v473
    %706 = vmatpush.msra.mxu0 %v469
    %707 = vmatpush.msra.mxu0 %v465
    %708 = vmatmul.f32.gmra.mxu0 %v463
    %v709 = vpop.f32.mrf.mxu0
    %v710 = vadd.f32 %v630, %v709
    %711 = vdwg.mxu0
    %712 = vmatpush.msra.mxu0 %v526
    %713 = vmatpush.msra.mxu0 %v522
    %714 = vmatpush.msra.mxu0 %v518
    %715 = vmatpush.msra.mxu0 %v514
    %716 = vmatpush.msra.mxu0 %v510
    %717 = vmatpush.msra.mxu0 %v506
    %718 = vmatpush.msra.mxu0 %v502
    %719 = vmatpush.msra.mxu0 %v498
    %720 = vmatpush.msra.mxu0 %v494
    %721 = vmatpush.msra.mxu0 %v490
    %722 = vmatpush.msra.mxu0 %v486
    %723 = vmatpush.msra.mxu0 %v482
    %724 = vmatpush.msra.mxu0 %v478
    %725 = vmatpush.msra.mxu0 %v474
    %726 = vmatpush.msra.mxu0 %v470
    %727 = vmatpush.msra.mxu0 %v466
    %728 = vmatmul.f32.gmra.mxu0 %v463
    %v729 = vpop.f32.mrf.mxu0
    %v730 = vadd.f32 %v650, %v729
    %731 = vdwg.mxu0
    %732 = vmatpush.msra.mxu0 %v527
    %733 = vmatpush.msra.mxu0 %v523
    %734 = vmatpush.msra.mxu0 %v519
    %735 = vmatpush.msra.mxu0 %v515
    %736 = vmatpush.msra.mxu0 %v511
    %737 = vmatpush.msra.mxu0 %v507
    %738 = vmatpush.msra.mxu0 %v503
    %739 = vmatpush.msra.mxu0 %v499
    %740 = vmatpush.msra.mxu0 %v495
    %741 = vmatpush.msra.mxu0 %v491
    %742 = vmatpush.msra.mxu0 %v487
    %743 = vmatpush.msra.mxu0 %v483
    %744 = vmatpush.msra.mxu0 %v479
    %745 = vmatpush.msra.mxu0 %v475
    %746 = vmatpush.msra.mxu0 %v471
    %747 = vmatpush.msra.mxu0 %v467
    %748 = vmatmul.f32.gmra.mxu0 %v463
    %v749 = vpop.f32.mrf.mxu0
    %v750 = vadd.f32 %v670, %v749
    %751 = vdwg.mxu0
    %v752 = vadd.f32 %v690, %v245
    %v753 = vadd.f32 %v710, %v246
    %v754 = vadd.f32 %v730, %v247
    %v755 = vadd.f32 %v750, %v248
    %v756 = vxor.u32 %v752, 2147483648
    %v757 = vmul.f32 %v756, 1.442695
    %v758 = vpow.pop %v757
    %v759 = vadd.f32 %v758, 1.0
    %v760 = vrcp.pop %v759
    %v761 = vmul.f32 %v759, %v760
    %v762 = vsub.f32 1.0, %v761
    %v763 = vmul.f32 %v760, %v762
    %v764 = vadd.f32 %v760, %v763
    %vm765 = vweird.f32 %v759
    %vm766 = vweird.f32 %v760
    %vm767 = vmor %vm765, %vm766
    %v768 = vsel %vm767, %v760, %v764
    %v769 = vand.u32 2147483647, %v759
    %vm770 = vcmp.eq.f32.partialorder %v769, 8.507059e+37
    %v771 = vand.u32 %v759, 2147483648
    %v772 = vor.u32 1.1754944e-38, %v771
    %v773 = vsel %vm770, %v772, %v768
    %v774 = vmul.f32 1.0, %v773
    %v775 = vxor.u32 %v753, 2147483648
    %v776 = vmul.f32 %v775, 1.442695
    %v777 = vpow.pop %v776
    %v778 = vadd.f32 %v777, 1.0
    %v779 = vrcp.pop %v778
    %v780 = vmul.f32 %v778, %v779
    %v781 = vsub.f32 1.0, %v780
    %v782 = vmul.f32 %v779, %v781
    %v783 = vadd.f32 %v779, %v782
    %vm784 = vweird.f32 %v778
    %vm785 = vweird.f32 %v779
    %vm786 = vmor %vm784, %vm785
    %v787 = vsel %vm786, %v779, %v783
    %v788 = vand.u32 2147483647, %v778
    %vm789 = vcmp.eq.f32.partialorder %v788, 8.507059e+37
    %v790 = vand.u32 %v778, 2147483648
    %v791 = vor.u32 1.1754944e-38, %v790
    %v792 = vsel %vm789, %v791, %v787
    %v793 = vmul.f32 1.0, %v792
    %v794 = vtanh.pop %v754
    %v795 = vxor.u32 %v755, 2147483648
    %v796 = vmul.f32 %v795, 1.442695
    %v797 = vpow.pop %v796
    %v798 = vadd.f32 %v797, 1.0
    %v799 = vrcp.pop %v798
    %v800 = vmul.f32 %v798, %v799
    %v801 = vsub.f32 1.0, %v800
    %v802 = vmul.f32 %v799, %v801
    %v803 = vadd.f32 %v799, %v802
    %vm804 = vweird.f32 %v798
    %vm805 = vweird.f32 %v799
    %vm806 = vmor %vm804, %vm805
    %v807 = vsel %vm806, %v799, %v803
    %v808 = vand.u32 2147483647, %v798
    %vm809 = vcmp.eq.f32.partialorder %v808, 8.507059e+37
    %v810 = vand.u32 %v798, 2147483648
    %v811 = vor.u32 1.1754944e-38, %v810
    %v812 = vsel %vm809, %v811, %v807
    %v813 = vmul.f32 1.0, %v812
    %v814 = vmul.f32 %v793, 0.0
    %v815 = vmul.f32 %v774, %v794
    %v816 = vadd.f32 %v814, %v815
    %v817 = vtanh.pop %v816
    %v818 = vmul.f32 %v813, %v817
    %819 = vst [vmem:[#allocation2] sm:$0x3] %v818
    %v820 = vld [vmem:[#allocation3] sm:$0xff]
    %v821 = vld [vmem:[#allocation3 + $0x8] sm:$0xff]
    %v822 = vld [vmem:[#allocation3 + $0x10] sm:$0xff]
    %v823 = vld [vmem:[#allocation3 + $0x18] sm:$0xff]
    %v824 = vld [vmem:[#allocation3 + $0x20] sm:$0xff]
    %v825 = vld [vmem:[#allocation3 + $0x28] sm:$0xff]
    %v826 = vld [vmem:[#allocation3 + $0x30] sm:$0xff]
    %v827 = vld [vmem:[#allocation3 + $0x38] sm:$0xff]
    %v828 = vld [vmem:[#allocation3 + $0x40] sm:$0xff]
    %v829 = vld [vmem:[#allocation3 + $0x48] sm:$0xff]
    %v830 = vld [vmem:[#allocation3 + $0x50] sm:$0xff]
    %v831 = vld [vmem:[#allocation3 + $0x58] sm:$0xff]
    %v832 = vld [vmem:[#allocation3 + $0x60] sm:$0xff]
    %v833 = vld [vmem:[#allocation3 + $0x68] sm:$0xff]
    %v834 = vld [vmem:[#allocation3 + $0x70] sm:$0xff]
    %v835 = vld [vmem:[#allocation3 + $0x78] sm:$0xff]
    %v836 = vld [vmem:[#allocation3 + $0x80] sm:$0xff]
    %v837 = vld [vmem:[#allocation3 + $0x88] sm:$0xff]
    %v838 = vld [vmem:[#allocation3 + $0x90] sm:$0xff]
    %v839 = vld [vmem:[#allocation3 + $0x98] sm:$0xff]
    %v840 = vld [vmem:[#allocation3 + $0xa0] sm:$0xff]
    %v841 = vld [vmem:[#allocation3 + $0xa8] sm:$0xff]
    %v842 = vld [vmem:[#allocation3 + $0xb0] sm:$0xff]
    %v843 = vld [vmem:[#allocation3 + $0xb8] sm:$0xff]
    %v844 = vld [vmem:[#allocation3 + $0xc0] sm:$0xff]
    %v845 = vld [vmem:[#allocation3 + $0xc8] sm:$0xff]
    %v846 = vld [vmem:[#allocation3 + $0xd0] sm:$0xff]
    %v847 = vld [vmem:[#allocation3 + $0xd8] sm:$0xff]
    %v848 = vld [vmem:[#allocation3 + $0xe0] sm:$0xff]
    %v849 = vld [vmem:[#allocation3 + $0xe8] sm:$0xff]
    %v850 = vld [vmem:[#allocation3 + $0xf0] sm:$0xff]
    %v851 = vld [vmem:[#allocation3 + $0xf8] sm:$0xff]
    %v852 = vld [vmem:[#allocation3 + $0x100] sm:$0xff]
    %v853 = vld [vmem:[#allocation3 + $0x108] sm:$0xff]
    %v854 = vld [vmem:[#allocation3 + $0x110] sm:$0xff]
    %v855 = vld [vmem:[#allocation3 + $0x118] sm:$0xff]
    %v856 = vld [vmem:[#allocation3 + $0x120] sm:$0xff]
    %v857 = vld [vmem:[#allocation3 + $0x128] sm:$0xff]
    %v858 = vld [vmem:[#allocation3 + $0x130] sm:$0xff]
    %v859 = vld [vmem:[#allocation3 + $0x138] sm:$0xff]
    %v860 = vld [vmem:[#allocation3 + $0x140] sm:$0xff]
    %v861 = vld [vmem:[#allocation3 + $0x148] sm:$0xff]
    %v862 = vld [vmem:[#allocation3 + $0x150] sm:$0xff]
    %v863 = vld [vmem:[#allocation3 + $0x158] sm:$0xff]
    %v864 = vld [vmem:[#allocation3 + $0x160] sm:$0xff]
    %v865 = vld [vmem:[#allocation3 + $0x168] sm:$0xff]
    %v866 = vld [vmem:[#allocation3 + $0x170] sm:$0xff]
    %v867 = vld [vmem:[#allocation3 + $0x178] sm:$0xff]
    %v868 = vld [vmem:[#allocation3 + $0x180] sm:$0xff]
    %v869 = vld [vmem:[#allocation3 + $0x188] sm:$0xff]
    %v870 = vld [vmem:[#allocation3 + $0x190] sm:$0xff]
    %v871 = vld [vmem:[#allocation3 + $0x198] sm:$0xff]
    %v872 = vld [vmem:[#allocation3 + $0x1a0] sm:$0xff]
    %v873 = vld [vmem:[#allocation3 + $0x1a8] sm:$0xff]
    %v874 = vld [vmem:[#allocation3 + $0x1b0] sm:$0xff]
    %v875 = vld [vmem:[#allocation3 + $0x1b8] sm:$0xff]
    %v876 = vld [vmem:[#allocation3 + $0x1c0] sm:$0xff]
    %v877 = vld [vmem:[#allocation3 + $0x1c8] sm:$0xff]
    %v878 = vld [vmem:[#allocation3 + $0x1d0] sm:$0xff]
    %v879 = vld [vmem:[#allocation3 + $0x1d8] sm:$0xff]
    %v880 = vld [vmem:[#allocation3 + $0x1e0] sm:$0xff]
    %v881 = vld [vmem:[#allocation3 + $0x1e8] sm:$0xff]
    %v882 = vld [vmem:[#allocation3 + $0x1f0] sm:$0xff]
    %v883 = vld [vmem:[#allocation3 + $0x1f8] sm:$0xff]
    %884 = vmatpush.msra.mxu0 %v880
    %885 = vmatpush.msra.mxu0 %v876
    %886 = vmatpush.msra.mxu0 %v872
    %887 = vmatpush.msra.mxu0 %v868
    %888 = vmatpush.msra.mxu0 %v864
    %889 = vmatpush.msra.mxu0 %v860
    %890 = vmatpush.msra.mxu0 %v856
    %891 = vmatpush.msra.mxu0 %v852
    %892 = vmatpush.msra.mxu0 %v848
    %893 = vmatpush.msra.mxu0 %v844
    %894 = vmatpush.msra.mxu0 %v840
    %895 = vmatpush.msra.mxu0 %v836
    %896 = vmatpush.msra.mxu0 %v832
    %897 = vmatpush.msra.mxu0 %v828
    %898 = vmatpush.msra.mxu0 %v824
    %899 = vmatpush.msra.mxu0 %v820
    %900 = vmatmul.f32.gmra.mxu0 %v463
    %v901 = vpop.f32.mrf.mxu0
    %v902 = vadd.f32 0.0, %v901
    %903 = vdwg.mxu0
    %904 = vmatpush.msra.mxu0 %v881
    %905 = vmatpush.msra.mxu0 %v877
    %906 = vmatpush.msra.mxu0 %v873
    %907 = vmatpush.msra.mxu0 %v869
    %908 = vmatpush.msra.mxu0 %v865
    %909 = vmatpush.msra.mxu0 %v861
    %910 = vmatpush.msra.mxu0 %v857
    %911 = vmatpush.msra.mxu0 %v853
    %912 = vmatpush.msra.mxu0 %v849
    %913 = vmatpush.msra.mxu0 %v845
    %914 = vmatpush.msra.mxu0 %v841
    %915 = vmatpush.msra.mxu0 %v837
    %916 = vmatpush.msra.mxu0 %v833
    %917 = vmatpush.msra.mxu0 %v829
    %918 = vmatpush.msra.mxu0 %v825
    %919 = vmatpush.msra.mxu0 %v821
    %920 = vmatmul.f32.gmra.mxu0 %v463
    %v921 = vpop.f32.mrf.mxu0
    %v922 = vadd.f32 0.0, %v921
    %923 = vdwg.mxu0
    %924 = vmatpush.msra.mxu0 %v882
    %925 = vmatpush.msra.mxu0 %v878
    %926 = vmatpush.msra.mxu0 %v874
    %927 = vmatpush.msra.mxu0 %v870
    %928 = vmatpush.msra.mxu0 %v866
    %929 = vmatpush.msra.mxu0 %v862
    %930 = vmatpush.msra.mxu0 %v858
    %931 = vmatpush.msra.mxu0 %v854
    %932 = vmatpush.msra.mxu0 %v850
    %933 = vmatpush.msra.mxu0 %v846
    %934 = vmatpush.msra.mxu0 %v842
    %935 = vmatpush.msra.mxu0 %v838
    %936 = vmatpush.msra.mxu0 %v834
    %937 = vmatpush.msra.mxu0 %v830
    %938 = vmatpush.msra.mxu0 %v826
    %939 = vmatpush.msra.mxu0 %v822
    %940 = vmatmul.f32.gmra.mxu0 %v463
    %v941 = vpop.f32.mrf.mxu0
    %v942 = vadd.f32 0.0, %v941
    %943 = vdwg.mxu0
    %944 = vmatpush.msra.mxu0 %v883
    %945 = vmatpush.msra.mxu0 %v879
    %946 = vmatpush.msra.mxu0 %v875
    %947 = vmatpush.msra.mxu0 %v871
    %948 = vmatpush.msra.mxu0 %v867
    %949 = vmatpush.msra.mxu0 %v863
    %950 = vmatpush.msra.mxu0 %v859
    %951 = vmatpush.msra.mxu0 %v855
    %952 = vmatpush.msra.mxu0 %v851
    %953 = vmatpush.msra.mxu0 %v847
    %954 = vmatpush.msra.mxu0 %v843
    %955 = vmatpush.msra.mxu0 %v839
    %956 = vmatpush.msra.mxu0 %v835
    %957 = vmatpush.msra.mxu0 %v831
    %958 = vmatpush.msra.mxu0 %v827
    %959 = vmatpush.msra.mxu0 %v823
    %960 = vmatmul.f32.gmra.mxu0 %v463
    %v961 = vpop.f32.mrf.mxu0
    %v962 = vadd.f32 0.0, %v961
    %963 = vdwg.mxu0
    %v968 = vrot.slane %v902, 6
    %v969 = vrot.slane %v922, 6
    %v970 = vrot.slane %v942, 6
    %v971 = vrot.slane %v962, 6
    %v976 = vadd.f32 %v169, %v968
    %v977 = vadd.f32 %v192, %v969
    %v978 = vadd.f32 %v215, %v970
    %v979 = vadd.f32 %v238, %v971
    %v980 = vxor.u32 %v976, 2147483648
    %v981 = vmul.f32 %v980, 1.442695
    %v982 = vpow.pop %v981
    %v983 = vadd.f32 %v982, 1.0
    %v984 = vrcp.pop %v983
    %v985 = vmul.f32 %v983, %v984
    %v986 = vsub.f32 1.0, %v985
    %v987 = vmul.f32 %v984, %v986
    %v988 = vadd.f32 %v984, %v987
    %vm989 = vweird.f32 %v983
    %vm990 = vweird.f32 %v984
    %vm991 = vmor %vm989, %vm990
    %v992 = vsel %vm991, %v984, %v988
    %v993 = vand.u32 2147483647, %v983
    %vm994 = vcmp.eq.f32.partialorder %v993, 8.507059e+37
    %v995 = vand.u32 %v983, 2147483648
    %v996 = vor.u32 1.1754944e-38, %v995
    %v997 = vsel %vm994, %v996, %v992
    %v998 = vmul.f32 1.0, %v997
    %v999 = vxor.u32 %v977, 2147483648
    %v1000 = vmul.f32 %v999, 1.442695
    %v1001 = vpow.pop %v1000
    %v1002 = vadd.f32 %v1001, 1.0
    %v1003 = vrcp.pop %v1002
    %v1004 = vmul.f32 %v1002, %v1003
    %v1005 = vsub.f32 1.0, %v1004
    %v1006 = vmul.f32 %v1003, %v1005
    %v1007 = vadd.f32 %v1003, %v1006
    %vm1008 = vweird.f32 %v1002
    %vm1009 = vweird.f32 %v1003
    %vm1010 = vmor %vm1008, %vm1009
    %v1011 = vsel %vm1010, %v1003, %v1007
    %v1012 = vand.u32 2147483647, %v1002
    %vm1013 = vcmp.eq.f32.partialorder %v1012, 8.507059e+37
    %v1014 = vand.u32 %v1002, 2147483648
    %v1015 = vor.u32 1.1754944e-38, %v1014
    %v1016 = vsel %vm1013, %v1015, %v1011
    %v1017 = vmul.f32 1.0, %v1016
    %v1018 = vtanh.pop %v978
    %v1019 = vxor.u32 %v979, 2147483648
    %v1020 = vmul.f32 %v1019, 1.442695
    %v1021 = vpow.pop %v1020
    %v1022 = vadd.f32 %v1021, 1.0
    %v1023 = vrcp.pop %v1022
    %v1024 = vmul.f32 %v1022, %v1023
    %v1025 = vsub.f32 1.0, %v1024
    %v1026 = vmul.f32 %v1023, %v1025
    %v1027 = vadd.f32 %v1023, %v1026
    %vm1028 = vweird.f32 %v1022
    %vm1029 = vweird.f32 %v1023
    %vm1030 = vmor %vm1028, %vm1029
    %v1031 = vsel %vm1030, %v1023, %v1027
    %v1032 = vand.u32 2147483647, %v1022
    %vm1033 = vcmp.eq.f32.partialorder %v1032, 8.507059e+37
    %v1034 = vand.u32 %v1022, 2147483648
    %v1035 = vor.u32 1.1754944e-38, %v1034
    %v1036 = vsel %vm1033, %v1035, %v1031
    %v1037 = vmul.f32 1.0, %v1036
    %v1039 = vrot.slane %v461, 6
    %v1041 = vmul.f32 %v1017, %v1039
    %v1042 = vmul.f32 %v998, %v1018
    %v1043 = vadd.f32 %v1041, %v1042
    %v1044 = vtanh.pop %v1043
    %v1045 = vmul.f32 %v1037, %v1044
    %v1046 = vld [vmem:[#allocation6] sm:$0xff]
    %v1047 = vld [vmem:[#allocation6 + $0x8] sm:$0xff]
    %v1048 = vld [vmem:[#allocation6 + $0x10] sm:$0xff]
    %v1049 = vld [vmem:[#allocation6 + $0x18] sm:$0xff]
    %v1050 = vld [vmem:[#allocation6 + $0x20] sm:$0xff]
    %v1051 = vld [vmem:[#allocation6 + $0x28] sm:$0xff]
    %v1052 = vld [vmem:[#allocation6 + $0x30] sm:$0xff]
    %v1053 = vld [vmem:[#allocation6 + $0x38] sm:$0xff]
    %v1054 = vld [vmem:[#allocation6 + $0x40] sm:$0xff]
    %v1055 = vld [vmem:[#allocation6 + $0x48] sm:$0xff]
    %v1056 = vld [vmem:[#allocation6 + $0x50] sm:$0xff]
    %v1057 = vld [vmem:[#allocation6 + $0x58] sm:$0xff]
    %v1058 = vld [vmem:[#allocation6 + $0x60] sm:$0xff]
    %v1059 = vld [vmem:[#allocation6 + $0x68] sm:$0xff]
    %v1060 = vld [vmem:[#allocation6 + $0x70] sm:$0xff]
    %v1061 = vld [vmem:[#allocation6 + $0x78] sm:$0xff]
    %v1062 = vld [vmem:[#allocation6 + $0x80] sm:$0xff]
    %v1063 = vld [vmem:[#allocation6 + $0x88] sm:$0xff]
    %v1064 = vld [vmem:[#allocation6 + $0x90] sm:$0xff]
    %v1065 = vld [vmem:[#allocation6 + $0x98] sm:$0xff]
    %v1066 = vld [vmem:[#allocation6 + $0xa0] sm:$0xff]
    %v1067 = vld [vmem:[#allocation6 + $0xa8] sm:$0xff]
    %v1068 = vld [vmem:[#allocation6 + $0xb0] sm:$0xff]
    %v1069 = vld [vmem:[#allocation6 + $0xb8] sm:$0xff]
    %v1070 = vld [vmem:[#allocation6 + $0xc0] sm:$0xff]
    %v1071 = vld [vmem:[#allocation6 + $0xc8] sm:$0xff]
    %v1072 = vld [vmem:[#allocation6 + $0xd0] sm:$0xff]
    %v1073 = vld [vmem:[#allocation6 + $0xd8] sm:$0xff]
    %v1074 = vld [vmem:[#allocation6 + $0xe0] sm:$0xff]
    %v1075 = vld [vmem:[#allocation6 + $0xe8] sm:$0xff]
    %v1076 = vld [vmem:[#allocation6 + $0xf0] sm:$0xff]
    %v1077 = vld [vmem:[#allocation6 + $0xf8] sm:$0xff]
    %v1078 = vld [vmem:[#allocation6 + $0x100] sm:$0xff]
    %v1079 = vld [vmem:[#allocation6 + $0x108] sm:$0xff]
    %v1080 = vld [vmem:[#allocation6 + $0x110] sm:$0xff]
    %v1081 = vld [vmem:[#allocation6 + $0x118] sm:$0xff]
    %v1082 = vld [vmem:[#allocation6 + $0x120] sm:$0xff]
    %v1083 = vld [vmem:[#allocation6 + $0x128] sm:$0xff]
    %v1084 = vld [vmem:[#allocation6 + $0x130] sm:$0xff]
    %v1085 = vld [vmem:[#allocation6 + $0x138] sm:$0xff]
    %v1086 = vld [vmem:[#allocation6 + $0x140] sm:$0xff]
    %v1087 = vld [vmem:[#allocation6 + $0x148] sm:$0xff]
    %v1088 = vld [vmem:[#allocation6 + $0x150] sm:$0xff]
    %v1089 = vld [vmem:[#allocation6 + $0x158] sm:$0xff]
    %v1090 = vld [vmem:[#allocation6 + $0x160] sm:$0xff]
    %v1091 = vld [vmem:[#allocation6 + $0x168] sm:$0xff]
    %v1092 = vld [vmem:[#allocation6 + $0x170] sm:$0xff]
    %v1093 = vld [vmem:[#allocation6 + $0x178] sm:$0xff]
    %v1094 = vld [vmem:[#allocation6 + $0x180] sm:$0xff]
    %v1095 = vld [vmem:[#allocation6 + $0x188] sm:$0xff]
    %v1096 = vld [vmem:[#allocation6 + $0x190] sm:$0xff]
    %v1097 = vld [vmem:[#allocation6 + $0x198] sm:$0xff]
    %v1098 = vld [vmem:[#allocation6 + $0x1a0] sm:$0xff]
    %v1099 = vld [vmem:[#allocation6 + $0x1a8] sm:$0xff]
    %v1100 = vld [vmem:[#allocation6 + $0x1b0] sm:$0xff]
    %v1101 = vld [vmem:[#allocation6 + $0x1b8] sm:$0xff]
    %v1102 = vld [vmem:[#allocation6 + $0x1c0] sm:$0xff]
    %v1103 = vld [vmem:[#allocation6 + $0x1c8] sm:$0xff]
    %v1104 = vld [vmem:[#allocation6 + $0x1d0] sm:$0xff]
    %v1105 = vld [vmem:[#allocation6 + $0x1d8] sm:$0xff]
    %v1106 = vld [vmem:[#allocation6 + $0x1e0] sm:$0xff]
    %v1107 = vld [vmem:[#allocation6 + $0x1e8] sm:$0xff]
    %v1108 = vld [vmem:[#allocation6 + $0x1f0] sm:$0xff]
    %v1109 = vld [vmem:[#allocation6 + $0x1f8] sm:$0xff]
    %v1110 = vld [vmem:[#allocation8] sm:$0xff]
    %v1111 = vld [vmem:[#allocation8 + $0x8] sm:$0xff]
    %v1112 = vld [vmem:[#allocation8 + $0x10] sm:$0xff]
    %v1113 = vld [vmem:[#allocation8 + $0x18] sm:$0xff]
    %v1114 = vld [vmem:[#allocation8 + $0x20] sm:$0xff]
    %v1115 = vld [vmem:[#allocation8 + $0x28] sm:$0xff]
    %v1116 = vld [vmem:[#allocation8 + $0x30] sm:$0xff]
    %v1117 = vld [vmem:[#allocation8 + $0x38] sm:$0xff]
    %v1118 = vld [vmem:[#allocation8 + $0x40] sm:$0xff]
    %v1119 = vld [vmem:[#allocation8 + $0x48] sm:$0xff]
    %v1120 = vld [vmem:[#allocation8 + $0x50] sm:$0xff]
    %v1121 = vld [vmem:[#allocation8 + $0x58] sm:$0xff]
    %v1122 = vld [vmem:[#allocation8 + $0x60] sm:$0xff]
    %v1123 = vld [vmem:[#allocation8 + $0x68] sm:$0xff]
    %v1124 = vld [vmem:[#allocation8 + $0x70] sm:$0xff]
    %v1125 = vld [vmem:[#allocation8 + $0x78] sm:$0xff]
    %v1126 = vld [vmem:[#allocation8 + $0x80] sm:$0xff]
    %v1127 = vld [vmem:[#allocation8 + $0x88] sm:$0xff]
    %v1128 = vld [vmem:[#allocation8 + $0x90] sm:$0xff]
    %v1129 = vld [vmem:[#allocation8 + $0x98] sm:$0xff]
    %v1130 = vld [vmem:[#allocation8 + $0xa0] sm:$0xff]
    %v1131 = vld [vmem:[#allocation8 + $0xa8] sm:$0xff]
    %v1132 = vld [vmem:[#allocation8 + $0xb0] sm:$0xff]
    %v1133 = vld [vmem:[#allocation8 + $0xb8] sm:$0xff]
    %v1134 = vld [vmem:[#allocation8 + $0xc0] sm:$0xff]
    %v1135 = vld [vmem:[#allocation8 + $0xc8] sm:$0xff]
    %v1136 = vld [vmem:[#allocation8 + $0xd0] sm:$0xff]
    %v1137 = vld [vmem:[#allocation8 + $0xd8] sm:$0xff]
    %v1138 = vld [vmem:[#allocation8 + $0xe0] sm:$0xff]
    %v1139 = vld [vmem:[#allocation8 + $0xe8] sm:$0xff]
    %v1140 = vld [vmem:[#allocation8 + $0xf0] sm:$0xff]
    %v1141 = vld [vmem:[#allocation8 + $0xf8] sm:$0xff]
    %v1142 = vld [vmem:[#allocation8 + $0x100] sm:$0xff]
    %v1143 = vld [vmem:[#allocation8 + $0x108] sm:$0xff]
    %v1144 = vld [vmem:[#allocation8 + $0x110] sm:$0xff]
    %v1145 = vld [vmem:[#allocation8 + $0x118] sm:$0xff]
    %v1146 = vld [vmem:[#allocation8 + $0x120] sm:$0xff]
    %v1147 = vld [vmem:[#allocation8 + $0x128] sm:$0xff]
    %v1148 = vld [vmem:[#allocation8 + $0x130] sm:$0xff]
    %v1149 = vld [vmem:[#allocation8 + $0x138] sm:$0xff]
    %v1150 = vld [vmem:[#allocation8 + $0x140] sm:$0xff]
    %v1151 = vld [vmem:[#allocation8 + $0x148] sm:$0xff]
    %v1152 = vld [vmem:[#allocation8 + $0x150] sm:$0xff]
    %v1153 = vld [vmem:[#allocation8 + $0x158] sm:$0xff]
    %v1154 = vld [vmem:[#allocation8 + $0x160] sm:$0xff]
    %v1155 = vld [vmem:[#allocation8 + $0x168] sm:$0xff]
    %v1156 = vld [vmem:[#allocation8 + $0x170] sm:$0xff]
    %v1157 = vld [vmem:[#allocation8 + $0x178] sm:$0xff]
    %v1158 = vld [vmem:[#allocation8 + $0x180] sm:$0xff]
    %v1159 = vld [vmem:[#allocation8 + $0x188] sm:$0xff]
    %v1160 = vld [vmem:[#allocation8 + $0x190] sm:$0xff]
    %v1161 = vld [vmem:[#allocation8 + $0x198] sm:$0xff]
    %v1162 = vld [vmem:[#allocation8 + $0x1a0] sm:$0xff]
    %v1163 = vld [vmem:[#allocation8 + $0x1a8] sm:$0xff]
    %v1164 = vld [vmem:[#allocation8 + $0x1b0] sm:$0xff]
    %v1165 = vld [vmem:[#allocation8 + $0x1b8] sm:$0xff]
    %v1166 = vld [vmem:[#allocation8 + $0x1c0] sm:$0xff]
    %v1167 = vld [vmem:[#allocation8 + $0x1c8] sm:$0xff]
    %v1168 = vld [vmem:[#allocation8 + $0x1d0] sm:$0xff]
    %v1169 = vld [vmem:[#allocation8 + $0x1d8] sm:$0xff]
    %v1170 = vld [vmem:[#allocation8 + $0x1e0] sm:$0xff]
    %v1171 = vld [vmem:[#allocation8 + $0x1e8] sm:$0xff]
    %v1172 = vld [vmem:[#allocation8 + $0x1f0] sm:$0xff]
    %v1173 = vld [vmem:[#allocation8 + $0x1f8] sm:$0xff]
    %1174 = vmatpush.msra.mxu0 %v1170
    %1175 = vmatpush.msra.mxu0 %v1166
    %1176 = vmatpush.msra.mxu0 %v1162
    %1177 = vmatpush.msra.mxu0 %v1158
    %1178 = vmatpush.msra.mxu0 %v1154
    %1179 = vmatpush.msra.mxu0 %v1150
    %1180 = vmatpush.msra.mxu0 %v1146
    %1181 = vmatpush.msra.mxu0 %v1142
    %1182 = vmatpush.msra.mxu0 %v1138
    %1183 = vmatpush.msra.mxu0 %v1134
    %1184 = vmatpush.msra.mxu0 %v1130
    %1185 = vmatpush.msra.mxu0 %v1126
    %1186 = vmatpush.msra.mxu0 %v1122
    %1187 = vmatpush.msra.mxu0 %v1118
    %1188 = vmatpush.msra.mxu0 %v1114
    %1189 = vmatpush.msra.mxu0 %v1110
    %1190 = vmatmul.f32.gmra.mxu0 %v818
    %v1191 = vpop.f32.mrf.mxu0
    %v1192 = vadd.f32 0.0, %v1191
    %1193 = vdwg.mxu0
    %1194 = vmatpush.msra.mxu0 %v1171
    %1195 = vmatpush.msra.mxu0 %v1167
    %1196 = vmatpush.msra.mxu0 %v1163
    %1197 = vmatpush.msra.mxu0 %v1159
    %1198 = vmatpush.msra.mxu0 %v1155
    %1199 = vmatpush.msra.mxu0 %v1151
    %1200 = vmatpush.msra.mxu0 %v1147
    %1201 = vmatpush.msra.mxu0 %v1143
    %1202 = vmatpush.msra.mxu0 %v1139
    %1203 = vmatpush.msra.mxu0 %v1135
    %1204 = vmatpush.msra.mxu0 %v1131
    %1205 = vmatpush.msra.mxu0 %v1127
    %1206 = vmatpush.msra.mxu0 %v1123
    %1207 = vmatpush.msra.mxu0 %v1119
    %1208 = vmatpush.msra.mxu0 %v1115
    %1209 = vmatpush.msra.mxu0 %v1111
    %1210 = vmatmul.f32.gmra.mxu0 %v818
    %v1211 = vpop.f32.mrf.mxu0
    %v1212 = vadd.f32 0.0, %v1211
    %1213 = vdwg.mxu0
    %1214 = vmatpush.msra.mxu0 %v1172
    %1215 = vmatpush.msra.mxu0 %v1168
    %1216 = vmatpush.msra.mxu0 %v1164
    %1217 = vmatpush.msra.mxu0 %v1160
    %1218 = vmatpush.msra.mxu0 %v1156
    %1219 = vmatpush.msra.mxu0 %v1152
    %1220 = vmatpush.msra.mxu0 %v1148
    %1221 = vmatpush.msra.mxu0 %v1144
    %1222 = vmatpush.msra.mxu0 %v1140
    %1223 = vmatpush.msra.mxu0 %v1136
    %1224 = vmatpush.msra.mxu0 %v1132
    %1225 = vmatpush.msra.mxu0 %v1128
    %1226 = vmatpush.msra.mxu0 %v1124
    %1227 = vmatpush.msra.mxu0 %v1120
    %1228 = vmatpush.msra.mxu0 %v1116
    %1229 = vmatpush.msra.mxu0 %v1112
    %1230 = vmatmul.f32.gmra.mxu0 %v818
    %v1231 = vpop.f32.mrf.mxu0
    %v1232 = vadd.f32 0.0, %v1231
    %1233 = vdwg.mxu0
    %1234 = vmatpush.msra.mxu0 %v1173
    %1235 = vmatpush.msra.mxu0 %v1169
    %1236 = vmatpush.msra.mxu0 %v1165
    %1237 = vmatpush.msra.mxu0 %v1161
    %1238 = vmatpush.msra.mxu0 %v1157
    %1239 = vmatpush.msra.mxu0 %v1153
    %1240 = vmatpush.msra.mxu0 %v1149
    %1241 = vmatpush.msra.mxu0 %v1145
    %1242 = vmatpush.msra.mxu0 %v1141
    %1243 = vmatpush.msra.mxu0 %v1137
    %1244 = vmatpush.msra.mxu0 %v1133
    %1245 = vmatpush.msra.mxu0 %v1129
    %1246 = vmatpush.msra.mxu0 %v1125
    %1247 = vmatpush.msra.mxu0 %v1121
    %1248 = vmatpush.msra.mxu0 %v1117
    %1249 = vmatpush.msra.mxu0 %v1113
    %1250 = vmatmul.f32.gmra.mxu0 %v818
    %v1251 = vpop.f32.mrf.mxu0
    %v1252 = vadd.f32 0.0, %v1251
    %1253 = vdwg.mxu0
    %v1255 = vrot.slane %v1045, 2
    %1257 = vmatpush.msra.mxu0 %v1106
    %1258 = vmatpush.msra.mxu0 %v1102
    %1259 = vmatpush.msra.mxu0 %v1098
    %1260 = vmatpush.msra.mxu0 %v1094
    %1261 = vmatpush.msra.mxu0 %v1090
    %1262 = vmatpush.msra.mxu0 %v1086
    %1263 = vmatpush.msra.mxu0 %v1082
    %1264 = vmatpush.msra.mxu0 %v1078
    %1265 = vmatpush.msra.mxu0 %v1074
    %1266 = vmatpush.msra.mxu0 %v1070
    %1267 = vmatpush.msra.mxu0 %v1066
    %1268 = vmatpush.msra.mxu0 %v1062
    %1269 = vmatpush.msra.mxu0 %v1058
    %1270 = vmatpush.msra.mxu0 %v1054
    %1271 = vmatpush.msra.mxu0 %v1050
    %1272 = vmatpush.msra.mxu0 %v1046
    %1273 = vmatmul.f32.gmra.mxu0 %v1255
    %v1274 = vpop.f32.mrf.mxu0
    %v1275 = vadd.f32 %v1192, %v1274
    %1276 = vdwg.mxu0
    %1277 = vmatpush.msra.mxu0 %v1107
    %1278 = vmatpush.msra.mxu0 %v1103
    %1279 = vmatpush.msra.mxu0 %v1099
    %1280 = vmatpush.msra.mxu0 %v1095
    %1281 = vmatpush.msra.mxu0 %v1091
    %1282 = vmatpush.msra.mxu0 %v1087
    %1283 = vmatpush.msra.mxu0 %v1083
    %1284 = vmatpush.msra.mxu0 %v1079
    %1285 = vmatpush.msra.mxu0 %v1075
    %1286 = vmatpush.msra.mxu0 %v1071
    %1287 = vmatpush.msra.mxu0 %v1067
    %1288 = vmatpush.msra.mxu0 %v1063
    %1289 = vmatpush.msra.mxu0 %v1059
    %1290 = vmatpush.msra.mxu0 %v1055
    %1291 = vmatpush.msra.mxu0 %v1051
    %1292 = vmatpush.msra.mxu0 %v1047
    %1293 = vmatmul.f32.gmra.mxu0 %v1255
    %v1294 = vpop.f32.mrf.mxu0
    %v1295 = vadd.f32 %v1212, %v1294
    %1296 = vdwg.mxu0
    %1297 = vmatpush.msra.mxu0 %v1108
    %1298 = vmatpush.msra.mxu0 %v1104
    %1299 = vmatpush.msra.mxu0 %v1100
    %1300 = vmatpush.msra.mxu0 %v1096
    %1301 = vmatpush.msra.mxu0 %v1092
    %1302 = vmatpush.msra.mxu0 %v1088
    %1303 = vmatpush.msra.mxu0 %v1084
    %1304 = vmatpush.msra.mxu0 %v1080
    %1305 = vmatpush.msra.mxu0 %v1076
    %1306 = vmatpush.msra.mxu0 %v1072
    %1307 = vmatpush.msra.mxu0 %v1068
    %1308 = vmatpush.msra.mxu0 %v1064
    %1309 = vmatpush.msra.mxu0 %v1060
    %1310 = vmatpush.msra.mxu0 %v1056
    %1311 = vmatpush.msra.mxu0 %v1052
    %1312 = vmatpush.msra.mxu0 %v1048
    %1313 = vmatmul.f32.gmra.mxu0 %v1255
    %v1314 = vpop.f32.mrf.mxu0
    %v1315 = vadd.f32 %v1232, %v1314
    %1316 = vdwg.mxu0
    %1317 = vmatpush.msra.mxu0 %v1109
    %1318 = vmatpush.msra.mxu0 %v1105
    %1319 = vmatpush.msra.mxu0 %v1101
    %1320 = vmatpush.msra.mxu0 %v1097
    %1321 = vmatpush.msra.mxu0 %v1093
    %1322 = vmatpush.msra.mxu0 %v1089
    %1323 = vmatpush.msra.mxu0 %v1085
    %1324 = vmatpush.msra.mxu0 %v1081
    %1325 = vmatpush.msra.mxu0 %v1077
    %1326 = vmatpush.msra.mxu0 %v1073
    %1327 = vmatpush.msra.mxu0 %v1069
    %1328 = vmatpush.msra.mxu0 %v1065
    %1329 = vmatpush.msra.mxu0 %v1061
    %1330 = vmatpush.msra.mxu0 %v1057
    %1331 = vmatpush.msra.mxu0 %v1053
    %1332 = vmatpush.msra.mxu0 %v1049
    %1333 = vmatmul.f32.gmra.mxu0 %v1255
    %v1334 = vpop.f32.mrf.mxu0
    %v1335 = vadd.f32 %v1252, %v1334
    %1336 = vdwg.mxu0
    %v1337 = vadd.f32 %v1275, %v245
    %v1338 = vadd.f32 %v1295, %v246
    %v1339 = vadd.f32 %v1315, %v247
    %v1340 = vadd.f32 %v1335, %v248
    %v1341 = vxor.u32 %v1337, 2147483648
    %v1342 = vmul.f32 %v1341, 1.442695
    %v1343 = vpow.pop %v1342
    %v1344 = vadd.f32 %v1343, 1.0
    %v1345 = vrcp.pop %v1344
    %v1346 = vmul.f32 %v1344, %v1345
    %v1347 = vsub.f32 1.0, %v1346
    %v1348 = vmul.f32 %v1345, %v1347
    %v1349 = vadd.f32 %v1345, %v1348
    %vm1350 = vweird.f32 %v1344
    %vm1351 = vweird.f32 %v1345
    %vm1352 = vmor %vm1350, %vm1351
    %v1353 = vsel %vm1352, %v1345, %v1349
    %v1354 = vand.u32 2147483647, %v1344
    %vm1355 = vcmp.eq.f32.partialorder %v1354, 8.507059e+37
    %v1356 = vand.u32 %v1344, 2147483648
    %v1357 = vor.u32 1.1754944e-38, %v1356
    %v1358 = vsel %vm1355, %v1357, %v1353
    %v1359 = vmul.f32 1.0, %v1358
    %v1360 = vxor.u32 %v1338, 2147483648
    %v1361 = vmul.f32 %v1360, 1.442695
    %v1362 = vpow.pop %v1361
    %v1363 = vadd.f32 %v1362, 1.0
    %v1364 = vrcp.pop %v1363
    %v1365 = vmul.f32 %v1363, %v1364
    %v1366 = vsub.f32 1.0, %v1365
    %v1367 = vmul.f32 %v1364, %v1366
    %v1368 = vadd.f32 %v1364, %v1367
    %vm1369 = vweird.f32 %v1363
    %vm1370 = vweird.f32 %v1364
    %vm1371 = vmor %vm1369, %vm1370
    %v1372 = vsel %vm1371, %v1364, %v1368
    %v1373 = vand.u32 2147483647, %v1363
    %vm1374 = vcmp.eq.f32.partialorder %v1373, 8.507059e+37
    %v1375 = vand.u32 %v1363, 2147483648
    %v1376 = vor.u32 1.1754944e-38, %v1375
    %v1377 = vsel %vm1374, %v1376, %v1372
    %v1378 = vmul.f32 1.0, %v1377
    %v1379 = vtanh.pop %v1339
    %v1380 = vxor.u32 %v1340, 2147483648
    %v1381 = vmul.f32 %v1380, 1.442695
    %v1382 = vpow.pop %v1381
    %v1383 = vadd.f32 %v1382, 1.0
    %v1384 = vrcp.pop %v1383
    %v1385 = vmul.f32 %v1383, %v1384
    %v1386 = vsub.f32 1.0, %v1385
    %v1387 = vmul.f32 %v1384, %v1386
    %v1388 = vadd.f32 %v1384, %v1387
    %vm1389 = vweird.f32 %v1383
    %vm1390 = vweird.f32 %v1384
    %vm1391 = vmor %vm1389, %vm1390
    %v1392 = vsel %vm1391, %v1384, %v1388
    %v1393 = vand.u32 2147483647, %v1383
    %vm1394 = vcmp.eq.f32.partialorder %v1393, 8.507059e+37
    %v1395 = vand.u32 %v1383, 2147483648
    %v1396 = vor.u32 1.1754944e-38, %v1395
    %v1397 = vsel %vm1394, %v1396, %v1392
    %v1398 = vmul.f32 1.0, %v1397
    %v1399 = vmul.f32 %v1378, %v816
    %v1400 = vmul.f32 %v1359, %v1379
    %v1401 = vadd.f32 %v1399, %v1400
    %v1402 = vtanh.pop %v1401
    %v1403 = vmul.f32 %v1398, %v1402
    %1404 = vst [vmem:[#allocation2 + $0x2] sm:$0x3] %v1403
    %v1405 = vld [vmem:[#allocation3] sm:$0xff]
    %v1406 = vld [vmem:[#allocation3 + $0x8] sm:$0xff]
    %v1407 = vld [vmem:[#allocation3 + $0x10] sm:$0xff]
    %v1408 = vld [vmem:[#allocation3 + $0x18] sm:$0xff]
    %v1409 = vld [vmem:[#allocation3 + $0x20] sm:$0xff]
    %v1410 = vld [vmem:[#allocation3 + $0x28] sm:$0xff]
    %v1411 = vld [vmem:[#allocation3 + $0x30] sm:$0xff]
    %v1412 = vld [vmem:[#allocation3 + $0x38] sm:$0xff]
    %v1413 = vld [vmem:[#allocation3 + $0x40] sm:$0xff]
    %v1414 = vld [vmem:[#allocation3 + $0x48] sm:$0xff]
    %v1415 = vld [vmem:[#allocation3 + $0x50] sm:$0xff]
    %v1416 = vld [vmem:[#allocation3 + $0x58] sm:$0xff]
    %v1417 = vld [vmem:[#allocation3 + $0x60] sm:$0xff]
    %v1418 = vld [vmem:[#allocation3 + $0x68] sm:$0xff]
    %v1419 = vld [vmem:[#allocation3 + $0x70] sm:$0xff]
    %v1420 = vld [vmem:[#allocation3 + $0x78] sm:$0xff]
    %v1421 = vld [vmem:[#allocation3 + $0x80] sm:$0xff]
    %v1422 = vld [vmem:[#allocation3 + $0x88] sm:$0xff]
    %v1423 = vld [vmem:[#allocation3 + $0x90] sm:$0xff]
    %v1424 = vld [vmem:[#allocation3 + $0x98] sm:$0xff]
    %v1425 = vld [vmem:[#allocation3 + $0xa0] sm:$0xff]
    %v1426 = vld [vmem:[#allocation3 + $0xa8] sm:$0xff]
    %v1427 = vld [vmem:[#allocation3 + $0xb0] sm:$0xff]
    %v1428 = vld [vmem:[#allocation3 + $0xb8] sm:$0xff]
    %v1429 = vld [vmem:[#allocation3 + $0xc0] sm:$0xff]
    %v1430 = vld [vmem:[#allocation3 + $0xc8] sm:$0xff]
    %v1431 = vld [vmem:[#allocation3 + $0xd0] sm:$0xff]
    %v1432 = vld [vmem:[#allocation3 + $0xd8] sm:$0xff]
    %v1433 = vld [vmem:[#allocation3 + $0xe0] sm:$0xff]
    %v1434 = vld [vmem:[#allocation3 + $0xe8] sm:$0xff]
    %v1435 = vld [vmem:[#allocation3 + $0xf0] sm:$0xff]
    %v1436 = vld [vmem:[#allocation3 + $0xf8] sm:$0xff]
    %v1437 = vld [vmem:[#allocation3 + $0x100] sm:$0xff]
    %v1438 = vld [vmem:[#allocation3 + $0x108] sm:$0xff]
    %v1439 = vld [vmem:[#allocation3 + $0x110] sm:$0xff]
    %v1440 = vld [vmem:[#allocation3 + $0x118] sm:$0xff]
    %v1441 = vld [vmem:[#allocation3 + $0x120] sm:$0xff]
    %v1442 = vld [vmem:[#allocation3 + $0x128] sm:$0xff]
    %v1443 = vld [vmem:[#allocation3 + $0x130] sm:$0xff]
    %v1444 = vld [vmem:[#allocation3 + $0x138] sm:$0xff]
    %v1445 = vld [vmem:[#allocation3 + $0x140] sm:$0xff]
    %v1446 = vld [vmem:[#allocation3 + $0x148] sm:$0xff]
    %v1447 = vld [vmem:[#allocation3 + $0x150] sm:$0xff]
    %v1448 = vld [vmem:[#allocation3 + $0x158] sm:$0xff]
    %v1449 = vld [vmem:[#allocation3 + $0x160] sm:$0xff]
    %v1450 = vld [vmem:[#allocation3 + $0x168] sm:$0xff]
    %v1451 = vld [vmem:[#allocation3 + $0x170] sm:$0xff]
    %v1452 = vld [vmem:[#allocation3 + $0x178] sm:$0xff]
    %v1453 = vld [vmem:[#allocation3 + $0x180] sm:$0xff]
    %v1454 = vld [vmem:[#allocation3 + $0x188] sm:$0xff]
    %v1455 = vld [vmem:[#allocation3 + $0x190] sm:$0xff]
    %v1456 = vld [vmem:[#allocation3 + $0x198] sm:$0xff]
    %v1457 = vld [vmem:[#allocation3 + $0x1a0] sm:$0xff]
    %v1458 = vld [vmem:[#allocation3 + $0x1a8] sm:$0xff]
    %v1459 = vld [vmem:[#allocation3 + $0x1b0] sm:$0xff]
    %v1460 = vld [vmem:[#allocation3 + $0x1b8] sm:$0xff]
    %v1461 = vld [vmem:[#allocation3 + $0x1c0] sm:$0xff]
    %v1462 = vld [vmem:[#allocation3 + $0x1c8] sm:$0xff]
    %v1463 = vld [vmem:[#allocation3 + $0x1d0] sm:$0xff]
    %v1464 = vld [vmem:[#allocation3 + $0x1d8] sm:$0xff]
    %v1465 = vld [vmem:[#allocation3 + $0x1e0] sm:$0xff]
    %v1466 = vld [vmem:[#allocation3 + $0x1e8] sm:$0xff]
    %v1467 = vld [vmem:[#allocation3 + $0x1f0] sm:$0xff]
    %v1468 = vld [vmem:[#allocation3 + $0x1f8] sm:$0xff]
    %1469 = vmatpush.msra.mxu0 %v1465
    %1470 = vmatpush.msra.mxu0 %v1461
    %1471 = vmatpush.msra.mxu0 %v1457
    %1472 = vmatpush.msra.mxu0 %v1453
    %1473 = vmatpush.msra.mxu0 %v1449
    %1474 = vmatpush.msra.mxu0 %v1445
    %1475 = vmatpush.msra.mxu0 %v1441
    %1476 = vmatpush.msra.mxu0 %v1437
    %1477 = vmatpush.msra.mxu0 %v1433
    %1478 = vmatpush.msra.mxu0 %v1429
    %1479 = vmatpush.msra.mxu0 %v1425
    %1480 = vmatpush.msra.mxu0 %v1421
    %1481 = vmatpush.msra.mxu0 %v1417
    %1482 = vmatpush.msra.mxu0 %v1413
    %1483 = vmatpush.msra.mxu0 %v1409
    %1484 = vmatpush.msra.mxu0 %v1405
    %1485 = vmatmul.f32.gmra.mxu0 %v1255
    %v1486 = vpop.f32.mrf.mxu0
    %v1487 = vadd.f32 0.0, %v1486
    %1488 = vdwg.mxu0
    %1489 = vmatpush.msra.mxu0 %v1466
    %1490 = vmatpush.msra.mxu0 %v1462
    %1491 = vmatpush.msra.mxu0 %v1458
    %1492 = vmatpush.msra.mxu0 %v1454
    %1493 = vmatpush.msra.mxu0 %v1450
    %1494 = vmatpush.msra.mxu0 %v1446
    %1495 = vmatpush.msra.mxu0 %v1442
    %1496 = vmatpush.msra.mxu0 %v1438
    %1497 = vmatpush.msra.mxu0 %v1434
    %1498 = vmatpush.msra.mxu0 %v1430
    %1499 = vmatpush.msra.mxu0 %v1426
    %1500 = vmatpush.msra.mxu0 %v1422
    %1501 = vmatpush.msra.mxu0 %v1418
    %1502 = vmatpush.msra.mxu0 %v1414
    %1503 = vmatpush.msra.mxu0 %v1410
    %1504 = vmatpush.msra.mxu0 %v1406
    %1505 = vmatmul.f32.gmra.mxu0 %v1255
    %v1506 = vpop.f32.mrf.mxu0
    %v1507 = vadd.f32 0.0, %v1506
    %1508 = vdwg.mxu0
    %1509 = vmatpush.msra.mxu0 %v1467
    %1510 = vmatpush.msra.mxu0 %v1463
    %1511 = vmatpush.msra.mxu0 %v1459
    %1512 = vmatpush.msra.mxu0 %v1455
    %1513 = vmatpush.msra.mxu0 %v1451
    %1514 = vmatpush.msra.mxu0 %v1447
    %1515 = vmatpush.msra.mxu0 %v1443
    %1516 = vmatpush.msra.mxu0 %v1439
    %1517 = vmatpush.msra.mxu0 %v1435
    %1518 = vmatpush.msra.mxu0 %v1431
    %1519 = vmatpush.msra.mxu0 %v1427
    %1520 = vmatpush.msra.mxu0 %v1423
    %1521 = vmatpush.msra.mxu0 %v1419
    %1522 = vmatpush.msra.mxu0 %v1415
    %1523 = vmatpush.msra.mxu0 %v1411
    %1524 = vmatpush.msra.mxu0 %v1407
    %1525 = vmatmul.f32.gmra.mxu0 %v1255
    %v1526 = vpop.f32.mrf.mxu0
    %v1527 = vadd.f32 0.0, %v1526
    %1528 = vdwg.mxu0
    %1529 = vmatpush.msra.mxu0 %v1468
    %1530 = vmatpush.msra.mxu0 %v1464
    %1531 = vmatpush.msra.mxu0 %v1460
    %1532 = vmatpush.msra.mxu0 %v1456
    %1533 = vmatpush.msra.mxu0 %v1452
    %1534 = vmatpush.msra.mxu0 %v1448
    %1535 = vmatpush.msra.mxu0 %v1444
    %1536 = vmatpush.msra.mxu0 %v1440
    %1537 = vmatpush.msra.mxu0 %v1436
    %1538 = vmatpush.msra.mxu0 %v1432
    %1539 = vmatpush.msra.mxu0 %v1428
    %1540 = vmatpush.msra.mxu0 %v1424
    %1541 = vmatpush.msra.mxu0 %v1420
    %1542 = vmatpush.msra.mxu0 %v1416
    %1543 = vmatpush.msra.mxu0 %v1412
    %1544 = vmatpush.msra.mxu0 %v1408
    %1545 = vmatmul.f32.gmra.mxu0 %v1255
    %v1546 = vpop.f32.mrf.mxu0
    %v1547 = vadd.f32 0.0, %v1546
    %1548 = vdwg.mxu0
    %v1553 = vrot.slane %v1487, 4
    %v1554 = vrot.slane %v1507, 4
    %v1555 = vrot.slane %v1527, 4
    %v1556 = vrot.slane %v1547, 4
    %v1561 = vadd.f32 %v169, %v1553
    %v1562 = vadd.f32 %v192, %v1554
    %v1563 = vadd.f32 %v215, %v1555
    %v1564 = vadd.f32 %v238, %v1556
    %v1565 = vxor.u32 %v1561, 2147483648
    %v1566 = vmul.f32 %v1565, 1.442695
    %v1567 = vpow.pop %v1566
    %v1568 = vadd.f32 %v1567, 1.0
    %v1569 = vrcp.pop %v1568
    %v1570 = vmul.f32 %v1568, %v1569
    %v1571 = vsub.f32 1.0, %v1570
    %v1572 = vmul.f32 %v1569, %v1571
    %v1573 = vadd.f32 %v1569, %v1572
    %vm1574 = vweird.f32 %v1568
    %vm1575 = vweird.f32 %v1569
    %vm1576 = vmor %vm1574, %vm1575
    %v1577 = vsel %vm1576, %v1569, %v1573
    %v1578 = vand.u32 2147483647, %v1568
    %vm1579 = vcmp.eq.f32.partialorder %v1578, 8.507059e+37
    %v1580 = vand.u32 %v1568, 2147483648
    %v1581 = vor.u32 1.1754944e-38, %v1580
    %v1582 = vsel %vm1579, %v1581, %v1577
    %v1583 = vmul.f32 1.0, %v1582
    %v1584 = vxor.u32 %v1562, 2147483648
    %v1585 = vmul.f32 %v1584, 1.442695
    %v1586 = vpow.pop %v1585
    %v1587 = vadd.f32 %v1586, 1.0
    %v1588 = vrcp.pop %v1587
    %v1589 = vmul.f32 %v1587, %v1588
    %v1590 = vsub.f32 1.0, %v1589
    %v1591 = vmul.f32 %v1588, %v1590
    %v1592 = vadd.f32 %v1588, %v1591
    %vm1593 = vweird.f32 %v1587
    %vm1594 = vweird.f32 %v1588
    %vm1595 = vmor %vm1593, %vm1594
    %v1596 = vsel %vm1595, %v1588, %v1592
    %v1597 = vand.u32 2147483647, %v1587
    %vm1598 = vcmp.eq.f32.partialorder %v1597, 8.507059e+37
    %v1599 = vand.u32 %v1587, 2147483648
    %v1600 = vor.u32 1.1754944e-38, %v1599
    %v1601 = vsel %vm1598, %v1600, %v1596
    %v1602 = vmul.f32 1.0, %v1601
    %v1603 = vtanh.pop %v1563
    %v1604 = vxor.u32 %v1564, 2147483648
    %v1605 = vmul.f32 %v1604, 1.442695
    %v1606 = vpow.pop %v1605
    %v1607 = vadd.f32 %v1606, 1.0
    %v1608 = vrcp.pop %v1607
    %v1609 = vmul.f32 %v1607, %v1608
    %v1610 = vsub.f32 1.0, %v1609
    %v1611 = vmul.f32 %v1608, %v1610
    %v1612 = vadd.f32 %v1608, %v1611
    %vm1613 = vweird.f32 %v1607
    %vm1614 = vweird.f32 %v1608
    %vm1615 = vmor %vm1613, %vm1614
    %v1616 = vsel %vm1615, %v1608, %v1612
    %v1617 = vand.u32 2147483647, %v1607
    %vm1618 = vcmp.eq.f32.partialorder %v1617, 8.507059e+37
    %v1619 = vand.u32 %v1607, 2147483648
    %v1620 = vor.u32 1.1754944e-38, %v1619
    %v1621 = vsel %vm1618, %v1620, %v1616
    %v1622 = vmul.f32 1.0, %v1621
    %v1624 = vrot.slane %v1043, 6
    %v1626 = vmul.f32 %v1602, %v1624
    %v1627 = vmul.f32 %v1583, %v1603
    %v1628 = vadd.f32 %v1626, %v1627
    %v1629 = vtanh.pop %v1628
    %v1630 = vmul.f32 %v1622, %v1629
    %v1631 = vld [vmem:[#allocation6] sm:$0xff]
    %v1632 = vld [vmem:[#allocation6 + $0x8] sm:$0xff]
    %v1633 = vld [vmem:[#allocation6 + $0x10] sm:$0xff]
    %v1634 = vld [vmem:[#allocation6 + $0x18] sm:$0xff]
    %v1635 = vld [vmem:[#allocation6 + $0x20] sm:$0xff]
    %v1636 = vld [vmem:[#allocation6 + $0x28] sm:$0xff]
    %v1637 = vld [vmem:[#allocation6 + $0x30] sm:$0xff]
    %v1638 = vld [vmem:[#allocation6 + $0x38] sm:$0xff]
    %v1639 = vld [vmem:[#allocation6 + $0x40] sm:$0xff]
    %v1640 = vld [vmem:[#allocation6 + $0x48] sm:$0xff]
    %v1641 = vld [vmem:[#allocation6 + $0x50] sm:$0xff]
    %v1642 = vld [vmem:[#allocation6 + $0x58] sm:$0xff]
    %v1643 = vld [vmem:[#allocation6 + $0x60] sm:$0xff]
    %v1644 = vld [vmem:[#allocation6 + $0x68] sm:$0xff]
    %v1645 = vld [vmem:[#allocation6 + $0x70] sm:$0xff]
    %v1646 = vld [vmem:[#allocation6 + $0x78] sm:$0xff]
    %v1647 = vld [vmem:[#allocation6 + $0x80] sm:$0xff]
    %v1648 = vld [vmem:[#allocation6 + $0x88] sm:$0xff]
    %v1649 = vld [vmem:[#allocation6 + $0x90] sm:$0xff]
    %v1650 = vld [vmem:[#allocation6 + $0x98] sm:$0xff]
    %v1651 = vld [vmem:[#allocation6 + $0xa0] sm:$0xff]
    %v1652 = vld [vmem:[#allocation6 + $0xa8] sm:$0xff]
    %v1653 = vld [vmem:[#allocation6 + $0xb0] sm:$0xff]
    %v1654 = vld [vmem:[#allocation6 + $0xb8] sm:$0xff]
    %v1655 = vld [vmem:[#allocation6 + $0xc0] sm:$0xff]
    %v1656 = vld [vmem:[#allocation6 + $0xc8] sm:$0xff]
    %v1657 = vld [vmem:[#allocation6 + $0xd0] sm:$0xff]
    %v1658 = vld [vmem:[#allocation6 + $0xd8] sm:$0xff]
    %v1659 = vld [vmem:[#allocation6 + $0xe0] sm:$0xff]
    %v1660 = vld [vmem:[#allocation6 + $0xe8] sm:$0xff]
    %v1661 = vld [vmem:[#allocation6 + $0xf0] sm:$0xff]
    %v1662 = vld [vmem:[#allocation6 + $0xf8] sm:$0xff]
    %v1663 = vld [vmem:[#allocation6 + $0x100] sm:$0xff]
    %v1664 = vld [vmem:[#allocation6 + $0x108] sm:$0xff]
    %v1665 = vld [vmem:[#allocation6 + $0x110] sm:$0xff]
    %v1666 = vld [vmem:[#allocation6 + $0x118] sm:$0xff]
    %v1667 = vld [vmem:[#allocation6 + $0x120] sm:$0xff]
    %v1668 = vld [vmem:[#allocation6 + $0x128] sm:$0xff]
    %v1669 = vld [vmem:[#allocation6 + $0x130] sm:$0xff]
    %v1670 = vld [vmem:[#allocation6 + $0x138] sm:$0xff]
    %v1671 = vld [vmem:[#allocation6 + $0x140] sm:$0xff]
    %v1672 = vld [vmem:[#allocation6 + $0x148] sm:$0xff]
    %v1673 = vld [vmem:[#allocation6 + $0x150] sm:$0xff]
    %v1674 = vld [vmem:[#allocation6 + $0x158] sm:$0xff]
    %v1675 = vld [vmem:[#allocation6 + $0x160] sm:$0xff]
    %v1676 = vld [vmem:[#allocation6 + $0x168] sm:$0xff]
    %v1677 = vld [vmem:[#allocation6 + $0x170] sm:$0xff]
    %v1678 = vld [vmem:[#allocation6 + $0x178] sm:$0xff]
    %v1679 = vld [vmem:[#allocation6 + $0x180] sm:$0xff]
    %v1680 = vld [vmem:[#allocation6 + $0x188] sm:$0xff]
    %v1681 = vld [vmem:[#allocation6 + $0x190] sm:$0xff]
    %v1682 = vld [vmem:[#allocation6 + $0x198] sm:$0xff]
    %v1683 = vld [vmem:[#allocation6 + $0x1a0] sm:$0xff]
    %v1684 = vld [vmem:[#allocation6 + $0x1a8] sm:$0xff]
    %v1685 = vld [vmem:[#allocation6 + $0x1b0] sm:$0xff]
    %v1686 = vld [vmem:[#allocation6 + $0x1b8] sm:$0xff]
    %v1687 = vld [vmem:[#allocation6 + $0x1c0] sm:$0xff]
    %v1688 = vld [vmem:[#allocation6 + $0x1c8] sm:$0xff]
    %v1689 = vld [vmem:[#allocation6 + $0x1d0] sm:$0xff]
    %v1690 = vld [vmem:[#allocation6 + $0x1d8] sm:$0xff]
    %v1691 = vld [vmem:[#allocation6 + $0x1e0] sm:$0xff]
    %v1692 = vld [vmem:[#allocation6 + $0x1e8] sm:$0xff]
    %v1693 = vld [vmem:[#allocation6 + $0x1f0] sm:$0xff]
    %v1694 = vld [vmem:[#allocation6 + $0x1f8] sm:$0xff]
    %v1695 = vld [vmem:[#allocation8] sm:$0xff]
    %v1696 = vld [vmem:[#allocation8 + $0x8] sm:$0xff]
    %v1697 = vld [vmem:[#allocation8 + $0x10] sm:$0xff]
    %v1698 = vld [vmem:[#allocation8 + $0x18] sm:$0xff]
    %v1699 = vld [vmem:[#allocation8 + $0x20] sm:$0xff]
    %v1700 = vld [vmem:[#allocation8 + $0x28] sm:$0xff]
    %v1701 = vld [vmem:[#allocation8 + $0x30] sm:$0xff]
    %v1702 = vld [vmem:[#allocation8 + $0x38] sm:$0xff]
    %v1703 = vld [vmem:[#allocation8 + $0x40] sm:$0xff]
    %v1704 = vld [vmem:[#allocation8 + $0x48] sm:$0xff]
    %v1705 = vld [vmem:[#allocation8 + $0x50] sm:$0xff]
    %v1706 = vld [vmem:[#allocation8 + $0x58] sm:$0xff]
    %v1707 = vld [vmem:[#allocation8 + $0x60] sm:$0xff]
    %v1708 = vld [vmem:[#allocation8 + $0x68] sm:$0xff]
    %v1709 = vld [vmem:[#allocation8 + $0x70] sm:$0xff]
    %v1710 = vld [vmem:[#allocation8 + $0x78] sm:$0xff]
    %v1711 = vld [vmem:[#allocation8 + $0x80] sm:$0xff]
    %v1712 = vld [vmem:[#allocation8 + $0x88] sm:$0xff]
    %v1713 = vld [vmem:[#allocation8 + $0x90] sm:$0xff]
    %v1714 = vld [vmem:[#allocation8 + $0x98] sm:$0xff]
    %v1715 = vld [vmem:[#allocation8 + $0xa0] sm:$0xff]
    %v1716 = vld [vmem:[#allocation8 + $0xa8] sm:$0xff]
    %v1717 = vld [vmem:[#allocation8 + $0xb0] sm:$0xff]
    %v1718 = vld [vmem:[#allocation8 + $0xb8] sm:$0xff]
    %v1719 = vld [vmem:[#allocation8 + $0xc0] sm:$0xff]
    %v1720 = vld [vmem:[#allocation8 + $0xc8] sm:$0xff]
    %v1721 = vld [vmem:[#allocation8 + $0xd0] sm:$0xff]
    %v1722 = vld [vmem:[#allocation8 + $0xd8] sm:$0xff]
    %v1723 = vld [vmem:[#allocation8 + $0xe0] sm:$0xff]
    %v1724 = vld [vmem:[#allocation8 + $0xe8] sm:$0xff]
    %v1725 = vld [vmem:[#allocation8 + $0xf0] sm:$0xff]
    %v1726 = vld [vmem:[#allocation8 + $0xf8] sm:$0xff]
    %v1727 = vld [vmem:[#allocation8 + $0x100] sm:$0xff]
    %v1728 = vld [vmem:[#allocation8 + $0x108] sm:$0xff]
    %v1729 = vld [vmem:[#allocation8 + $0x110] sm:$0xff]
    %v1730 = vld [vmem:[#allocation8 + $0x118] sm:$0xff]
    %v1731 = vld [vmem:[#allocation8 + $0x120] sm:$0xff]
    %v1732 = vld [vmem:[#allocation8 + $0x128] sm:$0xff]
    %v1733 = vld [vmem:[#allocation8 + $0x130] sm:$0xff]
    %v1734 = vld [vmem:[#allocation8 + $0x138] sm:$0xff]
    %v1735 = vld [vmem:[#allocation8 + $0x140] sm:$0xff]
    %v1736 = vld [vmem:[#allocation8 + $0x148] sm:$0xff]
    %v1737 = vld [vmem:[#allocation8 + $0x150] sm:$0xff]
    %v1738 = vld [vmem:[#allocation8 + $0x158] sm:$0xff]
    %v1739 = vld [vmem:[#allocation8 + $0x160] sm:$0xff]
    %v1740 = vld [vmem:[#allocation8 + $0x168] sm:$0xff]
    %v1741 = vld [vmem:[#allocation8 + $0x170] sm:$0xff]
    %v1742 = vld [vmem:[#allocation8 + $0x178] sm:$0xff]
    %v1743 = vld [vmem:[#allocation8 + $0x180] sm:$0xff]
    %v1744 = vld [vmem:[#allocation8 + $0x188] sm:$0xff]
    %v1745 = vld [vmem:[#allocation8 + $0x190] sm:$0xff]
    %v1746 = vld [vmem:[#allocation8 + $0x198] sm:$0xff]
    %v1747 = vld [vmem:[#allocation8 + $0x1a0] sm:$0xff]
    %v1748 = vld [vmem:[#allocation8 + $0x1a8] sm:$0xff]
    %v1749 = vld [vmem:[#allocation8 + $0x1b0] sm:$0xff]
    %v1750 = vld [vmem:[#allocation8 + $0x1b8] sm:$0xff]
    %v1751 = vld [vmem:[#allocation8 + $0x1c0] sm:$0xff]
    %v1752 = vld [vmem:[#allocation8 + $0x1c8] sm:$0xff]
    %v1753 = vld [vmem:[#allocation8 + $0x1d0] sm:$0xff]
    %v1754 = vld [vmem:[#allocation8 + $0x1d8] sm:$0xff]
    %v1755 = vld [vmem:[#allocation8 + $0x1e0] sm:$0xff]
    %v1756 = vld [vmem:[#allocation8 + $0x1e8] sm:$0xff]
    %v1757 = vld [vmem:[#allocation8 + $0x1f0] sm:$0xff]
    %v1758 = vld [vmem:[#allocation8 + $0x1f8] sm:$0xff]
    %1759 = vmatpush.msra.mxu0 %v1755
    %1760 = vmatpush.msra.mxu0 %v1751
    %1761 = vmatpush.msra.mxu0 %v1747
    %1762 = vmatpush.msra.mxu0 %v1743
    %1763 = vmatpush.msra.mxu0 %v1739
    %1764 = vmatpush.msra.mxu0 %v1735
    %1765 = vmatpush.msra.mxu0 %v1731
    %1766 = vmatpush.msra.mxu0 %v1727
    %1767 = vmatpush.msra.mxu0 %v1723
    %1768 = vmatpush.msra.mxu0 %v1719
    %1769 = vmatpush.msra.mxu0 %v1715
    %1770 = vmatpush.msra.mxu0 %v1711
    %1771 = vmatpush.msra.mxu0 %v1707
    %1772 = vmatpush.msra.mxu0 %v1703
    %1773 = vmatpush.msra.mxu0 %v1699
    %1774 = vmatpush.msra.mxu0 %v1695
    %1775 = vmatmul.f32.gmra.mxu0 %v1403
    %v1776 = vpop.f32.mrf.mxu0
    %v1777 = vadd.f32 0.0, %v1776
    %1778 = vdwg.mxu0
    %1779 = vmatpush.msra.mxu0 %v1756
    %1780 = vmatpush.msra.mxu0 %v1752
    %1781 = vmatpush.msra.mxu0 %v1748
    %1782 = vmatpush.msra.mxu0 %v1744
    %1783 = vmatpush.msra.mxu0 %v1740
    %1784 = vmatpush.msra.mxu0 %v1736
    %1785 = vmatpush.msra.mxu0 %v1732
    %1786 = vmatpush.msra.mxu0 %v1728
    %1787 = vmatpush.msra.mxu0 %v1724
    %1788 = vmatpush.msra.mxu0 %v1720
    %1789 = vmatpush.msra.mxu0 %v1716
    %1790 = vmatpush.msra.mxu0 %v1712
    %1791 = vmatpush.msra.mxu0 %v1708
    %1792 = vmatpush.msra.mxu0 %v1704
    %1793 = vmatpush.msra.mxu0 %v1700
    %1794 = vmatpush.msra.mxu0 %v1696
    %1795 = vmatmul.f32.gmra.mxu0 %v1403
    %v1796 = vpop.f32.mrf.mxu0
    %v1797 = vadd.f32 0.0, %v1796
    %1798 = vdwg.mxu0
    %1799 = vmatpush.msra.mxu0 %v1757
    %1800 = vmatpush.msra.mxu0 %v1753
    %1801 = vmatpush.msra.mxu0 %v1749
    %1802 = vmatpush.msra.mxu0 %v1745
    %1803 = vmatpush.msra.mxu0 %v1741
    %1804 = vmatpush.msra.mxu0 %v1737
    %1805 = vmatpush.msra.mxu0 %v1733
    %1806 = vmatpush.msra.mxu0 %v1729
    %1807 = vmatpush.msra.mxu0 %v1725
    %1808 = vmatpush.msra.mxu0 %v1721
    %1809 = vmatpush.msra.mxu0 %v1717
    %1810 = vmatpush.msra.mxu0 %v1713
    %1811 = vmatpush.msra.mxu0 %v1709
    %1812 = vmatpush.msra.mxu0 %v1705
    %1813 = vmatpush.msra.mxu0 %v1701
    %1814 = vmatpush.msra.mxu0 %v1697
    %1815 = vmatmul.f32.gmra.mxu0 %v1403
    %v1816 = vpop.f32.mrf.mxu0
    %v1817 = vadd.f32 0.0, %v1816
    %1818 = vdwg.mxu0
    %1819 = vmatpush.msra.mxu0 %v1758
    %1820 = vmatpush.msra.mxu0 %v1754
    %1821 = vmatpush.msra.mxu0 %v1750
    %1822 = vmatpush.msra.mxu0 %v1746
    %1823 = vmatpush.msra.mxu0 %v1742
    %1824 = vmatpush.msra.mxu0 %v1738
    %1825 = vmatpush.msra.mxu0 %v1734
    %1826 = vmatpush.msra.mxu0 %v1730
    %1827 = vmatpush.msra.mxu0 %v1726
    %1828 = vmatpush.msra.mxu0 %v1722
    %1829 = vmatpush.msra.mxu0 %v1718
    %1830 = vmatpush.msra.mxu0 %v1714
    %1831 = vmatpush.msra.mxu0 %v1710
    %1832 = vmatpush.msra.mxu0 %v1706
    %1833 = vmatpush.msra.mxu0 %v1702
    %1834 = vmatpush.msra.mxu0 %v1698
    %1835 = vmatmul.f32.gmra.mxu0 %v1403
    %v1836 = vpop.f32.mrf.mxu0
    %v1837 = vadd.f32 0.0, %v1836
    %1838 = vdwg.mxu0
    %v1840 = vrot.slane %v1630, 4
    %1842 = vmatpush.msra.mxu0 %v1691
    %1843 = vmatpush.msra.mxu0 %v1687
    %1844 = vmatpush.msra.mxu0 %v1683
    %1845 = vmatpush.msra.mxu0 %v1679
    %1846 = vmatpush.msra.mxu0 %v1675
    %1847 = vmatpush.msra.mxu0 %v1671
    %1848 = vmatpush.msra.mxu0 %v1667
    %1849 = vmatpush.msra.mxu0 %v1663
    %1850 = vmatpush.msra.mxu0 %v1659
    %1851 = vmatpush.msra.mxu0 %v1655
    %1852 = vmatpush.msra.mxu0 %v1651
    %1853 = vmatpush.msra.mxu0 %v1647
    %1854 = vmatpush.msra.mxu0 %v1643
    %1855 = vmatpush.msra.mxu0 %v1639
    %1856 = vmatpush.msra.mxu0 %v1635
    %1857 = vmatpush.msra.mxu0 %v1631
    %1858 = vmatmul.f32.gmra.mxu0 %v1840
    %v1859 = vpop.f32.mrf.mxu0
    %v1860 = vadd.f32 %v1777, %v1859
    %1861 = vdwg.mxu0
    %1862 = vmatpush.msra.mxu0 %v1692
    %1863 = vmatpush.msra.mxu0 %v1688
    %1864 = vmatpush.msra.mxu0 %v1684
    %1865 = vmatpush.msra.mxu0 %v1680
    %1866 = vmatpush.msra.mxu0 %v1676
    %1867 = vmatpush.msra.mxu0 %v1672
    %1868 = vmatpush.msra.mxu0 %v1668
    %1869 = vmatpush.msra.mxu0 %v1664
    %1870 = vmatpush.msra.mxu0 %v1660
    %1871 = vmatpush.msra.mxu0 %v1656
    %1872 = vmatpush.msra.mxu0 %v1652
    %1873 = vmatpush.msra.mxu0 %v1648
    %1874 = vmatpush.msra.mxu0 %v1644
    %1875 = vmatpush.msra.mxu0 %v1640
    %1876 = vmatpush.msra.mxu0 %v1636
    %1877 = vmatpush.msra.mxu0 %v1632
    %1878 = vmatmul.f32.gmra.mxu0 %v1840
    %v1879 = vpop.f32.mrf.mxu0
    %v1880 = vadd.f32 %v1797, %v1879
    %1881 = vdwg.mxu0
    %1882 = vmatpush.msra.mxu0 %v1693
    %1883 = vmatpush.msra.mxu0 %v1689
    %1884 = vmatpush.msra.mxu0 %v1685
    %1885 = vmatpush.msra.mxu0 %v1681
    %1886 = vmatpush.msra.mxu0 %v1677
    %1887 = vmatpush.msra.mxu0 %v1673
    %1888 = vmatpush.msra.mxu0 %v1669
    %1889 = vmatpush.msra.mxu0 %v1665
    %1890 = vmatpush.msra.mxu0 %v1661
    %1891 = vmatpush.msra.mxu0 %v1657
    %1892 = vmatpush.msra.mxu0 %v1653
    %1893 = vmatpush.msra.mxu0 %v1649
    %1894 = vmatpush.msra.mxu0 %v1645
    %1895 = vmatpush.msra.mxu0 %v1641
    %1896 = vmatpush.msra.mxu0 %v1637
    %1897 = vmatpush.msra.mxu0 %v1633
    %1898 = vmatmul.f32.gmra.mxu0 %v1840
    %v1899 = vpop.f32.mrf.mxu0
    %v1900 = vadd.f32 %v1817, %v1899
    %1901 = vdwg.mxu0
    %1902 = vmatpush.msra.mxu0 %v1694
    %1903 = vmatpush.msra.mxu0 %v1690
    %1904 = vmatpush.msra.mxu0 %v1686
    %1905 = vmatpush.msra.mxu0 %v1682
    %1906 = vmatpush.msra.mxu0 %v1678
    %1907 = vmatpush.msra.mxu0 %v1674
    %1908 = vmatpush.msra.mxu0 %v1670
    %1909 = vmatpush.msra.mxu0 %v1666
    %1910 = vmatpush.msra.mxu0 %v1662
    %1911 = vmatpush.msra.mxu0 %v1658
    %1912 = vmatpush.msra.mxu0 %v1654
    %1913 = vmatpush.msra.mxu0 %v1650
    %1914 = vmatpush.msra.mxu0 %v1646
    %1915 = vmatpush.msra.mxu0 %v1642
    %1916 = vmatpush.msra.mxu0 %v1638
    %1917 = vmatpush.msra.mxu0 %v1634
    %1918 = vmatmul.f32.gmra.mxu0 %v1840
    %v1919 = vpop.f32.mrf.mxu0
    %v1920 = vadd.f32 %v1837, %v1919
    %1921 = vdwg.mxu0
    %v1922 = vadd.f32 %v1860, %v245
    %v1923 = vadd.f32 %v1880, %v246
    %v1924 = vadd.f32 %v1900, %v247
    %v1925 = vadd.f32 %v1920, %v248
    %v1926 = vxor.u32 %v1922, 2147483648
    %v1927 = vmul.f32 %v1926, 1.442695
    %v1928 = vpow.pop %v1927
    %v1929 = vadd.f32 %v1928, 1.0
    %v1930 = vrcp.pop %v1929
    %v1931 = vmul.f32 %v1929, %v1930
    %v1932 = vsub.f32 1.0, %v1931
    %v1933 = vmul.f32 %v1930, %v1932
    %v1934 = vadd.f32 %v1930, %v1933
    %vm1935 = vweird.f32 %v1929
    %vm1936 = vweird.f32 %v1930
    %vm1937 = vmor %vm1935, %vm1936
    %v1938 = vsel %vm1937, %v1930, %v1934
    %v1939 = vand.u32 2147483647, %v1929
    %vm1940 = vcmp.eq.f32.partialorder %v1939, 8.507059e+37
    %v1941 = vand.u32 %v1929, 2147483648
    %v1942 = vor.u32 1.1754944e-38, %v1941
    %v1943 = vsel %vm1940, %v1942, %v1938
    %v1944 = vmul.f32 1.0, %v1943
    %v1945 = vxor.u32 %v1923, 2147483648
    %v1946 = vmul.f32 %v1945, 1.442695
    %v1947 = vpow.pop %v1946
    %v1948 = vadd.f32 %v1947, 1.0
    %v1949 = vrcp.pop %v1948
    %v1950 = vmul.f32 %v1948, %v1949
    %v1951 = vsub.f32 1.0, %v1950
    %v1952 = vmul.f32 %v1949, %v1951
    %v1953 = vadd.f32 %v1949, %v1952
    %vm1954 = vweird.f32 %v1948
    %vm1955 = vweird.f32 %v1949
    %vm1956 = vmor %vm1954, %vm1955
    %v1957 = vsel %vm1956, %v1949, %v1953
    %v1958 = vand.u32 2147483647, %v1948
    %vm1959 = vcmp.eq.f32.partialorder %v1958, 8.507059e+37
    %v1960 = vand.u32 %v1948, 2147483648
    %v1961 = vor.u32 1.1754944e-38, %v1960
    %v1962 = vsel %vm1959, %v1961, %v1957
    %v1963 = vmul.f32 1.0, %v1962
    %v1964 = vtanh.pop %v1924
    %v1965 = vxor.u32 %v1925, 2147483648
    %v1966 = vmul.f32 %v1965, 1.442695
    %v1967 = vpow.pop %v1966
    %v1968 = vadd.f32 %v1967, 1.0
    %v1969 = vrcp.pop %v1968
    %v1970 = vmul.f32 %v1968, %v1969
    %v1971 = vsub.f32 1.0, %v1970
    %v1972 = vmul.f32 %v1969, %v1971
    %v1973 = vadd.f32 %v1969, %v1972
    %vm1974 = vweird.f32 %v1968
    %vm1975 = vweird.f32 %v1969
    %vm1976 = vmor %vm1974, %vm1975
    %v1977 = vsel %vm1976, %v1969, %v1973
    %v1978 = vand.u32 2147483647, %v1968
    %vm1979 = vcmp.eq.f32.partialorder %v1978, 8.507059e+37
    %v1980 = vand.u32 %v1968, 2147483648
    %v1981 = vor.u32 1.1754944e-38, %v1980
    %v1982 = vsel %vm1979, %v1981, %v1977
    %v1983 = vmul.f32 1.0, %v1982
    %v1984 = vmul.f32 %v1963, %v1401
    %v1985 = vmul.f32 %v1944, %v1964
    %v1986 = vadd.f32 %v1984, %v1985
    %v1987 = vtanh.pop %v1986
    %v1988 = vmul.f32 %v1983, %v1987
    %1989 = vst [vmem:[#allocation2 + $0x4] sm:$0x3] %v1988
    %v1990 = vld [vmem:[#allocation3] sm:$0xff]
    %v1991 = vld [vmem:[#allocation3 + $0x8] sm:$0xff]
    %v1992 = vld [vmem:[#allocation3 + $0x10] sm:$0xff]
    %v1993 = vld [vmem:[#allocation3 + $0x18] sm:$0xff]
    %v1994 = vld [vmem:[#allocation3 + $0x20] sm:$0xff]
    %v1995 = vld [vmem:[#allocation3 + $0x28] sm:$0xff]
    %v1996 = vld [vmem:[#allocation3 + $0x30] sm:$0xff]
    %v1997 = vld [vmem:[#allocation3 + $0x38] sm:$0xff]
    %v1998 = vld [vmem:[#allocation3 + $0x40] sm:$0xff]
    %v1999 = vld [vmem:[#allocation3 + $0x48] sm:$0xff]
    %v2000 = vld [vmem:[#allocation3 + $0x50] sm:$0xff]
    %v2001 = vld [vmem:[#allocation3 + $0x58] sm:$0xff]
    %v2002 = vld [vmem:[#allocation3 + $0x60] sm:$0xff]
    %v2003 = vld [vmem:[#allocation3 + $0x68] sm:$0xff]
    %v2004 = vld [vmem:[#allocation3 + $0x70] sm:$0xff]
    %v2005 = vld [vmem:[#allocation3 + $0x78] sm:$0xff]
    %v2006 = vld [vmem:[#allocation3 + $0x80] sm:$0xff]
    %v2007 = vld [vmem:[#allocation3 + $0x88] sm:$0xff]
    %v2008 = vld [vmem:[#allocation3 + $0x90] sm:$0xff]
    %v2009 = vld [vmem:[#allocation3 + $0x98] sm:$0xff]
    %v2010 = vld [vmem:[#allocation3 + $0xa0] sm:$0xff]
    %v2011 = vld [vmem:[#allocation3 + $0xa8] sm:$0xff]
    %v2012 = vld [vmem:[#allocation3 + $0xb0] sm:$0xff]
    %v2013 = vld [vmem:[#allocation3 + $0xb8] sm:$0xff]
    %v2014 = vld [vmem:[#allocation3 + $0xc0] sm:$0xff]
    %v2015 = vld [vmem:[#allocation3 + $0xc8] sm:$0xff]
    %v2016 = vld [vmem:[#allocation3 + $0xd0] sm:$0xff]
    %v2017 = vld [vmem:[#allocation3 + $0xd8] sm:$0xff]
    %v2018 = vld [vmem:[#allocation3 + $0xe0] sm:$0xff]
    %v2019 = vld [vmem:[#allocation3 + $0xe8] sm:$0xff]
    %v2020 = vld [vmem:[#allocation3 + $0xf0] sm:$0xff]
    %v2021 = vld [vmem:[#allocation3 + $0xf8] sm:$0xff]
    %v2022 = vld [vmem:[#allocation3 + $0x100] sm:$0xff]
    %v2023 = vld [vmem:[#allocation3 + $0x108] sm:$0xff]
    %v2024 = vld [vmem:[#allocation3 + $0x110] sm:$0xff]
    %v2025 = vld [vmem:[#allocation3 + $0x118] sm:$0xff]
    %v2026 = vld [vmem:[#allocation3 + $0x120] sm:$0xff]
    %v2027 = vld [vmem:[#allocation3 + $0x128] sm:$0xff]
    %v2028 = vld [vmem:[#allocation3 + $0x130] sm:$0xff]
    %v2029 = vld [vmem:[#allocation3 + $0x138] sm:$0xff]
    %v2030 = vld [vmem:[#allocation3 + $0x140] sm:$0xff]
    %v2031 = vld [vmem:[#allocation3 + $0x148] sm:$0xff]
    %v2032 = vld [vmem:[#allocation3 + $0x150] sm:$0xff]
    %v2033 = vld [vmem:[#allocation3 + $0x158] sm:$0xff]
    %v2034 = vld [vmem:[#allocation3 + $0x160] sm:$0xff]
    %v2035 = vld [vmem:[#allocation3 + $0x168] sm:$0xff]
    %v2036 = vld [vmem:[#allocation3 + $0x170] sm:$0xff]
    %v2037 = vld [vmem:[#allocation3 + $0x178] sm:$0xff]
    %v2038 = vld [vmem:[#allocation3 + $0x180] sm:$0xff]
    %v2039 = vld [vmem:[#allocation3 + $0x188] sm:$0xff]
    %v2040 = vld [vmem:[#allocation3 + $0x190] sm:$0xff]
    %v2041 = vld [vmem:[#allocation3 + $0x198] sm:$0xff]
    %v2042 = vld [vmem:[#allocation3 + $0x1a0] sm:$0xff]
    %v2043 = vld [vmem:[#allocation3 + $0x1a8] sm:$0xff]
    %v2044 = vld [vmem:[#allocation3 + $0x1b0] sm:$0xff]
    %v2045 = vld [vmem:[#allocation3 + $0x1b8] sm:$0xff]
    %v2046 = vld [vmem:[#allocation3 + $0x1c0] sm:$0xff]
    %v2047 = vld [vmem:[#allocation3 + $0x1c8] sm:$0xff]
    %v2048 = vld [vmem:[#allocation3 + $0x1d0] sm:$0xff]
    %v2049 = vld [vmem:[#allocation3 + $0x1d8] sm:$0xff]
    %v2050 = vld [vmem:[#allocation3 + $0x1e0] sm:$0xff]
    %v2051 = vld [vmem:[#allocation3 + $0x1e8] sm:$0xff]
    %v2052 = vld [vmem:[#allocation3 + $0x1f0] sm:$0xff]
    %v2053 = vld [vmem:[#allocation3 + $0x1f8] sm:$0xff]
    %2054 = vmatpush.msra.mxu0 %v2050
    %2055 = vmatpush.msra.mxu0 %v2046
    %2056 = vmatpush.msra.mxu0 %v2042
    %2057 = vmatpush.msra.mxu0 %v2038
    %2058 = vmatpush.msra.mxu0 %v2034
    %2059 = vmatpush.msra.mxu0 %v2030
    %2060 = vmatpush.msra.mxu0 %v2026
    %2061 = vmatpush.msra.mxu0 %v2022
    %2062 = vmatpush.msra.mxu0 %v2018
    %2063 = vmatpush.msra.mxu0 %v2014
    %2064 = vmatpush.msra.mxu0 %v2010
    %2065 = vmatpush.msra.mxu0 %v2006
    %2066 = vmatpush.msra.mxu0 %v2002
    %2067 = vmatpush.msra.mxu0 %v1998
    %2068 = vmatpush.msra.mxu0 %v1994
    %2069 = vmatpush.msra.mxu0 %v1990
    %2070 = vmatmul.f32.gmra.mxu0 %v1840
    %v2071 = vpop.f32.mrf.mxu0
    %v2072 = vadd.f32 0.0, %v2071
    %2073 = vdwg.mxu0
    %2074 = vmatpush.msra.mxu0 %v2051
    %2075 = vmatpush.msra.mxu0 %v2047
    %2076 = vmatpush.msra.mxu0 %v2043
    %2077 = vmatpush.msra.mxu0 %v2039
    %2078 = vmatpush.msra.mxu0 %v2035
    %2079 = vmatpush.msra.mxu0 %v2031
    %2080 = vmatpush.msra.mxu0 %v2027
    %2081 = vmatpush.msra.mxu0 %v2023
    %2082 = vmatpush.msra.mxu0 %v2019
    %2083 = vmatpush.msra.mxu0 %v2015
    %2084 = vmatpush.msra.mxu0 %v2011
    %2085 = vmatpush.msra.mxu0 %v2007
    %2086 = vmatpush.msra.mxu0 %v2003
    %2087 = vmatpush.msra.mxu0 %v1999
    %2088 = vmatpush.msra.mxu0 %v1995
    %2089 = vmatpush.msra.mxu0 %v1991
    %2090 = vmatmul.f32.gmra.mxu0 %v1840
    %v2091 = vpop.f32.mrf.mxu0
    %v2092 = vadd.f32 0.0, %v2091
    %2093 = vdwg.mxu0
    %2094 = vmatpush.msra.mxu0 %v2052
    %2095 = vmatpush.msra.mxu0 %v2048
    %2096 = vmatpush.msra.mxu0 %v2044
    %2097 = vmatpush.msra.mxu0 %v2040
    %2098 = vmatpush.msra.mxu0 %v2036
    %2099 = vmatpush.msra.mxu0 %v2032
    %2100 = vmatpush.msra.mxu0 %v2028
    %2101 = vmatpush.msra.mxu0 %v2024
    %2102 = vmatpush.msra.mxu0 %v2020
    %2103 = vmatpush.msra.mxu0 %v2016
    %2104 = vmatpush.msra.mxu0 %v2012
    %2105 = vmatpush.msra.mxu0 %v2008
    %2106 = vmatpush.msra.mxu0 %v2004
    %2107 = vmatpush.msra.mxu0 %v2000
    %2108 = vmatpush.msra.mxu0 %v1996
    %2109 = vmatpush.msra.mxu0 %v1992
    %2110 = vmatmul.f32.gmra.mxu0 %v1840
    %v2111 = vpop.f32.mrf.mxu0
    %v2112 = vadd.f32 0.0, %v2111
    %2113 = vdwg.mxu0
    %2114 = vmatpush.msra.mxu0 %v2053
    %2115 = vmatpush.msra.mxu0 %v2049
    %2116 = vmatpush.msra.mxu0 %v2045
    %2117 = vmatpush.msra.mxu0 %v2041
    %2118 = vmatpush.msra.mxu0 %v2037
    %2119 = vmatpush.msra.mxu0 %v2033
    %2120 = vmatpush.msra.mxu0 %v2029
    %2121 = vmatpush.msra.mxu0 %v2025
    %2122 = vmatpush.msra.mxu0 %v2021
    %2123 = vmatpush.msra.mxu0 %v2017
    %2124 = vmatpush.msra.mxu0 %v2013
    %2125 = vmatpush.msra.mxu0 %v2009
    %2126 = vmatpush.msra.mxu0 %v2005
    %2127 = vmatpush.msra.mxu0 %v2001
    %2128 = vmatpush.msra.mxu0 %v1997
    %2129 = vmatpush.msra.mxu0 %v1993
    %2130 = vmatmul.f32.gmra.mxu0 %v1840
    %v2131 = vpop.f32.mrf.mxu0
    %v2132 = vadd.f32 0.0, %v2131
    %2133 = vdwg.mxu0
    %v2138 = vrot.slane %v2072, 2
    %v2139 = vrot.slane %v2092, 2
    %v2140 = vrot.slane %v2112, 2
    %v2141 = vrot.slane %v2132, 2
    %v2146 = vadd.f32 %v169, %v2138
    %v2147 = vadd.f32 %v192, %v2139
    %v2148 = vadd.f32 %v215, %v2140
    %v2149 = vadd.f32 %v238, %v2141
    %v2150 = vxor.u32 %v2146, 2147483648
    %v2151 = vmul.f32 %v2150, 1.442695
    %v2152 = vpow.pop %v2151
    %v2153 = vadd.f32 %v2152, 1.0
    %v2154 = vrcp.pop %v2153
    %v2155 = vmul.f32 %v2153, %v2154
    %v2156 = vsub.f32 1.0, %v2155
    %v2157 = vmul.f32 %v2154, %v2156
    %v2158 = vadd.f32 %v2154, %v2157
    %vm2159 = vweird.f32 %v2153
    %vm2160 = vweird.f32 %v2154
    %vm2161 = vmor %vm2159, %vm2160
    %v2162 = vsel %vm2161, %v2154, %v2158
    %v2163 = vand.u32 2147483647, %v2153
    %vm2164 = vcmp.eq.f32.partialorder %v2163, 8.507059e+37
    %v2165 = vand.u32 %v2153, 2147483648
    %v2166 = vor.u32 1.1754944e-38, %v2165
    %v2167 = vsel %vm2164, %v2166, %v2162
    %v2168 = vmul.f32 1.0, %v2167
    %v2169 = vxor.u32 %v2147, 2147483648
    %v2170 = vmul.f32 %v2169, 1.442695
    %v2171 = vpow.pop %v2170
    %v2172 = vadd.f32 %v2171, 1.0
    %v2173 = vrcp.pop %v2172
    %v2174 = vmul.f32 %v2172, %v2173
    %v2175 = vsub.f32 1.0, %v2174
    %v2176 = vmul.f32 %v2173, %v2175
    %v2177 = vadd.f32 %v2173, %v2176
    %vm2178 = vweird.f32 %v2172
    %vm2179 = vweird.f32 %v2173
    %vm2180 = vmor %vm2178, %vm2179
    %v2181 = vsel %vm2180, %v2173, %v2177
    %v2182 = vand.u32 2147483647, %v2172
    %vm2183 = vcmp.eq.f32.partialorder %v2182, 8.507059e+37
    %v2184 = vand.u32 %v2172, 2147483648
    %v2185 = vor.u32 1.1754944e-38, %v2184
    %v2186 = vsel %vm2183, %v2185, %v2181
    %v2187 = vmul.f32 1.0, %v2186
    %v2188 = vtanh.pop %v2148
    %v2189 = vxor.u32 %v2149, 2147483648
    %v2190 = vmul.f32 %v2189, 1.442695
    %v2191 = vpow.pop %v2190
    %v2192 = vadd.f32 %v2191, 1.0
    %v2193 = vrcp.pop %v2192
    %v2194 = vmul.f32 %v2192, %v2193
    %v2195 = vsub.f32 1.0, %v2194
    %v2196 = vmul.f32 %v2193, %v2195
    %v2197 = vadd.f32 %v2193, %v2196
    %vm2198 = vweird.f32 %v2192
    %vm2199 = vweird.f32 %v2193
    %vm2200 = vmor %vm2198, %vm2199
    %v2201 = vsel %vm2200, %v2193, %v2197
    %v2202 = vand.u32 2147483647, %v2192
    %vm2203 = vcmp.eq.f32.partialorder %v2202, 8.507059e+37
    %v2204 = vand.u32 %v2192, 2147483648
    %v2205 = vor.u32 1.1754944e-38, %v2204
    %v2206 = vsel %vm2203, %v2205, %v2201
    %v2207 = vmul.f32 1.0, %v2206
    %v2209 = vrot.slane %v1628, 6
    %v2211 = vmul.f32 %v2187, %v2209
    %v2212 = vmul.f32 %v2168, %v2188
    %v2213 = vadd.f32 %v2211, %v2212
    %v2214 = vtanh.pop %v2213
    %v2215 = vmul.f32 %v2207, %v2214
    %v2216 = vld [vmem:[#allocation6] sm:$0xff]
    %v2217 = vld [vmem:[#allocation6 + $0x8] sm:$0xff]
    %v2218 = vld [vmem:[#allocation6 + $0x10] sm:$0xff]
    %v2219 = vld [vmem:[#allocation6 + $0x18] sm:$0xff]
    %v2220 = vld [vmem:[#allocation6 + $0x20] sm:$0xff]
    %v2221 = vld [vmem:[#allocation6 + $0x28] sm:$0xff]
    %v2222 = vld [vmem:[#allocation6 + $0x30] sm:$0xff]
    %v2223 = vld [vmem:[#allocation6 + $0x38] sm:$0xff]
    %v2224 = vld [vmem:[#allocation6 + $0x40] sm:$0xff]
    %v2225 = vld [vmem:[#allocation6 + $0x48] sm:$0xff]
    %v2226 = vld [vmem:[#allocation6 + $0x50] sm:$0xff]
    %v2227 = vld [vmem:[#allocation6 + $0x58] sm:$0xff]
    %v2228 = vld [vmem:[#allocation6 + $0x60] sm:$0xff]
    %v2229 = vld [vmem:[#allocation6 + $0x68] sm:$0xff]
    %v2230 = vld [vmem:[#allocation6 + $0x70] sm:$0xff]
    %v2231 = vld [vmem:[#allocation6 + $0x78] sm:$0xff]
    %v2232 = vld [vmem:[#allocation6 + $0x80] sm:$0xff]
    %v2233 = vld [vmem:[#allocation6 + $0x88] sm:$0xff]
    %v2234 = vld [vmem:[#allocation6 + $0x90] sm:$0xff]
    %v2235 = vld [vmem:[#allocation6 + $0x98] sm:$0xff]
    %v2236 = vld [vmem:[#allocation6 + $0xa0] sm:$0xff]
    %v2237 = vld [vmem:[#allocation6 + $0xa8] sm:$0xff]
    %v2238 = vld [vmem:[#allocation6 + $0xb0] sm:$0xff]
    %v2239 = vld [vmem:[#allocation6 + $0xb8] sm:$0xff]
    %v2240 = vld [vmem:[#allocation6 + $0xc0] sm:$0xff]
    %v2241 = vld [vmem:[#allocation6 + $0xc8] sm:$0xff]
    %v2242 = vld [vmem:[#allocation6 + $0xd0] sm:$0xff]
    %v2243 = vld [vmem:[#allocation6 + $0xd8] sm:$0xff]
    %v2244 = vld [vmem:[#allocation6 + $0xe0] sm:$0xff]
    %v2245 = vld [vmem:[#allocation6 + $0xe8] sm:$0xff]
    %v2246 = vld [vmem:[#allocation6 + $0xf0] sm:$0xff]
    %v2247 = vld [vmem:[#allocation6 + $0xf8] sm:$0xff]
    %v2248 = vld [vmem:[#allocation6 + $0x100] sm:$0xff]
    %v2249 = vld [vmem:[#allocation6 + $0x108] sm:$0xff]
    %v2250 = vld [vmem:[#allocation6 + $0x110] sm:$0xff]
    %v2251 = vld [vmem:[#allocation6 + $0x118] sm:$0xff]
    %v2252 = vld [vmem:[#allocation6 + $0x120] sm:$0xff]
    %v2253 = vld [vmem:[#allocation6 + $0x128] sm:$0xff]
    %v2254 = vld [vmem:[#allocation6 + $0x130] sm:$0xff]
    %v2255 = vld [vmem:[#allocation6 + $0x138] sm:$0xff]
    %v2256 = vld [vmem:[#allocation6 + $0x140] sm:$0xff]
    %v2257 = vld [vmem:[#allocation6 + $0x148] sm:$0xff]
    %v2258 = vld [vmem:[#allocation6 + $0x150] sm:$0xff]
    %v2259 = vld [vmem:[#allocation6 + $0x158] sm:$0xff]
    %v2260 = vld [vmem:[#allocation6 + $0x160] sm:$0xff]
    %v2261 = vld [vmem:[#allocation6 + $0x168] sm:$0xff]
    %v2262 = vld [vmem:[#allocation6 + $0x170] sm:$0xff]
    %v2263 = vld [vmem:[#allocation6 + $0x178] sm:$0xff]
    %v2264 = vld [vmem:[#allocation6 + $0x180] sm:$0xff]
    %v2265 = vld [vmem:[#allocation6 + $0x188] sm:$0xff]
    %v2266 = vld [vmem:[#allocation6 + $0x190] sm:$0xff]
    %v2267 = vld [vmem:[#allocation6 + $0x198] sm:$0xff]
    %v2268 = vld [vmem:[#allocation6 + $0x1a0] sm:$0xff]
    %v2269 = vld [vmem:[#allocation6 + $0x1a8] sm:$0xff]
    %v2270 = vld [vmem:[#allocation6 + $0x1b0] sm:$0xff]
    %v2271 = vld [vmem:[#allocation6 + $0x1b8] sm:$0xff]
    %v2272 = vld [vmem:[#allocation6 + $0x1c0] sm:$0xff]
    %v2273 = vld [vmem:[#allocation6 + $0x1c8] sm:$0xff]
    %v2274 = vld [vmem:[#allocation6 + $0x1d0] sm:$0xff]
    %v2275 = vld [vmem:[#allocation6 + $0x1d8] sm:$0xff]
    %v2276 = vld [vmem:[#allocation6 + $0x1e0] sm:$0xff]
    %v2277 = vld [vmem:[#allocation6 + $0x1e8] sm:$0xff]
    %v2278 = vld [vmem:[#allocation6 + $0x1f0] sm:$0xff]
    %v2279 = vld [vmem:[#allocation6 + $0x1f8] sm:$0xff]
    %v2280 = vld [vmem:[#allocation8] sm:$0xff]
    %v2281 = vld [vmem:[#allocation8 + $0x8] sm:$0xff]
    %v2282 = vld [vmem:[#allocation8 + $0x10] sm:$0xff]
    %v2283 = vld [vmem:[#allocation8 + $0x18] sm:$0xff]
    %v2284 = vld [vmem:[#allocation8 + $0x20] sm:$0xff]
    %v2285 = vld [vmem:[#allocation8 + $0x28] sm:$0xff]
    %v2286 = vld [vmem:[#allocation8 + $0x30] sm:$0xff]
    %v2287 = vld [vmem:[#allocation8 + $0x38] sm:$0xff]
    %v2288 = vld [vmem:[#allocation8 + $0x40] sm:$0xff]
    %v2289 = vld [vmem:[#allocation8 + $0x48] sm:$0xff]
    %v2290 = vld [vmem:[#allocation8 + $0x50] sm:$0xff]
    %v2291 = vld [vmem:[#allocation8 + $0x58] sm:$0xff]
    %v2292 = vld [vmem:[#allocation8 + $0x60] sm:$0xff]
    %v2293 = vld [vmem:[#allocation8 + $0x68] sm:$0xff]
    %v2294 = vld [vmem:[#allocation8 + $0x70] sm:$0xff]
    %v2295 = vld [vmem:[#allocation8 + $0x78] sm:$0xff]
    %v2296 = vld [vmem:[#allocation8 + $0x80] sm:$0xff]
    %v2297 = vld [vmem:[#allocation8 + $0x88] sm:$0xff]
    %v2298 = vld [vmem:[#allocation8 + $0x90] sm:$0xff]
    %v2299 = vld [vmem:[#allocation8 + $0x98] sm:$0xff]
    %v2300 = vld [vmem:[#allocation8 + $0xa0] sm:$0xff]
    %v2301 = vld [vmem:[#allocation8 + $0xa8] sm:$0xff]
    %v2302 = vld [vmem:[#allocation8 + $0xb0] sm:$0xff]
    %v2303 = vld [vmem:[#allocation8 + $0xb8] sm:$0xff]
    %v2304 = vld [vmem:[#allocation8 + $0xc0] sm:$0xff]
    %v2305 = vld [vmem:[#allocation8 + $0xc8] sm:$0xff]
    %v2306 = vld [vmem:[#allocation8 + $0xd0] sm:$0xff]
    %v2307 = vld [vmem:[#allocation8 + $0xd8] sm:$0xff]
    %v2308 = vld [vmem:[#allocation8 + $0xe0] sm:$0xff]
    %v2309 = vld [vmem:[#allocation8 + $0xe8] sm:$0xff]
    %v2310 = vld [vmem:[#allocation8 + $0xf0] sm:$0xff]
    %v2311 = vld [vmem:[#allocation8 + $0xf8] sm:$0xff]
    %v2312 = vld [vmem:[#allocation8 + $0x100] sm:$0xff]
    %v2313 = vld [vmem:[#allocation8 + $0x108] sm:$0xff]
    %v2314 = vld [vmem:[#allocation8 + $0x110] sm:$0xff]
    %v2315 = vld [vmem:[#allocation8 + $0x118] sm:$0xff]
    %v2316 = vld [vmem:[#allocation8 + $0x120] sm:$0xff]
    %v2317 = vld [vmem:[#allocation8 + $0x128] sm:$0xff]
    %v2318 = vld [vmem:[#allocation8 + $0x130] sm:$0xff]
    %v2319 = vld [vmem:[#allocation8 + $0x138] sm:$0xff]
    %v2320 = vld [vmem:[#allocation8 + $0x140] sm:$0xff]
    %v2321 = vld [vmem:[#allocation8 + $0x148] sm:$0xff]
    %v2322 = vld [vmem:[#allocation8 + $0x150] sm:$0xff]
    %v2323 = vld [vmem:[#allocation8 + $0x158] sm:$0xff]
    %v2324 = vld [vmem:[#allocation8 + $0x160] sm:$0xff]
    %v2325 = vld [vmem:[#allocation8 + $0x168] sm:$0xff]
    %v2326 = vld [vmem:[#allocation8 + $0x170] sm:$0xff]
    %v2327 = vld [vmem:[#allocation8 + $0x178] sm:$0xff]
    %v2328 = vld [vmem:[#allocation8 + $0x180] sm:$0xff]
    %v2329 = vld [vmem:[#allocation8 + $0x188] sm:$0xff]
    %v2330 = vld [vmem:[#allocation8 + $0x190] sm:$0xff]
    %v2331 = vld [vmem:[#allocation8 + $0x198] sm:$0xff]
    %v2332 = vld [vmem:[#allocation8 + $0x1a0] sm:$0xff]
    %v2333 = vld [vmem:[#allocation8 + $0x1a8] sm:$0xff]
    %v2334 = vld [vmem:[#allocation8 + $0x1b0] sm:$0xff]
    %v2335 = vld [vmem:[#allocation8 + $0x1b8] sm:$0xff]
    %v2336 = vld [vmem:[#allocation8 + $0x1c0] sm:$0xff]
    %v2337 = vld [vmem:[#allocation8 + $0x1c8] sm:$0xff]
    %v2338 = vld [vmem:[#allocation8 + $0x1d0] sm:$0xff]
    %v2339 = vld [vmem:[#allocation8 + $0x1d8] sm:$0xff]
    %v2340 = vld [vmem:[#allocation8 + $0x1e0] sm:$0xff]
    %v2341 = vld [vmem:[#allocation8 + $0x1e8] sm:$0xff]
    %v2342 = vld [vmem:[#allocation8 + $0x1f0] sm:$0xff]
    %v2343 = vld [vmem:[#allocation8 + $0x1f8] sm:$0xff]
    %2344 = vmatpush.msra.mxu0 %v2340
    %2345 = vmatpush.msra.mxu0 %v2336
    %2346 = vmatpush.msra.mxu0 %v2332
    %2347 = vmatpush.msra.mxu0 %v2328
    %2348 = vmatpush.msra.mxu0 %v2324
    %2349 = vmatpush.msra.mxu0 %v2320
    %2350 = vmatpush.msra.mxu0 %v2316
    %2351 = vmatpush.msra.mxu0 %v2312
    %2352 = vmatpush.msra.mxu0 %v2308
    %2353 = vmatpush.msra.mxu0 %v2304
    %2354 = vmatpush.msra.mxu0 %v2300
    %2355 = vmatpush.msra.mxu0 %v2296
    %2356 = vmatpush.msra.mxu0 %v2292
    %2357 = vmatpush.msra.mxu0 %v2288
    %2358 = vmatpush.msra.mxu0 %v2284
    %2359 = vmatpush.msra.mxu0 %v2280
    %2360 = vmatmul.f32.gmra.mxu0 %v1988
    %v2361 = vpop.f32.mrf.mxu0
    %v2362 = vadd.f32 0.0, %v2361
    %2363 = vdwg.mxu0
    %2364 = vmatpush.msra.mxu0 %v2341
    %2365 = vmatpush.msra.mxu0 %v2337
    %2366 = vmatpush.msra.mxu0 %v2333
    %2367 = vmatpush.msra.mxu0 %v2329
    %2368 = vmatpush.msra.mxu0 %v2325
    %2369 = vmatpush.msra.mxu0 %v2321
    %2370 = vmatpush.msra.mxu0 %v2317
    %2371 = vmatpush.msra.mxu0 %v2313
    %2372 = vmatpush.msra.mxu0 %v2309
    %2373 = vmatpush.msra.mxu0 %v2305
    %2374 = vmatpush.msra.mxu0 %v2301
    %2375 = vmatpush.msra.mxu0 %v2297
    %2376 = vmatpush.msra.mxu0 %v2293
    %2377 = vmatpush.msra.mxu0 %v2289
    %2378 = vmatpush.msra.mxu0 %v2285
    %2379 = vmatpush.msra.mxu0 %v2281
    %2380 = vmatmul.f32.gmra.mxu0 %v1988
    %v2381 = vpop.f32.mrf.mxu0
    %v2382 = vadd.f32 0.0, %v2381
    %2383 = vdwg.mxu0
    %2384 = vmatpush.msra.mxu0 %v2342
    %2385 = vmatpush.msra.mxu0 %v2338
    %2386 = vmatpush.msra.mxu0 %v2334
    %2387 = vmatpush.msra.mxu0 %v2330
    %2388 = vmatpush.msra.mxu0 %v2326
    %2389 = vmatpush.msra.mxu0 %v2322
    %2390 = vmatpush.msra.mxu0 %v2318
    %2391 = vmatpush.msra.mxu0 %v2314
    %2392 = vmatpush.msra.mxu0 %v2310
    %2393 = vmatpush.msra.mxu0 %v2306
    %2394 = vmatpush.msra.mxu0 %v2302
    %2395 = vmatpush.msra.mxu0 %v2298
    %2396 = vmatpush.msra.mxu0 %v2294
    %2397 = vmatpush.msra.mxu0 %v2290
    %2398 = vmatpush.msra.mxu0 %v2286
    %2399 = vmatpush.msra.mxu0 %v2282
    %2400 = vmatmul.f32.gmra.mxu0 %v1988
    %v2401 = vpop.f32.mrf.mxu0
    %v2402 = vadd.f32 0.0, %v2401
    %2403 = vdwg.mxu0
    %2404 = vmatpush.msra.mxu0 %v2343
    %2405 = vmatpush.msra.mxu0 %v2339
    %2406 = vmatpush.msra.mxu0 %v2335
    %2407 = vmatpush.msra.mxu0 %v2331
    %2408 = vmatpush.msra.mxu0 %v2327
    %2409 = vmatpush.msra.mxu0 %v2323
    %2410 = vmatpush.msra.mxu0 %v2319
    %2411 = vmatpush.msra.mxu0 %v2315
    %2412 = vmatpush.msra.mxu0 %v2311
    %2413 = vmatpush.msra.mxu0 %v2307
    %2414 = vmatpush.msra.mxu0 %v2303
    %2415 = vmatpush.msra.mxu0 %v2299
    %2416 = vmatpush.msra.mxu0 %v2295
    %2417 = vmatpush.msra.mxu0 %v2291
    %2418 = vmatpush.msra.mxu0 %v2287
    %2419 = vmatpush.msra.mxu0 %v2283
    %2420 = vmatmul.f32.gmra.mxu0 %v1988
    %v2421 = vpop.f32.mrf.mxu0
    %v2422 = vadd.f32 0.0, %v2421
    %2423 = vdwg.mxu0
    %v2425 = vrot.slane %v2215, 6
    %2427 = vmatpush.msra.mxu0 %v2276
    %2428 = vmatpush.msra.mxu0 %v2272
    %2429 = vmatpush.msra.mxu0 %v2268
    %2430 = vmatpush.msra.mxu0 %v2264
    %2431 = vmatpush.msra.mxu0 %v2260
    %2432 = vmatpush.msra.mxu0 %v2256
    %2433 = vmatpush.msra.mxu0 %v2252
    %2434 = vmatpush.msra.mxu0 %v2248
    %2435 = vmatpush.msra.mxu0 %v2244
    %2436 = vmatpush.msra.mxu0 %v2240
    %2437 = vmatpush.msra.mxu0 %v2236
    %2438 = vmatpush.msra.mxu0 %v2232
    %2439 = vmatpush.msra.mxu0 %v2228
    %2440 = vmatpush.msra.mxu0 %v2224
    %2441 = vmatpush.msra.mxu0 %v2220
    %2442 = vmatpush.msra.mxu0 %v2216
    %2443 = vmatmul.f32.gmra.mxu0 %v2425
    %v2444 = vpop.f32.mrf.mxu0
    %v2445 = vadd.f32 %v2362, %v2444
    %2446 = vdwg.mxu0
    %2447 = vmatpush.msra.mxu0 %v2277
    %2448 = vmatpush.msra.mxu0 %v2273
    %2449 = vmatpush.msra.mxu0 %v2269
    %2450 = vmatpush.msra.mxu0 %v2265
    %2451 = vmatpush.msra.mxu0 %v2261
    %2452 = vmatpush.msra.mxu0 %v2257
    %2453 = vmatpush.msra.mxu0 %v2253
    %2454 = vmatpush.msra.mxu0 %v2249
    %2455 = vmatpush.msra.mxu0 %v2245
    %2456 = vmatpush.msra.mxu0 %v2241
    %2457 = vmatpush.msra.mxu0 %v2237
    %2458 = vmatpush.msra.mxu0 %v2233
    %2459 = vmatpush.msra.mxu0 %v2229
    %2460 = vmatpush.msra.mxu0 %v2225
    %2461 = vmatpush.msra.mxu0 %v2221
    %2462 = vmatpush.msra.mxu0 %v2217
    %2463 = vmatmul.f32.gmra.mxu0 %v2425
    %v2464 = vpop.f32.mrf.mxu0
    %v2465 = vadd.f32 %v2382, %v2464
    %2466 = vdwg.mxu0
    %2467 = vmatpush.msra.mxu0 %v2278
    %2468 = vmatpush.msra.mxu0 %v2274
    %2469 = vmatpush.msra.mxu0 %v2270
    %2470 = vmatpush.msra.mxu0 %v2266
    %2471 = vmatpush.msra.mxu0 %v2262
    %2472 = vmatpush.msra.mxu0 %v2258
    %2473 = vmatpush.msra.mxu0 %v2254
    %2474 = vmatpush.msra.mxu0 %v2250
    %2475 = vmatpush.msra.mxu0 %v2246
    %2476 = vmatpush.msra.mxu0 %v2242
    %2477 = vmatpush.msra.mxu0 %v2238
    %2478 = vmatpush.msra.mxu0 %v2234
    %2479 = vmatpush.msra.mxu0 %v2230
    %2480 = vmatpush.msra.mxu0 %v2226
    %2481 = vmatpush.msra.mxu0 %v2222
    %2482 = vmatpush.msra.mxu0 %v2218
    %2483 = vmatmul.f32.gmra.mxu0 %v2425
    %v2484 = vpop.f32.mrf.mxu0
    %v2485 = vadd.f32 %v2402, %v2484
    %2486 = vdwg.mxu0
    %2487 = vmatpush.msra.mxu0 %v2279
    %2488 = vmatpush.msra.mxu0 %v2275
    %2489 = vmatpush.msra.mxu0 %v2271
    %2490 = vmatpush.msra.mxu0 %v2267
    %2491 = vmatpush.msra.mxu0 %v2263
    %2492 = vmatpush.msra.mxu0 %v2259
    %2493 = vmatpush.msra.mxu0 %v2255
    %2494 = vmatpush.msra.mxu0 %v2251
    %2495 = vmatpush.msra.mxu0 %v2247
    %2496 = vmatpush.msra.mxu0 %v2243
    %2497 = vmatpush.msra.mxu0 %v2239
    %2498 = vmatpush.msra.mxu0 %v2235
    %2499 = vmatpush.msra.mxu0 %v2231
    %2500 = vmatpush.msra.mxu0 %v2227
    %2501 = vmatpush.msra.mxu0 %v2223
    %2502 = vmatpush.msra.mxu0 %v2219
    %2503 = vmatmul.f32.gmra.mxu0 %v2425
    %v2504 = vpop.f32.mrf.mxu0
    %v2505 = vadd.f32 %v2422, %v2504
    %2506 = vdwg.mxu0
    %v2507 = vadd.f32 %v2445, %v245
    %v2508 = vadd.f32 %v2465, %v246
    %v2509 = vadd.f32 %v2485, %v247
    %v2510 = vadd.f32 %v2505, %v248
    %v2511 = vxor.u32 %v2507, 2147483648
    %v2512 = vmul.f32 %v2511, 1.442695
    %v2513 = vpow.pop %v2512
    %v2514 = vadd.f32 %v2513, 1.0
    %v2515 = vrcp.pop %v2514
    %v2516 = vmul.f32 %v2514, %v2515
    %v2517 = vsub.f32 1.0, %v2516
    %v2518 = vmul.f32 %v2515, %v2517
    %v2519 = vadd.f32 %v2515, %v2518
    %vm2520 = vweird.f32 %v2514
    %vm2521 = vweird.f32 %v2515
    %vm2522 = vmor %vm2520, %vm2521
    %v2523 = vsel %vm2522, %v2515, %v2519
    %v2524 = vand.u32 2147483647, %v2514
    %vm2525 = vcmp.eq.f32.partialorder %v2524, 8.507059e+37
    %v2526 = vand.u32 %v2514, 2147483648
    %v2527 = vor.u32 1.1754944e-38, %v2526
    %v2528 = vsel %vm2525, %v2527, %v2523
    %v2529 = vmul.f32 1.0, %v2528
    %v2530 = vxor.u32 %v2508, 2147483648
    %v2531 = vmul.f32 %v2530, 1.442695
    %v2532 = vpow.pop %v2531
    %v2533 = vadd.f32 %v2532, 1.0
    %v2534 = vrcp.pop %v2533
    %v2535 = vmul.f32 %v2533, %v2534
    %v2536 = vsub.f32 1.0, %v2535
    %v2537 = vmul.f32 %v2534, %v2536
    %v2538 = vadd.f32 %v2534, %v2537
    %vm2539 = vweird.f32 %v2533
    %vm2540 = vweird.f32 %v2534
    %vm2541 = vmor %vm2539, %vm2540
    %v2542 = vsel %vm2541, %v2534, %v2538
    %v2543 = vand.u32 2147483647, %v2533
    %vm2544 = vcmp.eq.f32.partialorder %v2543, 8.507059e+37
    %v2545 = vand.u32 %v2533, 2147483648
    %v2546 = vor.u32 1.1754944e-38, %v2545
    %v2547 = vsel %vm2544, %v2546, %v2542
    %v2548 = vmul.f32 1.0, %v2547
    %v2549 = vtanh.pop %v2509
    %v2550 = vxor.u32 %v2510, 2147483648
    %v2551 = vmul.f32 %v2550, 1.442695
    %v2552 = vpow.pop %v2551
    %v2553 = vadd.f32 %v2552, 1.0
    %v2554 = vrcp.pop %v2553
    %v2555 = vmul.f32 %v2553, %v2554
    %v2556 = vsub.f32 1.0, %v2555
    %v2557 = vmul.f32 %v2554, %v2556
    %v2558 = vadd.f32 %v2554, %v2557
    %vm2559 = vweird.f32 %v2553
    %vm2560 = vweird.f32 %v2554
    %vm2561 = vmor %vm2559, %vm2560
    %v2562 = vsel %vm2561, %v2554, %v2558
    %v2563 = vand.u32 2147483647, %v2553
    %vm2564 = vcmp.eq.f32.partialorder %v2563, 8.507059e+37
    %v2565 = vand.u32 %v2553, 2147483648
    %v2566 = vor.u32 1.1754944e-38, %v2565
    %v2567 = vsel %vm2564, %v2566, %v2562
    %v2568 = vmul.f32 1.0, %v2567
    %v2569 = vmul.f32 %v2548, %v1986
    %v2570 = vmul.f32 %v2529, %v2549
    %v2571 = vadd.f32 %v2569, %v2570
    %v2572 = vtanh.pop %v2571
    %v2573 = vmul.f32 %v2568, %v2572
    %2574 = vst [vmem:[#allocation2 + $0x6] sm:$0x3] %v2573
    %v2575 = vld [vmem:[#allocation3] sm:$0xff]
    %v2576 = vld [vmem:[#allocation3 + $0x8] sm:$0xff]
    %v2577 = vld [vmem:[#allocation3 + $0x10] sm:$0xff]
    %v2578 = vld [vmem:[#allocation3 + $0x18] sm:$0xff]
    %v2579 = vld [vmem:[#allocation3 + $0x20] sm:$0xff]
    %v2580 = vld [vmem:[#allocation3 + $0x28] sm:$0xff]
    %v2581 = vld [vmem:[#allocation3 + $0x30] sm:$0xff]
    %v2582 = vld [vmem:[#allocation3 + $0x38] sm:$0xff]
    %v2583 = vld [vmem:[#allocation3 + $0x40] sm:$0xff]
    %v2584 = vld [vmem:[#allocation3 + $0x48] sm:$0xff]
    %v2585 = vld [vmem:[#allocation3 + $0x50] sm:$0xff]
    %v2586 = vld [vmem:[#allocation3 + $0x58] sm:$0xff]
    %v2587 = vld [vmem:[#allocation3 + $0x60] sm:$0xff]
    %v2588 = vld [vmem:[#allocation3 + $0x68] sm:$0xff]
    %v2589 = vld [vmem:[#allocation3 + $0x70] sm:$0xff]
    %v2590 = vld [vmem:[#allocation3 + $0x78] sm:$0xff]
    %v2591 = vld [vmem:[#allocation3 + $0x80] sm:$0xff]
    %v2592 = vld [vmem:[#allocation3 + $0x88] sm:$0xff]
    %v2593 = vld [vmem:[#allocation3 + $0x90] sm:$0xff]
    %v2594 = vld [vmem:[#allocation3 + $0x98] sm:$0xff]
    %v2595 = vld [vmem:[#allocation3 + $0xa0] sm:$0xff]
    %v2596 = vld [vmem:[#allocation3 + $0xa8] sm:$0xff]
    %v2597 = vld [vmem:[#allocation3 + $0xb0] sm:$0xff]
    %v2598 = vld [vmem:[#allocation3 + $0xb8] sm:$0xff]
    %v2599 = vld [vmem:[#allocation3 + $0xc0] sm:$0xff]
    %v2600 = vld [vmem:[#allocation3 + $0xc8] sm:$0xff]
    %v2601 = vld [vmem:[#allocation3 + $0xd0] sm:$0xff]
    %v2602 = vld [vmem:[#allocation3 + $0xd8] sm:$0xff]
    %v2603 = vld [vmem:[#allocation3 + $0xe0] sm:$0xff]
    %v2604 = vld [vmem:[#allocation3 + $0xe8] sm:$0xff]
    %v2605 = vld [vmem:[#allocation3 + $0xf0] sm:$0xff]
    %v2606 = vld [vmem:[#allocation3 + $0xf8] sm:$0xff]
    %v2607 = vld [vmem:[#allocation3 + $0x100] sm:$0xff]
    %v2608 = vld [vmem:[#allocation3 + $0x108] sm:$0xff]
    %v2609 = vld [vmem:[#allocation3 + $0x110] sm:$0xff]
    %v2610 = vld [vmem:[#allocation3 + $0x118] sm:$0xff]
    %v2611 = vld [vmem:[#allocation3 + $0x120] sm:$0xff]
    %v2612 = vld [vmem:[#allocation3 + $0x128] sm:$0xff]
    %v2613 = vld [vmem:[#allocation3 + $0x130] sm:$0xff]
    %v2614 = vld [vmem:[#allocation3 + $0x138] sm:$0xff]
    %v2615 = vld [vmem:[#allocation3 + $0x140] sm:$0xff]
    %v2616 = vld [vmem:[#allocation3 + $0x148] sm:$0xff]
    %v2617 = vld [vmem:[#allocation3 + $0x150] sm:$0xff]
    %v2618 = vld [vmem:[#allocation3 + $0x158] sm:$0xff]
    %v2619 = vld [vmem:[#allocation3 + $0x160] sm:$0xff]
    %v2620 = vld [vmem:[#allocation3 + $0x168] sm:$0xff]
    %v2621 = vld [vmem:[#allocation3 + $0x170] sm:$0xff]
    %v2622 = vld [vmem:[#allocation3 + $0x178] sm:$0xff]
    %v2623 = vld [vmem:[#allocation3 + $0x180] sm:$0xff]
    %v2624 = vld [vmem:[#allocation3 + $0x188] sm:$0xff]
    %v2625 = vld [vmem:[#allocation3 + $0x190] sm:$0xff]
    %v2626 = vld [vmem:[#allocation3 + $0x198] sm:$0xff]
    %v2627 = vld [vmem:[#allocation3 + $0x1a0] sm:$0xff]
    %v2628 = vld [vmem:[#allocation3 + $0x1a8] sm:$0xff]
    %v2629 = vld [vmem:[#allocation3 + $0x1b0] sm:$0xff]
    %v2630 = vld [vmem:[#allocation3 + $0x1b8] sm:$0xff]
    %v2631 = vld [vmem:[#allocation3 + $0x1c0] sm:$0xff]
    %v2632 = vld [vmem:[#allocation3 + $0x1c8] sm:$0xff]
    %v2633 = vld [vmem:[#allocation3 + $0x1d0] sm:$0xff]
    %v2634 = vld [vmem:[#allocation3 + $0x1d8] sm:$0xff]
    %v2635 = vld [vmem:[#allocation3 + $0x1e0] sm:$0xff]
    %v2636 = vld [vmem:[#allocation3 + $0x1e8] sm:$0xff]
    %v2637 = vld [vmem:[#allocation3 + $0x1f0] sm:$0xff]
    %v2638 = vld [vmem:[#allocation3 + $0x1f8] sm:$0xff]
    %2639 = vmatpush.msra.mxu0 %v2635
    %2640 = vmatpush.msra.mxu0 %v2631
    %2641 = vmatpush.msra.mxu0 %v2627
    %2642 = vmatpush.msra.mxu0 %v2623
    %2643 = vmatpush.msra.mxu0 %v2619
    %2644 = vmatpush.msra.mxu0 %v2615
    %2645 = vmatpush.msra.mxu0 %v2611
    %2646 = vmatpush.msra.mxu0 %v2607
    %2647 = vmatpush.msra.mxu0 %v2603
    %2648 = vmatpush.msra.mxu0 %v2599
    %2649 = vmatpush.msra.mxu0 %v2595
    %2650 = vmatpush.msra.mxu0 %v2591
    %2651 = vmatpush.msra.mxu0 %v2587
    %2652 = vmatpush.msra.mxu0 %v2583
    %2653 = vmatpush.msra.mxu0 %v2579
    %2654 = vmatpush.msra.mxu0 %v2575
    %2655 = vmatmul.f32.gmra.mxu0 %v2425
    %v2656 = vpop.f32.mrf.mxu0
    %v2657 = vadd.f32 0.0, %v2656
    %2658 = vdwg.mxu0
    %2659 = vmatpush.msra.mxu0 %v2636
    %2660 = vmatpush.msra.mxu0 %v2632
    %2661 = vmatpush.msra.mxu0 %v2628
    %2662 = vmatpush.msra.mxu0 %v2624
    %2663 = vmatpush.msra.mxu0 %v2620
    %2664 = vmatpush.msra.mxu0 %v2616
    %2665 = vmatpush.msra.mxu0 %v2612
    %2666 = vmatpush.msra.mxu0 %v2608
    %2667 = vmatpush.msra.mxu0 %v2604
    %2668 = vmatpush.msra.mxu0 %v2600
    %2669 = vmatpush.msra.mxu0 %v2596
    %2670 = vmatpush.msra.mxu0 %v2592
    %2671 = vmatpush.msra.mxu0 %v2588
    %2672 = vmatpush.msra.mxu0 %v2584
    %2673 = vmatpush.msra.mxu0 %v2580
    %2674 = vmatpush.msra.mxu0 %v2576
    %2675 = vmatmul.f32.gmra.mxu0 %v2425
    %v2676 = vpop.f32.mrf.mxu0
    %v2677 = vadd.f32 0.0, %v2676
    %2678 = vdwg.mxu0
    %2679 = vmatpush.msra.mxu0 %v2637
    %2680 = vmatpush.msra.mxu0 %v2633
    %2681 = vmatpush.msra.mxu0 %v2629
    %2682 = vmatpush.msra.mxu0 %v2625
    %2683 = vmatpush.msra.mxu0 %v2621
    %2684 = vmatpush.msra.mxu0 %v2617
    %2685 = vmatpush.msra.mxu0 %v2613
    %2686 = vmatpush.msra.mxu0 %v2609
    %2687 = vmatpush.msra.mxu0 %v2605
    %2688 = vmatpush.msra.mxu0 %v2601
    %2689 = vmatpush.msra.mxu0 %v2597
    %2690 = vmatpush.msra.mxu0 %v2593
    %2691 = vmatpush.msra.mxu0 %v2589
    %2692 = vmatpush.msra.mxu0 %v2585
    %2693 = vmatpush.msra.mxu0 %v2581
    %2694 = vmatpush.msra.mxu0 %v2577
    %2695 = vmatmul.f32.gmra.mxu0 %v2425
    %v2696 = vpop.f32.mrf.mxu0
    %v2697 = vadd.f32 0.0, %v2696
    %2698 = vdwg.mxu0
    %2699 = vmatpush.msra.mxu0 %v2638
    %2700 = vmatpush.msra.mxu0 %v2634
    %2701 = vmatpush.msra.mxu0 %v2630
    %2702 = vmatpush.msra.mxu0 %v2626
    %2703 = vmatpush.msra.mxu0 %v2622
    %2704 = vmatpush.msra.mxu0 %v2618
    %2705 = vmatpush.msra.mxu0 %v2614
    %2706 = vmatpush.msra.mxu0 %v2610
    %2707 = vmatpush.msra.mxu0 %v2606
    %2708 = vmatpush.msra.mxu0 %v2602
    %2709 = vmatpush.msra.mxu0 %v2598
    %2710 = vmatpush.msra.mxu0 %v2594
    %2711 = vmatpush.msra.mxu0 %v2590
    %2712 = vmatpush.msra.mxu0 %v2586
    %2713 = vmatpush.msra.mxu0 %v2582
    %2714 = vmatpush.msra.mxu0 %v2578
    %2715 = vmatmul.f32.gmra.mxu0 %v2425
    %v2716 = vpop.f32.mrf.mxu0
    %v2717 = vadd.f32 0.0, %v2716
    %2718 = vdwg.mxu0
    %v2719 = vadd.f32 %v172, %v2657
    %v2720 = vadd.f32 %v195, %v2677
    %v2721 = vadd.f32 %v218, %v2697
    %v2722 = vadd.f32 %v241, %v2717
    %v2723 = vxor.u32 %v2719, 2147483648
    %v2724 = vmul.f32 %v2723, 1.442695
    %v2725 = vpow.pop %v2724
    %v2726 = vadd.f32 %v2725, 1.0
    %v2727 = vrcp.pop %v2726
    %v2728 = vmul.f32 %v2726, %v2727
    %v2729 = vsub.f32 1.0, %v2728
    %v2730 = vmul.f32 %v2727, %v2729
    %v2731 = vadd.f32 %v2727, %v2730
    %vm2732 = vweird.f32 %v2726
    %vm2733 = vweird.f32 %v2727
    %vm2734 = vmor %vm2732, %vm2733
    %v2735 = vsel %vm2734, %v2727, %v2731
    %v2736 = vand.u32 2147483647, %v2726
    %vm2737 = vcmp.eq.f32.partialorder %v2736, 8.507059e+37
    %v2738 = vand.u32 %v2726, 2147483648
    %v2739 = vor.u32 1.1754944e-38, %v2738
    %v2740 = vsel %vm2737, %v2739, %v2735
    %v2741 = vmul.f32 1.0, %v2740
    %v2742 = vxor.u32 %v2720, 2147483648
    %v2743 = vmul.f32 %v2742, 1.442695
    %v2744 = vpow.pop %v2743
    %v2745 = vadd.f32 %v2744, 1.0
    %v2746 = vrcp.pop %v2745
    %v2747 = vmul.f32 %v2745, %v2746
    %v2748 = vsub.f32 1.0, %v2747
    %v2749 = vmul.f32 %v2746, %v2748
    %v2750 = vadd.f32 %v2746, %v2749
    %vm2751 = vweird.f32 %v2745
    %vm2752 = vweird.f32 %v2746
    %vm2753 = vmor %vm2751, %vm2752
    %v2754 = vsel %vm2753, %v2746, %v2750
    %v2755 = vand.u32 2147483647, %v2745
    %vm2756 = vcmp.eq.f32.partialorder %v2755, 8.507059e+37
    %v2757 = vand.u32 %v2745, 2147483648
    %v2758 = vor.u32 1.1754944e-38, %v2757
    %v2759 = vsel %vm2756, %v2758, %v2754
    %v2760 = vmul.f32 1.0, %v2759
    %v2761 = vtanh.pop %v2721
    %v2762 = vxor.u32 %v2722, 2147483648
    %v2763 = vmul.f32 %v2762, 1.442695
    %v2764 = vpow.pop %v2763
    %v2765 = vadd.f32 %v2764, 1.0
    %v2766 = vrcp.pop %v2765
    %v2767 = vmul.f32 %v2765, %v2766
    %v2768 = vsub.f32 1.0, %v2767
    %v2769 = vmul.f32 %v2766, %v2768
    %v2770 = vadd.f32 %v2766, %v2769
    %vm2771 = vweird.f32 %v2765
    %vm2772 = vweird.f32 %v2766
    %vm2773 = vmor %vm2771, %vm2772
    %v2774 = vsel %vm2773, %v2766, %v2770
    %v2775 = vand.u32 2147483647, %v2765
    %vm2776 = vcmp.eq.f32.partialorder %v2775, 8.507059e+37
    %v2777 = vand.u32 %v2765, 2147483648
    %v2778 = vor.u32 1.1754944e-38, %v2777
    %v2779 = vsel %vm2776, %v2778, %v2774
    %v2780 = vmul.f32 1.0, %v2779
    %v2782 = vrot.slane %v2213, 6
    %v2784 = vmul.f32 %v2760, %v2782
    %v2785 = vmul.f32 %v2741, %v2761
    %v2786 = vadd.f32 %v2784, %v2785
    %v2787 = vtanh.pop %v2786
    %v2788 = vmul.f32 %v2780, %v2787
    %v2789 = vld [vmem:[#allocation6] sm:$0xff]
    %v2790 = vld [vmem:[#allocation6 + $0x8] sm:$0xff]
    %v2791 = vld [vmem:[#allocation6 + $0x10] sm:$0xff]
    %v2792 = vld [vmem:[#allocation6 + $0x18] sm:$0xff]
    %v2793 = vld [vmem:[#allocation6 + $0x20] sm:$0xff]
    %v2794 = vld [vmem:[#allocation6 + $0x28] sm:$0xff]
    %v2795 = vld [vmem:[#allocation6 + $0x30] sm:$0xff]
    %v2796 = vld [vmem:[#allocation6 + $0x38] sm:$0xff]
    %v2797 = vld [vmem:[#allocation6 + $0x40] sm:$0xff]
    %v2798 = vld [vmem:[#allocation6 + $0x48] sm:$0xff]
    %v2799 = vld [vmem:[#allocation6 + $0x50] sm:$0xff]
    %v2800 = vld [vmem:[#allocation6 + $0x58] sm:$0xff]
    %v2801 = vld [vmem:[#allocation6 + $0x60] sm:$0xff]
    %v2802 = vld [vmem:[#allocation6 + $0x68] sm:$0xff]
    %v2803 = vld [vmem:[#allocation6 + $0x70] sm:$0xff]
    %v2804 = vld [vmem:[#allocation6 + $0x78] sm:$0xff]
    %v2805 = vld [vmem:[#allocation6 + $0x80] sm:$0xff]
    %v2806 = vld [vmem:[#allocation6 + $0x88] sm:$0xff]
    %v2807 = vld [vmem:[#allocation6 + $0x90] sm:$0xff]
    %v2808 = vld [vmem:[#allocation6 + $0x98] sm:$0xff]
    %v2809 = vld [vmem:[#allocation6 + $0xa0] sm:$0xff]
    %v2810 = vld [vmem:[#allocation6 + $0xa8] sm:$0xff]
    %v2811 = vld [vmem:[#allocation6 + $0xb0] sm:$0xff]
    %v2812 = vld [vmem:[#allocation6 + $0xb8] sm:$0xff]
    %v2813 = vld [vmem:[#allocation6 + $0xc0] sm:$0xff]
    %v2814 = vld [vmem:[#allocation6 + $0xc8] sm:$0xff]
    %v2815 = vld [vmem:[#allocation6 + $0xd0] sm:$0xff]
    %v2816 = vld [vmem:[#allocation6 + $0xd8] sm:$0xff]
    %v2817 = vld [vmem:[#allocation6 + $0xe0] sm:$0xff]
    %v2818 = vld [vmem:[#allocation6 + $0xe8] sm:$0xff]
    %v2819 = vld [vmem:[#allocation6 + $0xf0] sm:$0xff]
    %v2820 = vld [vmem:[#allocation6 + $0xf8] sm:$0xff]
    %v2821 = vld [vmem:[#allocation6 + $0x100] sm:$0xff]
    %v2822 = vld [vmem:[#allocation6 + $0x108] sm:$0xff]
    %v2823 = vld [vmem:[#allocation6 + $0x110] sm:$0xff]
    %v2824 = vld [vmem:[#allocation6 + $0x118] sm:$0xff]
    %v2825 = vld [vmem:[#allocation6 + $0x120] sm:$0xff]
    %v2826 = vld [vmem:[#allocation6 + $0x128] sm:$0xff]
    %v2827 = vld [vmem:[#allocation6 + $0x130] sm:$0xff]
    %v2828 = vld [vmem:[#allocation6 + $0x138] sm:$0xff]
    %v2829 = vld [vmem:[#allocation6 + $0x140] sm:$0xff]
    %v2830 = vld [vmem:[#allocation6 + $0x148] sm:$0xff]
    %v2831 = vld [vmem:[#allocation6 + $0x150] sm:$0xff]
    %v2832 = vld [vmem:[#allocation6 + $0x158] sm:$0xff]
    %v2833 = vld [vmem:[#allocation6 + $0x160] sm:$0xff]
    %v2834 = vld [vmem:[#allocation6 + $0x168] sm:$0xff]
    %v2835 = vld [vmem:[#allocation6 + $0x170] sm:$0xff]
    %v2836 = vld [vmem:[#allocation6 + $0x178] sm:$0xff]
    %v2837 = vld [vmem:[#allocation6 + $0x180] sm:$0xff]
    %v2838 = vld [vmem:[#allocation6 + $0x188] sm:$0xff]
    %v2839 = vld [vmem:[#allocation6 + $0x190] sm:$0xff]
    %v2840 = vld [vmem:[#allocation6 + $0x198] sm:$0xff]
    %v2841 = vld [vmem:[#allocation6 + $0x1a0] sm:$0xff]
    %v2842 = vld [vmem:[#allocation6 + $0x1a8] sm:$0xff]
    %v2843 = vld [vmem:[#allocation6 + $0x1b0] sm:$0xff]
    %v2844 = vld [vmem:[#allocation6 + $0x1b8] sm:$0xff]
    %v2845 = vld [vmem:[#allocation6 + $0x1c0] sm:$0xff]
    %v2846 = vld [vmem:[#allocation6 + $0x1c8] sm:$0xff]
    %v2847 = vld [vmem:[#allocation6 + $0x1d0] sm:$0xff]
    %v2848 = vld [vmem:[#allocation6 + $0x1d8] sm:$0xff]
    %v2849 = vld [vmem:[#allocation6 + $0x1e0] sm:$0xff]
    %v2850 = vld [vmem:[#allocation6 + $0x1e8] sm:$0xff]
    %v2851 = vld [vmem:[#allocation6 + $0x1f0] sm:$0xff]
    %v2852 = vld [vmem:[#allocation6 + $0x1f8] sm:$0xff]
    %v2853 = vld [vmem:[#allocation8] sm:$0xff]
    %v2854 = vld [vmem:[#allocation8 + $0x8] sm:$0xff]
    %v2855 = vld [vmem:[#allocation8 + $0x10] sm:$0xff]
    %v2856 = vld [vmem:[#allocation8 + $0x18] sm:$0xff]
    %v2857 = vld [vmem:[#allocation8 + $0x20] sm:$0xff]
    %v2858 = vld [vmem:[#allocation8 + $0x28] sm:$0xff]
    %v2859 = vld [vmem:[#allocation8 + $0x30] sm:$0xff]
    %v2860 = vld [vmem:[#allocation8 + $0x38] sm:$0xff]
    %v2861 = vld [vmem:[#allocation8 + $0x40] sm:$0xff]
    %v2862 = vld [vmem:[#allocation8 + $0x48] sm:$0xff]
    %v2863 = vld [vmem:[#allocation8 + $0x50] sm:$0xff]
    %v2864 = vld [vmem:[#allocation8 + $0x58] sm:$0xff]
    %v2865 = vld [vmem:[#allocation8 + $0x60] sm:$0xff]
    %v2866 = vld [vmem:[#allocation8 + $0x68] sm:$0xff]
    %v2867 = vld [vmem:[#allocation8 + $0x70] sm:$0xff]
    %v2868 = vld [vmem:[#allocation8 + $0x78] sm:$0xff]
    %v2869 = vld [vmem:[#allocation8 + $0x80] sm:$0xff]
    %v2870 = vld [vmem:[#allocation8 + $0x88] sm:$0xff]
    %v2871 = vld [vmem:[#allocation8 + $0x90] sm:$0xff]
    %v2872 = vld [vmem:[#allocation8 + $0x98] sm:$0xff]
    %v2873 = vld [vmem:[#allocation8 + $0xa0] sm:$0xff]
    %v2874 = vld [vmem:[#allocation8 + $0xa8] sm:$0xff]
    %v2875 = vld [vmem:[#allocation8 + $0xb0] sm:$0xff]
    %v2876 = vld [vmem:[#allocation8 + $0xb8] sm:$0xff]
    %v2877 = vld [vmem:[#allocation8 + $0xc0] sm:$0xff]
    %v2878 = vld [vmem:[#allocation8 + $0xc8] sm:$0xff]
    %v2879 = vld [vmem:[#allocation8 + $0xd0] sm:$0xff]
    %v2880 = vld [vmem:[#allocation8 + $0xd8] sm:$0xff]
    %v2881 = vld [vmem:[#allocation8 + $0xe0] sm:$0xff]
    %v2882 = vld [vmem:[#allocation8 + $0xe8] sm:$0xff]
    %v2883 = vld [vmem:[#allocation8 + $0xf0] sm:$0xff]
    %v2884 = vld [vmem:[#allocation8 + $0xf8] sm:$0xff]
    %v2885 = vld [vmem:[#allocation8 + $0x100] sm:$0xff]
    %v2886 = vld [vmem:[#allocation8 + $0x108] sm:$0xff]
    %v2887 = vld [vmem:[#allocation8 + $0x110] sm:$0xff]
    %v2888 = vld [vmem:[#allocation8 + $0x118] sm:$0xff]
    %v2889 = vld [vmem:[#allocation8 + $0x120] sm:$0xff]
    %v2890 = vld [vmem:[#allocation8 + $0x128] sm:$0xff]
    %v2891 = vld [vmem:[#allocation8 + $0x130] sm:$0xff]
    %v2892 = vld [vmem:[#allocation8 + $0x138] sm:$0xff]
    %v2893 = vld [vmem:[#allocation8 + $0x140] sm:$0xff]
    %v2894 = vld [vmem:[#allocation8 + $0x148] sm:$0xff]
    %v2895 = vld [vmem:[#allocation8 + $0x150] sm:$0xff]
    %v2896 = vld [vmem:[#allocation8 + $0x158] sm:$0xff]
    %v2897 = vld [vmem:[#allocation8 + $0x160] sm:$0xff]
    %v2898 = vld [vmem:[#allocation8 + $0x168] sm:$0xff]
    %v2899 = vld [vmem:[#allocation8 + $0x170] sm:$0xff]
    %v2900 = vld [vmem:[#allocation8 + $0x178] sm:$0xff]
    %v2901 = vld [vmem:[#allocation8 + $0x180] sm:$0xff]
    %v2902 = vld [vmem:[#allocation8 + $0x188] sm:$0xff]
    %v2903 = vld [vmem:[#allocation8 + $0x190] sm:$0xff]
    %v2904 = vld [vmem:[#allocation8 + $0x198] sm:$0xff]
    %v2905 = vld [vmem:[#allocation8 + $0x1a0] sm:$0xff]
    %v2906 = vld [vmem:[#allocation8 + $0x1a8] sm:$0xff]
    %v2907 = vld [vmem:[#allocation8 + $0x1b0] sm:$0xff]
    %v2908 = vld [vmem:[#allocation8 + $0x1b8] sm:$0xff]
    %v2909 = vld [vmem:[#allocation8 + $0x1c0] sm:$0xff]
    %v2910 = vld [vmem:[#allocation8 + $0x1c8] sm:$0xff]
    %v2911 = vld [vmem:[#allocation8 + $0x1d0] sm:$0xff]
    %v2912 = vld [vmem:[#allocation8 + $0x1d8] sm:$0xff]
    %v2913 = vld [vmem:[#allocation8 + $0x1e0] sm:$0xff]
    %v2914 = vld [vmem:[#allocation8 + $0x1e8] sm:$0xff]
    %v2915 = vld [vmem:[#allocation8 + $0x1f0] sm:$0xff]
    %v2916 = vld [vmem:[#allocation8 + $0x1f8] sm:$0xff]
    %2917 = vmatpush.msra.mxu0 %v2913
    %2918 = vmatpush.msra.mxu0 %v2909
    %2919 = vmatpush.msra.mxu0 %v2905
    %2920 = vmatpush.msra.mxu0 %v2901
    %2921 = vmatpush.msra.mxu0 %v2897
    %2922 = vmatpush.msra.mxu0 %v2893
    %2923 = vmatpush.msra.mxu0 %v2889
    %2924 = vmatpush.msra.mxu0 %v2885
    %2925 = vmatpush.msra.mxu0 %v2881
    %2926 = vmatpush.msra.mxu0 %v2877
    %2927 = vmatpush.msra.mxu0 %v2873
    %2928 = vmatpush.msra.mxu0 %v2869
    %2929 = vmatpush.msra.mxu0 %v2865
    %2930 = vmatpush.msra.mxu0 %v2861
    %2931 = vmatpush.msra.mxu0 %v2857
    %2932 = vmatpush.msra.mxu0 %v2853
    %2933 = vmatmul.f32.gmra.mxu0 %v2573
    %v2934 = vpop.f32.mrf.mxu0
    %v2935 = vadd.f32 0.0, %v2934
    %2936 = vdwg.mxu0
    %2937 = vmatpush.msra.mxu0 %v2914
    %2938 = vmatpush.msra.mxu0 %v2910
    %2939 = vmatpush.msra.mxu0 %v2906
    %2940 = vmatpush.msra.mxu0 %v2902
    %2941 = vmatpush.msra.mxu0 %v2898
    %2942 = vmatpush.msra.mxu0 %v2894
    %2943 = vmatpush.msra.mxu0 %v2890
    %2944 = vmatpush.msra.mxu0 %v2886
    %2945 = vmatpush.msra.mxu0 %v2882
    %2946 = vmatpush.msra.mxu0 %v2878
    %2947 = vmatpush.msra.mxu0 %v2874
    %2948 = vmatpush.msra.mxu0 %v2870
    %2949 = vmatpush.msra.mxu0 %v2866
    %2950 = vmatpush.msra.mxu0 %v2862
    %2951 = vmatpush.msra.mxu0 %v2858
    %2952 = vmatpush.msra.mxu0 %v2854
    %2953 = vmatmul.f32.gmra.mxu0 %v2573
    %v2954 = vpop.f32.mrf.mxu0
    %v2955 = vadd.f32 0.0, %v2954
    %2956 = vdwg.mxu0
    %2957 = vmatpush.msra.mxu0 %v2915
    %2958 = vmatpush.msra.mxu0 %v2911
    %2959 = vmatpush.msra.mxu0 %v2907
    %2960 = vmatpush.msra.mxu0 %v2903
    %2961 = vmatpush.msra.mxu0 %v2899
    %2962 = vmatpush.msra.mxu0 %v2895
    %2963 = vmatpush.msra.mxu0 %v2891
    %2964 = vmatpush.msra.mxu0 %v2887
    %2965 = vmatpush.msra.mxu0 %v2883
    %2966 = vmatpush.msra.mxu0 %v2879
    %2967 = vmatpush.msra.mxu0 %v2875
    %2968 = vmatpush.msra.mxu0 %v2871
    %2969 = vmatpush.msra.mxu0 %v2867
    %2970 = vmatpush.msra.mxu0 %v2863
    %2971 = vmatpush.msra.mxu0 %v2859
    %2972 = vmatpush.msra.mxu0 %v2855
    %2973 = vmatmul.f32.gmra.mxu0 %v2573
    %v2974 = vpop.f32.mrf.mxu0
    %v2975 = vadd.f32 0.0, %v2974
    %2976 = vdwg.mxu0
    %2977 = vmatpush.msra.mxu0 %v2916
    %2978 = vmatpush.msra.mxu0 %v2912
    %2979 = vmatpush.msra.mxu0 %v2908
    %2980 = vmatpush.msra.mxu0 %v2904
    %2981 = vmatpush.msra.mxu0 %v2900
    %2982 = vmatpush.msra.mxu0 %v2896
    %2983 = vmatpush.msra.mxu0 %v2892
    %2984 = vmatpush.msra.mxu0 %v2888
    %2985 = vmatpush.msra.mxu0 %v2884
    %2986 = vmatpush.msra.mxu0 %v2880
    %2987 = vmatpush.msra.mxu0 %v2876
    %2988 = vmatpush.msra.mxu0 %v2872
    %2989 = vmatpush.msra.mxu0 %v2868
    %2990 = vmatpush.msra.mxu0 %v2864
    %2991 = vmatpush.msra.mxu0 %v2860
    %2992 = vmatpush.msra.mxu0 %v2856
    %2993 = vmatmul.f32.gmra.mxu0 %v2573
    %v2994 = vpop.f32.mrf.mxu0
    %v2995 = vadd.f32 0.0, %v2994
    %2996 = vdwg.mxu0
    %2997 = vmatpush.msra.mxu0 %v2849
    %2998 = vmatpush.msra.mxu0 %v2845
    %2999 = vmatpush.msra.mxu0 %v2841
    %3000 = vmatpush.msra.mxu0 %v2837
    %3001 = vmatpush.msra.mxu0 %v2833
    %3002 = vmatpush.msra.mxu0 %v2829
    %3003 = vmatpush.msra.mxu0 %v2825
    %3004 = vmatpush.msra.mxu0 %v2821
    %3005 = vmatpush.msra.mxu0 %v2817
    %3006 = vmatpush.msra.mxu0 %v2813
    %3007 = vmatpush.msra.mxu0 %v2809
    %3008 = vmatpush.msra.mxu0 %v2805
    %3009 = vmatpush.msra.mxu0 %v2801
    %3010 = vmatpush.msra.mxu0 %v2797
    %3011 = vmatpush.msra.mxu0 %v2793
    %3012 = vmatpush.msra.mxu0 %v2789
    %3013 = vmatmul.f32.gmra.mxu0 %v2788
    %v3014 = vpop.f32.mrf.mxu0
    %v3015 = vadd.f32 %v2935, %v3014
    %3016 = vdwg.mxu0
    %3017 = vmatpush.msra.mxu0 %v2850
    %3018 = vmatpush.msra.mxu0 %v2846
    %3019 = vmatpush.msra.mxu0 %v2842
    %3020 = vmatpush.msra.mxu0 %v2838
    %3021 = vmatpush.msra.mxu0 %v2834
    %3022 = vmatpush.msra.mxu0 %v2830
    %3023 = vmatpush.msra.mxu0 %v2826
    %3024 = vmatpush.msra.mxu0 %v2822
    %3025 = vmatpush.msra.mxu0 %v2818
    %3026 = vmatpush.msra.mxu0 %v2814
    %3027 = vmatpush.msra.mxu0 %v2810
    %3028 = vmatpush.msra.mxu0 %v2806
    %3029 = vmatpush.msra.mxu0 %v2802
    %3030 = vmatpush.msra.mxu0 %v2798
    %3031 = vmatpush.msra.mxu0 %v2794
    %3032 = vmatpush.msra.mxu0 %v2790
    %3033 = vmatmul.f32.gmra.mxu0 %v2788
    %v3034 = vpop.f32.mrf.mxu0
    %v3035 = vadd.f32 %v2955, %v3034
    %3036 = vdwg.mxu0
    %3037 = vmatpush.msra.mxu0 %v2851
    %3038 = vmatpush.msra.mxu0 %v2847
    %3039 = vmatpush.msra.mxu0 %v2843
    %3040 = vmatpush.msra.mxu0 %v2839
    %3041 = vmatpush.msra.mxu0 %v2835
    %3042 = vmatpush.msra.mxu0 %v2831
    %3043 = vmatpush.msra.mxu0 %v2827
    %3044 = vmatpush.msra.mxu0 %v2823
    %3045 = vmatpush.msra.mxu0 %v2819
    %3046 = vmatpush.msra.mxu0 %v2815
    %3047 = vmatpush.msra.mxu0 %v2811
    %3048 = vmatpush.msra.mxu0 %v2807
    %3049 = vmatpush.msra.mxu0 %v2803
    %3050 = vmatpush.msra.mxu0 %v2799
    %3051 = vmatpush.msra.mxu0 %v2795
    %3052 = vmatpush.msra.mxu0 %v2791
    %3053 = vmatmul.f32.gmra.mxu0 %v2788
    %v3054 = vpop.f32.mrf.mxu0
    %v3055 = vadd.f32 %v2975, %v3054
    %3056 = vdwg.mxu0
    %3057 = vmatpush.msra.mxu0 %v2852
    %3058 = vmatpush.msra.mxu0 %v2848
    %3059 = vmatpush.msra.mxu0 %v2844
    %3060 = vmatpush.msra.mxu0 %v2840
    %3061 = vmatpush.msra.mxu0 %v2836
    %3062 = vmatpush.msra.mxu0 %v2832
    %3063 = vmatpush.msra.mxu0 %v2828
    %3064 = vmatpush.msra.mxu0 %v2824
    %3065 = vmatpush.msra.mxu0 %v2820
    %3066 = vmatpush.msra.mxu0 %v2816
    %3067 = vmatpush.msra.mxu0 %v2812
    %3068 = vmatpush.msra.mxu0 %v2808
    %3069 = vmatpush.msra.mxu0 %v2804
    %3070 = vmatpush.msra.mxu0 %v2800
    %3071 = vmatpush.msra.mxu0 %v2796
    %3072 = vmatpush.msra.mxu0 %v2792
    %3073 = vmatmul.f32.gmra.mxu0 %v2788
    %v3074 = vpop.f32.mrf.mxu0
    %v3075 = vadd.f32 %v2995, %v3074
    %3076 = vdwg.mxu0
    %v3077 = vadd.f32 %v3015, %v245
    %v3078 = vadd.f32 %v3035, %v246
    %v3079 = vadd.f32 %v3055, %v247
    %v3080 = vadd.f32 %v3075, %v248
    %v3081 = vxor.u32 %v3077, 2147483648
    %v3082 = vmul.f32 %v3081, 1.442695
    %v3083 = vpow.pop %v3082
    %v3084 = vadd.f32 %v3083, 1.0
    %v3085 = vrcp.pop %v3084
    %v3086 = vmul.f32 %v3084, %v3085
    %v3087 = vsub.f32 1.0, %v3086
    %v3088 = vmul.f32 %v3085, %v3087
    %v3089 = vadd.f32 %v3085, %v3088
    %vm3090 = vweird.f32 %v3084
    %vm3091 = vweird.f32 %v3085
    %vm3092 = vmor %vm3090, %vm3091
    %v3093 = vsel %vm3092, %v3085, %v3089
    %v3094 = vand.u32 2147483647, %v3084
    %vm3095 = vcmp.eq.f32.partialorder %v3094, 8.507059e+37
    %v3096 = vand.u32 %v3084, 2147483648
    %v3097 = vor.u32 1.1754944e-38, %v3096
    %v3098 = vsel %vm3095, %v3097, %v3093
    %v3099 = vmul.f32 1.0, %v3098
    %v3100 = vxor.u32 %v3078, 2147483648
    %v3101 = vmul.f32 %v3100, 1.442695
    %v3102 = vpow.pop %v3101
    %v3103 = vadd.f32 %v3102, 1.0
    %v3104 = vrcp.pop %v3103
    %v3105 = vmul.f32 %v3103, %v3104
    %v3106 = vsub.f32 1.0, %v3105
    %v3107 = vmul.f32 %v3104, %v3106
    %v3108 = vadd.f32 %v3104, %v3107
    %vm3109 = vweird.f32 %v3103
    %vm3110 = vweird.f32 %v3104
    %vm3111 = vmor %vm3109, %vm3110
    %v3112 = vsel %vm3111, %v3104, %v3108
    %v3113 = vand.u32 2147483647, %v3103
    %vm3114 = vcmp.eq.f32.partialorder %v3113, 8.507059e+37
    %v3115 = vand.u32 %v3103, 2147483648
    %v3116 = vor.u32 1.1754944e-38, %v3115
    %v3117 = vsel %vm3114, %v3116, %v3112
    %v3118 = vmul.f32 1.0, %v3117
    %v3119 = vtanh.pop %v3079
    %v3120 = vxor.u32 %v3080, 2147483648
    %v3121 = vmul.f32 %v3120, 1.442695
    %v3122 = vpow.pop %v3121
    %v3123 = vadd.f32 %v3122, 1.0
    %v3124 = vrcp.pop %v3123
    %v3125 = vmul.f32 %v3123, %v3124
    %v3126 = vsub.f32 1.0, %v3125
    %v3127 = vmul.f32 %v3124, %v3126
    %v3128 = vadd.f32 %v3124, %v3127
    %vm3129 = vweird.f32 %v3123
    %vm3130 = vweird.f32 %v3124
    %vm3131 = vmor %vm3129, %vm3130
    %v3132 = vsel %vm3131, %v3124, %v3128
    %v3133 = vand.u32 2147483647, %v3123
    %vm3134 = vcmp.eq.f32.partialorder %v3133, 8.507059e+37
    %v3135 = vand.u32 %v3123, 2147483648
    %v3136 = vor.u32 1.1754944e-38, %v3135
    %v3137 = vsel %vm3134, %v3136, %v3132
    %v3138 = vmul.f32 1.0, %v3137
    %v3139 = vmul.f32 %v3118, %v2571
    %v3140 = vmul.f32 %v3099, %v3119
    %v3141 = vadd.f32 %v3139, %v3140
    %v3142 = vtanh.pop %v3141
    %v3143 = vmul.f32 %v3138, %v3142
    %3144 = vst [vmem:[#allocation2 + $0x8] sm:$0x3] %v3143
    %v3145 = vld [vmem:[#allocation3] sm:$0xff]
    %v3146 = vld [vmem:[#allocation3 + $0x8] sm:$0xff]
    %v3147 = vld [vmem:[#allocation3 + $0x10] sm:$0xff]
    %v3148 = vld [vmem:[#allocation3 + $0x18] sm:$0xff]
    %v3149 = vld [vmem:[#allocation3 + $0x20] sm:$0xff]
    %v3150 = vld [vmem:[#allocation3 + $0x28] sm:$0xff]
    %v3151 = vld [vmem:[#allocation3 + $0x30] sm:$0xff]
    %v3152 = vld [vmem:[#allocation3 + $0x38] sm:$0xff]
    %v3153 = vld [vmem:[#allocation3 + $0x40] sm:$0xff]
    %v3154 = vld [vmem:[#allocation3 + $0x48] sm:$0xff]
    %v3155 = vld [vmem:[#allocation3 + $0x50] sm:$0xff]
    %v3156 = vld [vmem:[#allocation3 + $0x58] sm:$0xff]
    %v3157 = vld [vmem:[#allocation3 + $0x60] sm:$0xff]
    %v3158 = vld [vmem:[#allocation3 + $0x68] sm:$0xff]
    %v3159 = vld [vmem:[#allocation3 + $0x70] sm:$0xff]
    %v3160 = vld [vmem:[#allocation3 + $0x78] sm:$0xff]
    %v3161 = vld [vmem:[#allocation3 + $0x80] sm:$0xff]
    %v3162 = vld [vmem:[#allocation3 + $0x88] sm:$0xff]
    %v3163 = vld [vmem:[#allocation3 + $0x90] sm:$0xff]
    %v3164 = vld [vmem:[#allocation3 + $0x98] sm:$0xff]
    %v3165 = vld [vmem:[#allocation3 + $0xa0] sm:$0xff]
    %v3166 = vld [vmem:[#allocation3 + $0xa8] sm:$0xff]
    %v3167 = vld [vmem:[#allocation3 + $0xb0] sm:$0xff]
    %v3168 = vld [vmem:[#allocation3 + $0xb8] sm:$0xff]
    %v3169 = vld [vmem:[#allocation3 + $0xc0] sm:$0xff]
    %v3170 = vld [vmem:[#allocation3 + $0xc8] sm:$0xff]
    %v3171 = vld [vmem:[#allocation3 + $0xd0] sm:$0xff]
    %v3172 = vld [vmem:[#allocation3 + $0xd8] sm:$0xff]
    %v3173 = vld [vmem:[#allocation3 + $0xe0] sm:$0xff]
    %v3174 = vld [vmem:[#allocation3 + $0xe8] sm:$0xff]
    %v3175 = vld [vmem:[#allocation3 + $0xf0] sm:$0xff]
    %v3176 = vld [vmem:[#allocation3 + $0xf8] sm:$0xff]
    %v3177 = vld [vmem:[#allocation3 + $0x100] sm:$0xff]
    %v3178 = vld [vmem:[#allocation3 + $0x108] sm:$0xff]
    %v3179 = vld [vmem:[#allocation3 + $0x110] sm:$0xff]
    %v3180 = vld [vmem:[#allocation3 + $0x118] sm:$0xff]
    %v3181 = vld [vmem:[#allocation3 + $0x120] sm:$0xff]
    %v3182 = vld [vmem:[#allocation3 + $0x128] sm:$0xff]
    %v3183 = vld [vmem:[#allocation3 + $0x130] sm:$0xff]
    %v3184 = vld [vmem:[#allocation3 + $0x138] sm:$0xff]
    %v3185 = vld [vmem:[#allocation3 + $0x140] sm:$0xff]
    %v3186 = vld [vmem:[#allocation3 + $0x148] sm:$0xff]
    %v3187 = vld [vmem:[#allocation3 + $0x150] sm:$0xff]
    %v3188 = vld [vmem:[#allocation3 + $0x158] sm:$0xff]
    %v3189 = vld [vmem:[#allocation3 + $0x160] sm:$0xff]
    %v3190 = vld [vmem:[#allocation3 + $0x168] sm:$0xff]
    %v3191 = vld [vmem:[#allocation3 + $0x170] sm:$0xff]
    %v3192 = vld [vmem:[#allocation3 + $0x178] sm:$0xff]
    %v3193 = vld [vmem:[#allocation3 + $0x180] sm:$0xff]
    %v3194 = vld [vmem:[#allocation3 + $0x188] sm:$0xff]
    %v3195 = vld [vmem:[#allocation3 + $0x190] sm:$0xff]
    %v3196 = vld [vmem:[#allocation3 + $0x198] sm:$0xff]
    %v3197 = vld [vmem:[#allocation3 + $0x1a0] sm:$0xff]
    %v3198 = vld [vmem:[#allocation3 + $0x1a8] sm:$0xff]
    %v3199 = vld [vmem:[#allocation3 + $0x1b0] sm:$0xff]
    %v3200 = vld [vmem:[#allocation3 + $0x1b8] sm:$0xff]
    %v3201 = vld [vmem:[#allocation3 + $0x1c0] sm:$0xff]
    %v3202 = vld [vmem:[#allocation3 + $0x1c8] sm:$0xff]
    %v3203 = vld [vmem:[#allocation3 + $0x1d0] sm:$0xff]
    %v3204 = vld [vmem:[#allocation3 + $0x1d8] sm:$0xff]
    %v3205 = vld [vmem:[#allocation3 + $0x1e0] sm:$0xff]
    %v3206 = vld [vmem:[#allocation3 + $0x1e8] sm:$0xff]
    %v3207 = vld [vmem:[#allocation3 + $0x1f0] sm:$0xff]
    %v3208 = vld [vmem:[#allocation3 + $0x1f8] sm:$0xff]
    %3209 = vmatpush.msra.mxu0 %v3205
    %3210 = vmatpush.msra.mxu0 %v3201
    %3211 = vmatpush.msra.mxu0 %v3197
    %3212 = vmatpush.msra.mxu0 %v3193
    %3213 = vmatpush.msra.mxu0 %v3189
    %3214 = vmatpush.msra.mxu0 %v3185
    %3215 = vmatpush.msra.mxu0 %v3181
    %3216 = vmatpush.msra.mxu0 %v3177
    %3217 = vmatpush.msra.mxu0 %v3173
    %3218 = vmatpush.msra.mxu0 %v3169
    %3219 = vmatpush.msra.mxu0 %v3165
    %3220 = vmatpush.msra.mxu0 %v3161
    %3221 = vmatpush.msra.mxu0 %v3157
    %3222 = vmatpush.msra.mxu0 %v3153
    %3223 = vmatpush.msra.mxu0 %v3149
    %3224 = vmatpush.msra.mxu0 %v3145
    %3225 = vmatmul.f32.gmra.mxu0 %v2788
    %v3226 = vpop.f32.mrf.mxu0
    %v3227 = vadd.f32 0.0, %v3226
    %3228 = vdwg.mxu0
    %3229 = vmatpush.msra.mxu0 %v3206
    %3230 = vmatpush.msra.mxu0 %v3202
    %3231 = vmatpush.msra.mxu0 %v3198
    %3232 = vmatpush.msra.mxu0 %v3194
    %3233 = vmatpush.msra.mxu0 %v3190
    %3234 = vmatpush.msra.mxu0 %v3186
    %3235 = vmatpush.msra.mxu0 %v3182
    %3236 = vmatpush.msra.mxu0 %v3178
    %3237 = vmatpush.msra.mxu0 %v3174
    %3238 = vmatpush.msra.mxu0 %v3170
    %3239 = vmatpush.msra.mxu0 %v3166
    %3240 = vmatpush.msra.mxu0 %v3162
    %3241 = vmatpush.msra.mxu0 %v3158
    %3242 = vmatpush.msra.mxu0 %v3154
    %3243 = vmatpush.msra.mxu0 %v3150
    %3244 = vmatpush.msra.mxu0 %v3146
    %3245 = vmatmul.f32.gmra.mxu0 %v2788
    %v3246 = vpop.f32.mrf.mxu0
    %v3247 = vadd.f32 0.0, %v3246
    %3248 = vdwg.mxu0
    %3249 = vmatpush.msra.mxu0 %v3207
    %3250 = vmatpush.msra.mxu0 %v3203
    %3251 = vmatpush.msra.mxu0 %v3199
    %3252 = vmatpush.msra.mxu0 %v3195
    %3253 = vmatpush.msra.mxu0 %v3191
    %3254 = vmatpush.msra.mxu0 %v3187
    %3255 = vmatpush.msra.mxu0 %v3183
    %3256 = vmatpush.msra.mxu0 %v3179
    %3257 = vmatpush.msra.mxu0 %v3175
    %3258 = vmatpush.msra.mxu0 %v3171
    %3259 = vmatpush.msra.mxu0 %v3167
    %3260 = vmatpush.msra.mxu0 %v3163
    %3261 = vmatpush.msra.mxu0 %v3159
    %3262 = vmatpush.msra.mxu0 %v3155
    %3263 = vmatpush.msra.mxu0 %v3151
    %3264 = vmatpush.msra.mxu0 %v3147
    %3265 = vmatmul.f32.gmra.mxu0 %v2788
    %v3266 = vpop.f32.mrf.mxu0
    %v3267 = vadd.f32 0.0, %v3266
    %3268 = vdwg.mxu0
    %3269 = vmatpush.msra.mxu0 %v3208
    %3270 = vmatpush.msra.mxu0 %v3204
    %3271 = vmatpush.msra.mxu0 %v3200
    %3272 = vmatpush.msra.mxu0 %v3196
    %3273 = vmatpush.msra.mxu0 %v3192
    %3274 = vmatpush.msra.mxu0 %v3188
    %3275 = vmatpush.msra.mxu0 %v3184
    %3276 = vmatpush.msra.mxu0 %v3180
    %3277 = vmatpush.msra.mxu0 %v3176
    %3278 = vmatpush.msra.mxu0 %v3172
    %3279 = vmatpush.msra.mxu0 %v3168
    %3280 = vmatpush.msra.mxu0 %v3164
    %3281 = vmatpush.msra.mxu0 %v3160
    %3282 = vmatpush.msra.mxu0 %v3156
    %3283 = vmatpush.msra.mxu0 %v3152
    %3284 = vmatpush.msra.mxu0 %v3148
    %3285 = vmatmul.f32.gmra.mxu0 %v2788
    %v3286 = vpop.f32.mrf.mxu0
    %v3287 = vadd.f32 0.0, %v3286
    %3288 = vdwg.mxu0
    %v3293 = vrot.slane %v3227, 6
    %v3294 = vrot.slane %v3247, 6
    %v3295 = vrot.slane %v3267, 6
    %v3296 = vrot.slane %v3287, 6
    %v3301 = vadd.f32 %v172, %v3293
    %v3302 = vadd.f32 %v195, %v3294
    %v3303 = vadd.f32 %v218, %v3295
    %v3304 = vadd.f32 %v241, %v3296
    %v3305 = vxor.u32 %v3301, 2147483648
    %v3306 = vmul.f32 %v3305, 1.442695
    %v3307 = vpow.pop %v3306
    %v3308 = vadd.f32 %v3307, 1.0
    %v3309 = vrcp.pop %v3308
    %v3310 = vmul.f32 %v3308, %v3309
    %v3311 = vsub.f32 1.0, %v3310
    %v3312 = vmul.f32 %v3309, %v3311
    %v3313 = vadd.f32 %v3309, %v3312
    %vm3314 = vweird.f32 %v3308
    %vm3315 = vweird.f32 %v3309
    %vm3316 = vmor %vm3314, %vm3315
    %v3317 = vsel %vm3316, %v3309, %v3313
    %v3318 = vand.u32 2147483647, %v3308
    %vm3319 = vcmp.eq.f32.partialorder %v3318, 8.507059e+37
    %v3320 = vand.u32 %v3308, 2147483648
    %v3321 = vor.u32 1.1754944e-38, %v3320
    %v3322 = vsel %vm3319, %v3321, %v3317
    %v3323 = vmul.f32 1.0, %v3322
    %v3324 = vxor.u32 %v3302, 2147483648
    %v3325 = vmul.f32 %v3324, 1.442695
    %v3326 = vpow.pop %v3325
    %v3327 = vadd.f32 %v3326, 1.0
    %v3328 = vrcp.pop %v3327
    %v3329 = vmul.f32 %v3327, %v3328
    %v3330 = vsub.f32 1.0, %v3329
    %v3331 = vmul.f32 %v3328, %v3330
    %v3332 = vadd.f32 %v3328, %v3331
    %vm3333 = vweird.f32 %v3327
    %vm3334 = vweird.f32 %v3328
    %vm3335 = vmor %vm3333, %vm3334
    %v3336 = vsel %vm3335, %v3328, %v3332
    %v3337 = vand.u32 2147483647, %v3327
    %vm3338 = vcmp.eq.f32.partialorder %v3337, 8.507059e+37
    %v3339 = vand.u32 %v3327, 2147483648
    %v3340 = vor.u32 1.1754944e-38, %v3339
    %v3341 = vsel %vm3338, %v3340, %v3336
    %v3342 = vmul.f32 1.0, %v3341
    %v3343 = vtanh.pop %v3303
    %v3344 = vxor.u32 %v3304, 2147483648
    %v3345 = vmul.f32 %v3344, 1.442695
    %v3346 = vpow.pop %v3345
    %v3347 = vadd.f32 %v3346, 1.0
    %v3348 = vrcp.pop %v3347
    %v3349 = vmul.f32 %v3347, %v3348
    %v3350 = vsub.f32 1.0, %v3349
    %v3351 = vmul.f32 %v3348, %v3350
    %v3352 = vadd.f32 %v3348, %v3351
    %vm3353 = vweird.f32 %v3347
    %vm3354 = vweird.f32 %v3348
    %vm3355 = vmor %vm3353, %vm3354
    %v3356 = vsel %vm3355, %v3348, %v3352
    %v3357 = vand.u32 2147483647, %v3347
    %vm3358 = vcmp.eq.f32.partialorder %v3357, 8.507059e+37
    %v3359 = vand.u32 %v3347, 2147483648
    %v3360 = vor.u32 1.1754944e-38, %v3359
    %v3361 = vsel %vm3358, %v3360, %v3356
    %v3362 = vmul.f32 1.0, %v3361
    %v3364 = vrot.slane %v2786, 6
    %v3366 = vmul.f32 %v3342, %v3364
    %v3367 = vmul.f32 %v3323, %v3343
    %v3368 = vadd.f32 %v3366, %v3367
    %v3369 = vtanh.pop %v3368
    %v3370 = vmul.f32 %v3362, %v3369
    %v3371 = vld [vmem:[#allocation6] sm:$0xff]
    %v3372 = vld [vmem:[#allocation6 + $0x8] sm:$0xff]
    %v3373 = vld [vmem:[#allocation6 + $0x10] sm:$0xff]
    %v3374 = vld [vmem:[#allocation6 + $0x18] sm:$0xff]
    %v3375 = vld [vmem:[#allocation6 + $0x20] sm:$0xff]
    %v3376 = vld [vmem:[#allocation6 + $0x28] sm:$0xff]
    %v3377 = vld [vmem:[#allocation6 + $0x30] sm:$0xff]
    %v3378 = vld [vmem:[#allocation6 + $0x38] sm:$0xff]
    %v3379 = vld [vmem:[#allocation6 + $0x40] sm:$0xff]
    %v3380 = vld [vmem:[#allocation6 + $0x48] sm:$0xff]
    %v3381 = vld [vmem:[#allocation6 + $0x50] sm:$0xff]
    %v3382 = vld [vmem:[#allocation6 + $0x58] sm:$0xff]
    %v3383 = vld [vmem:[#allocation6 + $0x60] sm:$0xff]
    %v3384 = vld [vmem:[#allocation6 + $0x68] sm:$0xff]
    %v3385 = vld [vmem:[#allocation6 + $0x70] sm:$0xff]
    %v3386 = vld [vmem:[#allocation6 + $0x78] sm:$0xff]
    %v3387 = vld [vmem:[#allocation6 + $0x80] sm:$0xff]
    %v3388 = vld [vmem:[#allocation6 + $0x88] sm:$0xff]
    %v3389 = vld [vmem:[#allocation6 + $0x90] sm:$0xff]
    %v3390 = vld [vmem:[#allocation6 + $0x98] sm:$0xff]
    %v3391 = vld [vmem:[#allocation6 + $0xa0] sm:$0xff]
    %v3392 = vld [vmem:[#allocation6 + $0xa8] sm:$0xff]
    %v3393 = vld [vmem:[#allocation6 + $0xb0] sm:$0xff]
    %v3394 = vld [vmem:[#allocation6 + $0xb8] sm:$0xff]
    %v3395 = vld [vmem:[#allocation6 + $0xc0] sm:$0xff]
    %v3396 = vld [vmem:[#allocation6 + $0xc8] sm:$0xff]
    %v3397 = vld [vmem:[#allocation6 + $0xd0] sm:$0xff]
    %v3398 = vld [vmem:[#allocation6 + $0xd8] sm:$0xff]
    %v3399 = vld [vmem:[#allocation6 + $0xe0] sm:$0xff]
    %v3400 = vld [vmem:[#allocation6 + $0xe8] sm:$0xff]
    %v3401 = vld [vmem:[#allocation6 + $0xf0] sm:$0xff]
    %v3402 = vld [vmem:[#allocation6 + $0xf8] sm:$0xff]
    %v3403 = vld [vmem:[#allocation6 + $0x100] sm:$0xff]
    %v3404 = vld [vmem:[#allocation6 + $0x108] sm:$0xff]
    %v3405 = vld [vmem:[#allocation6 + $0x110] sm:$0xff]
    %v3406 = vld [vmem:[#allocation6 + $0x118] sm:$0xff]
    %v3407 = vld [vmem:[#allocation6 + $0x120] sm:$0xff]
    %v3408 = vld [vmem:[#allocation6 + $0x128] sm:$0xff]
    %v3409 = vld [vmem:[#allocation6 + $0x130] sm:$0xff]
    %v3410 = vld [vmem:[#allocation6 + $0x138] sm:$0xff]
    %v3411 = vld [vmem:[#allocation6 + $0x140] sm:$0xff]
    %v3412 = vld [vmem:[#allocation6 + $0x148] sm:$0xff]
    %v3413 = vld [vmem:[#allocation6 + $0x150] sm:$0xff]
    %v3414 = vld [vmem:[#allocation6 + $0x158] sm:$0xff]
    %v3415 = vld [vmem:[#allocation6 + $0x160] sm:$0xff]
    %v3416 = vld [vmem:[#allocation6 + $0x168] sm:$0xff]
    %v3417 = vld [vmem:[#allocation6 + $0x170] sm:$0xff]
    %v3418 = vld [vmem:[#allocation6 + $0x178] sm:$0xff]
    %v3419 = vld [vmem:[#allocation6 + $0x180] sm:$0xff]
    %v3420 = vld [vmem:[#allocation6 + $0x188] sm:$0xff]
    %v3421 = vld [vmem:[#allocation6 + $0x190] sm:$0xff]
    %v3422 = vld [vmem:[#allocation6 + $0x198] sm:$0xff]
    %v3423 = vld [vmem:[#allocation6 + $0x1a0] sm:$0xff]
    %v3424 = vld [vmem:[#allocation6 + $0x1a8] sm:$0xff]
    %v3425 = vld [vmem:[#allocation6 + $0x1b0] sm:$0xff]
    %v3426 = vld [vmem:[#allocation6 + $0x1b8] sm:$0xff]
    %v3427 = vld [vmem:[#allocation6 + $0x1c0] sm:$0xff]
    %v3428 = vld [vmem:[#allocation6 + $0x1c8] sm:$0xff]
    %v3429 = vld [vmem:[#allocation6 + $0x1d0] sm:$0xff]
    %v3430 = vld [vmem:[#allocation6 + $0x1d8] sm:$0xff]
    %v3431 = vld [vmem:[#allocation6 + $0x1e0] sm:$0xff]
    %v3432 = vld [vmem:[#allocation6 + $0x1e8] sm:$0xff]
    %v3433 = vld [vmem:[#allocation6 + $0x1f0] sm:$0xff]
    %v3434 = vld [vmem:[#allocation6 + $0x1f8] sm:$0xff]
    %v3435 = vld [vmem:[#allocation8] sm:$0xff]
    %v3436 = vld [vmem:[#allocation8 + $0x8] sm:$0xff]
    %v3437 = vld [vmem:[#allocation8 + $0x10] sm:$0xff]
    %v3438 = vld [vmem:[#allocation8 + $0x18] sm:$0xff]
    %v3439 = vld [vmem:[#allocation8 + $0x20] sm:$0xff]
    %v3440 = vld [vmem:[#allocation8 + $0x28] sm:$0xff]
    %v3441 = vld [vmem:[#allocation8 + $0x30] sm:$0xff]
    %v3442 = vld [vmem:[#allocation8 + $0x38] sm:$0xff]
    %v3443 = vld [vmem:[#allocation8 + $0x40] sm:$0xff]
    %v3444 = vld [vmem:[#allocation8 + $0x48] sm:$0xff]
    %v3445 = vld [vmem:[#allocation8 + $0x50] sm:$0xff]
    %v3446 = vld [vmem:[#allocation8 + $0x58] sm:$0xff]
    %v3447 = vld [vmem:[#allocation8 + $0x60] sm:$0xff]
    %v3448 = vld [vmem:[#allocation8 + $0x68] sm:$0xff]
    %v3449 = vld [vmem:[#allocation8 + $0x70] sm:$0xff]
    %v3450 = vld [vmem:[#allocation8 + $0x78] sm:$0xff]
    %v3451 = vld [vmem:[#allocation8 + $0x80] sm:$0xff]
    %v3452 = vld [vmem:[#allocation8 + $0x88] sm:$0xff]
    %v3453 = vld [vmem:[#allocation8 + $0x90] sm:$0xff]
    %v3454 = vld [vmem:[#allocation8 + $0x98] sm:$0xff]
    %v3455 = vld [vmem:[#allocation8 + $0xa0] sm:$0xff]
    %v3456 = vld [vmem:[#allocation8 + $0xa8] sm:$0xff]
    %v3457 = vld [vmem:[#allocation8 + $0xb0] sm:$0xff]
    %v3458 = vld [vmem:[#allocation8 + $0xb8] sm:$0xff]
    %v3459 = vld [vmem:[#allocation8 + $0xc0] sm:$0xff]
    %v3460 = vld [vmem:[#allocation8 + $0xc8] sm:$0xff]
    %v3461 = vld [vmem:[#allocation8 + $0xd0] sm:$0xff]
    %v3462 = vld [vmem:[#allocation8 + $0xd8] sm:$0xff]
    %v3463 = vld [vmem:[#allocation8 + $0xe0] sm:$0xff]
    %v3464 = vld [vmem:[#allocation8 + $0xe8] sm:$0xff]
    %v3465 = vld [vmem:[#allocation8 + $0xf0] sm:$0xff]
    %v3466 = vld [vmem:[#allocation8 + $0xf8] sm:$0xff]
    %v3467 = vld [vmem:[#allocation8 + $0x100] sm:$0xff]
    %v3468 = vld [vmem:[#allocation8 + $0x108] sm:$0xff]
    %v3469 = vld [vmem:[#allocation8 + $0x110] sm:$0xff]
    %v3470 = vld [vmem:[#allocation8 + $0x118] sm:$0xff]
    %v3471 = vld [vmem:[#allocation8 + $0x120] sm:$0xff]
    %v3472 = vld [vmem:[#allocation8 + $0x128] sm:$0xff]
    %v3473 = vld [vmem:[#allocation8 + $0x130] sm:$0xff]
    %v3474 = vld [vmem:[#allocation8 + $0x138] sm:$0xff]
    %v3475 = vld [vmem:[#allocation8 + $0x140] sm:$0xff]
    %v3476 = vld [vmem:[#allocation8 + $0x148] sm:$0xff]
    %v3477 = vld [vmem:[#allocation8 + $0x150] sm:$0xff]
    %v3478 = vld [vmem:[#allocation8 + $0x158] sm:$0xff]
    %v3479 = vld [vmem:[#allocation8 + $0x160] sm:$0xff]
    %v3480 = vld [vmem:[#allocation8 + $0x168] sm:$0xff]
    %v3481 = vld [vmem:[#allocation8 + $0x170] sm:$0xff]
    %v3482 = vld [vmem:[#allocation8 + $0x178] sm:$0xff]
    %v3483 = vld [vmem:[#allocation8 + $0x180] sm:$0xff]
    %v3484 = vld [vmem:[#allocation8 + $0x188] sm:$0xff]
    %v3485 = vld [vmem:[#allocation8 + $0x190] sm:$0xff]
    %v3486 = vld [vmem:[#allocation8 + $0x198] sm:$0xff]
    %v3487 = vld [vmem:[#allocation8 + $0x1a0] sm:$0xff]
    %v3488 = vld [vmem:[#allocation8 + $0x1a8] sm:$0xff]
    %v3489 = vld [vmem:[#allocation8 + $0x1b0] sm:$0xff]
    %v3490 = vld [vmem:[#allocation8 + $0x1b8] sm:$0xff]
    %v3491 = vld [vmem:[#allocation8 + $0x1c0] sm:$0xff]
    %v3492 = vld [vmem:[#allocation8 + $0x1c8] sm:$0xff]
    %v3493 = vld [vmem:[#allocation8 + $0x1d0] sm:$0xff]
    %v3494 = vld [vmem:[#allocation8 + $0x1d8] sm:$0xff]
    %v3495 = vld [vmem:[#allocation8 + $0x1e0] sm:$0xff]
    %v3496 = vld [vmem:[#allocation8 + $0x1e8] sm:$0xff]
    %v3497 = vld [vmem:[#allocation8 + $0x1f0] sm:$0xff]
    %v3498 = vld [vmem:[#allocation8 + $0x1f8] sm:$0xff]
    %3499 = vmatpush.msra.mxu0 %v3495
    %3500 = vmatpush.msra.mxu0 %v3491
    %3501 = vmatpush.msra.mxu0 %v3487
    %3502 = vmatpush.msra.mxu0 %v3483
    %3503 = vmatpush.msra.mxu0 %v3479
    %3504 = vmatpush.msra.mxu0 %v3475
    %3505 = vmatpush.msra.mxu0 %v3471
    %3506 = vmatpush.msra.mxu0 %v3467
    %3507 = vmatpush.msra.mxu0 %v3463
    %3508 = vmatpush.msra.mxu0 %v3459
    %3509 = vmatpush.msra.mxu0 %v3455
    %3510 = vmatpush.msra.mxu0 %v3451
    %3511 = vmatpush.msra.mxu0 %v3447
    %3512 = vmatpush.msra.mxu0 %v3443
    %3513 = vmatpush.msra.mxu0 %v3439
    %3514 = vmatpush.msra.mxu0 %v3435
    %3515 = vmatmul.f32.gmra.mxu0 %v3143
    %v3516 = vpop.f32.mrf.mxu0
    %v3517 = vadd.f32 0.0, %v3516
    %3518 = vdwg.mxu0
    %3519 = vmatpush.msra.mxu0 %v3496
    %3520 = vmatpush.msra.mxu0 %v3492
    %3521 = vmatpush.msra.mxu0 %v3488
    %3522 = vmatpush.msra.mxu0 %v3484
    %3523 = vmatpush.msra.mxu0 %v3480
    %3524 = vmatpush.msra.mxu0 %v3476
    %3525 = vmatpush.msra.mxu0 %v3472
    %3526 = vmatpush.msra.mxu0 %v3468
    %3527 = vmatpush.msra.mxu0 %v3464
    %3528 = vmatpush.msra.mxu0 %v3460
    %3529 = vmatpush.msra.mxu0 %v3456
    %3530 = vmatpush.msra.mxu0 %v3452
    %3531 = vmatpush.msra.mxu0 %v3448
    %3532 = vmatpush.msra.mxu0 %v3444
    %3533 = vmatpush.msra.mxu0 %v3440
    %3534 = vmatpush.msra.mxu0 %v3436
    %3535 = vmatmul.f32.gmra.mxu0 %v3143
    %v3536 = vpop.f32.mrf.mxu0
    %v3537 = vadd.f32 0.0, %v3536
    %3538 = vdwg.mxu0
    %3539 = vmatpush.msra.mxu0 %v3497
    %3540 = vmatpush.msra.mxu0 %v3493
    %3541 = vmatpush.msra.mxu0 %v3489
    %3542 = vmatpush.msra.mxu0 %v3485
    %3543 = vmatpush.msra.mxu0 %v3481
    %3544 = vmatpush.msra.mxu0 %v3477
    %3545 = vmatpush.msra.mxu0 %v3473
    %3546 = vmatpush.msra.mxu0 %v3469
    %3547 = vmatpush.msra.mxu0 %v3465
    %3548 = vmatpush.msra.mxu0 %v3461
    %3549 = vmatpush.msra.mxu0 %v3457
    %3550 = vmatpush.msra.mxu0 %v3453
    %3551 = vmatpush.msra.mxu0 %v3449
    %3552 = vmatpush.msra.mxu0 %v3445
    %3553 = vmatpush.msra.mxu0 %v3441
    %3554 = vmatpush.msra.mxu0 %v3437
    %3555 = vmatmul.f32.gmra.mxu0 %v3143
    %v3556 = vpop.f32.mrf.mxu0
    %v3557 = vadd.f32 0.0, %v3556
    %3558 = vdwg.mxu0
    %3559 = vmatpush.msra.mxu0 %v3498
    %3560 = vmatpush.msra.mxu0 %v3494
    %3561 = vmatpush.msra.mxu0 %v3490
    %3562 = vmatpush.msra.mxu0 %v3486
    %3563 = vmatpush.msra.mxu0 %v3482
    %3564 = vmatpush.msra.mxu0 %v3478
    %3565 = vmatpush.msra.mxu0 %v3474
    %3566 = vmatpush.msra.mxu0 %v3470
    %3567 = vmatpush.msra.mxu0 %v3466
    %3568 = vmatpush.msra.mxu0 %v3462
    %3569 = vmatpush.msra.mxu0 %v3458
    %3570 = vmatpush.msra.mxu0 %v3454
    %3571 = vmatpush.msra.mxu0 %v3450
    %3572 = vmatpush.msra.mxu0 %v3446
    %3573 = vmatpush.msra.mxu0 %v3442
    %3574 = vmatpush.msra.mxu0 %v3438
    %3575 = vmatmul.f32.gmra.mxu0 %v3143
    %v3576 = vpop.f32.mrf.mxu0
    %v3577 = vadd.f32 0.0, %v3576
    %3578 = vdwg.mxu0
    %v3580 = vrot.slane %v3370, 2
    %3582 = vmatpush.msra.mxu0 %v3431
    %3583 = vmatpush.msra.mxu0 %v3427
    %3584 = vmatpush.msra.mxu0 %v3423
    %3585 = vmatpush.msra.mxu0 %v3419
    %3586 = vmatpush.msra.mxu0 %v3415
    %3587 = vmatpush.msra.mxu0 %v3411
    %3588 = vmatpush.msra.mxu0 %v3407
    %3589 = vmatpush.msra.mxu0 %v3403
    %3590 = vmatpush.msra.mxu0 %v3399
    %3591 = vmatpush.msra.mxu0 %v3395
    %3592 = vmatpush.msra.mxu0 %v3391
    %3593 = vmatpush.msra.mxu0 %v3387
    %3594 = vmatpush.msra.mxu0 %v3383
    %3595 = vmatpush.msra.mxu0 %v3379
    %3596 = vmatpush.msra.mxu0 %v3375
    %3597 = vmatpush.msra.mxu0 %v3371
    %3598 = vmatmul.f32.gmra.mxu0 %v3580
    %v3599 = vpop.f32.mrf.mxu0
    %v3600 = vadd.f32 %v3517, %v3599
    %3601 = vdwg.mxu0
    %3602 = vmatpush.msra.mxu0 %v3432
    %3603 = vmatpush.msra.mxu0 %v3428
    %3604 = vmatpush.msra.mxu0 %v3424
    %3605 = vmatpush.msra.mxu0 %v3420
    %3606 = vmatpush.msra.mxu0 %v3416
    %3607 = vmatpush.msra.mxu0 %v3412
    %3608 = vmatpush.msra.mxu0 %v3408
    %3609 = vmatpush.msra.mxu0 %v3404
    %3610 = vmatpush.msra.mxu0 %v3400
    %3611 = vmatpush.msra.mxu0 %v3396
    %3612 = vmatpush.msra.mxu0 %v3392
    %3613 = vmatpush.msra.mxu0 %v3388
    %3614 = vmatpush.msra.mxu0 %v3384
    %3615 = vmatpush.msra.mxu0 %v3380
    %3616 = vmatpush.msra.mxu0 %v3376
    %3617 = vmatpush.msra.mxu0 %v3372
    %3618 = vmatmul.f32.gmra.mxu0 %v3580
    %v3619 = vpop.f32.mrf.mxu0
    %v3620 = vadd.f32 %v3537, %v3619
    %3621 = vdwg.mxu0
    %3622 = vmatpush.msra.mxu0 %v3433
    %3623 = vmatpush.msra.mxu0 %v3429
    %3624 = vmatpush.msra.mxu0 %v3425
    %3625 = vmatpush.msra.mxu0 %v3421
    %3626 = vmatpush.msra.mxu0 %v3417
    %3627 = vmatpush.msra.mxu0 %v3413
    %3628 = vmatpush.msra.mxu0 %v3409
    %3629 = vmatpush.msra.mxu0 %v3405
    %3630 = vmatpush.msra.mxu0 %v3401
    %3631 = vmatpush.msra.mxu0 %v3397
    %3632 = vmatpush.msra.mxu0 %v3393
    %3633 = vmatpush.msra.mxu0 %v3389
    %3634 = vmatpush.msra.mxu0 %v3385
    %3635 = vmatpush.msra.mxu0 %v3381
    %3636 = vmatpush.msra.mxu0 %v3377
    %3637 = vmatpush.msra.mxu0 %v3373
    %3638 = vmatmul.f32.gmra.mxu0 %v3580
    %v3639 = vpop.f32.mrf.mxu0
    %v3640 = vadd.f32 %v3557, %v3639
    %3641 = vdwg.mxu0
    %3642 = vmatpush.msra.mxu0 %v3434
    %3643 = vmatpush.msra.mxu0 %v3430
    %3644 = vmatpush.msra.mxu0 %v3426
    %3645 = vmatpush.msra.mxu0 %v3422
    %3646 = vmatpush.msra.mxu0 %v3418
    %3647 = vmatpush.msra.mxu0 %v3414
    %3648 = vmatpush.msra.mxu0 %v3410
    %3649 = vmatpush.msra.mxu0 %v3406
    %3650 = vmatpush.msra.mxu0 %v3402
    %3651 = vmatpush.msra.mxu0 %v3398
    %3652 = vmatpush.msra.mxu0 %v3394
    %3653 = vmatpush.msra.mxu0 %v3390
    %3654 = vmatpush.msra.mxu0 %v3386
    %3655 = vmatpush.msra.mxu0 %v3382
    %3656 = vmatpush.msra.mxu0 %v3378
    %3657 = vmatpush.msra.mxu0 %v3374
    %3658 = vmatmul.f32.gmra.mxu0 %v3580
    %v3659 = vpop.f32.mrf.mxu0
    %v3660 = vadd.f32 %v3577, %v3659
    %3661 = vdwg.mxu0
    %v3662 = vadd.f32 %v3600, %v245
    %v3663 = vadd.f32 %v3620, %v246
    %v3664 = vadd.f32 %v3640, %v247
    %v3665 = vadd.f32 %v3660, %v248
    %v3666 = vxor.u32 %v3662, 2147483648
    %v3667 = vmul.f32 %v3666, 1.442695
    %v3668 = vpow.pop %v3667
    %v3669 = vadd.f32 %v3668, 1.0
    %v3670 = vrcp.pop %v3669
    %v3671 = vmul.f32 %v3669, %v3670
    %v3672 = vsub.f32 1.0, %v3671
    %v3673 = vmul.f32 %v3670, %v3672
    %v3674 = vadd.f32 %v3670, %v3673
    %vm3675 = vweird.f32 %v3669
    %vm3676 = vweird.f32 %v3670
    %vm3677 = vmor %vm3675, %vm3676
    %v3678 = vsel %vm3677, %v3670, %v3674
    %v3679 = vand.u32 2147483647, %v3669
    %vm3680 = vcmp.eq.f32.partialorder %v3679, 8.507059e+37
    %v3681 = vand.u32 %v3669, 2147483648
    %v3682 = vor.u32 1.1754944e-38, %v3681
    %v3683 = vsel %vm3680, %v3682, %v3678
    %v3684 = vmul.f32 1.0, %v3683
    %v3685 = vxor.u32 %v3663, 2147483648
    %v3686 = vmul.f32 %v3685, 1.442695
    %v3687 = vpow.pop %v3686
    %v3688 = vadd.f32 %v3687, 1.0
    %v3689 = vrcp.pop %v3688
    %v3690 = vmul.f32 %v3688, %v3689
    %v3691 = vsub.f32 1.0, %v3690
    %v3692 = vmul.f32 %v3689, %v3691
    %v3693 = vadd.f32 %v3689, %v3692
    %vm3694 = vweird.f32 %v3688
    %vm3695 = vweird.f32 %v3689
    %vm3696 = vmor %vm3694, %vm3695
    %v3697 = vsel %vm3696, %v3689, %v3693
    %v3698 = vand.u32 2147483647, %v3688
    %vm3699 = vcmp.eq.f32.partialorder %v3698, 8.507059e+37
    %v3700 = vand.u32 %v3688, 2147483648
    %v3701 = vor.u32 1.1754944e-38, %v3700
    %v3702 = vsel %vm3699, %v3701, %v3697
    %v3703 = vmul.f32 1.0, %v3702
    %v3704 = vtanh.pop %v3664
    %v3705 = vxor.u32 %v3665, 2147483648
    %v3706 = vmul.f32 %v3705, 1.442695
    %v3707 = vpow.pop %v3706
    %v3708 = vadd.f32 %v3707, 1.0
    %v3709 = vrcp.pop %v3708
    %v3710 = vmul.f32 %v3708, %v3709
    %v3711 = vsub.f32 1.0, %v3710
    %v3712 = vmul.f32 %v3709, %v3711
    %v3713 = vadd.f32 %v3709, %v3712
    %vm3714 = vweird.f32 %v3708
    %vm3715 = vweird.f32 %v3709
    %vm3716 = vmor %vm3714, %vm3715
    %v3717 = vsel %vm3716, %v3709, %v3713
    %v3718 = vand.u32 2147483647, %v3708
    %vm3719 = vcmp.eq.f32.partialorder %v3718, 8.507059e+37
    %v3720 = vand.u32 %v3708, 2147483648
    %v3721 = vor.u32 1.1754944e-38, %v3720
    %v3722 = vsel %vm3719, %v3721, %v3717
    %v3723 = vmul.f32 1.0, %v3722
    %v3724 = vmul.f32 %v3703, %v3141
    %v3725 = vmul.f32 %v3684, %v3704
    %v3726 = vadd.f32 %v3724, %v3725
    %v3727 = vtanh.pop %v3726
    %v3728 = vmul.f32 %v3723, %v3727
    %3729 = vst [vmem:[#allocation2 + $0xa] sm:$0x3] %v3728
    %v3730 = vld [vmem:[#allocation3] sm:$0xff]
    %v3731 = vld [vmem:[#allocation3 + $0x8] sm:$0xff]
    %v3732 = vld [vmem:[#allocation3 + $0x10] sm:$0xff]
    %v3733 = vld [vmem:[#allocation3 + $0x18] sm:$0xff]
    %v3734 = vld [vmem:[#allocation3 + $0x20] sm:$0xff]
    %v3735 = vld [vmem:[#allocation3 + $0x28] sm:$0xff]
    %v3736 = vld [vmem:[#allocation3 + $0x30] sm:$0xff]
    %v3737 = vld [vmem:[#allocation3 + $0x38] sm:$0xff]
    %v3738 = vld [vmem:[#allocation3 + $0x40] sm:$0xff]
    %v3739 = vld [vmem:[#allocation3 + $0x48] sm:$0xff]
    %v3740 = vld [vmem:[#allocation3 + $0x50] sm:$0xff]
    %v3741 = vld [vmem:[#allocation3 + $0x58] sm:$0xff]
    %v3742 = vld [vmem:[#allocation3 + $0x60] sm:$0xff]
    %v3743 = vld [vmem:[#allocation3 + $0x68] sm:$0xff]
    %v3744 = vld [vmem:[#allocation3 + $0x70] sm:$0xff]
    %v3745 = vld [vmem:[#allocation3 + $0x78] sm:$0xff]
    %v3746 = vld [vmem:[#allocation3 + $0x80] sm:$0xff]
    %v3747 = vld [vmem:[#allocation3 + $0x88] sm:$0xff]
    %v3748 = vld [vmem:[#allocation3 + $0x90] sm:$0xff]
    %v3749 = vld [vmem:[#allocation3 + $0x98] sm:$0xff]
    %v3750 = vld [vmem:[#allocation3 + $0xa0] sm:$0xff]
    %v3751 = vld [vmem:[#allocation3 + $0xa8] sm:$0xff]
    %v3752 = vld [vmem:[#allocation3 + $0xb0] sm:$0xff]
    %v3753 = vld [vmem:[#allocation3 + $0xb8] sm:$0xff]
    %v3754 = vld [vmem:[#allocation3 + $0xc0] sm:$0xff]
    %v3755 = vld [vmem:[#allocation3 + $0xc8] sm:$0xff]
    %v3756 = vld [vmem:[#allocation3 + $0xd0] sm:$0xff]
    %v3757 = vld [vmem:[#allocation3 + $0xd8] sm:$0xff]
    %v3758 = vld [vmem:[#allocation3 + $0xe0] sm:$0xff]
    %v3759 = vld [vmem:[#allocation3 + $0xe8] sm:$0xff]
    %v3760 = vld [vmem:[#allocation3 + $0xf0] sm:$0xff]
    %v3761 = vld [vmem:[#allocation3 + $0xf8] sm:$0xff]
    %v3762 = vld [vmem:[#allocation3 + $0x100] sm:$0xff]
    %v3763 = vld [vmem:[#allocation3 + $0x108] sm:$0xff]
    %v3764 = vld [vmem:[#allocation3 + $0x110] sm:$0xff]
    %v3765 = vld [vmem:[#allocation3 + $0x118] sm:$0xff]
    %v3766 = vld [vmem:[#allocation3 + $0x120] sm:$0xff]
    %v3767 = vld [vmem:[#allocation3 + $0x128] sm:$0xff]
    %v3768 = vld [vmem:[#allocation3 + $0x130] sm:$0xff]
    %v3769 = vld [vmem:[#allocation3 + $0x138] sm:$0xff]
    %v3770 = vld [vmem:[#allocation3 + $0x140] sm:$0xff]
    %v3771 = vld [vmem:[#allocation3 + $0x148] sm:$0xff]
    %v3772 = vld [vmem:[#allocation3 + $0x150] sm:$0xff]
    %v3773 = vld [vmem:[#allocation3 + $0x158] sm:$0xff]
    %v3774 = vld [vmem:[#allocation3 + $0x160] sm:$0xff]
    %v3775 = vld [vmem:[#allocation3 + $0x168] sm:$0xff]
    %v3776 = vld [vmem:[#allocation3 + $0x170] sm:$0xff]
    %v3777 = vld [vmem:[#allocation3 + $0x178] sm:$0xff]
    %v3778 = vld [vmem:[#allocation3 + $0x180] sm:$0xff]
    %v3779 = vld [vmem:[#allocation3 + $0x188] sm:$0xff]
    %v3780 = vld [vmem:[#allocation3 + $0x190] sm:$0xff]
    %v3781 = vld [vmem:[#allocation3 + $0x198] sm:$0xff]
    %v3782 = vld [vmem:[#allocation3 + $0x1a0] sm:$0xff]
    %v3783 = vld [vmem:[#allocation3 + $0x1a8] sm:$0xff]
    %v3784 = vld [vmem:[#allocation3 + $0x1b0] sm:$0xff]
    %v3785 = vld [vmem:[#allocation3 + $0x1b8] sm:$0xff]
    %v3786 = vld [vmem:[#allocation3 + $0x1c0] sm:$0xff]
    %v3787 = vld [vmem:[#allocation3 + $0x1c8] sm:$0xff]
    %v3788 = vld [vmem:[#allocation3 + $0x1d0] sm:$0xff]
    %v3789 = vld [vmem:[#allocation3 + $0x1d8] sm:$0xff]
    %v3790 = vld [vmem:[#allocation3 + $0x1e0] sm:$0xff]
    %v3791 = vld [vmem:[#allocation3 + $0x1e8] sm:$0xff]
    %v3792 = vld [vmem:[#allocation3 + $0x1f0] sm:$0xff]
    %v3793 = vld [vmem:[#allocation3 + $0x1f8] sm:$0xff]
    %3794 = vmatpush.msra.mxu0 %v3790
    %3795 = vmatpush.msra.mxu0 %v3786
    %3796 = vmatpush.msra.mxu0 %v3782
    %3797 = vmatpush.msra.mxu0 %v3778
    %3798 = vmatpush.msra.mxu0 %v3774
    %3799 = vmatpush.msra.mxu0 %v3770
    %3800 = vmatpush.msra.mxu0 %v3766
    %3801 = vmatpush.msra.mxu0 %v3762
    %3802 = vmatpush.msra.mxu0 %v3758
    %3803 = vmatpush.msra.mxu0 %v3754
    %3804 = vmatpush.msra.mxu0 %v3750
    %3805 = vmatpush.msra.mxu0 %v3746
    %3806 = vmatpush.msra.mxu0 %v3742
    %3807 = vmatpush.msra.mxu0 %v3738
    %3808 = vmatpush.msra.mxu0 %v3734
    %3809 = vmatpush.msra.mxu0 %v3730
    %3810 = vmatmul.f32.gmra.mxu0 %v3580
    %v3811 = vpop.f32.mrf.mxu0
    %v3812 = vadd.f32 0.0, %v3811
    %3813 = vdwg.mxu0
    %3814 = vmatpush.msra.mxu0 %v3791
    %3815 = vmatpush.msra.mxu0 %v3787
    %3816 = vmatpush.msra.mxu0 %v3783
    %3817 = vmatpush.msra.mxu0 %v3779
    %3818 = vmatpush.msra.mxu0 %v3775
    %3819 = vmatpush.msra.mxu0 %v3771
    %3820 = vmatpush.msra.mxu0 %v3767
    %3821 = vmatpush.msra.mxu0 %v3763
    %3822 = vmatpush.msra.mxu0 %v3759
    %3823 = vmatpush.msra.mxu0 %v3755
    %3824 = vmatpush.msra.mxu0 %v3751
    %3825 = vmatpush.msra.mxu0 %v3747
    %3826 = vmatpush.msra.mxu0 %v3743
    %3827 = vmatpush.msra.mxu0 %v3739
    %3828 = vmatpush.msra.mxu0 %v3735
    %3829 = vmatpush.msra.mxu0 %v3731
    %3830 = vmatmul.f32.gmra.mxu0 %v3580
    %v3831 = vpop.f32.mrf.mxu0
    %v3832 = vadd.f32 0.0, %v3831
    %3833 = vdwg.mxu0
    %3834 = vmatpush.msra.mxu0 %v3792
    %3835 = vmatpush.msra.mxu0 %v3788
    %3836 = vmatpush.msra.mxu0 %v3784
    %3837 = vmatpush.msra.mxu0 %v3780
    %3838 = vmatpush.msra.mxu0 %v3776
    %3839 = vmatpush.msra.mxu0 %v3772
    %3840 = vmatpush.msra.mxu0 %v3768
    %3841 = vmatpush.msra.mxu0 %v3764
    %3842 = vmatpush.msra.mxu0 %v3760
    %3843 = vmatpush.msra.mxu0 %v3756
    %3844 = vmatpush.msra.mxu0 %v3752
    %3845 = vmatpush.msra.mxu0 %v3748
    %3846 = vmatpush.msra.mxu0 %v3744
    %3847 = vmatpush.msra.mxu0 %v3740
    %3848 = vmatpush.msra.mxu0 %v3736
    %3849 = vmatpush.msra.mxu0 %v3732
    %3850 = vmatmul.f32.gmra.mxu0 %v3580
    %v3851 = vpop.f32.mrf.mxu0
    %v3852 = vadd.f32 0.0, %v3851
    %3853 = vdwg.mxu0
    %3854 = vmatpush.msra.mxu0 %v3793
    %3855 = vmatpush.msra.mxu0 %v3789
    %3856 = vmatpush.msra.mxu0 %v3785
    %3857 = vmatpush.msra.mxu0 %v3781
    %3858 = vmatpush.msra.mxu0 %v3777
    %3859 = vmatpush.msra.mxu0 %v3773
    %3860 = vmatpush.msra.mxu0 %v3769
    %3861 = vmatpush.msra.mxu0 %v3765
    %3862 = vmatpush.msra.mxu0 %v3761
    %3863 = vmatpush.msra.mxu0 %v3757
    %3864 = vmatpush.msra.mxu0 %v3753
    %3865 = vmatpush.msra.mxu0 %v3749
    %3866 = vmatpush.msra.mxu0 %v3745
    %3867 = vmatpush.msra.mxu0 %v3741
    %3868 = vmatpush.msra.mxu0 %v3737
    %3869 = vmatpush.msra.mxu0 %v3733
    %3870 = vmatmul.f32.gmra.mxu0 %v3580
    %v3871 = vpop.f32.mrf.mxu0
    %v3872 = vadd.f32 0.0, %v3871
    %3873 = vdwg.mxu0
    %v3878 = vrot.slane %v3812, 4
    %v3879 = vrot.slane %v3832, 4
    %v3880 = vrot.slane %v3852, 4
    %v3881 = vrot.slane %v3872, 4
    %v3886 = vadd.f32 %v172, %v3878
    %v3887 = vadd.f32 %v195, %v3879
    %v3888 = vadd.f32 %v218, %v3880
    %v3889 = vadd.f32 %v241, %v3881
    %v3890 = vxor.u32 %v3886, 2147483648
    %v3891 = vmul.f32 %v3890, 1.442695
    %v3892 = vpow.pop %v3891
    %v3893 = vadd.f32 %v3892, 1.0
    %v3894 = vrcp.pop %v3893
    %v3895 = vmul.f32 %v3893, %v3894
    %v3896 = vsub.f32 1.0, %v3895
    %v3897 = vmul.f32 %v3894, %v3896
    %v3898 = vadd.f32 %v3894, %v3897
    %vm3899 = vweird.f32 %v3893
    %vm3900 = vweird.f32 %v3894
    %vm3901 = vmor %vm3899, %vm3900
    %v3902 = vsel %vm3901, %v3894, %v3898
    %v3903 = vand.u32 2147483647, %v3893
    %vm3904 = vcmp.eq.f32.partialorder %v3903, 8.507059e+37
    %v3905 = vand.u32 %v3893, 2147483648
    %v3906 = vor.u32 1.1754944e-38, %v3905
    %v3907 = vsel %vm3904, %v3906, %v3902
    %v3908 = vmul.f32 1.0, %v3907
    %v3909 = vxor.u32 %v3887, 2147483648
    %v3910 = vmul.f32 %v3909, 1.442695
    %v3911 = vpow.pop %v3910
    %v3912 = vadd.f32 %v3911, 1.0
    %v3913 = vrcp.pop %v3912
    %v3914 = vmul.f32 %v3912, %v3913
    %v3915 = vsub.f32 1.0, %v3914
    %v3916 = vmul.f32 %v3913, %v3915
    %v3917 = vadd.f32 %v3913, %v3916
    %vm3918 = vweird.f32 %v3912
    %vm3919 = vweird.f32 %v3913
    %vm3920 = vmor %vm3918, %vm3919
    %v3921 = vsel %vm3920, %v3913, %v3917
    %v3922 = vand.u32 2147483647, %v3912
    %vm3923 = vcmp.eq.f32.partialorder %v3922, 8.507059e+37
    %v3924 = vand.u32 %v3912, 2147483648
    %v3925 = vor.u32 1.1754944e-38, %v3924
    %v3926 = vsel %vm3923, %v3925, %v3921
    %v3927 = vmul.f32 1.0, %v3926
    %v3928 = vtanh.pop %v3888
    %v3929 = vxor.u32 %v3889, 2147483648
    %v3930 = vmul.f32 %v3929, 1.442695
    %v3931 = vpow.pop %v3930
    %v3932 = vadd.f32 %v3931, 1.0
    %v3933 = vrcp.pop %v3932
    %v3934 = vmul.f32 %v3932, %v3933
    %v3935 = vsub.f32 1.0, %v3934
    %v3936 = vmul.f32 %v3933, %v3935
    %v3937 = vadd.f32 %v3933, %v3936
    %vm3938 = vweird.f32 %v3932
    %vm3939 = vweird.f32 %v3933
    %vm3940 = vmor %vm3938, %vm3939
    %v3941 = vsel %vm3940, %v3933, %v3937
    %v3942 = vand.u32 2147483647, %v3932
    %vm3943 = vcmp.eq.f32.partialorder %v3942, 8.507059e+37
    %v3944 = vand.u32 %v3932, 2147483648
    %v3945 = vor.u32 1.1754944e-38, %v3944
    %v3946 = vsel %vm3943, %v3945, %v3941
    %v3947 = vmul.f32 1.0, %v3946
    %v3949 = vrot.slane %v3368, 6
    %v3951 = vmul.f32 %v3927, %v3949
    %v3952 = vmul.f32 %v3908, %v3928
    %v3953 = vadd.f32 %v3951, %v3952
    %v3954 = vtanh.pop %v3953
    %v3955 = vmul.f32 %v3947, %v3954
    %v3956 = vld [vmem:[#allocation6] sm:$0xff]
    %v3957 = vld [vmem:[#allocation6 + $0x8] sm:$0xff]
    %v3958 = vld [vmem:[#allocation6 + $0x10] sm:$0xff]
    %v3959 = vld [vmem:[#allocation6 + $0x18] sm:$0xff]
    %v3960 = vld [vmem:[#allocation6 + $0x20] sm:$0xff]
    %v3961 = vld [vmem:[#allocation6 + $0x28] sm:$0xff]
    %v3962 = vld [vmem:[#allocation6 + $0x30] sm:$0xff]
    %v3963 = vld [vmem:[#allocation6 + $0x38] sm:$0xff]
    %v3964 = vld [vmem:[#allocation6 + $0x40] sm:$0xff]
    %v3965 = vld [vmem:[#allocation6 + $0x48] sm:$0xff]
    %v3966 = vld [vmem:[#allocation6 + $0x50] sm:$0xff]
    %v3967 = vld [vmem:[#allocation6 + $0x58] sm:$0xff]
    %v3968 = vld [vmem:[#allocation6 + $0x60] sm:$0xff]
    %v3969 = vld [vmem:[#allocation6 + $0x68] sm:$0xff]
    %v3970 = vld [vmem:[#allocation6 + $0x70] sm:$0xff]
    %v3971 = vld [vmem:[#allocation6 + $0x78] sm:$0xff]
    %v3972 = vld [vmem:[#allocation6 + $0x80] sm:$0xff]
    %v3973 = vld [vmem:[#allocation6 + $0x88] sm:$0xff]
    %v3974 = vld [vmem:[#allocation6 + $0x90] sm:$0xff]
    %v3975 = vld [vmem:[#allocation6 + $0x98] sm:$0xff]
    %v3976 = vld [vmem:[#allocation6 + $0xa0] sm:$0xff]
    %v3977 = vld [vmem:[#allocation6 + $0xa8] sm:$0xff]
    %v3978 = vld [vmem:[#allocation6 + $0xb0] sm:$0xff]
    %v3979 = vld [vmem:[#allocation6 + $0xb8] sm:$0xff]
    %v3980 = vld [vmem:[#allocation6 + $0xc0] sm:$0xff]
    %v3981 = vld [vmem:[#allocation6 + $0xc8] sm:$0xff]
    %v3982 = vld [vmem:[#allocation6 + $0xd0] sm:$0xff]
    %v3983 = vld [vmem:[#allocation6 + $0xd8] sm:$0xff]
    %v3984 = vld [vmem:[#allocation6 + $0xe0] sm:$0xff]
    %v3985 = vld [vmem:[#allocation6 + $0xe8] sm:$0xff]
    %v3986 = vld [vmem:[#allocation6 + $0xf0] sm:$0xff]
    %v3987 = vld [vmem:[#allocation6 + $0xf8] sm:$0xff]
    %v3988 = vld [vmem:[#allocation6 + $0x100] sm:$0xff]
    %v3989 = vld [vmem:[#allocation6 + $0x108] sm:$0xff]
    %v3990 = vld [vmem:[#allocation6 + $0x110] sm:$0xff]
    %v3991 = vld [vmem:[#allocation6 + $0x118] sm:$0xff]
    %v3992 = vld [vmem:[#allocation6 + $0x120] sm:$0xff]
    %v3993 = vld [vmem:[#allocation6 + $0x128] sm:$0xff]
    %v3994 = vld [vmem:[#allocation6 + $0x130] sm:$0xff]
    %v3995 = vld [vmem:[#allocation6 + $0x138] sm:$0xff]
    %v3996 = vld [vmem:[#allocation6 + $0x140] sm:$0xff]
    %v3997 = vld [vmem:[#allocation6 + $0x148] sm:$0xff]
    %v3998 = vld [vmem:[#allocation6 + $0x150] sm:$0xff]
    %v3999 = vld [vmem:[#allocation6 + $0x158] sm:$0xff]
    %v4000 = vld [vmem:[#allocation6 + $0x160] sm:$0xff]
    %v4001 = vld [vmem:[#allocation6 + $0x168] sm:$0xff]
    %v4002 = vld [vmem:[#allocation6 + $0x170] sm:$0xff]
    %v4003 = vld [vmem:[#allocation6 + $0x178] sm:$0xff]
    %v4004 = vld [vmem:[#allocation6 + $0x180] sm:$0xff]
    %v4005 = vld [vmem:[#allocation6 + $0x188] sm:$0xff]
    %v4006 = vld [vmem:[#allocation6 + $0x190] sm:$0xff]
    %v4007 = vld [vmem:[#allocation6 + $0x198] sm:$0xff]
    %v4008 = vld [vmem:[#allocation6 + $0x1a0] sm:$0xff]
    %v4009 = vld [vmem:[#allocation6 + $0x1a8] sm:$0xff]
    %v4010 = vld [vmem:[#allocation6 + $0x1b0] sm:$0xff]
    %v4011 = vld [vmem:[#allocation6 + $0x1b8] sm:$0xff]
    %v4012 = vld [vmem:[#allocation6 + $0x1c0] sm:$0xff]
    %v4013 = vld [vmem:[#allocation6 + $0x1c8] sm:$0xff]
    %v4014 = vld [vmem:[#allocation6 + $0x1d0] sm:$0xff]
    %v4015 = vld [vmem:[#allocation6 + $0x1d8] sm:$0xff]
    %v4016 = vld [vmem:[#allocation6 + $0x1e0] sm:$0xff]
    %v4017 = vld [vmem:[#allocation6 + $0x1e8] sm:$0xff]
    %v4018 = vld [vmem:[#allocation6 + $0x1f0] sm:$0xff]
    %v4019 = vld [vmem:[#allocation6 + $0x1f8] sm:$0xff]
    %v4020 = vld [vmem:[#allocation8] sm:$0xff]
    %v4021 = vld [vmem:[#allocation8 + $0x8] sm:$0xff]
    %v4022 = vld [vmem:[#allocation8 + $0x10] sm:$0xff]
    %v4023 = vld [vmem:[#allocation8 + $0x18] sm:$0xff]
    %v4024 = vld [vmem:[#allocation8 + $0x20] sm:$0xff]
    %v4025 = vld [vmem:[#allocation8 + $0x28] sm:$0xff]
    %v4026 = vld [vmem:[#allocation8 + $0x30] sm:$0xff]
    %v4027 = vld [vmem:[#allocation8 + $0x38] sm:$0xff]
    %v4028 = vld [vmem:[#allocation8 + $0x40] sm:$0xff]
    %v4029 = vld [vmem:[#allocation8 + $0x48] sm:$0xff]
    %v4030 = vld [vmem:[#allocation8 + $0x50] sm:$0xff]
    %v4031 = vld [vmem:[#allocation8 + $0x58] sm:$0xff]
    %v4032 = vld [vmem:[#allocation8 + $0x60] sm:$0xff]
    %v4033 = vld [vmem:[#allocation8 + $0x68] sm:$0xff]
    %v4034 = vld [vmem:[#allocation8 + $0x70] sm:$0xff]
    %v4035 = vld [vmem:[#allocation8 + $0x78] sm:$0xff]
    %v4036 = vld [vmem:[#allocation8 + $0x80] sm:$0xff]
    %v4037 = vld [vmem:[#allocation8 + $0x88] sm:$0xff]
    %v4038 = vld [vmem:[#allocation8 + $0x90] sm:$0xff]
    %v4039 = vld [vmem:[#allocation8 + $0x98] sm:$0xff]
    %v4040 = vld [vmem:[#allocation8 + $0xa0] sm:$0xff]
    %v4041 = vld [vmem:[#allocation8 + $0xa8] sm:$0xff]
    %v4042 = vld [vmem:[#allocation8 + $0xb0] sm:$0xff]
    %v4043 = vld [vmem:[#allocation8 + $0xb8] sm:$0xff]
    %v4044 = vld [vmem:[#allocation8 + $0xc0] sm:$0xff]
    %v4045 = vld [vmem:[#allocation8 + $0xc8] sm:$0xff]
    %v4046 = vld [vmem:[#allocation8 + $0xd0] sm:$0xff]
    %v4047 = vld [vmem:[#allocation8 + $0xd8] sm:$0xff]
    %v4048 = vld [vmem:[#allocation8 + $0xe0] sm:$0xff]
    %v4049 = vld [vmem:[#allocation8 + $0xe8] sm:$0xff]
    %v4050 = vld [vmem:[#allocation8 + $0xf0] sm:$0xff]
    %v4051 = vld [vmem:[#allocation8 + $0xf8] sm:$0xff]
    %v4052 = vld [vmem:[#allocation8 + $0x100] sm:$0xff]
    %v4053 = vld [vmem:[#allocation8 + $0x108] sm:$0xff]
    %v4054 = vld [vmem:[#allocation8 + $0x110] sm:$0xff]
    %v4055 = vld [vmem:[#allocation8 + $0x118] sm:$0xff]
    %v4056 = vld [vmem:[#allocation8 + $0x120] sm:$0xff]
    %v4057 = vld [vmem:[#allocation8 + $0x128] sm:$0xff]
    %v4058 = vld [vmem:[#allocation8 + $0x130] sm:$0xff]
    %v4059 = vld [vmem:[#allocation8 + $0x138] sm:$0xff]
    %v4060 = vld [vmem:[#allocation8 + $0x140] sm:$0xff]
    %v4061 = vld [vmem:[#allocation8 + $0x148] sm:$0xff]
    %v4062 = vld [vmem:[#allocation8 + $0x150] sm:$0xff]
    %v4063 = vld [vmem:[#allocation8 + $0x158] sm:$0xff]
    %v4064 = vld [vmem:[#allocation8 + $0x160] sm:$0xff]
    %v4065 = vld [vmem:[#allocation8 + $0x168] sm:$0xff]
    %v4066 = vld [vmem:[#allocation8 + $0x170] sm:$0xff]
    %v4067 = vld [vmem:[#allocation8 + $0x178] sm:$0xff]
    %v4068 = vld [vmem:[#allocation8 + $0x180] sm:$0xff]
    %v4069 = vld [vmem:[#allocation8 + $0x188] sm:$0xff]
    %v4070 = vld [vmem:[#allocation8 + $0x190] sm:$0xff]
    %v4071 = vld [vmem:[#allocation8 + $0x198] sm:$0xff]
    %v4072 = vld [vmem:[#allocation8 + $0x1a0] sm:$0xff]
    %v4073 = vld [vmem:[#allocation8 + $0x1a8] sm:$0xff]
    %v4074 = vld [vmem:[#allocation8 + $0x1b0] sm:$0xff]
    %v4075 = vld [vmem:[#allocation8 + $0x1b8] sm:$0xff]
    %v4076 = vld [vmem:[#allocation8 + $0x1c0] sm:$0xff]
    %v4077 = vld [vmem:[#allocation8 + $0x1c8] sm:$0xff]
    %v4078 = vld [vmem:[#allocation8 + $0x1d0] sm:$0xff]
    %v4079 = vld [vmem:[#allocation8 + $0x1d8] sm:$0xff]
    %v4080 = vld [vmem:[#allocation8 + $0x1e0] sm:$0xff]
    %v4081 = vld [vmem:[#allocation8 + $0x1e8] sm:$0xff]
    %v4082 = vld [vmem:[#allocation8 + $0x1f0] sm:$0xff]
    %v4083 = vld [vmem:[#allocation8 + $0x1f8] sm:$0xff]
    %4084 = vmatpush.msra.mxu0 %v4080
    %4085 = vmatpush.msra.mxu0 %v4076
    %4086 = vmatpush.msra.mxu0 %v4072
    %4087 = vmatpush.msra.mxu0 %v4068
    %4088 = vmatpush.msra.mxu0 %v4064
    %4089 = vmatpush.msra.mxu0 %v4060
    %4090 = vmatpush.msra.mxu0 %v4056
    %4091 = vmatpush.msra.mxu0 %v4052
    %4092 = vmatpush.msra.mxu0 %v4048
    %4093 = vmatpush.msra.mxu0 %v4044
    %4094 = vmatpush.msra.mxu0 %v4040
    %4095 = vmatpush.msra.mxu0 %v4036
    %4096 = vmatpush.msra.mxu0 %v4032
    %4097 = vmatpush.msra.mxu0 %v4028
    %4098 = vmatpush.msra.mxu0 %v4024
    %4099 = vmatpush.msra.mxu0 %v4020
    %4100 = vmatmul.f32.gmra.mxu0 %v3728
    %v4101 = vpop.f32.mrf.mxu0
    %v4102 = vadd.f32 0.0, %v4101
    %4103 = vdwg.mxu0
    %4104 = vmatpush.msra.mxu0 %v4081
    %4105 = vmatpush.msra.mxu0 %v4077
    %4106 = vmatpush.msra.mxu0 %v4073
    %4107 = vmatpush.msra.mxu0 %v4069
    %4108 = vmatpush.msra.mxu0 %v4065
    %4109 = vmatpush.msra.mxu0 %v4061
    %4110 = vmatpush.msra.mxu0 %v4057
    %4111 = vmatpush.msra.mxu0 %v4053
    %4112 = vmatpush.msra.mxu0 %v4049
    %4113 = vmatpush.msra.mxu0 %v4045
    %4114 = vmatpush.msra.mxu0 %v4041
    %4115 = vmatpush.msra.mxu0 %v4037
    %4116 = vmatpush.msra.mxu0 %v4033
    %4117 = vmatpush.msra.mxu0 %v4029
    %4118 = vmatpush.msra.mxu0 %v4025
    %4119 = vmatpush.msra.mxu0 %v4021
    %4120 = vmatmul.f32.gmra.mxu0 %v3728
    %v4121 = vpop.f32.mrf.mxu0
    %v4122 = vadd.f32 0.0, %v4121
    %4123 = vdwg.mxu0
    %4124 = vmatpush.msra.mxu0 %v4082
    %4125 = vmatpush.msra.mxu0 %v4078
    %4126 = vmatpush.msra.mxu0 %v4074
    %4127 = vmatpush.msra.mxu0 %v4070
    %4128 = vmatpush.msra.mxu0 %v4066
    %4129 = vmatpush.msra.mxu0 %v4062
    %4130 = vmatpush.msra.mxu0 %v4058
    %4131 = vmatpush.msra.mxu0 %v4054
    %4132 = vmatpush.msra.mxu0 %v4050
    %4133 = vmatpush.msra.mxu0 %v4046
    %4134 = vmatpush.msra.mxu0 %v4042
    %4135 = vmatpush.msra.mxu0 %v4038
    %4136 = vmatpush.msra.mxu0 %v4034
    %4137 = vmatpush.msra.mxu0 %v4030
    %4138 = vmatpush.msra.mxu0 %v4026
    %4139 = vmatpush.msra.mxu0 %v4022
    %4140 = vmatmul.f32.gmra.mxu0 %v3728
    %v4141 = vpop.f32.mrf.mxu0
    %v4142 = vadd.f32 0.0, %v4141
    %4143 = vdwg.mxu0
    %4144 = vmatpush.msra.mxu0 %v4083
    %4145 = vmatpush.msra.mxu0 %v4079
    %4146 = vmatpush.msra.mxu0 %v4075
    %4147 = vmatpush.msra.mxu0 %v4071
    %4148 = vmatpush.msra.mxu0 %v4067
    %4149 = vmatpush.msra.mxu0 %v4063
    %4150 = vmatpush.msra.mxu0 %v4059
    %4151 = vmatpush.msra.mxu0 %v4055
    %4152 = vmatpush.msra.mxu0 %v4051
    %4153 = vmatpush.msra.mxu0 %v4047
    %4154 = vmatpush.msra.mxu0 %v4043
    %4155 = vmatpush.msra.mxu0 %v4039
    %4156 = vmatpush.msra.mxu0 %v4035
    %4157 = vmatpush.msra.mxu0 %v4031
    %4158 = vmatpush.msra.mxu0 %v4027
    %4159 = vmatpush.msra.mxu0 %v4023
    %4160 = vmatmul.f32.gmra.mxu0 %v3728
    %v4161 = vpop.f32.mrf.mxu0
    %v4162 = vadd.f32 0.0, %v4161
    %4163 = vdwg.mxu0
    %v4165 = vrot.slane %v3955, 4
    %4167 = vmatpush.msra.mxu0 %v4016
    %4168 = vmatpush.msra.mxu0 %v4012
    %4169 = vmatpush.msra.mxu0 %v4008
    %4170 = vmatpush.msra.mxu0 %v4004
    %4171 = vmatpush.msra.mxu0 %v4000
    %4172 = vmatpush.msra.mxu0 %v3996
    %4173 = vmatpush.msra.mxu0 %v3992
    %4174 = vmatpush.msra.mxu0 %v3988
    %4175 = vmatpush.msra.mxu0 %v3984
    %4176 = vmatpush.msra.mxu0 %v3980
    %4177 = vmatpush.msra.mxu0 %v3976
    %4178 = vmatpush.msra.mxu0 %v3972
    %4179 = vmatpush.msra.mxu0 %v3968
    %4180 = vmatpush.msra.mxu0 %v3964
    %4181 = vmatpush.msra.mxu0 %v3960
    %4182 = vmatpush.msra.mxu0 %v3956
    %4183 = vmatmul.f32.gmra.mxu0 %v4165
    %v4184 = vpop.f32.mrf.mxu0
    %v4185 = vadd.f32 %v4102, %v4184
    %4186 = vdwg.mxu0
    %4187 = vmatpush.msra.mxu0 %v4017
    %4188 = vmatpush.msra.mxu0 %v4013
    %4189 = vmatpush.msra.mxu0 %v4009
    %4190 = vmatpush.msra.mxu0 %v4005
    %4191 = vmatpush.msra.mxu0 %v4001
    %4192 = vmatpush.msra.mxu0 %v3997
    %4193 = vmatpush.msra.mxu0 %v3993
    %4194 = vmatpush.msra.mxu0 %v3989
    %4195 = vmatpush.msra.mxu0 %v3985
    %4196 = vmatpush.msra.mxu0 %v3981
    %4197 = vmatpush.msra.mxu0 %v3977
    %4198 = vmatpush.msra.mxu0 %v3973
    %4199 = vmatpush.msra.mxu0 %v3969
    %4200 = vmatpush.msra.mxu0 %v3965
    %4201 = vmatpush.msra.mxu0 %v3961
    %4202 = vmatpush.msra.mxu0 %v3957
    %4203 = vmatmul.f32.gmra.mxu0 %v4165
    %v4204 = vpop.f32.mrf.mxu0
    %v4205 = vadd.f32 %v4122, %v4204
    %4206 = vdwg.mxu0
    %4207 = vmatpush.msra.mxu0 %v4018
    %4208 = vmatpush.msra.mxu0 %v4014
    %4209 = vmatpush.msra.mxu0 %v4010
    %4210 = vmatpush.msra.mxu0 %v4006
    %4211 = vmatpush.msra.mxu0 %v4002
    %4212 = vmatpush.msra.mxu0 %v3998
    %4213 = vmatpush.msra.mxu0 %v3994
    %4214 = vmatpush.msra.mxu0 %v3990
    %4215 = vmatpush.msra.mxu0 %v3986
    %4216 = vmatpush.msra.mxu0 %v3982
    %4217 = vmatpush.msra.mxu0 %v3978
    %4218 = vmatpush.msra.mxu0 %v3974
    %4219 = vmatpush.msra.mxu0 %v3970
    %4220 = vmatpush.msra.mxu0 %v3966
    %4221 = vmatpush.msra.mxu0 %v3962
    %4222 = vmatpush.msra.mxu0 %v3958
    %4223 = vmatmul.f32.gmra.mxu0 %v4165
    %v4224 = vpop.f32.mrf.mxu0
    %v4225 = vadd.f32 %v4142, %v4224
    %4226 = vdwg.mxu0
    %4227 = vmatpush.msra.mxu0 %v4019
    %4228 = vmatpush.msra.mxu0 %v4015
    %4229 = vmatpush.msra.mxu0 %v4011
    %4230 = vmatpush.msra.mxu0 %v4007
    %4231 = vmatpush.msra.mxu0 %v4003
    %4232 = vmatpush.msra.mxu0 %v3999
    %4233 = vmatpush.msra.mxu0 %v3995
    %4234 = vmatpush.msra.mxu0 %v3991
    %4235 = vmatpush.msra.mxu0 %v3987
    %4236 = vmatpush.msra.mxu0 %v3983
    %4237 = vmatpush.msra.mxu0 %v3979
    %4238 = vmatpush.msra.mxu0 %v3975
    %4239 = vmatpush.msra.mxu0 %v3971
    %4240 = vmatpush.msra.mxu0 %v3967
    %4241 = vmatpush.msra.mxu0 %v3963
    %4242 = vmatpush.msra.mxu0 %v3959
    %4243 = vmatmul.f32.gmra.mxu0 %v4165
    %v4244 = vpop.f32.mrf.mxu0
    %v4245 = vadd.f32 %v4162, %v4244
    %4246 = vdwg.mxu0
    %v4247 = vadd.f32 %v4185, %v245
    %v4248 = vadd.f32 %v4205, %v246
    %v4249 = vadd.f32 %v4225, %v247
    %v4250 = vadd.f32 %v4245, %v248
    %v4251 = vxor.u32 %v4247, 2147483648
    %v4252 = vmul.f32 %v4251, 1.442695
    %v4253 = vpow.pop %v4252
    %v4254 = vadd.f32 %v4253, 1.0
    %v4255 = vrcp.pop %v4254
    %v4256 = vmul.f32 %v4254, %v4255
    %v4257 = vsub.f32 1.0, %v4256
    %v4258 = vmul.f32 %v4255, %v4257
    %v4259 = vadd.f32 %v4255, %v4258
    %vm4260 = vweird.f32 %v4254
    %vm4261 = vweird.f32 %v4255
    %vm4262 = vmor %vm4260, %vm4261
    %v4263 = vsel %vm4262, %v4255, %v4259
    %v4264 = vand.u32 2147483647, %v4254
    %vm4265 = vcmp.eq.f32.partialorder %v4264, 8.507059e+37
    %v4266 = vand.u32 %v4254, 2147483648
    %v4267 = vor.u32 1.1754944e-38, %v4266
    %v4268 = vsel %vm4265, %v4267, %v4263
    %v4269 = vmul.f32 1.0, %v4268
    %v4270 = vxor.u32 %v4248, 2147483648
    %v4271 = vmul.f32 %v4270, 1.442695
    %v4272 = vpow.pop %v4271
    %v4273 = vadd.f32 %v4272, 1.0
    %v4274 = vrcp.pop %v4273
    %v4275 = vmul.f32 %v4273, %v4274
    %v4276 = vsub.f32 1.0, %v4275
    %v4277 = vmul.f32 %v4274, %v4276
    %v4278 = vadd.f32 %v4274, %v4277
    %vm4279 = vweird.f32 %v4273
    %vm4280 = vweird.f32 %v4274
    %vm4281 = vmor %vm4279, %vm4280
    %v4282 = vsel %vm4281, %v4274, %v4278
    %v4283 = vand.u32 2147483647, %v4273
    %vm4284 = vcmp.eq.f32.partialorder %v4283, 8.507059e+37
    %v4285 = vand.u32 %v4273, 2147483648
    %v4286 = vor.u32 1.1754944e-38, %v4285
    %v4287 = vsel %vm4284, %v4286, %v4282
    %v4288 = vmul.f32 1.0, %v4287
    %v4289 = vtanh.pop %v4249
    %v4290 = vxor.u32 %v4250, 2147483648
    %v4291 = vmul.f32 %v4290, 1.442695
    %v4292 = vpow.pop %v4291
    %v4293 = vadd.f32 %v4292, 1.0
    %v4294 = vrcp.pop %v4293
    %v4295 = vmul.f32 %v4293, %v4294
    %v4296 = vsub.f32 1.0, %v4295
    %v4297 = vmul.f32 %v4294, %v4296
    %v4298 = vadd.f32 %v4294, %v4297
    %vm4299 = vweird.f32 %v4293
    %vm4300 = vweird.f32 %v4294
    %vm4301 = vmor %vm4299, %vm4300
    %v4302 = vsel %vm4301, %v4294, %v4298
    %v4303 = vand.u32 2147483647, %v4293
    %vm4304 = vcmp.eq.f32.partialorder %v4303, 8.507059e+37
    %v4305 = vand.u32 %v4293, 2147483648
    %v4306 = vor.u32 1.1754944e-38, %v4305
    %v4307 = vsel %vm4304, %v4306, %v4302
    %v4308 = vmul.f32 1.0, %v4307
    %v4309 = vmul.f32 %v4288, %v3726
    %v4310 = vmul.f32 %v4269, %v4289
    %v4311 = vadd.f32 %v4309, %v4310
    %v4312 = vtanh.pop %v4311
    %v4313 = vmul.f32 %v4308, %v4312
    %4314 = vst [vmem:[#allocation2 + $0xc] sm:$0x3] %v4313
    %v4315 = vld [vmem:[#allocation3] sm:$0xff]
    %v4316 = vld [vmem:[#allocation3 + $0x8] sm:$0xff]
    %v4317 = vld [vmem:[#allocation3 + $0x10] sm:$0xff]
    %v4318 = vld [vmem:[#allocation3 + $0x18] sm:$0xff]
    %v4319 = vld [vmem:[#allocation3 + $0x20] sm:$0xff]
    %v4320 = vld [vmem:[#allocation3 + $0x28] sm:$0xff]
    %v4321 = vld [vmem:[#allocation3 + $0x30] sm:$0xff]
    %v4322 = vld [vmem:[#allocation3 + $0x38] sm:$0xff]
    %v4323 = vld [vmem:[#allocation3 + $0x40] sm:$0xff]
    %v4324 = vld [vmem:[#allocation3 + $0x48] sm:$0xff]
    %v4325 = vld [vmem:[#allocation3 + $0x50] sm:$0xff]
    %v4326 = vld [vmem:[#allocation3 + $0x58] sm:$0xff]
    %v4327 = vld [vmem:[#allocation3 + $0x60] sm:$0xff]
    %v4328 = vld [vmem:[#allocation3 + $0x68] sm:$0xff]
    %v4329 = vld [vmem:[#allocation3 + $0x70] sm:$0xff]
    %v4330 = vld [vmem:[#allocation3 + $0x78] sm:$0xff]
    %v4331 = vld [vmem:[#allocation3 + $0x80] sm:$0xff]
    %v4332 = vld [vmem:[#allocation3 + $0x88] sm:$0xff]
    %v4333 = vld [vmem:[#allocation3 + $0x90] sm:$0xff]
    %v4334 = vld [vmem:[#allocation3 + $0x98] sm:$0xff]
    %v4335 = vld [vmem:[#allocation3 + $0xa0] sm:$0xff]
    %v4336 = vld [vmem:[#allocation3 + $0xa8] sm:$0xff]
    %v4337 = vld [vmem:[#allocation3 + $0xb0] sm:$0xff]
    %v4338 = vld [vmem:[#allocation3 + $0xb8] sm:$0xff]
    %v4339 = vld [vmem:[#allocation3 + $0xc0] sm:$0xff]
    %v4340 = vld [vmem:[#allocation3 + $0xc8] sm:$0xff]
    %v4341 = vld [vmem:[#allocation3 + $0xd0] sm:$0xff]
    %v4342 = vld [vmem:[#allocation3 + $0xd8] sm:$0xff]
    %v4343 = vld [vmem:[#allocation3 + $0xe0] sm:$0xff]
    %v4344 = vld [vmem:[#allocation3 + $0xe8] sm:$0xff]
    %v4345 = vld [vmem:[#allocation3 + $0xf0] sm:$0xff]
    %v4346 = vld [vmem:[#allocation3 + $0xf8] sm:$0xff]
    %v4347 = vld [vmem:[#allocation3 + $0x100] sm:$0xff]
    %v4348 = vld [vmem:[#allocation3 + $0x108] sm:$0xff]
    %v4349 = vld [vmem:[#allocation3 + $0x110] sm:$0xff]
    %v4350 = vld [vmem:[#allocation3 + $0x118] sm:$0xff]
    %v4351 = vld [vmem:[#allocation3 + $0x120] sm:$0xff]
    %v4352 = vld [vmem:[#allocation3 + $0x128] sm:$0xff]
    %v4353 = vld [vmem:[#allocation3 + $0x130] sm:$0xff]
    %v4354 = vld [vmem:[#allocation3 + $0x138] sm:$0xff]
    %v4355 = vld [vmem:[#allocation3 + $0x140] sm:$0xff]
    %v4356 = vld [vmem:[#allocation3 + $0x148] sm:$0xff]
    %v4357 = vld [vmem:[#allocation3 + $0x150] sm:$0xff]
    %v4358 = vld [vmem:[#allocation3 + $0x158] sm:$0xff]
    %v4359 = vld [vmem:[#allocation3 + $0x160] sm:$0xff]
    %v4360 = vld [vmem:[#allocation3 + $0x168] sm:$0xff]
    %v4361 = vld [vmem:[#allocation3 + $0x170] sm:$0xff]
    %v4362 = vld [vmem:[#allocation3 + $0x178] sm:$0xff]
    %v4363 = vld [vmem:[#allocation3 + $0x180] sm:$0xff]
    %v4364 = vld [vmem:[#allocation3 + $0x188] sm:$0xff]
    %v4365 = vld [vmem:[#allocation3 + $0x190] sm:$0xff]
    %v4366 = vld [vmem:[#allocation3 + $0x198] sm:$0xff]
    %v4367 = vld [vmem:[#allocation3 + $0x1a0] sm:$0xff]
    %v4368 = vld [vmem:[#allocation3 + $0x1a8] sm:$0xff]
    %v4369 = vld [vmem:[#allocation3 + $0x1b0] sm:$0xff]
    %v4370 = vld [vmem:[#allocation3 + $0x1b8] sm:$0xff]
    %v4371 = vld [vmem:[#allocation3 + $0x1c0] sm:$0xff]
    %v4372 = vld [vmem:[#allocation3 + $0x1c8] sm:$0xff]
    %v4373 = vld [vmem:[#allocation3 + $0x1d0] sm:$0xff]
    %v4374 = vld [vmem:[#allocation3 + $0x1d8] sm:$0xff]
    %v4375 = vld [vmem:[#allocation3 + $0x1e0] sm:$0xff]
    %v4376 = vld [vmem:[#allocation3 + $0x1e8] sm:$0xff]
    %v4377 = vld [vmem:[#allocation3 + $0x1f0] sm:$0xff]
    %v4378 = vld [vmem:[#allocation3 + $0x1f8] sm:$0xff]
    %4379 = vmatpush.msra.mxu0 %v4375
    %4380 = vmatpush.msra.mxu0 %v4371
    %4381 = vmatpush.msra.mxu0 %v4367
    %4382 = vmatpush.msra.mxu0 %v4363
    %4383 = vmatpush.msra.mxu0 %v4359
    %4384 = vmatpush.msra.mxu0 %v4355
    %4385 = vmatpush.msra.mxu0 %v4351
    %4386 = vmatpush.msra.mxu0 %v4347
    %4387 = vmatpush.msra.mxu0 %v4343
    %4388 = vmatpush.msra.mxu0 %v4339
    %4389 = vmatpush.msra.mxu0 %v4335
    %4390 = vmatpush.msra.mxu0 %v4331
    %4391 = vmatpush.msra.mxu0 %v4327
    %4392 = vmatpush.msra.mxu0 %v4323
    %4393 = vmatpush.msra.mxu0 %v4319
    %4394 = vmatpush.msra.mxu0 %v4315
    %4395 = vmatmul.f32.gmra.mxu0 %v4165
    %v4396 = vpop.f32.mrf.mxu0
    %v4397 = vadd.f32 0.0, %v4396
    %4398 = vdwg.mxu0
    %4399 = vmatpush.msra.mxu0 %v4376
    %4400 = vmatpush.msra.mxu0 %v4372
    %4401 = vmatpush.msra.mxu0 %v4368
    %4402 = vmatpush.msra.mxu0 %v4364
    %4403 = vmatpush.msra.mxu0 %v4360
    %4404 = vmatpush.msra.mxu0 %v4356
    %4405 = vmatpush.msra.mxu0 %v4352
    %4406 = vmatpush.msra.mxu0 %v4348
    %4407 = vmatpush.msra.mxu0 %v4344
    %4408 = vmatpush.msra.mxu0 %v4340
    %4409 = vmatpush.msra.mxu0 %v4336
    %4410 = vmatpush.msra.mxu0 %v4332
    %4411 = vmatpush.msra.mxu0 %v4328
    %4412 = vmatpush.msra.mxu0 %v4324
    %4413 = vmatpush.msra.mxu0 %v4320
    %4414 = vmatpush.msra.mxu0 %v4316
    %4415 = vmatmul.f32.gmra.mxu0 %v4165
    %v4416 = vpop.f32.mrf.mxu0
    %v4417 = vadd.f32 0.0, %v4416
    %4418 = vdwg.mxu0
    %4419 = vmatpush.msra.mxu0 %v4377
    %4420 = vmatpush.msra.mxu0 %v4373
    %4421 = vmatpush.msra.mxu0 %v4369
    %4422 = vmatpush.msra.mxu0 %v4365
    %4423 = vmatpush.msra.mxu0 %v4361
    %4424 = vmatpush.msra.mxu0 %v4357
    %4425 = vmatpush.msra.mxu0 %v4353
    %4426 = vmatpush.msra.mxu0 %v4349
    %4427 = vmatpush.msra.mxu0 %v4345
    %4428 = vmatpush.msra.mxu0 %v4341
    %4429 = vmatpush.msra.mxu0 %v4337
    %4430 = vmatpush.msra.mxu0 %v4333
    %4431 = vmatpush.msra.mxu0 %v4329
    %4432 = vmatpush.msra.mxu0 %v4325
    %4433 = vmatpush.msra.mxu0 %v4321
    %4434 = vmatpush.msra.mxu0 %v4317
    %4435 = vmatmul.f32.gmra.mxu0 %v4165
    %v4436 = vpop.f32.mrf.mxu0
    %v4437 = vadd.f32 0.0, %v4436
    %4438 = vdwg.mxu0
    %4439 = vmatpush.msra.mxu0 %v4378
    %4440 = vmatpush.msra.mxu0 %v4374
    %4441 = vmatpush.msra.mxu0 %v4370
    %4442 = vmatpush.msra.mxu0 %v4366
    %4443 = vmatpush.msra.mxu0 %v4362
    %4444 = vmatpush.msra.mxu0 %v4358
    %4445 = vmatpush.msra.mxu0 %v4354
    %4446 = vmatpush.msra.mxu0 %v4350
    %4447 = vmatpush.msra.mxu0 %v4346
    %4448 = vmatpush.msra.mxu0 %v4342
    %4449 = vmatpush.msra.mxu0 %v4338
    %4450 = vmatpush.msra.mxu0 %v4334
    %4451 = vmatpush.msra.mxu0 %v4330
    %4452 = vmatpush.msra.mxu0 %v4326
    %4453 = vmatpush.msra.mxu0 %v4322
    %4454 = vmatpush.msra.mxu0 %v4318
    %4455 = vmatmul.f32.gmra.mxu0 %v4165
    %v4456 = vpop.f32.mrf.mxu0
    %v4457 = vadd.f32 0.0, %v4456
    %4458 = vdwg.mxu0
    %v4463 = vrot.slane %v4397, 2
    %v4464 = vrot.slane %v4417, 2
    %v4465 = vrot.slane %v4437, 2
    %v4466 = vrot.slane %v4457, 2
    %v4471 = vadd.f32 %v172, %v4463
    %v4472 = vadd.f32 %v195, %v4464
    %v4473 = vadd.f32 %v218, %v4465
    %v4474 = vadd.f32 %v241, %v4466
    %v4475 = vxor.u32 %v4471, 2147483648
    %v4476 = vmul.f32 %v4475, 1.442695
    %v4477 = vpow.pop %v4476
    %v4478 = vadd.f32 %v4477, 1.0
    %v4479 = vrcp.pop %v4478
    %v4480 = vmul.f32 %v4478, %v4479
    %v4481 = vsub.f32 1.0, %v4480
    %v4482 = vmul.f32 %v4479, %v4481
    %v4483 = vadd.f32 %v4479, %v4482
    %vm4484 = vweird.f32 %v4478
    %vm4485 = vweird.f32 %v4479
    %vm4486 = vmor %vm4484, %vm4485
    %v4487 = vsel %vm4486, %v4479, %v4483
    %v4488 = vand.u32 2147483647, %v4478
    %vm4489 = vcmp.eq.f32.partialorder %v4488, 8.507059e+37
    %v4490 = vand.u32 %v4478, 2147483648
    %v4491 = vor.u32 1.1754944e-38, %v4490
    %v4492 = vsel %vm4489, %v4491, %v4487
    %v4493 = vmul.f32 1.0, %v4492
    %v4494 = vxor.u32 %v4472, 2147483648
    %v4495 = vmul.f32 %v4494, 1.442695
    %v4496 = vpow.pop %v4495
    %v4497 = vadd.f32 %v4496, 1.0
    %v4498 = vrcp.pop %v4497
    %v4499 = vmul.f32 %v4497, %v4498
    %v4500 = vsub.f32 1.0, %v4499
    %v4501 = vmul.f32 %v4498, %v4500
    %v4502 = vadd.f32 %v4498, %v4501
    %vm4503 = vweird.f32 %v4497
    %vm4504 = vweird.f32 %v4498
    %vm4505 = vmor %vm4503, %vm4504
    %v4506 = vsel %vm4505, %v4498, %v4502
    %v4507 = vand.u32 2147483647, %v4497
    %vm4508 = vcmp.eq.f32.partialorder %v4507, 8.507059e+37
    %v4509 = vand.u32 %v4497, 2147483648
    %v4510 = vor.u32 1.1754944e-38, %v4509
    %v4511 = vsel %vm4508, %v4510, %v4506
    %v4512 = vmul.f32 1.0, %v4511
    %v4513 = vtanh.pop %v4473
    %v4514 = vxor.u32 %v4474, 2147483648
    %v4515 = vmul.f32 %v4514, 1.442695
    %v4516 = vpow.pop %v4515
    %v4517 = vadd.f32 %v4516, 1.0
    %v4518 = vrcp.pop %v4517
    %v4519 = vmul.f32 %v4517, %v4518
    %v4520 = vsub.f32 1.0, %v4519
    %v4521 = vmul.f32 %v4518, %v4520
    %v4522 = vadd.f32 %v4518, %v4521
    %vm4523 = vweird.f32 %v4517
    %vm4524 = vweird.f32 %v4518
    %vm4525 = vmor %vm4523, %vm4524
    %v4526 = vsel %vm4525, %v4518, %v4522
    %v4527 = vand.u32 2147483647, %v4517
    %vm4528 = vcmp.eq.f32.partialorder %v4527, 8.507059e+37
    %v4529 = vand.u32 %v4517, 2147483648
    %v4530 = vor.u32 1.1754944e-38, %v4529
    %v4531 = vsel %vm4528, %v4530, %v4526
    %v4532 = vmul.f32 1.0, %v4531
    %v4534 = vrot.slane %v3953, 6
    %v4536 = vmul.f32 %v4512, %v4534
    %v4537 = vmul.f32 %v4493, %v4513
    %v4538 = vadd.f32 %v4536, %v4537
    %v4539 = vtanh.pop %v4538
    %v4540 = vmul.f32 %v4532, %v4539
    %v4541 = vld [vmem:[#allocation6] sm:$0xff]
    %v4542 = vld [vmem:[#allocation6 + $0x8] sm:$0xff]
    %v4543 = vld [vmem:[#allocation6 + $0x10] sm:$0xff]
    %v4544 = vld [vmem:[#allocation6 + $0x18] sm:$0xff]
    %v4545 = vld [vmem:[#allocation6 + $0x20] sm:$0xff]
    %v4546 = vld [vmem:[#allocation6 + $0x28] sm:$0xff]
    %v4547 = vld [vmem:[#allocation6 + $0x30] sm:$0xff]
    %v4548 = vld [vmem:[#allocation6 + $0x38] sm:$0xff]
    %v4549 = vld [vmem:[#allocation6 + $0x40] sm:$0xff]
    %v4550 = vld [vmem:[#allocation6 + $0x48] sm:$0xff]
    %v4551 = vld [vmem:[#allocation6 + $0x50] sm:$0xff]
    %v4552 = vld [vmem:[#allocation6 + $0x58] sm:$0xff]
    %v4553 = vld [vmem:[#allocation6 + $0x60] sm:$0xff]
    %v4554 = vld [vmem:[#allocation6 + $0x68] sm:$0xff]
    %v4555 = vld [vmem:[#allocation6 + $0x70] sm:$0xff]
    %v4556 = vld [vmem:[#allocation6 + $0x78] sm:$0xff]
    %v4557 = vld [vmem:[#allocation6 + $0x80] sm:$0xff]
    %v4558 = vld [vmem:[#allocation6 + $0x88] sm:$0xff]
    %v4559 = vld [vmem:[#allocation6 + $0x90] sm:$0xff]
    %v4560 = vld [vmem:[#allocation6 + $0x98] sm:$0xff]
    %v4561 = vld [vmem:[#allocation6 + $0xa0] sm:$0xff]
    %v4562 = vld [vmem:[#allocation6 + $0xa8] sm:$0xff]
    %v4563 = vld [vmem:[#allocation6 + $0xb0] sm:$0xff]
    %v4564 = vld [vmem:[#allocation6 + $0xb8] sm:$0xff]
    %v4565 = vld [vmem:[#allocation6 + $0xc0] sm:$0xff]
    %v4566 = vld [vmem:[#allocation6 + $0xc8] sm:$0xff]
    %v4567 = vld [vmem:[#allocation6 + $0xd0] sm:$0xff]
    %v4568 = vld [vmem:[#allocation6 + $0xd8] sm:$0xff]
    %v4569 = vld [vmem:[#allocation6 + $0xe0] sm:$0xff]
    %v4570 = vld [vmem:[#allocation6 + $0xe8] sm:$0xff]
    %v4571 = vld [vmem:[#allocation6 + $0xf0] sm:$0xff]
    %v4572 = vld [vmem:[#allocation6 + $0xf8] sm:$0xff]
    %v4573 = vld [vmem:[#allocation6 + $0x100] sm:$0xff]
    %v4574 = vld [vmem:[#allocation6 + $0x108] sm:$0xff]
    %v4575 = vld [vmem:[#allocation6 + $0x110] sm:$0xff]
    %v4576 = vld [vmem:[#allocation6 + $0x118] sm:$0xff]
    %v4577 = vld [vmem:[#allocation6 + $0x120] sm:$0xff]
    %v4578 = vld [vmem:[#allocation6 + $0x128] sm:$0xff]
    %v4579 = vld [vmem:[#allocation6 + $0x130] sm:$0xff]
    %v4580 = vld [vmem:[#allocation6 + $0x138] sm:$0xff]
    %v4581 = vld [vmem:[#allocation6 + $0x140] sm:$0xff]
    %v4582 = vld [vmem:[#allocation6 + $0x148] sm:$0xff]
    %v4583 = vld [vmem:[#allocation6 + $0x150] sm:$0xff]
    %v4584 = vld [vmem:[#allocation6 + $0x158] sm:$0xff]
    %v4585 = vld [vmem:[#allocation6 + $0x160] sm:$0xff]
    %v4586 = vld [vmem:[#allocation6 + $0x168] sm:$0xff]
    %v4587 = vld [vmem:[#allocation6 + $0x170] sm:$0xff]
    %v4588 = vld [vmem:[#allocation6 + $0x178] sm:$0xff]
    %v4589 = vld [vmem:[#allocation6 + $0x180] sm:$0xff]
    %v4590 = vld [vmem:[#allocation6 + $0x188] sm:$0xff]
    %v4591 = vld [vmem:[#allocation6 + $0x190] sm:$0xff]
    %v4592 = vld [vmem:[#allocation6 + $0x198] sm:$0xff]
    %v4593 = vld [vmem:[#allocation6 + $0x1a0] sm:$0xff]
    %v4594 = vld [vmem:[#allocation6 + $0x1a8] sm:$0xff]
    %v4595 = vld [vmem:[#allocation6 + $0x1b0] sm:$0xff]
    %v4596 = vld [vmem:[#allocation6 + $0x1b8] sm:$0xff]
    %v4597 = vld [vmem:[#allocation6 + $0x1c0] sm:$0xff]
    %v4598 = vld [vmem:[#allocation6 + $0x1c8] sm:$0xff]
    %v4599 = vld [vmem:[#allocation6 + $0x1d0] sm:$0xff]
    %v4600 = vld [vmem:[#allocation6 + $0x1d8] sm:$0xff]
    %v4601 = vld [vmem:[#allocation6 + $0x1e0] sm:$0xff]
    %v4602 = vld [vmem:[#allocation6 + $0x1e8] sm:$0xff]
    %v4603 = vld [vmem:[#allocation6 + $0x1f0] sm:$0xff]
    %v4604 = vld [vmem:[#allocation6 + $0x1f8] sm:$0xff]
    %v4605 = vld [vmem:[#allocation8] sm:$0xff]
    %v4606 = vld [vmem:[#allocation8 + $0x8] sm:$0xff]
    %v4607 = vld [vmem:[#allocation8 + $0x10] sm:$0xff]
    %v4608 = vld [vmem:[#allocation8 + $0x18] sm:$0xff]
    %v4609 = vld [vmem:[#allocation8 + $0x20] sm:$0xff]
    %v4610 = vld [vmem:[#allocation8 + $0x28] sm:$0xff]
    %v4611 = vld [vmem:[#allocation8 + $0x30] sm:$0xff]
    %v4612 = vld [vmem:[#allocation8 + $0x38] sm:$0xff]
    %v4613 = vld [vmem:[#allocation8 + $0x40] sm:$0xff]
    %v4614 = vld [vmem:[#allocation8 + $0x48] sm:$0xff]
    %v4615 = vld [vmem:[#allocation8 + $0x50] sm:$0xff]
    %v4616 = vld [vmem:[#allocation8 + $0x58] sm:$0xff]
    %v4617 = vld [vmem:[#allocation8 + $0x60] sm:$0xff]
    %v4618 = vld [vmem:[#allocation8 + $0x68] sm:$0xff]
    %v4619 = vld [vmem:[#allocation8 + $0x70] sm:$0xff]
    %v4620 = vld [vmem:[#allocation8 + $0x78] sm:$0xff]
    %v4621 = vld [vmem:[#allocation8 + $0x80] sm:$0xff]
    %v4622 = vld [vmem:[#allocation8 + $0x88] sm:$0xff]
    %v4623 = vld [vmem:[#allocation8 + $0x90] sm:$0xff]
    %v4624 = vld [vmem:[#allocation8 + $0x98] sm:$0xff]
    %v4625 = vld [vmem:[#allocation8 + $0xa0] sm:$0xff]
    %v4626 = vld [vmem:[#allocation8 + $0xa8] sm:$0xff]
    %v4627 = vld [vmem:[#allocation8 + $0xb0] sm:$0xff]
    %v4628 = vld [vmem:[#allocation8 + $0xb8] sm:$0xff]
    %v4629 = vld [vmem:[#allocation8 + $0xc0] sm:$0xff]
    %v4630 = vld [vmem:[#allocation8 + $0xc8] sm:$0xff]
    %v4631 = vld [vmem:[#allocation8 + $0xd0] sm:$0xff]
    %v4632 = vld [vmem:[#allocation8 + $0xd8] sm:$0xff]
    %v4633 = vld [vmem:[#allocation8 + $0xe0] sm:$0xff]
    %v4634 = vld [vmem:[#allocation8 + $0xe8] sm:$0xff]
    %v4635 = vld [vmem:[#allocation8 + $0xf0] sm:$0xff]
    %v4636 = vld [vmem:[#allocation8 + $0xf8] sm:$0xff]
    %v4637 = vld [vmem:[#allocation8 + $0x100] sm:$0xff]
    %v4638 = vld [vmem:[#allocation8 + $0x108] sm:$0xff]
    %v4639 = vld [vmem:[#allocation8 + $0x110] sm:$0xff]
    %v4640 = vld [vmem:[#allocation8 + $0x118] sm:$0xff]
    %v4641 = vld [vmem:[#allocation8 + $0x120] sm:$0xff]
    %v4642 = vld [vmem:[#allocation8 + $0x128] sm:$0xff]
    %v4643 = vld [vmem:[#allocation8 + $0x130] sm:$0xff]
    %v4644 = vld [vmem:[#allocation8 + $0x138] sm:$0xff]
    %v4645 = vld [vmem:[#allocation8 + $0x140] sm:$0xff]
    %v4646 = vld [vmem:[#allocation8 + $0x148] sm:$0xff]
    %v4647 = vld [vmem:[#allocation8 + $0x150] sm:$0xff]
    %v4648 = vld [vmem:[#allocation8 + $0x158] sm:$0xff]
    %v4649 = vld [vmem:[#allocation8 + $0x160] sm:$0xff]
    %v4650 = vld [vmem:[#allocation8 + $0x168] sm:$0xff]
    %v4651 = vld [vmem:[#allocation8 + $0x170] sm:$0xff]
    %v4652 = vld [vmem:[#allocation8 + $0x178] sm:$0xff]
    %v4653 = vld [vmem:[#allocation8 + $0x180] sm:$0xff]
    %v4654 = vld [vmem:[#allocation8 + $0x188] sm:$0xff]
    %v4655 = vld [vmem:[#allocation8 + $0x190] sm:$0xff]
    %v4656 = vld [vmem:[#allocation8 + $0x198] sm:$0xff]
    %v4657 = vld [vmem:[#allocation8 + $0x1a0] sm:$0xff]
    %v4658 = vld [vmem:[#allocation8 + $0x1a8] sm:$0xff]
    %v4659 = vld [vmem:[#allocation8 + $0x1b0] sm:$0xff]
    %v4660 = vld [vmem:[#allocation8 + $0x1b8] sm:$0xff]
    %v4661 = vld [vmem:[#allocation8 + $0x1c0] sm:$0xff]
    %v4662 = vld [vmem:[#allocation8 + $0x1c8] sm:$0xff]
    %v4663 = vld [vmem:[#allocation8 + $0x1d0] sm:$0xff]
    %v4664 = vld [vmem:[#allocation8 + $0x1d8] sm:$0xff]
    %v4665 = vld [vmem:[#allocation8 + $0x1e0] sm:$0xff]
    %v4666 = vld [vmem:[#allocation8 + $0x1e8] sm:$0xff]
    %v4667 = vld [vmem:[#allocation8 + $0x1f0] sm:$0xff]
    %v4668 = vld [vmem:[#allocation8 + $0x1f8] sm:$0xff]
    %4669 = vmatpush.msra.mxu0 %v4665
    %4670 = vmatpush.msra.mxu0 %v4661
    %4671 = vmatpush.msra.mxu0 %v4657
    %4672 = vmatpush.msra.mxu0 %v4653
    %4673 = vmatpush.msra.mxu0 %v4649
    %4674 = vmatpush.msra.mxu0 %v4645
    %4675 = vmatpush.msra.mxu0 %v4641
    %4676 = vmatpush.msra.mxu0 %v4637
    %4677 = vmatpush.msra.mxu0 %v4633
    %4678 = vmatpush.msra.mxu0 %v4629
    %4679 = vmatpush.msra.mxu0 %v4625
    %4680 = vmatpush.msra.mxu0 %v4621
    %4681 = vmatpush.msra.mxu0 %v4617
    %4682 = vmatpush.msra.mxu0 %v4613
    %4683 = vmatpush.msra.mxu0 %v4609
    %4684 = vmatpush.msra.mxu0 %v4605
    %4685 = vmatmul.f32.gmra.mxu0 %v4313
    %v4686 = vpop.f32.mrf.mxu0
    %v4687 = vadd.f32 0.0, %v4686
    %4688 = vdwg.mxu0
    %4689 = vmatpush.msra.mxu0 %v4666
    %4690 = vmatpush.msra.mxu0 %v4662
    %4691 = vmatpush.msra.mxu0 %v4658
    %4692 = vmatpush.msra.mxu0 %v4654
    %4693 = vmatpush.msra.mxu0 %v4650
    %4694 = vmatpush.msra.mxu0 %v4646
    %4695 = vmatpush.msra.mxu0 %v4642
    %4696 = vmatpush.msra.mxu0 %v4638
    %4697 = vmatpush.msra.mxu0 %v4634
    %4698 = vmatpush.msra.mxu0 %v4630
    %4699 = vmatpush.msra.mxu0 %v4626
    %4700 = vmatpush.msra.mxu0 %v4622
    %4701 = vmatpush.msra.mxu0 %v4618
    %4702 = vmatpush.msra.mxu0 %v4614
    %4703 = vmatpush.msra.mxu0 %v4610
    %4704 = vmatpush.msra.mxu0 %v4606
    %4705 = vmatmul.f32.gmra.mxu0 %v4313
    %v4706 = vpop.f32.mrf.mxu0
    %v4707 = vadd.f32 0.0, %v4706
    %4708 = vdwg.mxu0
    %4709 = vmatpush.msra.mxu0 %v4667
    %4710 = vmatpush.msra.mxu0 %v4663
    %4711 = vmatpush.msra.mxu0 %v4659
    %4712 = vmatpush.msra.mxu0 %v4655
    %4713 = vmatpush.msra.mxu0 %v4651
    %4714 = vmatpush.msra.mxu0 %v4647
    %4715 = vmatpush.msra.mxu0 %v4643
    %4716 = vmatpush.msra.mxu0 %v4639
    %4717 = vmatpush.msra.mxu0 %v4635
    %4718 = vmatpush.msra.mxu0 %v4631
    %4719 = vmatpush.msra.mxu0 %v4627
    %4720 = vmatpush.msra.mxu0 %v4623
    %4721 = vmatpush.msra.mxu0 %v4619
    %4722 = vmatpush.msra.mxu0 %v4615
    %4723 = vmatpush.msra.mxu0 %v4611
    %4724 = vmatpush.msra.mxu0 %v4607
    %4725 = vmatmul.f32.gmra.mxu0 %v4313
    %v4726 = vpop.f32.mrf.mxu0
    %v4727 = vadd.f32 0.0, %v4726
    %4728 = vdwg.mxu0
    %4729 = vmatpush.msra.mxu0 %v4668
    %4730 = vmatpush.msra.mxu0 %v4664
    %4731 = vmatpush.msra.mxu0 %v4660
    %4732 = vmatpush.msra.mxu0 %v4656
    %4733 = vmatpush.msra.mxu0 %v4652
    %4734 = vmatpush.msra.mxu0 %v4648
    %4735 = vmatpush.msra.mxu0 %v4644
    %4736 = vmatpush.msra.mxu0 %v4640
    %4737 = vmatpush.msra.mxu0 %v4636
    %4738 = vmatpush.msra.mxu0 %v4632
    %4739 = vmatpush.msra.mxu0 %v4628
    %4740 = vmatpush.msra.mxu0 %v4624
    %4741 = vmatpush.msra.mxu0 %v4620
    %4742 = vmatpush.msra.mxu0 %v4616
    %4743 = vmatpush.msra.mxu0 %v4612
    %4744 = vmatpush.msra.mxu0 %v4608
    %4745 = vmatmul.f32.gmra.mxu0 %v4313
    %v4746 = vpop.f32.mrf.mxu0
    %v4747 = vadd.f32 0.0, %v4746
    %4748 = vdwg.mxu0
    %v4750 = vrot.slane %v4540, 6
    %4752 = vmatpush.msra.mxu0 %v4601
    %4753 = vmatpush.msra.mxu0 %v4597
    %4754 = vmatpush.msra.mxu0 %v4593
    %4755 = vmatpush.msra.mxu0 %v4589
    %4756 = vmatpush.msra.mxu0 %v4585
    %4757 = vmatpush.msra.mxu0 %v4581
    %4758 = vmatpush.msra.mxu0 %v4577
    %4759 = vmatpush.msra.mxu0 %v4573
    %4760 = vmatpush.msra.mxu0 %v4569
    %4761 = vmatpush.msra.mxu0 %v4565
    %4762 = vmatpush.msra.mxu0 %v4561
    %4763 = vmatpush.msra.mxu0 %v4557
    %4764 = vmatpush.msra.mxu0 %v4553
    %4765 = vmatpush.msra.mxu0 %v4549
    %4766 = vmatpush.msra.mxu0 %v4545
    %4767 = vmatpush.msra.mxu0 %v4541
    %4768 = vmatmul.f32.gmra.mxu0 %v4750
    %v4769 = vpop.f32.mrf.mxu0
    %v4770 = vadd.f32 %v4687, %v4769
    %4771 = vdwg.mxu0
    %4772 = vmatpush.msra.mxu0 %v4602
    %4773 = vmatpush.msra.mxu0 %v4598
    %4774 = vmatpush.msra.mxu0 %v4594
    %4775 = vmatpush.msra.mxu0 %v4590
    %4776 = vmatpush.msra.mxu0 %v4586
    %4777 = vmatpush.msra.mxu0 %v4582
    %4778 = vmatpush.msra.mxu0 %v4578
    %4779 = vmatpush.msra.mxu0 %v4574
    %4780 = vmatpush.msra.mxu0 %v4570
    %4781 = vmatpush.msra.mxu0 %v4566
    %4782 = vmatpush.msra.mxu0 %v4562
    %4783 = vmatpush.msra.mxu0 %v4558
    %4784 = vmatpush.msra.mxu0 %v4554
    %4785 = vmatpush.msra.mxu0 %v4550
    %4786 = vmatpush.msra.mxu0 %v4546
    %4787 = vmatpush.msra.mxu0 %v4542
    %4788 = vmatmul.f32.gmra.mxu0 %v4750
    %v4789 = vpop.f32.mrf.mxu0
    %v4790 = vadd.f32 %v4707, %v4789
    %4791 = vdwg.mxu0
    %4792 = vmatpush.msra.mxu0 %v4603
    %4793 = vmatpush.msra.mxu0 %v4599
    %4794 = vmatpush.msra.mxu0 %v4595
    %4795 = vmatpush.msra.mxu0 %v4591
    %4796 = vmatpush.msra.mxu0 %v4587
    %4797 = vmatpush.msra.mxu0 %v4583
    %4798 = vmatpush.msra.mxu0 %v4579
    %4799 = vmatpush.msra.mxu0 %v4575
    %4800 = vmatpush.msra.mxu0 %v4571
    %4801 = vmatpush.msra.mxu0 %v4567
    %4802 = vmatpush.msra.mxu0 %v4563
    %4803 = vmatpush.msra.mxu0 %v4559
    %4804 = vmatpush.msra.mxu0 %v4555
    %4805 = vmatpush.msra.mxu0 %v4551
    %4806 = vmatpush.msra.mxu0 %v4547
    %4807 = vmatpush.msra.mxu0 %v4543
    %4808 = vmatmul.f32.gmra.mxu0 %v4750
    %v4809 = vpop.f32.mrf.mxu0
    %v4810 = vadd.f32 %v4727, %v4809
    %4811 = vdwg.mxu0
    %4812 = vmatpush.msra.mxu0 %v4604
    %4813 = vmatpush.msra.mxu0 %v4600
    %4814 = vmatpush.msra.mxu0 %v4596
    %4815 = vmatpush.msra.mxu0 %v4592
    %4816 = vmatpush.msra.mxu0 %v4588
    %4817 = vmatpush.msra.mxu0 %v4584
    %4818 = vmatpush.msra.mxu0 %v4580
    %4819 = vmatpush.msra.mxu0 %v4576
    %4820 = vmatpush.msra.mxu0 %v4572
    %4821 = vmatpush.msra.mxu0 %v4568
    %4822 = vmatpush.msra.mxu0 %v4564
    %4823 = vmatpush.msra.mxu0 %v4560
    %4824 = vmatpush.msra.mxu0 %v4556
    %4825 = vmatpush.msra.mxu0 %v4552
    %4826 = vmatpush.msra.mxu0 %v4548
    %4827 = vmatpush.msra.mxu0 %v4544
    %4828 = vmatmul.f32.gmra.mxu0 %v4750
    %v4829 = vpop.f32.mrf.mxu0
    %v4830 = vadd.f32 %v4747, %v4829
    %4831 = vdwg.mxu0
    %v4832 = vadd.f32 %v4770, %v245
    %v4833 = vadd.f32 %v4790, %v246
    %v4834 = vadd.f32 %v4810, %v247
    %v4835 = vadd.f32 %v4830, %v248
    %v4836 = vxor.u32 %v4832, 2147483648
    %v4837 = vmul.f32 %v4836, 1.442695
    %v4838 = vpow.pop %v4837
    %v4839 = vadd.f32 %v4838, 1.0
    %v4840 = vrcp.pop %v4839
    %v4841 = vmul.f32 %v4839, %v4840
    %v4842 = vsub.f32 1.0, %v4841
    %v4843 = vmul.f32 %v4840, %v4842
    %v4844 = vadd.f32 %v4840, %v4843
    %vm4845 = vweird.f32 %v4839
    %vm4846 = vweird.f32 %v4840
    %vm4847 = vmor %vm4845, %vm4846
    %v4848 = vsel %vm4847, %v4840, %v4844
    %v4849 = vand.u32 2147483647, %v4839
    %vm4850 = vcmp.eq.f32.partialorder %v4849, 8.507059e+37
    %v4851 = vand.u32 %v4839, 2147483648
    %v4852 = vor.u32 1.1754944e-38, %v4851
    %v4853 = vsel %vm4850, %v4852, %v4848
    %v4854 = vmul.f32 1.0, %v4853
    %v4855 = vxor.u32 %v4833, 2147483648
    %v4856 = vmul.f32 %v4855, 1.442695
    %v4857 = vpow.pop %v4856
    %v4858 = vadd.f32 %v4857, 1.0
    %v4859 = vrcp.pop %v4858
    %v4860 = vmul.f32 %v4858, %v4859
    %v4861 = vsub.f32 1.0, %v4860
    %v4862 = vmul.f32 %v4859, %v4861
    %v4863 = vadd.f32 %v4859, %v4862
    %vm4864 = vweird.f32 %v4858
    %vm4865 = vweird.f32 %v4859
    %vm4866 = vmor %vm4864, %vm4865
    %v4867 = vsel %vm4866, %v4859, %v4863
    %v4868 = vand.u32 2147483647, %v4858
    %vm4869 = vcmp.eq.f32.partialorder %v4868, 8.507059e+37
    %v4870 = vand.u32 %v4858, 2147483648
    %v4871 = vor.u32 1.1754944e-38, %v4870
    %v4872 = vsel %vm4869, %v4871, %v4867
    %v4873 = vmul.f32 1.0, %v4872
    %v4874 = vtanh.pop %v4834
    %v4875 = vxor.u32 %v4835, 2147483648
    %v4876 = vmul.f32 %v4875, 1.442695
    %v4877 = vpow.pop %v4876
    %v4878 = vadd.f32 %v4877, 1.0
    %v4879 = vrcp.pop %v4878
    %v4880 = vmul.f32 %v4878, %v4879
    %v4881 = vsub.f32 1.0, %v4880
    %v4882 = vmul.f32 %v4879, %v4881
    %v4883 = vadd.f32 %v4879, %v4882
    %vm4884 = vweird.f32 %v4878
    %vm4885 = vweird.f32 %v4879
    %vm4886 = vmor %vm4884, %vm4885
    %v4887 = vsel %vm4886, %v4879, %v4883
    %v4888 = vand.u32 2147483647, %v4878
    %vm4889 = vcmp.eq.f32.partialorder %v4888, 8.507059e+37
    %v4890 = vand.u32 %v4878, 2147483648
    %v4891 = vor.u32 1.1754944e-38, %v4890
    %v4892 = vsel %vm4889, %v4891, %v4887
    %v4893 = vmul.f32 1.0, %v4892
    %v4894 = vmul.f32 %v4873, %v4311
    %v4895 = vmul.f32 %v4854, %v4874
    %v4896 = vadd.f32 %v4894, %v4895
    %v4897 = vtanh.pop %v4896
    %v4898 = vmul.f32 %v4893, %v4897
    %4899 = vst [vmem:[#allocation2 + $0xe] sm:$0x3] %v4898
    %v4900 = vld [vmem:[#allocation2] sm:$0xff]
    %v4901 = vld [vmem:[#allocation2 + $0x8] sm:$0xff]
    %v4902 = vld [vmem:[#allocation9] sm:$0xff]
    %v4903 = vld [vmem:[#allocation9 + $0x8] sm:$0xff]
    %v4904 = vld [vmem:[#allocation9 + $0x10] sm:$0xff]
    %v4905 = vld [vmem:[#allocation9 + $0x18] sm:$0xff]
    %v4906 = vld [vmem:[#allocation9 + $0x20] sm:$0xff]
    %v4907 = vld [vmem:[#allocation9 + $0x28] sm:$0xff]
    %v4908 = vld [vmem:[#allocation9 + $0x30] sm:$0xff]
    %v4909 = vld [vmem:[#allocation9 + $0x38] sm:$0xff]
    %v4910 = vld [vmem:[#allocation9 + $0x40] sm:$0xff]
    %v4911 = vld [vmem:[#allocation9 + $0x48] sm:$0xff]
    %v4912 = vld [vmem:[#allocation9 + $0x50] sm:$0xff]
    %v4913 = vld [vmem:[#allocation9 + $0x58] sm:$0xff]
    %v4914 = vld [vmem:[#allocation9 + $0x60] sm:$0xff]
    %v4915 = vld [vmem:[#allocation9 + $0x68] sm:$0xff]
    %v4916 = vld [vmem:[#allocation9 + $0x70] sm:$0xff]
    %v4917 = vld [vmem:[#allocation9 + $0x78] sm:$0xff]
    %v4918 = vld [vmem:[#allocation9 + $0x80] sm:$0xff]
    %v4919 = vld [vmem:[#allocation9 + $0x88] sm:$0xff]
    %v4920 = vld [vmem:[#allocation9 + $0x90] sm:$0xff]
    %v4921 = vld [vmem:[#allocation9 + $0x98] sm:$0xff]
    %v4922 = vld [vmem:[#allocation9 + $0xa0] sm:$0xff]
    %v4923 = vld [vmem:[#allocation9 + $0xa8] sm:$0xff]
    %v4924 = vld [vmem:[#allocation9 + $0xb0] sm:$0xff]
    %v4925 = vld [vmem:[#allocation9 + $0xb8] sm:$0xff]
    %v4926 = vld [vmem:[#allocation9 + $0xc0] sm:$0xff]
    %v4927 = vld [vmem:[#allocation9 + $0xc8] sm:$0xff]
    %v4928 = vld [vmem:[#allocation9 + $0xd0] sm:$0xff]
    %v4929 = vld [vmem:[#allocation9 + $0xd8] sm:$0xff]
    %v4930 = vld [vmem:[#allocation9 + $0xe0] sm:$0xff]
    %v4931 = vld [vmem:[#allocation9 + $0xe8] sm:$0xff]
    %v4932 = vld [vmem:[#allocation9 + $0xf0] sm:$0xff]
    %v4933 = vld [vmem:[#allocation9 + $0xf8] sm:$0xff]
    %v4934 = vld [vmem:[%s8] sm:$0x3]
    %v4936 = vperm.slane %v4934, 0
    %v4937 = vperm.slane %v4934, 1
    %4940 = vmatpush.msra.mxu0 %v4932
    %4941 = vmatpush.msra.mxu0 %v4930
    %4942 = vmatpush.msra.mxu0 %v4928
    %4943 = vmatpush.msra.mxu0 %v4926
    %4944 = vmatpush.msra.mxu0 %v4924
    %4945 = vmatpush.msra.mxu0 %v4922
    %4946 = vmatpush.msra.mxu0 %v4920
    %4947 = vmatpush.msra.mxu0 %v4918
    %4948 = vmatpush.msra.mxu0 %v4916
    %4949 = vmatpush.msra.mxu0 %v4914
    %4950 = vmatpush.msra.mxu0 %v4912
    %4951 = vmatpush.msra.mxu0 %v4910
    %4952 = vmatpush.msra.mxu0 %v4908
    %4953 = vmatpush.msra.mxu0 %v4906
    %4954 = vmatpush.msra.mxu0 %v4904
    %4955 = vmatpush.msra.mxu0 %v4902
    %4956 = vmatmul.f32.gmra.mxu0 %v4900
    %v4957 = vpop.f32.mrf.mxu0
    %v4958 = vadd.f32 %v4936, %v4957
    %4959 = vmatmul.f32.gmra.mxu0 %v4901
    %v4960 = vpop.f32.mrf.mxu0
    %v4961 = vadd.f32 %v4936, %v4960
    %4962 = vdwg.mxu0
    %4963 = vmatpush.msra.mxu0 %v4933
    %4964 = vmatpush.msra.mxu0 %v4931
    %4965 = vmatpush.msra.mxu0 %v4929
    %4966 = vmatpush.msra.mxu0 %v4927
    %4967 = vmatpush.msra.mxu0 %v4925
    %4968 = vmatpush.msra.mxu0 %v4923
    %4969 = vmatpush.msra.mxu0 %v4921
    %4970 = vmatpush.msra.mxu0 %v4919
    %4971 = vmatpush.msra.mxu0 %v4917
    %4972 = vmatpush.msra.mxu0 %v4915
    %4973 = vmatpush.msra.mxu0 %v4913
    %4974 = vmatpush.msra.mxu0 %v4911
    %4975 = vmatpush.msra.mxu0 %v4909
    %4976 = vmatpush.msra.mxu0 %v4907
    %4977 = vmatpush.msra.mxu0 %v4905
    %4978 = vmatpush.msra.mxu0 %v4903
    %4979 = vmatmul.f32.gmra.mxu0 %v4900
    %v4980 = vpop.f32.mrf.mxu0
    %v4981 = vadd.f32 %v4937, %v4980
    %4982 = vmatmul.f32.gmra.mxu0 %v4901
    %v4983 = vpop.f32.mrf.mxu0
    %v4984 = vadd.f32 %v4937, %v4983
    %4985 = vdwg.mxu0
    %v4986 = vmax.f32 %v4958, %v4981
    %4987 = vmax.xlane.f32.xlu0 %v4986
    %v4988 = vpop.xlane.xlu0 %4987
    %v4989 = vmax.f32 %v4961, %v4984
    %4990 = vmax.xlane.f32.xlu0 %v4989
    %v4991 = vpop.xlane.xlu0 %4990
    %v4992 = vsub.f32 %v4958, %v4988
    %v4993 = vsub.f32 %v4981, %v4988
    %v4994 = vsub.f32 %v4961, %v4991
    %v4995 = vsub.f32 %v4984, %v4991
    %v4996 = vmul.f32 %v4992, 1.442695
    %v4997 = vpow.pop %v4996
    %v4998 = vmul.f32 %v4993, 1.442695
    %v4999 = vpow.pop %v4998
    %v5000 = vmul.f32 %v4994, 1.442695
    %v5001 = vpow.pop %v5000
    %v5002 = vmul.f32 %v4995, 1.442695
    %v5003 = vpow.pop %v5002
    %v5004 = vadd.f32 %v4997, %v4999
    %5005 = vadd.xlane.f32.xlu0 %v5004
    %v5006 = vpop.xlane.xlu0 %5005
    %v5007 = vadd.f32 %v5001, %v5003
    %5008 = vadd.xlane.f32.xlu0 %v5007
    %v5009 = vpop.xlane.xlu0 %5008
    %v5010 = vrcp.pop %v5006
    %v5011 = vrcp.pop %v5009
    %v5012 = vmul.f32 %v4997, %v5010
    %v5013 = vmul.f32 %v4999, %v5010
    %v5014 = vmul.f32 %v5001, %v5011
    %v5015 = vmul.f32 %v5003, %v5011
    %5016 = vst [vmem:[#allocation11] sm:$0xff] %v5012
    %5017 = vst [vmem:[#allocation11 + $0x8] sm:$0xff] %v5013
    %5018 = vst [vmem:[#allocation11 + $0x10] sm:$0xff] %v5014
    %5019 = vst [vmem:[#allocation11 + $0x18] sm:$0xff] %v5015
    %5020 = vst [vmem:[#allocation12 - $0x6] sm:$0xc0] %v4540
    %s5021 = scalar_lea.vmem [#allocation12], 2
    %5022 = vst [vmem:[%s5021] sm:$0x3] %v4898
    %5023 = vst [vmem:[#allocation14 - $0x6] sm:$0xc0] %v4538
    %s5024 = scalar_lea.vmem [#allocation14], 2
    %5025 = vst [vmem:[%s5024] sm:$0x3] %v4896
    // Predicated region
    $region54: #{melody_rnn_forward.1} parent=1 // pred_check
      _
    $region55: #{melody_rnn_forward.1} parent=1 // pred_check_branch
      %5027 = sbr.rel (0) target = $region57
    $region56: #{melody_rnn_forward.1} parent=1 // pred_region
      %5029 = vsyncadd [#allocation5], 0
      %s5030 = sshll.u32 [#allocation11], 4
      %s5031 = int_to_ptr.vmem [resolvable:$true] %s5030
      %s5032 = sshll.u32 %s9, 4
      %s5033 = int_to_ptr.hbm [resolvable:$true] %s5032
      %5038 = dma.vmem_to_hbm [thread:$0]  %s5031, 512, %s5033, [#allocation5], 256, 256, 16
    $region57: #{melody_rnn_forward.1} parent=1 // pred_fallthru
      _
    // Predicated region
    $region58: #{melody_rnn_forward.1} parent=1 // pred_check
      _
    $region59: #{melody_rnn_forward.1} parent=1 // pred_check_branch
      %5040 = sbr.rel (0) target = $region61
    $region60: #{melody_rnn_forward.1} parent=1 // pred_region
      %5042 = vsyncadd [#allocation13], 0
      %s5043 = sshll.u32 [#allocation12], 4
      %s5044 = int_to_ptr.vmem [resolvable:$true] %s5043
      %s5045 = sshll.u32 %s10, 4
      %s5046 = int_to_ptr.hbm [resolvable:$true] %s5045
      %5051 = dma.vmem_to_hbm [thread:$0]  %s5044, 64, %s5046, [#allocation13], 32, 32, 2
    $region61: #{melody_rnn_forward.1} parent=1 // pred_fallthru
      _
    // Predicated region
    $region62: #{melody_rnn_forward.1} parent=1 // pred_check
      _
    $region63: #{melody_rnn_forward.1} parent=1 // pred_check_branch
      %5053 = sbr.rel (0) target = $region65
    $region64: #{melody_rnn_forward.1} parent=1 // pred_region
      %5055 = vsyncadd [#allocation13], 0
      %s5056 = sshll.u32 [#allocation14], 4
      %s5057 = int_to_ptr.vmem [resolvable:$true] %s5056
      %s5058 = sshll.u32 %s11, 4
      %s5059 = int_to_ptr.hbm [resolvable:$true] %s5058
      %5064 = dma.vmem_to_hbm [thread:$0]  %s5057, 64, %s5059, [#allocation13], 32, 32, 2
    $region65: #{melody_rnn_forward.1} parent=1 // pred_fallthru
      _
    // Predicated region
    $region66: #{melody_rnn_forward.1} parent=1 // pred_check
      _
    $region67: #{melody_rnn_forward.1} parent=1 // pred_check_branch
      %5066 = sbr.rel (0) target = $region69
    $region68: #{melody_rnn_forward.1} parent=1 // pred_region
      %5068 = dma.done [#allocation5], 512
    $region69: #{melody_rnn_forward.1} parent=1 // pred_fallthru
      _
    // Predicated region
    $region70: #{melody_rnn_forward.1} parent=1 // pred_check
      _
    $region71: #{melody_rnn_forward.1} parent=1 // pred_check_branch
      %5070 = sbr.rel (0) target = $region73
    $region72: #{melody_rnn_forward.1} parent=1 // pred_region
      %5072 = dma.done [#allocation13], 64
    $region73: #{melody_rnn_forward.1} parent=1 // pred_fallthru
      _
    // Predicated region
    $region74: #{melody_rnn_forward.1} parent=1 // pred_check
      _
    $region75: #{melody_rnn_forward.1} parent=1 // pred_check_branch
      %5074 = sbr.rel (0) target = $region77
    $region76: #{melody_rnn_forward.1} parent=1 // pred_region
      %5076 = dma.done [#allocation13], 64
    $region77: #{melody_rnn_forward.1} parent=1 // pred_fallthru
      _
    %5077 = vsyncpa [#allocation4], 1
    %5078 = vsyncpa [#allocation7], 1
    %5079 = vsyncpa [#allocation10], 1
    %5080 = vsyncpa [#allocation5], 1
    %5081 = vsyncpa [#allocation13], 1

</llo_original>
